<compile_context>
chip_gen: v5e
topology: v5e:2x2
jax: 0.10.0
libtpu: 0.0.40
codegen_flags: <defaults>
</compile_context>

<pallas_src>
import functools

import jax
import jax.numpy as jnp
from jax import lax
from jax.experimental import pallas as pl
from jax.experimental.pallas import tpu as pltpu


def _round_up(x, m):
    return (x + m - 1) // m * m


def _pad_to(a, shape):
    return jnp.pad(a, [(0, s - d) for d, s in zip(a.shape, shape)])


# ----------------------------------------------------------------------------
# Fused SSPDAN kernel: input 1x1 conv -> num_layers PDAN blocks -> output conv
# ----------------------------------------------------------------------------
def _sspdan_fused_kernel(x_ref, mtc_ref, mct_ref, w_in_ref, b_in_ref,
                         wqkv_ref, rel_ref, w1_ref, b1_ref, w_out_ref,
                         b_out_ref, o_ref, *, dilations, t_valid, mm_dtype,
                         recip_approx):
    T = x_ref.shape[1]                 # padded T (multiple of 128)
    C = w_in_ref.shape[1]              # padded num_f_maps (multiple of 128)

    m_tc = mtc_ref[0]                                       # (T, 1) f32
    m_ct = mct_ref[0]                                       # (1, T) f32

    # ---- SSPDAN.conv_1x1: (T, D) @ (D, C) + b   (no mask in the reference)
    out = jnp.dot(x_ref[0], w_in_ref[...],
                  preferred_element_type=jnp.float32) + b_in_ref[...]  # (T,C)

    # time index used to zero out-of-range dilated neighbours
    t_idx = lax.broadcasted_iota(jnp.int32, (T, 1), 0)

    # ---- PDAN blocks; residual stream `out` stays resident in VMEM in f32
    for i, d in enumerate(dilations):
        rel = rel_ref[i]                                    # (3, C) f32

        # fused q/k/v projection: one (T, C) @ (C, 3C) MXU pass; C is a
        # multiple of 128 so the three slices below are tile-aligned views.
        qkv = jnp.dot(out.astype(mm_dtype), wqkv_ref[i],
                      preferred_element_type=jnp.float32)   # (T, 3C) f32
        q = qkv[:, :C]
        k = qkv[:, C:2 * C]
        v = qkv[:, 2 * C:]

        # Dilated neighbours {t-d, t, t+d} via XLU rolls.  Out-of-range
        # neighbours have k=v=0 *before* the rel bias is added, matching
        # F.pad + unfold with bias-free key/value convs in DAL.  Validity is
        # measured against the real sequence length so the T padding never
        # contaminates real positions.
        vm = (t_idx >= d).astype(jnp.float32)               # t-d in range
        vp = (t_idx < t_valid - d).astype(jnp.float32)      # t+d in range
        k_m = pltpu.roll(k, d, axis=0) * vm                 # k[t-d]
        k_p = pltpu.roll(k, T - d, axis=0) * vp             # k[t+d]
        v_m = pltpu.roll(v, d, axis=0) * vm + rel[0:1, :]
        v_c = v + rel[1:2, :]
        v_p = pltpu.roll(v, T - d, axis=0) * vp + rel[2:3, :]

        # Direct 3-way softmax: one max, exactly 3 exps, one reciprocal.
        l_m = q * k_m
        l_c = q * k
        l_p = q * k_p
        mx = jnp.maximum(jnp.maximum(l_m, l_c), l_p)
        e_m = jnp.exp(l_m - mx)
        e_c = jnp.exp(l_c - mx)
        e_p = jnp.exp(l_p - mx)
        den = e_m + e_c + e_p                               # >= 1, recip safe
        num = e_m * v_m + e_c * v_c + e_p * v_p
        att = jnp.maximum(num * pl.reciprocal(den, approx=recip_approx), 0.0)

        # block conv_1x1 (+bias); nn.Dropout() is identity in eval mode.
        y = jnp.dot(att.astype(mm_dtype), w1_ref[i],
                    preferred_element_type=jnp.float32) + b1_ref[i]
        out = (out + y) * m_tc                              # residual + mask

    # ---- SSPDAN.conv_out, emitted channels-first so T is the lane dim:
    # (Co, C) contract C  x  (T, C) contract C  ->  (Co, T); lane-dense store.
    logits = lax.dot_general(
        w_out_ref[...], out.astype(mm_dtype),
        dimension_numbers=(((1,), (1,)), ((), ())),
        preferred_element_type=jnp.float32)                 # (Co, T)
    o_ref[0] = ((logits + b_out_ref[...]) * m_ct).astype(o_ref.dtype)


# ----------------------------------------------------------------------------
# Wrapper: padding + parameter packing + one pallas_call for the whole forward
# ----------------------------------------------------------------------------
def _vmem_limit_bytes():
    """~75% of physical VMEM (capped), leaving headroom for compiler scratch."""
    try:
        cap = int(pltpu.get_tpu_info().vmem_capacity_bytes)
    except Exception:
        cap = 64 * 1024 * 1024       # conservative default (v7x per-core VMEM)
    return max(32 * 1024 * 1024, min(cap * 3 // 4, 96 * 1024 * 1024))


def sspdan_forward(params, x_nct, mask_nct, *, compute_dtype=jnp.bfloat16,
                   approx_reciprocal=None):
    """x_nct: (B, dim, T), mask_nct: (B, >=1, T) -> (B, num_classes, T)."""
    B, D, T = x_nct.shape
    layers = params["layers"]
    L = len(layers)
    C = params["w_in"].shape[1]
    Co = params["w_out"].shape[1]
    dilations = tuple(2 ** i for i in range(L))
    assert dilations[-1] < T, "largest dilation must be smaller than T"

    if approx_reciprocal is None:        # exact reciprocal on the f32 path
        approx_reciprocal = compute_dtype != jnp.float32

    # Lane / sublane friendly padding (sliced away at the end).
    C_pad = _round_up(C, 128)
    T_pad = _round_up(T, 128)
    Co_pad = _round_up(Co, 8)

    # Activations channels-last for the in-kernel matmuls; mask passed in both
    # orientations ((T,1) for the residual mask, lane-dense (1,T) for the
    # channels-first output stage).  All padded with zeros.
    x_tc = _pad_to(jnp.transpose(x_nct, (0, 2, 1)),
                   (B, T_pad, D)).astype(compute_dtype)             # (B,Tp,D)
    m_ct = _pad_to(mask_nct[:, 0:1, :].astype(jnp.float32),
                   (B, 1, T_pad))                                   # (B,1,Tp)
    m_tc = jnp.transpose(m_ct, (0, 2, 1))                           # (B,Tp,1)

    # Weights: matmul operands in compute_dtype; biases / rel bias in f32.
    # Everything is zero-padded to C_pad lanes; padded channels stay exactly 0
    # through the whole network.
    w_in = _pad_to(params["w_in"], (D, C_pad)).astype(compute_dtype)
    b_in = _pad_to(params["b_in"].reshape(1, C), (1, C_pad)).astype(jnp.float32)
    wqkv = jnp.stack(
        [jnp.concatenate([_pad_to(lp["wq"], (C_pad, C_pad)),
                          _pad_to(lp["wk"], (C_pad, C_pad)),
                          _pad_to(lp["wv"], (C_pad, C_pad))], axis=1)
         for lp in layers], axis=0).astype(compute_dtype)           # (L,Cp,3Cp)
    rel = jnp.stack([_pad_to(lp["rel"], (3, C_pad)) for lp in layers],
                    axis=0).astype(jnp.float32)                     # (L,3,Cp)
    w1 = jnp.stack([_pad_to(lp["w1"], (C_pad, C_pad)) for lp in layers],
                   axis=0).astype(compute_dtype)                    # (L,Cp,Cp)
    b1 = jnp.stack([_pad_to(lp["b1"].reshape(1, C), (1, C_pad))
                    for lp in layers], axis=0).astype(jnp.float32)  # (L,1,Cp)
    w_out_t = _pad_to(params["w_out"].T, (Co_pad, C_pad)).astype(compute_dtype)
    b_out = _pad_to(params["b_out"].reshape(Co, 1),
                    (Co_pad, 1)).astype(jnp.float32)

    kernel = functools.partial(
        _sspdan_fused_kernel, dilations=dilations, t_valid=T,
        mm_dtype=compute_dtype, recip_approx=approx_reciprocal)

    operands = (x_tc, m_tc, m_ct, w_in, b_in, wqkv, rel, w1, b1, w_out_t, b_out)

    def run(weight_mode):
        def wspec(shape):
            if weight_mode is None:
                return pl.BlockSpec(shape, lambda b: (0,) * len(shape))
            return pl.BlockSpec(shape, lambda b: (0,) * len(shape),
                                pipeline_mode=weight_mode)

        in_specs = [
            pl.BlockSpec((1, T_pad, D), lambda b: (b, 0, 0)),   # x (chan-last)
            pl.BlockSpec((1, T_pad, 1), lambda b: (b, 0, 0)),   # mask (T, 1)
            pl.BlockSpec((1, 1, T_pad), lambda b: (b, 0, 0)),   # mask (1, T)
            wspec((D, C_pad)),                                  # w_in
            wspec((1, C_pad)),                                  # b_in
            wspec((L, C_pad, 3 * C_pad)),                       # fused qkv w
            wspec((L, 3, C_pad)),                               # rel_t biases
            wspec((L, C_pad, C_pad)),                           # block 1x1 w
            wspec((L, 1, C_pad)),                               # block 1x1 b
            wspec((Co_pad, C_pad)),                             # w_out^T
            wspec((Co_pad, 1)),                                 # b_out
        ]
        return pl.pallas_call(
            kernel,
            out_shape=jax.ShapeDtypeStruct((B, Co_pad, T_pad), jnp.float32),
            grid=(B,),
            in_specs=in_specs,
            out_specs=pl.BlockSpec((1, Co_pad, T_pad), lambda b: (b, 0, 0)),
            compiler_params=pltpu.CompilerParams(
                dimension_semantics=("parallel",),
                vmem_limit_bytes=_vmem_limit_bytes(),
            ),
        )(*operands)

    # Weight blocks have constant index maps -> a single pipeline buffer is
    # enough; fall back to default double-buffering if Buffered(1) is rejected.
    weight_mode = pl.Buffered(1) if hasattr(pl, "Buffered") else None
    if weight_mode is not None:
        try:
            full = run(weight_mode)
        except Exception:
            full = run(None)
    else:
        full = run(None)
    return full[:, :Co, :T]


# ----------------------------------------------------------------------------
# Pure-JAX reference for correctness checking (compute_dtype mirrors the
# kernel's matmul input dtype so the bf16 path is compared apples-to-apples).
# ----------------------------------------------------------------------------
def _ref_forward(params, x_nct, mask_nct, *, compute_dtype=jnp.float32):
    cd = compute_dtype

    def mm(a, b):
        return jnp.dot(a.astype(cd), b.astype(cd),
                       preferred_element_type=jnp.float32)

    x = jnp.transpose(x_nct, (0, 2, 1))
    m = jnp.transpose(mask_nct[:, 0:1, :], (0, 2, 1)).astype(jnp.float32)
    out = mm(x, params["w_in"]) + params["b_in"]
    for i, lp in enumerate(params["layers"]):
        d = 2 ** i
        q = mm(out, lp["wq"])
        k = mm(out, lp["wk"])
        v = mm(out, lp["wv"])

        def sh(a, s):
            B, T, C = a.shape
            if s > 0:
                return jnp.concatenate(
                    [a[:, s:, :], jnp.zeros((B, s, C), a.dtype)], axis=1)
            if s < 0:
                return jnp.concatenate(
                    [jnp.zeros((B, -s, C), a.dtype), a[:, : T + s, :]], axis=1)
            return a

        ks = jnp.stack([sh(k, -d), k, sh(k, d)], axis=-1)       # (B,T,C,3)
        vs = jnp.stack([sh(v, -d), v, sh(v, d)], axis=-1)
        vs = vs + lp["rel"].T[None, None, :, :]
        a_ = jax.nn.softmax(q[..., None] * ks, axis=-1)
        att = jnp.maximum(jnp.sum(a_ * vs, axis=-1), 0.0)
        y = mm(att, lp["w1"]) + lp["b1"]
        out = (out + y) * m
    out = (mm(out, params["w_out"]) + params["b_out"]) * m
    return jnp.transpose(out, (0, 2, 1))


# ----------------------------------------------------------------------------
# Deterministic synthetic parameters (shapes from the module's __init__)
# ----------------------------------------------------------------------------
def init_params(key, dim, num_f_maps, num_classes, num_layers):
    keys = iter(jax.random.split(key, 4 + 6 * num_layers))

    def nrm(shape, scale):
        return scale * jax.random.normal(next(keys), shape, jnp.float32)

    params = {
        "w_in": nrm((dim, num_f_maps), 0.3),           # Conv1d(dim, F, 1).weight^T
        "b_in": nrm((num_f_maps,), 0.1),
        "w_out": nrm((num_f_maps, num_classes), 0.3),  # Conv1d(F, classes, 1)
        "b_out": nrm((num_classes,), 0.1),
        "layers": [],
    }
    for _ in range(num_layers):
        params["layers"].append({
            "wq": nrm((num_f_maps, num_f_maps), 0.2),  # DAL.query_conv (no bias)
            "wk": nrm((num_f_maps, num_f_maps), 0.2),  # DAL.key_conv   (no bias)
            "wv": nrm((num_f_maps, num_f_maps), 0.2),  # DAL.value_conv (no bias)
            "rel": nrm((3, num_f_maps), 1.0),          # rel_t[c,0,k] -> rel[k,c]
            "w1": nrm((num_f_maps, num_f_maps), 0.2),  # block conv_1x1
            "b1": nrm((num_f_maps,), 0.1),
        })
    return params


if __name__ == "__main__":
    B, dim, T = 2, 8, 16
    num_f_maps, num_classes, num_layers = 32, 5, 3

    key = jax.random.PRNGKey(0)
    kx, km, kp = jax.random.split(key, 3)
    x = jax.random.normal(kx, (B, dim, T), jnp.float32)           # NCT like PyTorch
    mask = (jax.random.uniform(km, (B, 1, T)) > 0.2).astype(jnp.float32)
    params = init_params(kp, dim, num_f_maps, num_classes, num_layers)

    # Tolerances account for bf16-class MXU matmul passes; the f32 path uses
    # the exact (non-approximate) reciprocal so mismatches aren't masked.
    out_f32 = jax.block_until_ready(
        sspdan_forward(params, x, mask, compute_dtype=jnp.float32))
    ref_f32 = _ref_forward(params, x, mask, compute_dtype=jnp.float32)
    assert out_f32.shape == (B, num_classes, T)
    assert jnp.allclose(out_f32, ref_f32, rtol=5e-2, atol=5e-2), "f32 mismatch"

    out_bf16 = jax.block_until_ready(
        sspdan_forward(params, x, mask, compute_dtype=jnp.bfloat16))
    ref_bf16 = _ref_forward(params, x, mask, compute_dtype=jnp.bfloat16)
    assert out_bf16.shape == (B, num_classes, T)
    assert jnp.allclose(out_bf16, ref_bf16, rtol=5e-2, atol=5e-2), "bf16 mismatch"

    print("KERNEL_OK")
</pallas_src>

<mosaic_0001>
module attributes {stable_mosaic.version = 11 : i64} {
  func.func @_sspdan_fused_kernel(%arg0: i32, %arg1: memref<1x128x8xf32, #tpu.memory_space<vmem>>, %arg2: memref<1x128x1xf32, #tpu.memory_space<vmem>>, %arg3: memref<1x1x128xf32, #tpu.memory_space<vmem>>, %arg4: memref<8x128xf32, #tpu.memory_space<vmem>>, %arg5: memref<1x128xf32, #tpu.memory_space<vmem>>, %arg6: memref<3x128x384xf32, #tpu.memory_space<vmem>>, %arg7: memref<3x3x128xf32, #tpu.memory_space<vmem>>, %arg8: memref<3x128x128xf32, #tpu.memory_space<vmem>>, %arg9: memref<3x1x128xf32, #tpu.memory_space<vmem>>, %arg10: memref<8x128xf32, #tpu.memory_space<vmem>>, %arg11: memref<8x1xf32, #tpu.memory_space<vmem>>, %arg12: memref<1x8x128xf32, #tpu.memory_space<vmem>>) attributes {dimension_semantics = [#tpu.dimension_semantics<parallel>], iteration_bounds = array<i64: 2>, scalar_prefetch = 0 : i64, scratch_operands = 0 : i64, tpu.core_type = #tpu.core_type<tc>, window_params = [{transform_indices = @transform_0, window_bounds = array<i64: 1, 128, 8>}, {transform_indices = @transform_1, window_bounds = array<i64: 1, 128, 1>}, {transform_indices = @transform_2, window_bounds = array<i64: 1, 1, 128>}, {pipeline_mode = #tpu.pipeline_mode<synchronous>, transform_indices = @transform_3, window_bounds = array<i64: 8, 128>}, {pipeline_mode = #tpu.pipeline_mode<synchronous>, transform_indices = @transform_4, window_bounds = array<i64: 1, 128>}, {pipeline_mode = #tpu.pipeline_mode<synchronous>, transform_indices = @transform_5, window_bounds = array<i64: 3, 128, 384>}, {pipeline_mode = #tpu.pipeline_mode<synchronous>, transform_indices = @transform_6, window_bounds = array<i64: 3, 3, 128>}, {pipeline_mode = #tpu.pipeline_mode<synchronous>, transform_indices = @transform_7, window_bounds = array<i64: 3, 128, 128>}, {pipeline_mode = #tpu.pipeline_mode<synchronous>, transform_indices = @transform_8, window_bounds = array<i64: 3, 1, 128>}, {pipeline_mode = #tpu.pipeline_mode<synchronous>, transform_indices = @transform_9, window_bounds = array<i64: 8, 128>}, {pipeline_mode = #tpu.pipeline_mode<synchronous>, transform_indices = @transform_10, window_bounds = array<i64: 8, 1>}, {transform_indices = @transform_11, window_bounds = array<i64: 1, 8, 128>}]} {
    %c0 = arith.constant 0 : index
    %c0_0 = arith.constant 0 : index
    %c0_1 = arith.constant 0 : index
    %0 = vector.load %arg2[%c0, %c0_0, %c0_1] : memref<1x128x1xf32, #tpu.memory_space<vmem>>, vector<1x128x1xf32>
    %1 = vector.shape_cast %0 : vector<1x128x1xf32> to vector<128x1xf32>
    %c0_2 = arith.constant 0 : index
    %c0_3 = arith.constant 0 : index
    %c0_4 = arith.constant 0 : index
    %2 = vector.load %arg3[%c0_2, %c0_3, %c0_4] : memref<1x1x128xf32, #tpu.memory_space<vmem>>, vector<1x1x128xf32>
    %3 = vector.shape_cast %2 : vector<1x1x128xf32> to vector<1x128xf32>
    %c0_5 = arith.constant 0 : index
    %c0_6 = arith.constant 0 : index
    %c0_7 = arith.constant 0 : index
    %4 = vector.load %arg1[%c0_5, %c0_6, %c0_7] : memref<1x128x8xf32, #tpu.memory_space<vmem>>, vector<1x128x8xf32>
    %5 = vector.shape_cast %4 : vector<1x128x8xf32> to vector<128x8xf32>
    %c0_8 = arith.constant 0 : index
    %c0_9 = arith.constant 0 : index
    %6 = vector.load %arg4[%c0_8, %c0_9] : memref<8x128xf32, #tpu.memory_space<vmem>>, vector<8x128xf32>
    %cst = arith.constant dense<0.000000e+00> : vector<128x128xf32>
    %7 = tpu.matmul %5, %6, %cst {dimension_numbers = #tpu.dot_dimension_numbers<[1], [0], [0], [1], [0, 0, 1, 1], [], []>} : vector<128x8xf32>, vector<8x128xf32>, vector<128x128xf32> -> vector<128x128xf32>
    %c0_10 = arith.constant 0 : index
    %c0_11 = arith.constant 0 : index
    %8 = vector.load %arg5[%c0_10, %c0_11] : memref<1x128xf32, #tpu.memory_space<vmem>>, vector<1x128xf32>
    %9 = vector.broadcast %8 : vector<1x128xf32> to vector<128x128xf32>
    %10 = arith.addf %7, %9 : vector<128x128xf32>
    %11 = tpu.iota {dimensions = array<i32: 0>} : vector<128x1xi32>
    %c0_12 = arith.constant 0 : index
    %c0_13 = arith.constant 0 : index
    %c0_14 = arith.constant 0 : index
    %12 = vector.load %arg7[%c0_12, %c0_13, %c0_14] : memref<3x3x128xf32, #tpu.memory_space<vmem>>, vector<1x3x128xf32>
    %13 = vector.shape_cast %12 : vector<1x3x128xf32> to vector<3x128xf32>
    %c0_15 = arith.constant 0 : index
    %c0_16 = arith.constant 0 : index
    %c0_17 = arith.constant 0 : index
    %14 = vector.load %arg6[%c0_15, %c0_16, %c0_17] : memref<3x128x384xf32, #tpu.memory_space<vmem>>, vector<1x128x384xf32>
    %15 = vector.shape_cast %14 : vector<1x128x384xf32> to vector<128x384xf32>
    %cst_18 = arith.constant dense<0.000000e+00> : vector<128x384xf32>
    %16 = tpu.matmul %10, %15, %cst_18 {dimension_numbers = #tpu.dot_dimension_numbers<[1], [0], [0], [1], [0, 0, 1, 1], [], []>} : vector<128x128xf32>, vector<128x384xf32>, vector<128x384xf32> -> vector<128x384xf32>
    %17 = vector.extract_strided_slice %16 {offsets = [0, 0], sizes = [128, 128], strides = [1, 1]} : vector<128x384xf32> to vector<128x128xf32>
    %18 = vector.extract_strided_slice %16 {offsets = [0, 128], sizes = [128, 128], strides = [1, 1]} : vector<128x384xf32> to vector<128x128xf32>
    %19 = vector.extract_strided_slice %16 {offsets = [0, 256], sizes = [128, 128], strides = [1, 1]} : vector<128x384xf32> to vector<128x128xf32>
    %c1_i32 = arith.constant 1 : i32
    %20 = vector.broadcast %c1_i32 : i32 to vector<128x1xi32>
    %21 = arith.cmpi sge, %11, %20 : vector<128x1xi32>
    %22 = arith.extui %21 : vector<128x1xi1> to vector<128x1xi32>
    %23 = arith.sitofp %22 : vector<128x1xi32> to vector<128x1xf32>
    %c15_i32 = arith.constant 15 : i32
    %24 = vector.broadcast %c15_i32 : i32 to vector<128x1xi32>
    %25 = arith.cmpi slt, %11, %24 : vector<128x1xi32>
    %26 = arith.extui %25 : vector<128x1xi1> to vector<128x1xi32>
    %27 = arith.sitofp %26 : vector<128x1xi32> to vector<128x1xf32>
    %c1_i32_19 = arith.constant 1 : i32
    %28 = tpu.dynamic_rotate %18 by %c1_i32_19 dim 0 : vector<128x128xf32>, i32 -> vector<128x128xf32>
    %29 = vector.broadcast %23 : vector<128x1xf32> to vector<128x128xf32>
    %30 = arith.mulf %28, %29 : vector<128x128xf32>
    %c127_i32 = arith.constant 127 : i32
    %31 = tpu.dynamic_rotate %18 by %c127_i32 dim 0 : vector<128x128xf32>, i32 -> vector<128x128xf32>
    %32 = vector.broadcast %27 : vector<128x1xf32> to vector<128x128xf32>
    %33 = arith.mulf %31, %32 : vector<128x128xf32>
    %c1_i32_20 = arith.constant 1 : i32
    %34 = tpu.dynamic_rotate %19 by %c1_i32_20 dim 0 : vector<128x128xf32>, i32 -> vector<128x128xf32>
    %35 = vector.broadcast %23 : vector<128x1xf32> to vector<128x128xf32>
    %36 = arith.mulf %34, %35 : vector<128x128xf32>
    %37 = vector.extract_strided_slice %13 {offsets = [0, 0], sizes = [1, 128], strides = [1, 1]} : vector<3x128xf32> to vector<1x128xf32>
    %38 = vector.broadcast %37 : vector<1x128xf32> to vector<128x128xf32>
    %39 = arith.addf %36, %38 : vector<128x128xf32>
    %40 = vector.extract_strided_slice %13 {offsets = [1, 0], sizes = [1, 128], strides = [1, 1]} : vector<3x128xf32> to vector<1x128xf32>
    %41 = vector.broadcast %40 : vector<1x128xf32> to vector<128x128xf32>
    %42 = arith.addf %19, %41 : vector<128x128xf32>
    %c127_i32_21 = arith.constant 127 : i32
    %43 = tpu.dynamic_rotate %19 by %c127_i32_21 dim 0 : vector<128x128xf32>, i32 -> vector<128x128xf32>
    %44 = vector.broadcast %27 : vector<128x1xf32> to vector<128x128xf32>
    %45 = arith.mulf %43, %44 : vector<128x128xf32>
    %46 = vector.extract_strided_slice %13 {offsets = [2, 0], sizes = [1, 128], strides = [1, 1]} : vector<3x128xf32> to vector<1x128xf32>
    %47 = vector.broadcast %46 : vector<1x128xf32> to vector<128x128xf32>
    %48 = arith.addf %45, %47 : vector<128x128xf32>
    %49 = arith.mulf %17, %30 : vector<128x128xf32>
    %50 = arith.mulf %17, %18 : vector<128x128xf32>
    %51 = arith.mulf %17, %33 : vector<128x128xf32>
    %52 = arith.maximumf %49, %50 : vector<128x128xf32>
    %53 = arith.maximumf %52, %51 : vector<128x128xf32>
    %54 = arith.subf %49, %53 : vector<128x128xf32>
    %55 = math.exp %54 : vector<128x128xf32>
    %56 = arith.subf %50, %53 : vector<128x128xf32>
    %57 = math.exp %56 : vector<128x128xf32>
    %58 = arith.subf %51, %53 : vector<128x128xf32>
    %59 = math.exp %58 : vector<128x128xf32>
    %60 = arith.addf %55, %57 : vector<128x128xf32>
    %61 = arith.addf %60, %59 : vector<128x128xf32>
    %62 = arith.mulf %55, %39 : vector<128x128xf32>
    %63 = arith.mulf %57, %42 : vector<128x128xf32>
    %64 = arith.addf %62, %63 : vector<128x128xf32>
    %65 = arith.mulf %59, %48 : vector<128x128xf32>
    %66 = arith.addf %64, %65 : vector<128x128xf32>
    %67 = tpu.reciprocal %61 : vector<128x128xf32> -> vector<128x128xf32>
    %68 = arith.mulf %66, %67 : vector<128x128xf32>
    %cst_22 = arith.constant 0.000000e+00 : f32
    %69 = vector.broadcast %cst_22 : f32 to vector<128x128xf32>
    %70 = arith.maximumf %68, %69 : vector<128x128xf32>
    %c0_23 = arith.constant 0 : index
    %c0_24 = arith.constant 0 : index
    %c0_25 = arith.constant 0 : index
    %71 = vector.load %arg8[%c0_23, %c0_24, %c0_25] : memref<3x128x128xf32, #tpu.memory_space<vmem>>, vector<1x128x128xf32>
    %72 = vector.shape_cast %71 : vector<1x128x128xf32> to vector<128x128xf32>
    %cst_26 = arith.constant dense<0.000000e+00> : vector<128x128xf32>
    %73 = tpu.matmul %70, %72, %cst_26 {dimension_numbers = #tpu.dot_dimension_numbers<[1], [0], [0], [1], [0, 0, 1, 1], [], []>} : vector<128x128xf32>, vector<128x128xf32>, vector<128x128xf32> -> vector<128x128xf32>
    %c0_27 = arith.constant 0 : index
    %c0_28 = arith.constant 0 : index
    %c0_29 = arith.constant 0 : index
    %74 = vector.load %arg9[%c0_27, %c0_28, %c0_29] : memref<3x1x128xf32, #tpu.memory_space<vmem>>, vector<1x1x128xf32>
    %75 = vector.shape_cast %74 : vector<1x1x128xf32> to vector<1x128xf32>
    %76 = vector.broadcast %75 : vector<1x128xf32> to vector<128x128xf32>
    %77 = arith.addf %73, %76 : vector<128x128xf32>
    %78 = arith.addf %10, %77 : vector<128x128xf32>
    %79 = vector.broadcast %1 : vector<128x1xf32> to vector<128x128xf32>
    %80 = arith.mulf %78, %79 : vector<128x128xf32>
    %c1 = arith.constant 1 : index
    %c0_30 = arith.constant 0 : index
    %c0_31 = arith.constant 0 : index
    %81 = vector.load %arg7[%c1, %c0_30, %c0_31] : memref<3x3x128xf32, #tpu.memory_space<vmem>>, vector<1x3x128xf32>
    %82 = vector.shape_cast %81 : vector<1x3x128xf32> to vector<3x128xf32>
    %c1_32 = arith.constant 1 : index
    %c0_33 = arith.constant 0 : index
    %c0_34 = arith.constant 0 : index
    %83 = vector.load %arg6[%c1_32, %c0_33, %c0_34] : memref<3x128x384xf32, #tpu.memory_space<vmem>>, vector<1x128x384xf32>
    %84 = vector.shape_cast %83 : vector<1x128x384xf32> to vector<128x384xf32>
    %cst_35 = arith.constant dense<0.000000e+00> : vector<128x384xf32>
    %85 = tpu.matmul %80, %84, %cst_35 {dimension_numbers = #tpu.dot_dimension_numbers<[1], [0], [0], [1], [0, 0, 1, 1], [], []>} : vector<128x128xf32>, vector<128x384xf32>, vector<128x384xf32> -> vector<128x384xf32>
    %86 = vector.extract_strided_slice %85 {offsets = [0, 0], sizes = [128, 128], strides = [1, 1]} : vector<128x384xf32> to vector<128x128xf32>
    %87 = vector.extract_strided_slice %85 {offsets = [0, 128], sizes = [128, 128], strides = [1, 1]} : vector<128x384xf32> to vector<128x128xf32>
    %88 = vector.extract_strided_slice %85 {offsets = [0, 256], sizes = [128, 128], strides = [1, 1]} : vector<128x384xf32> to vector<128x128xf32>
    %c2_i32 = arith.constant 2 : i32
    %89 = vector.broadcast %c2_i32 : i32 to vector<128x1xi32>
    %90 = arith.cmpi sge, %11, %89 : vector<128x1xi32>
    %91 = arith.extui %90 : vector<128x1xi1> to vector<128x1xi32>
    %92 = arith.sitofp %91 : vector<128x1xi32> to vector<128x1xf32>
    %c14_i32 = arith.constant 14 : i32
    %93 = vector.broadcast %c14_i32 : i32 to vector<128x1xi32>
    %94 = arith.cmpi slt, %11, %93 : vector<128x1xi32>
    %95 = arith.extui %94 : vector<128x1xi1> to vector<128x1xi32>
    %96 = arith.sitofp %95 : vector<128x1xi32> to vector<128x1xf32>
    %c2_i32_36 = arith.constant 2 : i32
    %97 = tpu.dynamic_rotate %87 by %c2_i32_36 dim 0 : vector<128x128xf32>, i32 -> vector<128x128xf32>
    %98 = vector.broadcast %92 : vector<128x1xf32> to vector<128x128xf32>
    %99 = arith.mulf %97, %98 : vector<128x128xf32>
    %c126_i32 = arith.constant 126 : i32
    %100 = tpu.dynamic_rotate %87 by %c126_i32 dim 0 : vector<128x128xf32>, i32 -> vector<128x128xf32>
    %101 = vector.broadcast %96 : vector<128x1xf32> to vector<128x128xf32>
    %102 = arith.mulf %100, %101 : vector<128x128xf32>
    %c2_i32_37 = arith.constant 2 : i32
    %103 = tpu.dynamic_rotate %88 by %c2_i32_37 dim 0 : vector<128x128xf32>, i32 -> vector<128x128xf32>
    %104 = vector.broadcast %92 : vector<128x1xf32> to vector<128x128xf32>
    %105 = arith.mulf %103, %104 : vector<128x128xf32>
    %106 = vector.extract_strided_slice %82 {offsets = [0, 0], sizes = [1, 128], strides = [1, 1]} : vector<3x128xf32> to vector<1x128xf32>
    %107 = vector.broadcast %106 : vector<1x128xf32> to vector<128x128xf32>
    %108 = arith.addf %105, %107 : vector<128x128xf32>
    %109 = vector.extract_strided_slice %82 {offsets = [1, 0], sizes = [1, 128], strides = [1, 1]} : vector<3x128xf32> to vector<1x128xf32>
    %110 = vector.broadcast %109 : vector<1x128xf32> to vector<128x128xf32>
    %111 = arith.addf %88, %110 : vector<128x128xf32>
    %c126_i32_38 = arith.constant 126 : i32
    %112 = tpu.dynamic_rotate %88 by %c126_i32_38 dim 0 : vector<128x128xf32>, i32 -> vector<128x128xf32>
    %113 = vector.broadcast %96 : vector<128x1xf32> to vector<128x128xf32>
    %114 = arith.mulf %112, %113 : vector<128x128xf32>
    %115 = vector.extract_strided_slice %82 {offsets = [2, 0], sizes = [1, 128], strides = [1, 1]} : vector<3x128xf32> to vector<1x128xf32>
    %116 = vector.broadcast %115 : vector<1x128xf32> to vector<128x128xf32>
    %117 = arith.addf %114, %116 : vector<128x128xf32>
    %118 = arith.mulf %86, %99 : vector<128x128xf32>
    %119 = arith.mulf %86, %87 : vector<128x128xf32>
    %120 = arith.mulf %86, %102 : vector<128x128xf32>
    %121 = arith.maximumf %118, %119 : vector<128x128xf32>
    %122 = arith.maximumf %121, %120 : vector<128x128xf32>
    %123 = arith.subf %118, %122 : vector<128x128xf32>
    %124 = math.exp %123 : vector<128x128xf32>
    %125 = arith.subf %119, %122 : vector<128x128xf32>
    %126 = math.exp %125 : vector<128x128xf32>
    %127 = arith.subf %120, %122 : vector<128x128xf32>
    %128 = math.exp %127 : vector<128x128xf32>
    %129 = arith.addf %124, %126 : vector<128x128xf32>
    %130 = arith.addf %129, %128 : vector<128x128xf32>
    %131 = arith.mulf %124, %108 : vector<128x128xf32>
    %132 = arith.mulf %126, %111 : vector<128x128xf32>
    %133 = arith.addf %131, %132 : vector<128x128xf32>
    %134 = arith.mulf %128, %117 : vector<128x128xf32>
    %135 = arith.addf %133, %134 : vector<128x128xf32>
    %136 = tpu.reciprocal %130 : vector<128x128xf32> -> vector<128x128xf32>
    %137 = arith.mulf %135, %136 : vector<128x128xf32>
    %cst_39 = arith.constant 0.000000e+00 : f32
    %138 = vector.broadcast %cst_39 : f32 to vector<128x128xf32>
    %139 = arith.maximumf %137, %138 : vector<128x128xf32>
    %c1_40 = arith.constant 1 : index
    %c0_41 = arith.constant 0 : index
    %c0_42 = arith.constant 0 : index
    %140 = vector.load %arg8[%c1_40, %c0_41, %c0_42] : memref<3x128x128xf32, #tpu.memory_space<vmem>>, vector<1x128x128xf32>
    %141 = vector.shape_cast %140 : vector<1x128x128xf32> to vector<128x128xf32>
    %cst_43 = arith.constant dense<0.000000e+00> : vector<128x128xf32>
    %142 = tpu.matmul %139, %141, %cst_43 {dimension_numbers = #tpu.dot_dimension_numbers<[1], [0], [0], [1], [0, 0, 1, 1], [], []>} : vector<128x128xf32>, vector<128x128xf32>, vector<128x128xf32> -> vector<128x128xf32>
    %c1_44 = arith.constant 1 : index
    %c0_45 = arith.constant 0 : index
    %c0_46 = arith.constant 0 : index
    %143 = vector.load %arg9[%c1_44, %c0_45, %c0_46] : memref<3x1x128xf32, #tpu.memory_space<vmem>>, vector<1x1x128xf32>
    %144 = vector.shape_cast %143 : vector<1x1x128xf32> to vector<1x128xf32>
    %145 = vector.broadcast %144 : vector<1x128xf32> to vector<128x128xf32>
    %146 = arith.addf %142, %145 : vector<128x128xf32>
    %147 = arith.addf %80, %146 : vector<128x128xf32>
    %148 = vector.broadcast %1 : vector<128x1xf32> to vector<128x128xf32>
    %149 = arith.mulf %147, %148 : vector<128x128xf32>
    %c2 = arith.constant 2 : index
    %c0_47 = arith.constant 0 : index
    %c0_48 = arith.constant 0 : index
    %150 = vector.load %arg7[%c2, %c0_47, %c0_48] : memref<3x3x128xf32, #tpu.memory_space<vmem>>, vector<1x3x128xf32>
    %151 = vector.shape_cast %150 : vector<1x3x128xf32> to vector<3x128xf32>
    %c2_49 = arith.constant 2 : index
    %c0_50 = arith.constant 0 : index
    %c0_51 = arith.constant 0 : index
    %152 = vector.load %arg6[%c2_49, %c0_50, %c0_51] : memref<3x128x384xf32, #tpu.memory_space<vmem>>, vector<1x128x384xf32>
    %153 = vector.shape_cast %152 : vector<1x128x384xf32> to vector<128x384xf32>
    %cst_52 = arith.constant dense<0.000000e+00> : vector<128x384xf32>
    %154 = tpu.matmul %149, %153, %cst_52 {dimension_numbers = #tpu.dot_dimension_numbers<[1], [0], [0], [1], [0, 0, 1, 1], [], []>} : vector<128x128xf32>, vector<128x384xf32>, vector<128x384xf32> -> vector<128x384xf32>
    %155 = vector.extract_strided_slice %154 {offsets = [0, 0], sizes = [128, 128], strides = [1, 1]} : vector<128x384xf32> to vector<128x128xf32>
    %156 = vector.extract_strided_slice %154 {offsets = [0, 128], sizes = [128, 128], strides = [1, 1]} : vector<128x384xf32> to vector<128x128xf32>
    %157 = vector.extract_strided_slice %154 {offsets = [0, 256], sizes = [128, 128], strides = [1, 1]} : vector<128x384xf32> to vector<128x128xf32>
    %c4_i32 = arith.constant 4 : i32
    %158 = vector.broadcast %c4_i32 : i32 to vector<128x1xi32>
    %159 = arith.cmpi sge, %11, %158 : vector<128x1xi32>
    %160 = arith.extui %159 : vector<128x1xi1> to vector<128x1xi32>
    %161 = arith.sitofp %160 : vector<128x1xi32> to vector<128x1xf32>
    %c12_i32 = arith.constant 12 : i32
    %162 = vector.broadcast %c12_i32 : i32 to vector<128x1xi32>
    %163 = arith.cmpi slt, %11, %162 : vector<128x1xi32>
    %164 = arith.extui %163 : vector<128x1xi1> to vector<128x1xi32>
    %165 = arith.sitofp %164 : vector<128x1xi32> to vector<128x1xf32>
    %c4_i32_53 = arith.constant 4 : i32
    %166 = tpu.dynamic_rotate %156 by %c4_i32_53 dim 0 : vector<128x128xf32>, i32 -> vector<128x128xf32>
    %167 = vector.broadcast %161 : vector<128x1xf32> to vector<128x128xf32>
    %168 = arith.mulf %166, %167 : vector<128x128xf32>
    %c124_i32 = arith.constant 124 : i32
    %169 = tpu.dynamic_rotate %156 by %c124_i32 dim 0 : vector<128x128xf32>, i32 -> vector<128x128xf32>
    %170 = vector.broadcast %165 : vector<128x1xf32> to vector<128x128xf32>
    %171 = arith.mulf %169, %170 : vector<128x128xf32>
    %c4_i32_54 = arith.constant 4 : i32
    %172 = tpu.dynamic_rotate %157 by %c4_i32_54 dim 0 : vector<128x128xf32>, i32 -> vector<128x128xf32>
    %173 = vector.broadcast %161 : vector<128x1xf32> to vector<128x128xf32>
    %174 = arith.mulf %172, %173 : vector<128x128xf32>
    %175 = vector.extract_strided_slice %151 {offsets = [0, 0], sizes = [1, 128], strides = [1, 1]} : vector<3x128xf32> to vector<1x128xf32>
    %176 = vector.broadcast %175 : vector<1x128xf32> to vector<128x128xf32>
    %177 = arith.addf %174, %176 : vector<128x128xf32>
    %178 = vector.extract_strided_slice %151 {offsets = [1, 0], sizes = [1, 128], strides = [1, 1]} : vector<3x128xf32> to vector<1x128xf32>
    %179 = vector.broadcast %178 : vector<1x128xf32> to vector<128x128xf32>
    %180 = arith.addf %157, %179 : vector<128x128xf32>
    %c124_i32_55 = arith.constant 124 : i32
    %181 = tpu.dynamic_rotate %157 by %c124_i32_55 dim 0 : vector<128x128xf32>, i32 -> vector<128x128xf32>
    %182 = vector.broadcast %165 : vector<128x1xf32> to vector<128x128xf32>
    %183 = arith.mulf %181, %182 : vector<128x128xf32>
    %184 = vector.extract_strided_slice %151 {offsets = [2, 0], sizes = [1, 128], strides = [1, 1]} : vector<3x128xf32> to vector<1x128xf32>
    %185 = vector.broadcast %184 : vector<1x128xf32> to vector<128x128xf32>
    %186 = arith.addf %183, %185 : vector<128x128xf32>
    %187 = arith.mulf %155, %168 : vector<128x128xf32>
    %188 = arith.mulf %155, %156 : vector<128x128xf32>
    %189 = arith.mulf %155, %171 : vector<128x128xf32>
    %190 = arith.maximumf %187, %188 : vector<128x128xf32>
    %191 = arith.maximumf %190, %189 : vector<128x128xf32>
    %192 = arith.subf %187, %191 : vector<128x128xf32>
    %193 = math.exp %192 : vector<128x128xf32>
    %194 = arith.subf %188, %191 : vector<128x128xf32>
    %195 = math.exp %194 : vector<128x128xf32>
    %196 = arith.subf %189, %191 : vector<128x128xf32>
    %197 = math.exp %196 : vector<128x128xf32>
    %198 = arith.addf %193, %195 : vector<128x128xf32>
    %199 = arith.addf %198, %197 : vector<128x128xf32>
    %200 = arith.mulf %193, %177 : vector<128x128xf32>
    %201 = arith.mulf %195, %180 : vector<128x128xf32>
    %202 = arith.addf %200, %201 : vector<128x128xf32>
    %203 = arith.mulf %197, %186 : vector<128x128xf32>
    %204 = arith.addf %202, %203 : vector<128x128xf32>
    %205 = tpu.reciprocal %199 : vector<128x128xf32> -> vector<128x128xf32>
    %206 = arith.mulf %204, %205 : vector<128x128xf32>
    %cst_56 = arith.constant 0.000000e+00 : f32
    %207 = vector.broadcast %cst_56 : f32 to vector<128x128xf32>
    %208 = arith.maximumf %206, %207 : vector<128x128xf32>
    %c2_57 = arith.constant 2 : index
    %c0_58 = arith.constant 0 : index
    %c0_59 = arith.constant 0 : index
    %209 = vector.load %arg8[%c2_57, %c0_58, %c0_59] : memref<3x128x128xf32, #tpu.memory_space<vmem>>, vector<1x128x128xf32>
    %210 = vector.shape_cast %209 : vector<1x128x128xf32> to vector<128x128xf32>
    %cst_60 = arith.constant dense<0.000000e+00> : vector<128x128xf32>
    %211 = tpu.matmul %208, %210, %cst_60 {dimension_numbers = #tpu.dot_dimension_numbers<[1], [0], [0], [1], [0, 0, 1, 1], [], []>} : vector<128x128xf32>, vector<128x128xf32>, vector<128x128xf32> -> vector<128x128xf32>
    %c2_61 = arith.constant 2 : index
    %c0_62 = arith.constant 0 : index
    %c0_63 = arith.constant 0 : index
    %212 = vector.load %arg9[%c2_61, %c0_62, %c0_63] : memref<3x1x128xf32, #tpu.memory_space<vmem>>, vector<1x1x128xf32>
    %213 = vector.shape_cast %212 : vector<1x1x128xf32> to vector<1x128xf32>
    %214 = vector.broadcast %213 : vector<1x128xf32> to vector<128x128xf32>
    %215 = arith.addf %211, %214 : vector<128x128xf32>
    %216 = arith.addf %149, %215 : vector<128x128xf32>
    %217 = vector.broadcast %1 : vector<128x1xf32> to vector<128x128xf32>
    %218 = arith.mulf %216, %217 : vector<128x128xf32>
    %c0_64 = arith.constant 0 : index
    %c0_65 = arith.constant 0 : index
    %219 = vector.load %arg10[%c0_64, %c0_65] : memref<8x128xf32, #tpu.memory_space<vmem>>, vector<8x128xf32>
    %cst_66 = arith.constant dense<0.000000e+00> : vector<8x128xf32>
    %220 = tpu.matmul %219, %218, %cst_66 {dimension_numbers = #tpu.dot_dimension_numbers<[1], [1], [0], [0], [0, 0, 1, 0], [], []>} : vector<8x128xf32>, vector<128x128xf32>, vector<8x128xf32> -> vector<8x128xf32>
    %c0_67 = arith.constant 0 : index
    %c0_68 = arith.constant 0 : index
    %221 = vector.load %arg11[%c0_67, %c0_68] : memref<8x1xf32, #tpu.memory_space<vmem>>, vector<8x1xf32>
    %222 = vector.broadcast %221 : vector<8x1xf32> to vector<8x128xf32>
    %223 = arith.addf %220, %222 : vector<8x128xf32>
    %224 = vector.broadcast %3 : vector<1x128xf32> to vector<8x128xf32>
    %225 = arith.mulf %223, %224 : vector<8x128xf32>
    %c0_69 = arith.constant 0 : index
    %c0_70 = arith.constant 0 : index
    %c0_71 = arith.constant 0 : index
    %226 = vector.load %arg12[%c0_69, %c0_70, %c0_71] : memref<1x8x128xf32, #tpu.memory_space<vmem>>, vector<1x8x128xf32>
    %227 = vector.shape_cast %226 : vector<1x8x128xf32> to vector<8x128xf32>
    %228 = vector.shape_cast %225 : vector<8x128xf32> to vector<1x8x128xf32>
    tpu.vector_store %arg12[%c0_69, %c0_70, %c0_71], %228 {strides = array<i32>} : memref<1x8x128xf32, #tpu.memory_space<vmem>>, vector<1x8x128xf32>,
    return
  }
  func.func @transform_0(%arg0: i32) -> (i32, i32, i32) {
    %c0_i32 = arith.constant 0 : i32
    %c0_i32_0 = arith.constant 0 : i32
    %c0_i32_1 = arith.constant 0 : i32
    return %arg0, %c0_i32, %c0_i32_0 : i32, i32, i32
  }
  func.func @transform_1(%arg0: i32) -> (i32, i32, i32) {
    %c0_i32 = arith.constant 0 : i32
    %c0_i32_0 = arith.constant 0 : i32
    %c0_i32_1 = arith.constant 0 : i32
    return %arg0, %c0_i32, %c0_i32_0 : i32, i32, i32
  }
  func.func @transform_2(%arg0: i32) -> (i32, i32, i32) {
    %c0_i32 = arith.constant 0 : i32
    %c0_i32_0 = arith.constant 0 : i32
    %c0_i32_1 = arith.constant 0 : i32
    return %arg0, %c0_i32, %c0_i32_0 : i32, i32, i32
  }
  func.func @transform_3(%arg0: i32) -> (i32, i32) {
    %c0_i32 = arith.constant 0 : i32
    %c0_i32_0 = arith.constant 0 : i32
    %c0_i32_1 = arith.constant 0 : i32
    return %c0_i32, %c0_i32_0 : i32, i32
  }
  func.func @transform_4(%arg0: i32) -> (i32, i32) {
    %c0_i32 = arith.constant 0 : i32
    %c0_i32_0 = arith.constant 0 : i32
    %c0_i32_1 = arith.constant 0 : i32
    return %c0_i32, %c0_i32_0 : i32, i32
  }
  func.func @transform_5(%arg0: i32) -> (i32, i32, i32) {
    %c0_i32 = arith.constant 0 : i32
    %c0_i32_0 = arith.constant 0 : i32
    %c0_i32_1 = arith.constant 0 : i32
    %c0_i32_2 = arith.constant 0 : i32
    return %c0_i32, %c0_i32_0, %c0_i32_1 : i32, i32, i32
  }
  func.func @transform_6(%arg0: i32) -> (i32, i32, i32) {
    %c0_i32 = arith.constant 0 : i32
    %c0_i32_0 = arith.constant 0 : i32
    %c0_i32_1 = arith.constant 0 : i32
    %c0_i32_2 = arith.constant 0 : i32
    return %c0_i32, %c0_i32_0, %c0_i32_1 : i32, i32, i32
  }
  func.func @transform_7(%arg0: i32) -> (i32, i32, i32) {
    %c0_i32 = arith.constant 0 : i32
    %c0_i32_0 = arith.constant 0 : i32
    %c0_i32_1 = arith.constant 0 : i32
    %c0_i32_2 = arith.constant 0 : i32
    return %c0_i32, %c0_i32_0, %c0_i32_1 : i32, i32, i32
  }
  func.func @transform_8(%arg0: i32) -> (i32, i32, i32) {
    %c0_i32 = arith.constant 0 : i32
    %c0_i32_0 = arith.constant 0 : i32
    %c0_i32_1 = arith.constant 0 : i32
    %c0_i32_2 = arith.constant 0 : i32
    return %c0_i32, %c0_i32_0, %c0_i32_1 : i32, i32, i32
  }
  func.func @transform_9(%arg0: i32) -> (i32, i32) {
    %c0_i32 = arith.constant 0 : i32
    %c0_i32_0 = arith.constant 0 : i32
    %c0_i32_1 = arith.constant 0 : i32
    return %c0_i32, %c0_i32_0 : i32, i32
  }
  func.func @transform_10(%arg0: i32) -> (i32, i32) {
    %c0_i32 = arith.constant 0 : i32
    %c0_i32_0 = arith.constant 0 : i32
    %c0_i32_1 = arith.constant 0 : i32
    return %c0_i32, %c0_i32_0 : i32, i32
  }
  func.func @transform_11(%arg0: i32) -> (i32, i32, i32) {
    %c0_i32 = arith.constant 0 : i32
    %c0_i32_0 = arith.constant 0 : i32
    %c0_i32_1 = arith.constant 0 : i32
    return %arg0, %c0_i32, %c0_i32_0 : i32, i32, i32
  }
}

module attributes {stable_mosaic.version = 11 : i64} {
  func.func @_sspdan_fused_kernel(%arg0: i32, %arg1: memref<1x128x8xf32, #tpu.memory_space<vmem>>, %arg2: memref<1x128x1xf32, #tpu.memory_space<vmem>>, %arg3: memref<1x1x128xf32, #tpu.memory_space<vmem>>, %arg4: memref<8x128xf32, #tpu.memory_space<vmem>>, %arg5: memref<1x128xf32, #tpu.memory_space<vmem>>, %arg6: memref<3x128x384xf32, #tpu.memory_space<vmem>>, %arg7: memref<3x3x128xf32, #tpu.memory_space<vmem>>, %arg8: memref<3x128x128xf32, #tpu.memory_space<vmem>>, %arg9: memref<3x1x128xf32, #tpu.memory_space<vmem>>, %arg10: memref<8x128xf32, #tpu.memory_space<vmem>>, %arg11: memref<8x1xf32, #tpu.memory_space<vmem>>, %arg12: memref<1x8x128xf32, #tpu.memory_space<vmem>>) attributes {dimension_semantics = [#tpu.dimension_semantics<parallel>], iteration_bounds = array<i64: 2>, scalar_prefetch = 0 : i64, scratch_operands = 0 : i64, tpu.core_type = #tpu.core_type<tc>, window_params = [{transform_indices = @transform_0, window_bounds = array<i64: 1, 128, 8>}, {transform_indices = @transform_1, window_bounds = array<i64: 1, 128, 1>}, {transform_indices = @transform_2, window_bounds = array<i64: 1, 1, 128>}, {pipeline_mode = #tpu.pipeline_mode<synchronous>, transform_indices = @transform_3, window_bounds = array<i64: 8, 128>}, {pipeline_mode = #tpu.pipeline_mode<synchronous>, transform_indices = @transform_4, window_bounds = array<i64: 1, 128>}, {pipeline_mode = #tpu.pipeline_mode<synchronous>, transform_indices = @transform_5, window_bounds = array<i64: 3, 128, 384>}, {pipeline_mode = #tpu.pipeline_mode<synchronous>, transform_indices = @transform_6, window_bounds = array<i64: 3, 3, 128>}, {pipeline_mode = #tpu.pipeline_mode<synchronous>, transform_indices = @transform_7, window_bounds = array<i64: 3, 128, 128>}, {pipeline_mode = #tpu.pipeline_mode<synchronous>, transform_indices = @transform_8, window_bounds = array<i64: 3, 1, 128>}, {pipeline_mode = #tpu.pipeline_mode<synchronous>, transform_indices = @transform_9, window_bounds = array<i64: 8, 128>}, {pipeline_mode = #tpu.pipeline_mode<synchronous>, transform_indices = @transform_10, window_bounds = array<i64: 8, 1>}, {transform_indices = @transform_11, window_bounds = array<i64: 1, 8, 128>}]} {
    %c0 = arith.constant 0 : index
    %c0_0 = arith.constant 0 : index
    %c0_1 = arith.constant 0 : index
    %0 = vector.load %arg2[%c0, %c0_0, %c0_1] : memref<1x128x1xf32, #tpu.memory_space<vmem>>, vector<1x128x1xf32>
    %1 = vector.shape_cast %0 : vector<1x128x1xf32> to vector<128x1xf32>
    %c0_2 = arith.constant 0 : index
    %c0_3 = arith.constant 0 : index
    %c0_4 = arith.constant 0 : index
    %2 = vector.load %arg3[%c0_2, %c0_3, %c0_4] : memref<1x1x128xf32, #tpu.memory_space<vmem>>, vector<1x1x128xf32>
    %3 = vector.shape_cast %2 : vector<1x1x128xf32> to vector<1x128xf32>
    %c0_5 = arith.constant 0 : index
    %c0_6 = arith.constant 0 : index
    %c0_7 = arith.constant 0 : index
    %4 = vector.load %arg1[%c0_5, %c0_6, %c0_7] : memref<1x128x8xf32, #tpu.memory_space<vmem>>, vector<1x128x8xf32>
    %5 = vector.shape_cast %4 : vector<1x128x8xf32> to vector<128x8xf32>
    %c0_8 = arith.constant 0 : index
    %c0_9 = arith.constant 0 : index
    %6 = vector.load %arg4[%c0_8, %c0_9] : memref<8x128xf32, #tpu.memory_space<vmem>>, vector<8x128xf32>
    %cst = arith.constant dense<0.000000e+00> : vector<128x128xf32>
    %7 = tpu.matmul %5, %6, %cst {dimension_numbers = #tpu.dot_dimension_numbers<[1], [0], [0], [1], [0, 0, 1, 1], [], []>} : vector<128x8xf32>, vector<8x128xf32>, vector<128x128xf32> -> vector<128x128xf32>
    %c0_10 = arith.constant 0 : index
    %c0_11 = arith.constant 0 : index
    %8 = vector.load %arg5[%c0_10, %c0_11] : memref<1x128xf32, #tpu.memory_space<vmem>>, vector<1x128xf32>
    %9 = vector.broadcast %8 : vector<1x128xf32> to vector<128x128xf32>
    %10 = arith.addf %7, %9 : vector<128x128xf32>
    %11 = tpu.iota {dimensions = array<i32: 0>} : vector<128x1xi32>
    %c0_12 = arith.constant 0 : index
    %c0_13 = arith.constant 0 : index
    %c0_14 = arith.constant 0 : index
    %12 = vector.load %arg7[%c0_12, %c0_13, %c0_14] : memref<3x3x128xf32, #tpu.memory_space<vmem>>, vector<1x3x128xf32>
    %13 = vector.shape_cast %12 : vector<1x3x128xf32> to vector<3x128xf32>
    %c0_15 = arith.constant 0 : index
    %c0_16 = arith.constant 0 : index
    %c0_17 = arith.constant 0 : index
    %14 = vector.load %arg6[%c0_15, %c0_16, %c0_17] : memref<3x128x384xf32, #tpu.memory_space<vmem>>, vector<1x128x384xf32>
    %15 = vector.shape_cast %14 : vector<1x128x384xf32> to vector<128x384xf32>
    %cst_18 = arith.constant dense<0.000000e+00> : vector<128x384xf32>
    %16 = tpu.matmul %10, %15, %cst_18 {dimension_numbers = #tpu.dot_dimension_numbers<[1], [0], [0], [1], [0, 0, 1, 1], [], []>} : vector<128x128xf32>, vector<128x384xf32>, vector<128x384xf32> -> vector<128x384xf32>
    %17 = vector.extract_strided_slice %16 {offsets = [0, 0], sizes = [128, 128], strides = [1, 1]} : vector<128x384xf32> to vector<128x128xf32>
    %18 = vector.extract_strided_slice %16 {offsets = [0, 128], sizes = [128, 128], strides = [1, 1]} : vector<128x384xf32> to vector<128x128xf32>
    %19 = vector.extract_strided_slice %16 {offsets = [0, 256], sizes = [128, 128], strides = [1, 1]} : vector<128x384xf32> to vector<128x128xf32>
    %c1_i32 = arith.constant 1 : i32
    %20 = vector.broadcast %c1_i32 : i32 to vector<128x1xi32>
    %21 = arith.cmpi sge, %11, %20 : vector<128x1xi32>
    %22 = arith.extui %21 : vector<128x1xi1> to vector<128x1xi32>
    %23 = arith.sitofp %22 : vector<128x1xi32> to vector<128x1xf32>
    %c15_i32 = arith.constant 15 : i32
    %24 = vector.broadcast %c15_i32 : i32 to vector<128x1xi32>
    %25 = arith.cmpi slt, %11, %24 : vector<128x1xi32>
    %26 = arith.extui %25 : vector<128x1xi1> to vector<128x1xi32>
    %27 = arith.sitofp %26 : vector<128x1xi32> to vector<128x1xf32>
    %c1_i32_19 = arith.constant 1 : i32
    %28 = tpu.dynamic_rotate %18 by %c1_i32_19 dim 0 : vector<128x128xf32>, i32 -> vector<128x128xf32>
    %29 = vector.broadcast %23 : vector<128x1xf32> to vector<128x128xf32>
    %30 = arith.mulf %28, %29 : vector<128x128xf32>
    %c127_i32 = arith.constant 127 : i32
    %31 = tpu.dynamic_rotate %18 by %c127_i32 dim 0 : vector<128x128xf32>, i32 -> vector<128x128xf32>
    %32 = vector.broadcast %27 : vector<128x1xf32> to vector<128x128xf32>
    %33 = arith.mulf %31, %32 : vector<128x128xf32>
    %c1_i32_20 = arith.constant 1 : i32
    %34 = tpu.dynamic_rotate %19 by %c1_i32_20 dim 0 : vector<128x128xf32>, i32 -> vector<128x128xf32>
    %35 = vector.broadcast %23 : vector<128x1xf32> to vector<128x128xf32>
    %36 = arith.mulf %34, %35 : vector<128x128xf32>
    %37 = vector.extract_strided_slice %13 {offsets = [0, 0], sizes = [1, 128], strides = [1, 1]} : vector<3x128xf32> to vector<1x128xf32>
    %38 = vector.broadcast %37 : vector<1x128xf32> to vector<128x128xf32>
    %39 = arith.addf %36, %38 : vector<128x128xf32>
    %40 = vector.extract_strided_slice %13 {offsets = [1, 0], sizes = [1, 128], strides = [1, 1]} : vector<3x128xf32> to vector<1x128xf32>
    %41 = vector.broadcast %40 : vector<1x128xf32> to vector<128x128xf32>
    %42 = arith.addf %19, %41 : vector<128x128xf32>
    %c127_i32_21 = arith.constant 127 : i32
    %43 = tpu.dynamic_rotate %19 by %c127_i32_21 dim 0 : vector<128x128xf32>, i32 -> vector<128x128xf32>
    %44 = vector.broadcast %27 : vector<128x1xf32> to vector<128x128xf32>
    %45 = arith.mulf %43, %44 : vector<128x128xf32>
    %46 = vector.extract_strided_slice %13 {offsets = [2, 0], sizes = [1, 128], strides = [1, 1]} : vector<3x128xf32> to vector<1x128xf32>
    %47 = vector.broadcast %46 : vector<1x128xf32> to vector<128x128xf32>
    %48 = arith.addf %45, %47 : vector<128x128xf32>
    %49 = arith.mulf %17, %30 : vector<128x128xf32>
    %50 = arith.mulf %17, %18 : vector<128x128xf32>
    %51 = arith.mulf %17, %33 : vector<128x128xf32>
    %52 = arith.maximumf %49, %50 : vector<128x128xf32>
    %53 = arith.maximumf %52, %51 : vector<128x128xf32>
    %54 = arith.subf %49, %53 : vector<128x128xf32>
    %55 = math.exp %54 : vector<128x128xf32>
    %56 = arith.subf %50, %53 : vector<128x128xf32>
    %57 = math.exp %56 : vector<128x128xf32>
    %58 = arith.subf %51, %53 : vector<128x128xf32>
    %59 = math.exp %58 : vector<128x128xf32>
    %60 = arith.addf %55, %57 : vector<128x128xf32>
    %61 = arith.addf %60, %59 : vector<128x128xf32>
    %62 = arith.mulf %55, %39 : vector<128x128xf32>
    %63 = arith.mulf %57, %42 : vector<128x128xf32>
    %64 = arith.addf %62, %63 : vector<128x128xf32>
    %65 = arith.mulf %59, %48 : vector<128x128xf32>
    %66 = arith.addf %64, %65 : vector<128x128xf32>
    %67 = tpu.reciprocal %61 : vector<128x128xf32> -> vector<128x128xf32>
    %68 = arith.mulf %66, %67 : vector<128x128xf32>
    %cst_22 = arith.constant 0.000000e+00 : f32
    %69 = vector.broadcast %cst_22 : f32 to vector<128x128xf32>
    %70 = arith.maximumf %68, %69 : vector<128x128xf32>
    %c0_23 = arith.constant 0 : index
    %c0_24 = arith.constant 0 : index
    %c0_25 = arith.constant 0 : index
    %71 = vector.load %arg8[%c0_23, %c0_24, %c0_25] : memref<3x128x128xf32, #tpu.memory_space<vmem>>, vector<1x128x128xf32>
    %72 = vector.shape_cast %71 : vector<1x128x128xf32> to vector<128x128xf32>
    %cst_26 = arith.constant dense<0.000000e+00> : vector<128x128xf32>
    %73 = tpu.matmul %70, %72, %cst_26 {dimension_numbers = #tpu.dot_dimension_numbers<[1], [0], [0], [1], [0, 0, 1, 1], [], []>} : vector<128x128xf32>, vector<128x128xf32>, vector<128x128xf32> -> vector<128x128xf32>
    %c0_27 = arith.constant 0 : index
    %c0_28 = arith.constant 0 : index
    %c0_29 = arith.constant 0 : index
    %74 = vector.load %arg9[%c0_27, %c0_28, %c0_29] : memref<3x1x128xf32, #tpu.memory_space<vmem>>, vector<1x1x128xf32>
    %75 = vector.shape_cast %74 : vector<1x1x128xf32> to vector<1x128xf32>
    %76 = vector.broadcast %75 : vector<1x128xf32> to vector<128x128xf32>
    %77 = arith.addf %73, %76 : vector<128x128xf32>
    %78 = arith.addf %10, %77 : vector<128x128xf32>
    %79 = vector.broadcast %1 : vector<128x1xf32> to vector<128x128xf32>
    %80 = arith.mulf %78, %79 : vector<128x128xf32>
    %c1 = arith.constant 1 : index
    %c0_30 = arith.constant 0 : index
    %c0_31 = arith.constant 0 : index
    %81 = vector.load %arg7[%c1, %c0_30, %c0_31] : memref<3x3x128xf32, #tpu.memory_space<vmem>>, vector<1x3x128xf32>
    %82 = vector.shape_cast %81 : vector<1x3x128xf32> to vector<3x128xf32>
    %c1_32 = arith.constant 1 : index
    %c0_33 = arith.constant 0 : index
    %c0_34 = arith.constant 0 : index
    %83 = vector.load %arg6[%c1_32, %c0_33, %c0_34] : memref<3x128x384xf32, #tpu.memory_space<vmem>>, vector<1x128x384xf32>
    %84 = vector.shape_cast %83 : vector<1x128x384xf32> to vector<128x384xf32>
    %cst_35 = arith.constant dense<0.000000e+00> : vector<128x384xf32>
    %85 = tpu.matmul %80, %84, %cst_35 {dimension_numbers = #tpu.dot_dimension_numbers<[1], [0], [0], [1], [0, 0, 1, 1], [], []>} : vector<128x128xf32>, vector<128x384xf32>, vector<128x384xf32> -> vector<128x384xf32>
    %86 = vector.extract_strided_slice %85 {offsets = [0, 0], sizes = [128, 128], strides = [1, 1]} : vector<128x384xf32> to vector<128x128xf32>
    %87 = vector.extract_strided_slice %85 {offsets = [0, 128], sizes = [128, 128], strides = [1, 1]} : vector<128x384xf32> to vector<128x128xf32>
    %88 = vector.extract_strided_slice %85 {offsets = [0, 256], sizes = [128, 128], strides = [1, 1]} : vector<128x384xf32> to vector<128x128xf32>
    %c2_i32 = arith.constant 2 : i32
    %89 = vector.broadcast %c2_i32 : i32 to vector<128x1xi32>
    %90 = arith.cmpi sge, %11, %89 : vector<128x1xi32>
    %91 = arith.extui %90 : vector<128x1xi1> to vector<128x1xi32>
    %92 = arith.sitofp %91 : vector<128x1xi32> to vector<128x1xf32>
    %c14_i32 = arith.constant 14 : i32
    %93 = vector.broadcast %c14_i32 : i32 to vector<128x1xi32>
    %94 = arith.cmpi slt, %11, %93 : vector<128x1xi32>
    %95 = arith.extui %94 : vector<128x1xi1> to vector<128x1xi32>
    %96 = arith.sitofp %95 : vector<128x1xi32> to vector<128x1xf32>
    %c2_i32_36 = arith.constant 2 : i32
    %97 = tpu.dynamic_rotate %87 by %c2_i32_36 dim 0 : vector<128x128xf32>, i32 -> vector<128x128xf32>
    %98 = vector.broadcast %92 : vector<128x1xf32> to vector<128x128xf32>
    %99 = arith.mulf %97, %98 : vector<128x128xf32>
    %c126_i32 = arith.constant 126 : i32
    %100 = tpu.dynamic_rotate %87 by %c126_i32 dim 0 : vector<128x128xf32>, i32 -> vector<128x128xf32>
    %101 = vector.broadcast %96 : vector<128x1xf32> to vector<128x128xf32>
    %102 = arith.mulf %100, %101 : vector<128x128xf32>
    %c2_i32_37 = arith.constant 2 : i32
    %103 = tpu.dynamic_rotate %88 by %c2_i32_37 dim 0 : vector<128x128xf32>, i32 -> vector<128x128xf32>
    %104 = vector.broadcast %92 : vector<128x1xf32> to vector<128x128xf32>
    %105 = arith.mulf %103, %104 : vector<128x128xf32>
    %106 = vector.extract_strided_slice %82 {offsets = [0, 0], sizes = [1, 128], strides = [1, 1]} : vector<3x128xf32> to vector<1x128xf32>
    %107 = vector.broadcast %106 : vector<1x128xf32> to vector<128x128xf32>
    %108 = arith.addf %105, %107 : vector<128x128xf32>
    %109 = vector.extract_strided_slice %82 {offsets = [1, 0], sizes = [1, 128], strides = [1, 1]} : vector<3x128xf32> to vector<1x128xf32>
    %110 = vector.broadcast %109 : vector<1x128xf32> to vector<128x128xf32>
    %111 = arith.addf %88, %110 : vector<128x128xf32>
    %c126_i32_38 = arith.constant 126 : i32
    %112 = tpu.dynamic_rotate %88 by %c126_i32_38 dim 0 : vector<128x128xf32>, i32 -> vector<128x128xf32>
    %113 = vector.broadcast %96 : vector<128x1xf32> to vector<128x128xf32>
    %114 = arith.mulf %112, %113 : vector<128x128xf32>
    %115 = vector.extract_strided_slice %82 {offsets = [2, 0], sizes = [1, 128], strides = [1, 1]} : vector<3x128xf32> to vector<1x128xf32>
    %116 = vector.broadcast %115 : vector<1x128xf32> to vector<128x128xf32>
    %117 = arith.addf %114, %116 : vector<128x128xf32>
    %118 = arith.mulf %86, %99 : vector<128x128xf32>
    %119 = arith.mulf %86, %87 : vector<128x128xf32>
    %120 = arith.mulf %86, %102 : vector<128x128xf32>
    %121 = arith.maximumf %118, %119 : vector<128x128xf32>
    %122 = arith.maximumf %121, %120 : vector<128x128xf32>
    %123 = arith.subf %118, %122 : vector<128x128xf32>
    %124 = math.exp %123 : vector<128x128xf32>
    %125 = arith.subf %119, %122 : vector<128x128xf32>
    %126 = math.exp %125 : vector<128x128xf32>
    %127 = arith.subf %120, %122 : vector<128x128xf32>
    %128 = math.exp %127 : vector<128x128xf32>
    %129 = arith.addf %124, %126 : vector<128x128xf32>
    %130 = arith.addf %129, %128 : vector<128x128xf32>
    %131 = arith.mulf %124, %108 : vector<128x128xf32>
    %132 = arith.mulf %126, %111 : vector<128x128xf32>
    %133 = arith.addf %131, %132 : vector<128x128xf32>
    %134 = arith.mulf %128, %117 : vector<128x128xf32>
    %135 = arith.addf %133, %134 : vector<128x128xf32>
    %136 = tpu.reciprocal %130 : vector<128x128xf32> -> vector<128x128xf32>
    %137 = arith.mulf %135, %136 : vector<128x128xf32>
    %cst_39 = arith.constant 0.000000e+00 : f32
    %138 = vector.broadcast %cst_39 : f32 to vector<128x128xf32>
    %139 = arith.maximumf %137, %138 : vector<128x128xf32>
    %c1_40 = arith.constant 1 : index
    %c0_41 = arith.constant 0 : index
    %c0_42 = arith.constant 0 : index
    %140 = vector.load %arg8[%c1_40, %c0_41, %c0_42] : memref<3x128x128xf32, #tpu.memory_space<vmem>>, vector<1x128x128xf32>
    %141 = vector.shape_cast %140 : vector<1x128x128xf32> to vector<128x128xf32>
    %cst_43 = arith.constant dense<0.000000e+00> : vector<128x128xf32>
    %142 = tpu.matmul %139, %141, %cst_43 {dimension_numbers = #tpu.dot_dimension_numbers<[1], [0], [0], [1], [0, 0, 1, 1], [], []>} : vector<128x128xf32>, vector<128x128xf32>, vector<128x128xf32> -> vector<128x128xf32>
    %c1_44 = arith.constant 1 : index
    %c0_45 = arith.constant 0 : index
    %c0_46 = arith.constant 0 : index
    %143 = vector.load %arg9[%c1_44, %c0_45, %c0_46] : memref<3x1x128xf32, #tpu.memory_space<vmem>>, vector<1x1x128xf32>
    %144 = vector.shape_cast %143 : vector<1x1x128xf32> to vector<1x128xf32>
    %145 = vector.broadcast %144 : vector<1x128xf32> to vector<128x128xf32>
    %146 = arith.addf %142, %145 : vector<128x128xf32>
    %147 = arith.addf %80, %146 : vector<128x128xf32>
    %148 = vector.broadcast %1 : vector<128x1xf32> to vector<128x128xf32>
    %149 = arith.mulf %147, %148 : vector<128x128xf32>
    %c2 = arith.constant 2 : index
    %c0_47 = arith.constant 0 : index
    %c0_48 = arith.constant 0 : index
    %150 = vector.load %arg7[%c2, %c0_47, %c0_48] : memref<3x3x128xf32, #tpu.memory_space<vmem>>, vector<1x3x128xf32>
    %151 = vector.shape_cast %150 : vector<1x3x128xf32> to vector<3x128xf32>
    %c2_49 = arith.constant 2 : index
    %c0_50 = arith.constant 0 : index
    %c0_51 = arith.constant 0 : index
    %152 = vector.load %arg6[%c2_49, %c0_50, %c0_51] : memref<3x128x384xf32, #tpu.memory_space<vmem>>, vector<1x128x384xf32>
    %153 = vector.shape_cast %152 : vector<1x128x384xf32> to vector<128x384xf32>
    %cst_52 = arith.constant dense<0.000000e+00> : vector<128x384xf32>
    %154 = tpu.matmul %149, %153, %cst_52 {dimension_numbers = #tpu.dot_dimension_numbers<[1], [0], [0], [1], [0, 0, 1, 1], [], []>} : vector<128x128xf32>, vector<128x384xf32>, vector<128x384xf32> -> vector<128x384xf32>
    %155 = vector.extract_strided_slice %154 {offsets = [0, 0], sizes = [128, 128], strides = [1, 1]} : vector<128x384xf32> to vector<128x128xf32>
    %156 = vector.extract_strided_slice %154 {offsets = [0, 128], sizes = [128, 128], strides = [1, 1]} : vector<128x384xf32> to vector<128x128xf32>
    %157 = vector.extract_strided_slice %154 {offsets = [0, 256], sizes = [128, 128], strides = [1, 1]} : vector<128x384xf32> to vector<128x128xf32>
    %c4_i32 = arith.constant 4 : i32
    %158 = vector.broadcast %c4_i32 : i32 to vector<128x1xi32>
    %159 = arith.cmpi sge, %11, %158 : vector<128x1xi32>
    %160 = arith.extui %159 : vector<128x1xi1> to vector<128x1xi32>
    %161 = arith.sitofp %160 : vector<128x1xi32> to vector<128x1xf32>
    %c12_i32 = arith.constant 12 : i32
    %162 = vector.broadcast %c12_i32 : i32 to vector<128x1xi32>
    %163 = arith.cmpi slt, %11, %162 : vector<128x1xi32>
    %164 = arith.extui %163 : vector<128x1xi1> to vector<128x1xi32>
    %165 = arith.sitofp %164 : vector<128x1xi32> to vector<128x1xf32>
    %c4_i32_53 = arith.constant 4 : i32
    %166 = tpu.dynamic_rotate %156 by %c4_i32_53 dim 0 : vector<128x128xf32>, i32 -> vector<128x128xf32>
    %167 = vector.broadcast %161 : vector<128x1xf32> to vector<128x128xf32>
    %168 = arith.mulf %166, %167 : vector<128x128xf32>
    %c124_i32 = arith.constant 124 : i32
    %169 = tpu.dynamic_rotate %156 by %c124_i32 dim 0 : vector<128x128xf32>, i32 -> vector<128x128xf32>
    %170 = vector.broadcast %165 : vector<128x1xf32> to vector<128x128xf32>
    %171 = arith.mulf %169, %170 : vector<128x128xf32>
    %c4_i32_54 = arith.constant 4 : i32
    %172 = tpu.dynamic_rotate %157 by %c4_i32_54 dim 0 : vector<128x128xf32>, i32 -> vector<128x128xf32>
    %173 = vector.broadcast %161 : vector<128x1xf32> to vector<128x128xf32>
    %174 = arith.mulf %172, %173 : vector<128x128xf32>
    %175 = vector.extract_strided_slice %151 {offsets = [0, 0], sizes = [1, 128], strides = [1, 1]} : vector<3x128xf32> to vector<1x128xf32>
    %176 = vector.broadcast %175 : vector<1x128xf32> to vector<128x128xf32>
    %177 = arith.addf %174, %176 : vector<128x128xf32>
    %178 = vector.extract_strided_slice %151 {offsets = [1, 0], sizes = [1, 128], strides = [1, 1]} : vector<3x128xf32> to vector<1x128xf32>
    %179 = vector.broadcast %178 : vector<1x128xf32> to vector<128x128xf32>
    %180 = arith.addf %157, %179 : vector<128x128xf32>
    %c124_i32_55 = arith.constant 124 : i32
    %181 = tpu.dynamic_rotate %157 by %c124_i32_55 dim 0 : vector<128x128xf32>, i32 -> vector<128x128xf32>
    %182 = vector.broadcast %165 : vector<128x1xf32> to vector<128x128xf32>
    %183 = arith.mulf %181, %182 : vector<128x128xf32>
    %184 = vector.extract_strided_slice %151 {offsets = [2, 0], sizes = [1, 128], strides = [1, 1]} : vector<3x128xf32> to vector<1x128xf32>
    %185 = vector.broadcast %184 : vector<1x128xf32> to vector<128x128xf32>
    %186 = arith.addf %183, %185 : vector<128x128xf32>
    %187 = arith.mulf %155, %168 : vector<128x128xf32>
    %188 = arith.mulf %155, %156 : vector<128x128xf32>
    %189 = arith.mulf %155, %171 : vector<128x128xf32>
    %190 = arith.maximumf %187, %188 : vector<128x128xf32>
    %191 = arith.maximumf %190, %189 : vector<128x128xf32>
    %192 = arith.subf %187, %191 : vector<128x128xf32>
    %193 = math.exp %192 : vector<128x128xf32>
    %194 = arith.subf %188, %191 : vector<128x128xf32>
    %195 = math.exp %194 : vector<128x128xf32>
    %196 = arith.subf %189, %191 : vector<128x128xf32>
    %197 = math.exp %196 : vector<128x128xf32>
    %198 = arith.addf %193, %195 : vector<128x128xf32>
    %199 = arith.addf %198, %197 : vector<128x128xf32>
    %200 = arith.mulf %193, %177 : vector<128x128xf32>
    %201 = arith.mulf %195, %180 : vector<128x128xf32>
    %202 = arith.addf %200, %201 : vector<128x128xf32>
    %203 = arith.mulf %197, %186 : vector<128x128xf32>
    %204 = arith.addf %202, %203 : vector<128x128xf32>
    %205 = tpu.reciprocal %199 : vector<128x128xf32> -> vector<128x128xf32>
    %206 = arith.mulf %204, %205 : vector<128x128xf32>
    %cst_56 = arith.constant 0.000000e+00 : f32
    %207 = vector.broadcast %cst_56 : f32 to vector<128x128xf32>
    %208 = arith.maximumf %206, %207 : vector<128x128xf32>
    %c2_57 = arith.constant 2 : index
    %c0_58 = arith.constant 0 : index
    %c0_59 = arith.constant 0 : index
    %209 = vector.load %arg8[%c2_57, %c0_58, %c0_59] : memref<3x128x128xf32, #tpu.memory_space<vmem>>, vector<1x128x128xf32>
    %210 = vector.shape_cast %209 : vector<1x128x128xf32> to vector<128x128xf32>
    %cst_60 = arith.constant dense<0.000000e+00> : vector<128x128xf32>
    %211 = tpu.matmul %208, %210, %cst_60 {dimension_numbers = #tpu.dot_dimension_numbers<[1], [0], [0], [1], [0, 0, 1, 1], [], []>} : vector<128x128xf32>, vector<128x128xf32>, vector<128x128xf32> -> vector<128x128xf32>
    %c2_61 = arith.constant 2 : index
    %c0_62 = arith.constant 0 : index
    %c0_63 = arith.constant 0 : index
    %212 = vector.load %arg9[%c2_61, %c0_62, %c0_63] : memref<3x1x128xf32, #tpu.memory_space<vmem>>, vector<1x1x128xf32>
    %213 = vector.shape_cast %212 : vector<1x1x128xf32> to vector<1x128xf32>
    %214 = vector.broadcast %213 : vector<1x128xf32> to vector<128x128xf32>
    %215 = arith.addf %211, %214 : vector<128x128xf32>
    %216 = arith.addf %149, %215 : vector<128x128xf32>
    %217 = vector.broadcast %1 : vector<128x1xf32> to vector<128x128xf32>
    %218 = arith.mulf %216, %217 : vector<128x128xf32>
    %c0_64 = arith.constant 0 : index
    %c0_65 = arith.constant 0 : index
    %219 = vector.load %arg10[%c0_64, %c0_65] : memref<8x128xf32, #tpu.memory_space<vmem>>, vector<8x128xf32>
    %cst_66 = arith.constant dense<0.000000e+00> : vector<8x128xf32>
    %220 = tpu.matmul %219, %218, %cst_66 {dimension_numbers = #tpu.dot_dimension_numbers<[1], [1], [0], [0], [0, 0, 1, 0], [], []>} : vector<8x128xf32>, vector<128x128xf32>, vector<8x128xf32> -> vector<8x128xf32>
    %c0_67 = arith.constant 0 : index
    %c0_68 = arith.constant 0 : index
    %221 = vector.load %arg11[%c0_67, %c0_68] : memref<8x1xf32, #tpu.memory_space<vmem>>, vector<8x1xf32>
    %222 = vector.broadcast %221 : vector<8x1xf32> to vector<8x128xf32>
    %223 = arith.addf %220, %222 : vector<8x128xf32>
    %224 = vector.broadcast %3 : vector<1x128xf32> to vector<8x128xf32>
    %225 = arith.mulf %223, %224 : vector<8x128xf32>
    %c0_69 = arith.constant 0 : index
    %c0_70 = arith.constant 0 : index
    %c0_71 = arith.constant 0 : index
    %226 = vector.load %arg12[%c0_69, %c0_70, %c0_71] : memref<1x8x128xf32, #tpu.memory_space<vmem>>, vector<1x8x128xf32>
    %227 = vector.shape_cast %226 : vector<1x8x128xf32> to vector<8x128xf32>
    %228 = vector.shape_cast %225 : vector<8x128xf32> to vector<1x8x128xf32>
    tpu.vector_store %arg12[%c0_69, %c0_70, %c0_71], %228 {strides = array<i32>} : memref<1x8x128xf32, #tpu.memory_space<vmem>>, vector<1x8x128xf32>,
    return
  }
  func.func @transform_0(%arg0: i32) -> (i32, i32, i32) {
    %c0_i32 = arith.constant 0 : i32
    %c0_i32_0 = arith.constant 0 : i32
    %c0_i32_1 = arith.constant 0 : i32
    return %arg0, %c0_i32, %c0_i32_0 : i32, i32, i32
  }
  func.func @transform_1(%arg0: i32) -> (i32, i32, i32) {
    %c0_i32 = arith.constant 0 : i32
    %c0_i32_0 = arith.constant 0 : i32
    %c0_i32_1 = arith.constant 0 : i32
    return %arg0, %c0_i32, %c0_i32_0 : i32, i32, i32
  }
  func.func @transform_2(%arg0: i32) -> (i32, i32, i32) {
    %c0_i32 = arith.constant 0 : i32
    %c0_i32_0 = arith.constant 0 : i32
    %c0_i32_1 = arith.constant 0 : i32
    return %arg0, %c0_i32, %c0_i32_0 : i32, i32, i32
  }
  func.func @transform_3(%arg0: i32) -> (i32, i32) {
    %c0_i32 = arith.constant 0 : i32
    %c0_i32_0 = arith.constant 0 : i32
    %c0_i32_1 = arith.constant 0 : i32
    return %c0_i32, %c0_i32_0 : i32, i32
  }
  func.func @transform_4(%arg0: i32) -> (i32, i32) {
    %c0_i32 = arith.constant 0 : i32
    %c0_i32_0 = arith.constant 0 : i32
    %c0_i32_1 = arith.constant 0 : i32
    return %c0_i32, %c0_i32_0 : i32, i32
  }
  func.func @transform_5(%arg0: i32) -> (i32, i32, i32) {
    %c0_i32 = arith.constant 0 : i32
    %c0_i32_0 = arith.constant 0 : i32
    %c0_i32_1 = arith.constant 0 : i32
    %c0_i32_2 = arith.constant 0 : i32
    return %c0_i32, %c0_i32_0, %c0_i32_1 : i32, i32, i32
  }
  func.func @transform_6(%arg0: i32) -> (i32, i32, i32) {
    %c0_i32 = arith.constant 0 : i32
    %c0_i32_0 = arith.constant 0 : i32
    %c0_i32_1 = arith.constant 0 : i32
    %c0_i32_2 = arith.constant 0 : i32
    return %c0_i32, %c0_i32_0, %c0_i32_1 : i32, i32, i32
  }
  func.func @transform_7(%arg0: i32) -> (i32, i32, i32) {
    %c0_i32 = arith.constant 0 : i32
    %c0_i32_0 = arith.constant 0 : i32
    %c0_i32_1 = arith.constant 0 : i32
    %c0_i32_2 = arith.constant 0 : i32
    return %c0_i32, %c0_i32_0, %c0_i32_1 : i32, i32, i32
  }
  func.func @transform_8(%arg0: i32) -> (i32, i32, i32) {
    %c0_i32 = arith.constant 0 : i32
    %c0_i32_0 = arith.constant 0 : i32
    %c0_i32_1 = arith.constant 0 : i32
    %c0_i32_2 = arith.constant 0 : i32
    return %c0_i32, %c0_i32_0, %c0_i32_1 : i32, i32, i32
  }
  func.func @transform_9(%arg0: i32) -> (i32, i32) {
    %c0_i32 = arith.constant 0 : i32
    %c0_i32_0 = arith.constant 0 : i32
    %c0_i32_1 = arith.constant 0 : i32
    return %c0_i32, %c0_i32_0 : i32, i32
  }
  func.func @transform_10(%arg0: i32) -> (i32, i32) {
    %c0_i32 = arith.constant 0 : i32
    %c0_i32_0 = arith.constant 0 : i32
    %c0_i32_1 = arith.constant 0 : i32
    return %c0_i32, %c0_i32_0 : i32, i32
  }
  func.func @transform_11(%arg0: i32) -> (i32, i32, i32) {
    %c0_i32 = arith.constant 0 : i32
    %c0_i32_0 = arith.constant 0 : i32
    %c0_i32_1 = arith.constant 0 : i32
    return %arg0, %c0_i32, %c0_i32_0 : i32, i32, i32
  }
}

</mosaic_0001>

<llo_original>
// kernel: tpu_custom_call.1
$region0: #{tpu_custom_call.1}
  #allocation0 [shape = 'u32[]', space=smem, size = 0x4, offset = 0x4, fixed_abs, tag = 'smem constant byte address 0x4 - core index']
  #allocation1 [shape = 'u32[72,128]{1,0:T(1,128)}', space=vmem, size = 0x9000, scoped, tag = 'internal scratch']
  %s0 = inlined_call_operand.vmem [shape: f32[2,128,8], index: 0, kind: input, shape index: {}]
  %s1 = inlined_call_operand.vmem [shape: f32[2,128,1], index: 1, kind: input, shape index: {}]
  %s2 = inlined_call_operand.vmem [shape: f32[2,1,128], index: 2, kind: input, shape index: {}]
  %s3 = inlined_call_operand.vmem [shape: f32[8,128], index: 3, kind: input, shape index: {}]
  %s4 = inlined_call_operand.vmem [shape: f32[1,128], index: 4, kind: input, shape index: {}]
  %s5 = inlined_call_operand.hbm [shape: f32[3,128,384], index: 5, kind: input, shape index: {}]
  %s6 = inlined_call_operand.vmem [shape: f32[3,3,128], index: 6, kind: input, shape index: {}]
  %s7 = inlined_call_operand.vmem [shape: f32[3,128,128], index: 7, kind: input, shape index: {}]
  %s8 = inlined_call_operand.vmem [shape: f32[3,1,128], index: 8, kind: input, shape index: {}]
  %s9 = inlined_call_operand.vmem [shape: f32[8,128], index: 9, kind: input, shape index: {}]
  %s10 = inlined_call_operand.vmem [shape: f32[8,1], index: 10, kind: input, shape index: {}]
  %s11 = inlined_call_operand.hbm [shape: f32[2,8,128], index: 11, kind: output, shape index: {}]
  %s12 = sld [smem:[#allocation0]]
  $region81: #{tpu_custom_call.1} parent=0
    _
  %s14 = ssub.s32 1, %s12
  %s15 = scalar_select 0, %s14, %s12
  $region1: #{tpu_custom_call.1} parent=0
    #allocation2 [shape = 'u8[589824]{0}', space=vmem, size = 0x90000, scoped, tag = 'input window, operand 5, single buffered']
    #allocation3 [shape = 's32[2]{0}', space=sflag, size = 0x8, scoped, tag = 'scoped memory for tpu_custom_call.1']
    #allocation4 [shape = 's32[2]{0}', space=sflag, size = 0x8, scoped, tag = 'scoped memory for tpu_custom_call.1']
    #allocation5 [shape = 'u8[8192]{0}', space=vmem, size = 0x2000, scoped, tag = 'output window, operand 0']
    %16 = vsyncpa [#allocation3], 0
    %17 = vsyncpa [#allocation4], 0
    %s18 = scalar_lea.sflag [#allocation4], 1
    %19 = vsyncpa %s18, 0
    loop: start=0, step=1, limit=4
    $region2: #{tpu_custom_call.1} parent=1 // loop_pre_header
      _
    $region3: #{tpu_custom_call.1} parent=1 // loop_header
      %s21 = sphi 0, %s25
      %p22 = scmp.ge.s32.totalorder %s21, 4
      %s31 = sphi 0, %s33
      %s34 = sphi 0, %s31
      %s35 = sphi 0, %s34
      %s51 = sphi 0, %s35
      %s57 = sphi 0, %s59
      %s60 = sphi 0, %s57
      %s61 = sphi 0, %s60
      %s77 = sphi 0, %s61
      %s83 = sphi 0, %s85
      %s86 = sphi 0, %s83
      %s87 = sphi 0, %s86
      %s103 = sphi 0, %s87
      %s107 = sphi 0, %s107
      %s109 = sphi 0, %s107
      %s110 = sphi 0, %s109
      %s124 = sphi 0, %s110
      %s128 = sphi 0, %s128
      %s130 = sphi 0, %s128
      %s131 = sphi 0, %s130
      %s145 = sphi 0, %s131
      %s149 = sphi 0, %s149
      %s151 = sphi 0, %s149
      %s152 = sphi 0, %s151
      %s166 = sphi 0, %s152
      %s170 = sphi 0, %s170
      %s172 = sphi 0, %s170
      %s173 = sphi 0, %s172
      %s187 = sphi 0, %s173
      %s191 = sphi 0, %s191
      %s193 = sphi 0, %s191
      %s194 = sphi 0, %s193
      %s208 = sphi 0, %s194
      %s212 = sphi 0, %s212
      %s214 = sphi 0, %s212
      %s215 = sphi 0, %s214
      %s229 = sphi 0, %s215
      %s233 = sphi 0, %s233
      %s235 = sphi 0, %s233
      %s236 = sphi 0, %s235
      %s250 = sphi 0, %s236
      %s254 = sphi 0, %s254
      %s256 = sphi 0, %s254
      %s257 = sphi 0, %s256
      %s271 = sphi 0, %s257
      %s277 = sphi 0, %s279
      %s280 = sphi 0, %s277
      %s281 = sphi 0, %s280
      %s297 = sphi 0, %s281
    $region4: #{tpu_custom_call.1} parent=1 // loop_header_branch
      %24 = sbr.rel (%p22) target = $region8
    $region5: #{tpu_custom_call.1} parent=1 // loop_body
      %s26 = ssub.s32 %s21, 1
      %s27 = ssub.s32 %s21, 2
      %s28 = sadd.s32 %s21, 1
      %s29 = ssub.s32 %s21, %s28
      %p30 = scmp.eq.s32.totalorder %s29, 0
      %s32 = sadd.s32 %s31, 1
      %s33 = scalar_select %p30, %s31, %s32
      %p36 = pneg %p30
      %p37 = scmp.eq.s32.totalorder %s21, 1
      %p38 = por %p36, %p37
      %p39 = scmp.ne.s32.totalorder %s31, %s34
      %p40 = scmp.eq.s32.totalorder %s21, 0
      %p41 = por %p39, %p40
      %p42 = scmp.ne.s32.totalorder %s31, %s34
      %p43 = scmp.eq.s32.totalorder %s26, 1
      %p44 = por %p42, %p43
      %p45 = scmp.ne.s32.totalorder %s34, %s35
      %p46 = scmp.eq.s32.totalorder %s26, 0
      %p47 = por %p45, %p46
      %p48 = scmp.ne.s32.totalorder %s34, %s35
      %p49 = scmp.eq.s32.totalorder %s27, 1
      %p50 = por %p48, %p49
      %p52 = scmp.ne.s32.totalorder %s35, %s51
      %p53 = scmp.eq.s32.totalorder %s27, 0
      %p54 = por %p52, %p53
      %s55 = ssub.s32 %s21, %s28
      %p56 = scmp.eq.s32.totalorder %s55, 0
      %s58 = sadd.s32 %s57, 1
      %s59 = scalar_select %p56, %s57, %s58
      %p62 = pneg %p56
      %p63 = scmp.eq.s32.totalorder %s21, 1
      %p64 = por %p62, %p63
      %p65 = scmp.ne.s32.totalorder %s57, %s60
      %p66 = scmp.eq.s32.totalorder %s21, 0
      %p67 = por %p65, %p66
      %p68 = scmp.ne.s32.totalorder %s57, %s60
      %p69 = scmp.eq.s32.totalorder %s26, 1
      %p70 = por %p68, %p69
      %p71 = scmp.ne.s32.totalorder %s60, %s61
      %p72 = scmp.eq.s32.totalorder %s26, 0
      %p73 = por %p71, %p72
      %p74 = scmp.ne.s32.totalorder %s60, %s61
      %p75 = scmp.eq.s32.totalorder %s27, 1
      %p76 = por %p74, %p75
      %p78 = scmp.ne.s32.totalorder %s61, %s77
      %p79 = scmp.eq.s32.totalorder %s27, 0
      %p80 = por %p78, %p79
      %s81 = ssub.s32 %s21, %s28
      %p82 = scmp.eq.s32.totalorder %s81, 0
      %s84 = sadd.s32 %s83, 1
      %s85 = scalar_select %p82, %s83, %s84
      %p88 = pneg %p82
      %p89 = scmp.eq.s32.totalorder %s21, 1
      %p90 = por %p88, %p89
      %p91 = scmp.ne.s32.totalorder %s83, %s86
      %p92 = scmp.eq.s32.totalorder %s21, 0
      %p93 = por %p91, %p92
      %p94 = scmp.ne.s32.totalorder %s83, %s86
      %p95 = scmp.eq.s32.totalorder %s26, 1
      %p96 = por %p94, %p95
      %p97 = scmp.ne.s32.totalorder %s86, %s87
      %p98 = scmp.eq.s32.totalorder %s26, 0
      %p99 = por %p97, %p98
      %p100 = scmp.ne.s32.totalorder %s86, %s87
      %p101 = scmp.eq.s32.totalorder %s27, 1
      %p102 = por %p100, %p101
      %p104 = scmp.ne.s32.totalorder %s87, %s103
      %p105 = scmp.eq.s32.totalorder %s27, 0
      %p106 = por %p104, %p105
      %s108 = sadd.s32 %s107, 1
      %p111 = scmp.eq.s32.totalorder %s21, 1
      %p112 = scmp.ne.s32.totalorder %s107, %s109
      %p113 = scmp.eq.s32.totalorder %s21, 0
      %p114 = por %p112, %p113
      %p115 = scmp.ne.s32.totalorder %s107, %s109
      %p116 = scmp.eq.s32.totalorder %s26, 1
      %p117 = por %p115, %p116
      %p118 = scmp.ne.s32.totalorder %s109, %s110
      %p119 = scmp.eq.s32.totalorder %s26, 0
      %p120 = por %p118, %p119
      %p121 = scmp.ne.s32.totalorder %s109, %s110
      %p122 = scmp.eq.s32.totalorder %s27, 1
      %p123 = por %p121, %p122
      %p125 = scmp.ne.s32.totalorder %s110, %s124
      %p126 = scmp.eq.s32.totalorder %s27, 0
      %p127 = por %p125, %p126
      %s129 = sadd.s32 %s128, 1
      %p132 = scmp.eq.s32.totalorder %s21, 1
      %p133 = scmp.ne.s32.totalorder %s128, %s130
      %p134 = scmp.eq.s32.totalorder %s21, 0
      %p135 = por %p133, %p134
      %p136 = scmp.ne.s32.totalorder %s128, %s130
      %p137 = scmp.eq.s32.totalorder %s26, 1
      %p138 = por %p136, %p137
      %p139 = scmp.ne.s32.totalorder %s130, %s131
      %p140 = scmp.eq.s32.totalorder %s26, 0
      %p141 = por %p139, %p140
      %p142 = scmp.ne.s32.totalorder %s130, %s131
      %p143 = scmp.eq.s32.totalorder %s27, 1
      %p144 = por %p142, %p143
      %p146 = scmp.ne.s32.totalorder %s131, %s145
      %p147 = scmp.eq.s32.totalorder %s27, 0
      %p148 = por %p146, %p147
      %s150 = sadd.s32 %s149, 1
      %p153 = scmp.eq.s32.totalorder %s21, 1
      %p154 = scmp.ne.s32.totalorder %s149, %s151
      %p155 = scmp.eq.s32.totalorder %s21, 0
      %p156 = por %p154, %p155
      %p157 = scmp.ne.s32.totalorder %s149, %s151
      %p158 = scmp.eq.s32.totalorder %s26, 1
      %p159 = por %p157, %p158
      %p160 = scmp.ne.s32.totalorder %s151, %s152
      %p161 = scmp.eq.s32.totalorder %s26, 0
      %p162 = por %p160, %p161
      %p163 = scmp.ne.s32.totalorder %s151, %s152
      %p164 = scmp.eq.s32.totalorder %s27, 1
      %p165 = por %p163, %p164
      %p167 = scmp.ne.s32.totalorder %s152, %s166
      %p168 = scmp.eq.s32.totalorder %s27, 0
      %p169 = por %p167, %p168
      %s171 = sadd.s32 %s170, 1
      %p174 = scmp.eq.s32.totalorder %s21, 1
      %p175 = scmp.ne.s32.totalorder %s170, %s172
      %p176 = scmp.eq.s32.totalorder %s21, 0
      %p177 = por %p175, %p176
      %p178 = scmp.ne.s32.totalorder %s170, %s172
      %p179 = scmp.eq.s32.totalorder %s26, 1
      %p180 = por %p178, %p179
      %p181 = scmp.ne.s32.totalorder %s172, %s173
      %p182 = scmp.eq.s32.totalorder %s26, 0
      %p183 = por %p181, %p182
      %p184 = scmp.ne.s32.totalorder %s172, %s173
      %p185 = scmp.eq.s32.totalorder %s27, 1
      %p186 = por %p184, %p185
      %p188 = scmp.ne.s32.totalorder %s173, %s187
      %p189 = scmp.eq.s32.totalorder %s27, 0
      %p190 = por %p188, %p189
      %s192 = sadd.s32 %s191, 1
      %p195 = scmp.eq.s32.totalorder %s21, 1
      %p196 = scmp.ne.s32.totalorder %s191, %s193
      %p197 = scmp.eq.s32.totalorder %s21, 0
      %p198 = por %p196, %p197
      %p199 = scmp.ne.s32.totalorder %s191, %s193
      %p200 = scmp.eq.s32.totalorder %s26, 1
      %p201 = por %p199, %p200
      %p202 = scmp.ne.s32.totalorder %s193, %s194
      %p203 = scmp.eq.s32.totalorder %s26, 0
      %p204 = por %p202, %p203
      %p205 = scmp.ne.s32.totalorder %s193, %s194
      %p206 = scmp.eq.s32.totalorder %s27, 1
      %p207 = por %p205, %p206
      %p209 = scmp.ne.s32.totalorder %s194, %s208
      %p210 = scmp.eq.s32.totalorder %s27, 0
      %p211 = por %p209, %p210
      %s213 = sadd.s32 %s212, 1
      %p216 = scmp.eq.s32.totalorder %s21, 1
      %p217 = scmp.ne.s32.totalorder %s212, %s214
      %p218 = scmp.eq.s32.totalorder %s21, 0
      %p219 = por %p217, %p218
      %p220 = scmp.ne.s32.totalorder %s212, %s214
      %p221 = scmp.eq.s32.totalorder %s26, 1
      %p222 = por %p220, %p221
      %p223 = scmp.ne.s32.totalorder %s214, %s215
      %p224 = scmp.eq.s32.totalorder %s26, 0
      %p225 = por %p223, %p224
      %p226 = scmp.ne.s32.totalorder %s214, %s215
      %p227 = scmp.eq.s32.totalorder %s27, 1
      %p228 = por %p226, %p227
      %p230 = scmp.ne.s32.totalorder %s215, %s229
      %p231 = scmp.eq.s32.totalorder %s27, 0
      %p232 = por %p230, %p231
      %s234 = sadd.s32 %s233, 1
      %p237 = scmp.eq.s32.totalorder %s21, 1
      %p238 = scmp.ne.s32.totalorder %s233, %s235
      %p239 = scmp.eq.s32.totalorder %s21, 0
      %p240 = por %p238, %p239
      %p241 = scmp.ne.s32.totalorder %s233, %s235
      %p242 = scmp.eq.s32.totalorder %s26, 1
      %p243 = por %p241, %p242
      %p244 = scmp.ne.s32.totalorder %s235, %s236
      %p245 = scmp.eq.s32.totalorder %s26, 0
      %p246 = por %p244, %p245
      %p247 = scmp.ne.s32.totalorder %s235, %s236
      %p248 = scmp.eq.s32.totalorder %s27, 1
      %p249 = por %p247, %p248
      %p251 = scmp.ne.s32.totalorder %s236, %s250
      %p252 = scmp.eq.s32.totalorder %s27, 0
      %p253 = por %p251, %p252
      %s255 = sadd.s32 %s254, 1
      %p258 = scmp.eq.s32.totalorder %s21, 1
      %p259 = scmp.ne.s32.totalorder %s254, %s256
      %p260 = scmp.eq.s32.totalorder %s21, 0
      %p261 = por %p259, %p260
      %p262 = scmp.ne.s32.totalorder %s254, %s256
      %p263 = scmp.eq.s32.totalorder %s26, 1
      %p264 = por %p262, %p263
      %p265 = scmp.ne.s32.totalorder %s256, %s257
      %p266 = scmp.eq.s32.totalorder %s26, 0
      %p267 = por %p265, %p266
      %p268 = scmp.ne.s32.totalorder %s256, %s257
      %p269 = scmp.eq.s32.totalorder %s27, 1
      %p270 = por %p268, %p269
      %p272 = scmp.ne.s32.totalorder %s257, %s271
      %p273 = scmp.eq.s32.totalorder %s27, 0
      %p274 = por %p272, %p273
      %s275 = ssub.s32 %s21, %s28
      %p276 = scmp.eq.s32.totalorder %s275, 0
      %s278 = sadd.s32 %s277, 1
      %s279 = scalar_select %p276, %s277, %s278
      %p282 = pneg %p276
      %p283 = scmp.eq.s32.totalorder %s21, 1
      %p284 = por %p282, %p283
      %p285 = scmp.ne.s32.totalorder %s277, %s280
      %p286 = scmp.eq.s32.totalorder %s21, 0
      %p287 = por %p285, %p286
      %p288 = scmp.ne.s32.totalorder %s277, %s280
      %p289 = scmp.eq.s32.totalorder %s26, 1
      %p290 = por %p288, %p289
      %p291 = scmp.ne.s32.totalorder %s280, %s281
      %p292 = scmp.eq.s32.totalorder %s26, 0
      %p293 = por %p291, %p292
      %p294 = scmp.ne.s32.totalorder %s280, %s281
      %p295 = scmp.eq.s32.totalorder %s27, 1
      %p296 = por %p294, %p295
      %p298 = scmp.ne.s32.totalorder %s281, %s297
      %p299 = scmp.eq.s32.totalorder %s27, 0
      %p300 = por %p298, %p299
      %p301 = scmp.le.s32.totalorder 1, %s21
      %p302 = scmp.lt.s32.totalorder %s21, 3
      %p303 = pnand %p301, %p302
      %p304 = pneg %p303
      // Predicated region
      $region9: #{tpu_custom_call.1} parent=5 // pred_check
        _
      $region10: #{tpu_custom_call.1} parent=5 // pred_check_branch
        %306 = sbr.rel (%p303) target = $region12
      $region11: #{tpu_custom_call.1} parent=5 // pred_region
        %s307 = ssub.s32 %s21, 1
        // Predicated region
        $region13: #{tpu_custom_call.1} parent=11 // pred_check
          %p308 = pneg %p120
        $region14: #{tpu_custom_call.1} parent=11 // pred_check_branch
          %310 = sbr.rel (%p308) target = $region16
        $region15: #{tpu_custom_call.1} parent=11 // pred_region
          _
        $region16: #{tpu_custom_call.1} parent=11 // pred_fallthru
          _
        // Predicated region
        $region17: #{tpu_custom_call.1} parent=11 // pred_check
          %p311 = pneg %p141
        $region18: #{tpu_custom_call.1} parent=11 // pred_check_branch
          %313 = sbr.rel (%p311) target = $region20
        $region19: #{tpu_custom_call.1} parent=11 // pred_region
          _
        $region20: #{tpu_custom_call.1} parent=11 // pred_fallthru
          _
        // Predicated region
        $region21: #{tpu_custom_call.1} parent=11 // pred_check
          %p314 = pneg %p162
        $region22: #{tpu_custom_call.1} parent=11 // pred_check_branch
          %316 = sbr.rel (%p314) target = $region24
        $region23: #{tpu_custom_call.1} parent=11 // pred_region
          %318 = vsyncadd [#allocation3], 0
          %s319 = sshll.u32 %s5, 4
          %s320 = int_to_ptr.hbm [resolvable:$true] %s319
          %s321 = sshll.u32 [#allocation2], 4
          %s322 = int_to_ptr.vmem [resolvable:$true] %s321
          %327 = dma.hbm_to_vmem [thread:$0]  %s320, 18432, %s322, [#allocation3], 384, 384, 24
        $region24: #{tpu_custom_call.1} parent=11 // pred_fallthru
          _
        // Predicated region
        $region25: #{tpu_custom_call.1} parent=11 // pred_check
          %p328 = pneg %p183
        $region26: #{tpu_custom_call.1} parent=11 // pred_check_branch
          %330 = sbr.rel (%p328) target = $region28
        $region27: #{tpu_custom_call.1} parent=11 // pred_region
          _
        $region28: #{tpu_custom_call.1} parent=11 // pred_fallthru
          _
        // Predicated region
        $region29: #{tpu_custom_call.1} parent=11 // pred_check
          %p331 = pneg %p204
        $region30: #{tpu_custom_call.1} parent=11 // pred_check_branch
          %333 = sbr.rel (%p331) target = $region32
        $region31: #{tpu_custom_call.1} parent=11 // pred_region
          _
        $region32: #{tpu_custom_call.1} parent=11 // pred_fallthru
          _
        // Predicated region
        $region33: #{tpu_custom_call.1} parent=11 // pred_check
          %p334 = pneg %p225
        $region34: #{tpu_custom_call.1} parent=11 // pred_check_branch
          %336 = sbr.rel (%p334) target = $region36
        $region35: #{tpu_custom_call.1} parent=11 // pred_region
          _
        $region36: #{tpu_custom_call.1} parent=11 // pred_fallthru
          _
        // Predicated region
        $region37: #{tpu_custom_call.1} parent=11 // pred_check
          %p337 = pneg %p246
        $region38: #{tpu_custom_call.1} parent=11 // pred_check_branch
          %339 = sbr.rel (%p337) target = $region40
        $region39: #{tpu_custom_call.1} parent=11 // pred_region
          _
        $region40: #{tpu_custom_call.1} parent=11 // pred_fallthru
          _
        // Predicated region
        $region41: #{tpu_custom_call.1} parent=11 // pred_check
          %p340 = pneg %p267
        $region42: #{tpu_custom_call.1} parent=11 // pred_check_branch
          %342 = sbr.rel (%p340) target = $region44
        $region43: #{tpu_custom_call.1} parent=11 // pred_region
          _
        $region44: #{tpu_custom_call.1} parent=11 // pred_fallthru
          _
      $region12: #{tpu_custom_call.1} parent=5 // pred_fallthru
        _
      %p343 = scmp.lt.s32.totalorder %s21, 2
      // Predicated region
      $region45: #{tpu_custom_call.1} parent=5 // pred_check
        %p344 = pneg %p343
      $region46: #{tpu_custom_call.1} parent=5 // pred_check_branch
        %346 = sbr.rel (%p344) target = $region48
      $region47: #{tpu_custom_call.1} parent=5 // pred_region
        // Predicated region
        $region49: #{tpu_custom_call.1} parent=47 // pred_check
          %p347 = pneg %p41
        $region50: #{tpu_custom_call.1} parent=47 // pred_check_branch
          %349 = sbr.rel (%p347) target = $region52
        $region51: #{tpu_custom_call.1} parent=47 // pred_region
          %p350 = scmp.lt.s32.totalorder %s21, 1
          %s351 = scalar_select %p350, %s21, 1
          %s352 = smul.addr %s351, 16
          %s353 = smul.addr %s352, 8
          %s354 = scalar_lea.vmem %s0, %s353
        $region52: #{tpu_custom_call.1} parent=47 // pred_fallthru
          _
        // Predicated region
        $region53: #{tpu_custom_call.1} parent=47 // pred_check
          %p355 = pneg %p67
        $region54: #{tpu_custom_call.1} parent=47 // pred_check_branch
          %357 = sbr.rel (%p355) target = $region56
        $region55: #{tpu_custom_call.1} parent=47 // pred_region
          %p358 = scmp.lt.s32.totalorder %s21, 1
          %s359 = scalar_select %p358, %s21, 1
          %s360 = smul.addr %s359, 16
          %s361 = smul.addr %s360, 8
          %s362 = scalar_lea.vmem %s1, %s361
        $region56: #{tpu_custom_call.1} parent=47 // pred_fallthru
          _
        // Predicated region
        $region57: #{tpu_custom_call.1} parent=47 // pred_check
          %p363 = pneg %p93
        $region58: #{tpu_custom_call.1} parent=47 // pred_check_branch
          %365 = sbr.rel (%p363) target = $region60
        $region59: #{tpu_custom_call.1} parent=47 // pred_region
          %p366 = scmp.lt.s32.totalorder %s21, 1
          %s367 = scalar_select %p366, %s21, 1
          %s368 = scalar_lea.vmem %s2, %s367
        $region60: #{tpu_custom_call.1} parent=47 // pred_fallthru
          _
      $region48: #{tpu_custom_call.1} parent=5 // pred_fallthru
        _
      %p369 = scmp.le.s32.totalorder 1, %s21
      %p370 = scmp.lt.s32.totalorder %s21, 3
      %p371 = pnand %p369, %p370
      %p372 = pneg %p371
      // Predicated region
      $region61: #{tpu_custom_call.1} parent=5 // pred_check
        _
      $region62: #{tpu_custom_call.1} parent=5 // pred_check_branch
        %374 = sbr.rel (%p371) target = $region64
      $region63: #{tpu_custom_call.1} parent=5 // pred_region
        %s375 = ssub.s32 %s21, 1
        // Predicated region
        $region65: #{tpu_custom_call.1} parent=63 // pred_check
          %p376 = pneg %p162
        $region66: #{tpu_custom_call.1} parent=63 // pred_check_branch
          %378 = sbr.rel (%p376) target = $region68
        $region67: #{tpu_custom_call.1} parent=63 // pred_region
          %380 = dma.done [#allocation3], 18432
        $region68: #{tpu_custom_call.1} parent=63 // pred_fallthru
          _
        %p381 = scmp.lt.s32.totalorder %s26, 1
        %s382 = scalar_select %p381, %s26, 1
        %s383 = smul.addr %s382, 16
        %s384 = smul.addr %s383, 8
        %s385 = scalar_lea.vmem %s0, %s384
        %p386 = pneg %p47
        %p387 = pneg %p44
        %p388 = scmp.lt.s32.totalorder %s26, 1
        %s389 = scalar_select %p388, %s26, 1
        %s390 = smul.addr %s389, 16
        %s391 = smul.addr %s390, 8
        %s392 = scalar_lea.vmem %s1, %s391
        %p393 = pneg %p73
        %p394 = pneg %p70
        %p395 = scmp.lt.s32.totalorder %s26, 1
        %s396 = scalar_select %p395, %s26, 1
        %s397 = scalar_lea.vmem %s2, %s396
        %p398 = pneg %p99
        %p399 = pneg %p96
        %p400 = pneg %p120
        %p401 = pneg %p117
        %p402 = pneg %p141
        %p403 = pneg %p138
        %p404 = pneg %p162
        %p405 = pneg %p159
        %p406 = pneg %p183
        %p407 = pneg %p180
        %p408 = pneg %p204
        %p409 = pneg %p201
        %p410 = pneg %p225
        %p411 = pneg %p222
        %p412 = pneg %p246
        %p413 = pneg %p243
        %p414 = pneg %p267
        %p415 = pneg %p264
        %p416 = pneg %p293
        %p417 = pneg %p290
        %s418 = sand.u32 %s280, 1
        %s419 = scalar_lea.sflag [#allocation4], %s418
        %s420 = sand.u32 %s280, 1
        %s421 = smul.addr %s420, 8
        %s422 = scalar_lea.vmem [#allocation5], %s421
        %p423 = scmp.lt.s32.totalorder %s26, 1
        %s424 = scalar_select %p423, %s26, 1
        %s425 = smul.addr %s424, 16
        %s426 = smul.addr %s425, 8
        %s427 = scalar_lea.vmem %s0, %s426
        %p428 = scmp.lt.s32.totalorder %s26, 1
        %s429 = scalar_select %p428, %s26, 1
        %s430 = smul.addr %s429, 16
        %s431 = smul.addr %s430, 8
        %s432 = scalar_lea.vmem %s1, %s431
        %p433 = scmp.lt.s32.totalorder %s26, 1
        %s434 = scalar_select %p433, %s26, 1
        %s435 = scalar_lea.vmem %s2, %s434
        %v436 = vld [vmem:[%s432] sm:$0xff]
        %v437 = vld [vmem:[%s432 + $0x8] sm:$0xff]
        %v438 = vld [vmem:[%s432 + $0x10] sm:$0xff]
        %v439 = vld [vmem:[%s432 + $0x18] sm:$0xff]
        %v440 = vld [vmem:[%s432 + $0x20] sm:$0xff]
        %v441 = vld [vmem:[%s432 + $0x28] sm:$0xff]
        %v442 = vld [vmem:[%s432 + $0x30] sm:$0xff]
        %v443 = vld [vmem:[%s432 + $0x38] sm:$0xff]
        %v444 = vld [vmem:[%s432 + $0x40] sm:$0xff]
        %v445 = vld [vmem:[%s432 + $0x48] sm:$0xff]
        %v446 = vld [vmem:[%s432 + $0x50] sm:$0xff]
        %v447 = vld [vmem:[%s432 + $0x58] sm:$0xff]
        %v448 = vld [vmem:[%s432 + $0x60] sm:$0xff]
        %v449 = vld [vmem:[%s432 + $0x68] sm:$0xff]
        %v450 = vld [vmem:[%s432 + $0x70] sm:$0xff]
        %v451 = vld [vmem:[%s432 + $0x78] sm:$0xff]
        %v452 = vld [vmem:[%s435] sm:$0x1]
        %v453 = vld [vmem:[%s427] sm:$0xff]
        %v454 = vld [vmem:[%s427 + $0x8] sm:$0xff]
        %v455 = vld [vmem:[%s427 + $0x10] sm:$0xff]
        %v456 = vld [vmem:[%s427 + $0x18] sm:$0xff]
        %v457 = vld [vmem:[%s427 + $0x20] sm:$0xff]
        %v458 = vld [vmem:[%s427 + $0x28] sm:$0xff]
        %v459 = vld [vmem:[%s427 + $0x30] sm:$0xff]
        %v460 = vld [vmem:[%s427 + $0x38] sm:$0xff]
        %v461 = vld [vmem:[%s427 + $0x40] sm:$0xff]
        %v462 = vld [vmem:[%s427 + $0x48] sm:$0xff]
        %v463 = vld [vmem:[%s427 + $0x50] sm:$0xff]
        %v464 = vld [vmem:[%s427 + $0x58] sm:$0xff]
        %v465 = vld [vmem:[%s427 + $0x60] sm:$0xff]
        %v466 = vld [vmem:[%s427 + $0x68] sm:$0xff]
        %v467 = vld [vmem:[%s427 + $0x70] sm:$0xff]
        %v468 = vld [vmem:[%s427 + $0x78] sm:$0xff]
        %v469 = vld [vmem:[%s3] sm:$0xff]
        %v470 = vld [vmem:[%s4] sm:$0x1]
        %v472 = vperm.slane %v470, 0
        %vm474 = vcmask 64512
        %v476 = vsel %vm474, %v453, 0
        %v479 = vsel %vm474, %v454, 0
        %v482 = vsel %vm474, %v455, 0
        %v485 = vsel %vm474, %v456, 0
        %v488 = vsel %vm474, %v457, 0
        %v491 = vsel %vm474, %v458, 0
        %v494 = vsel %vm474, %v459, 0
        %v497 = vsel %vm474, %v460, 0
        %v500 = vsel %vm474, %v461, 0
        %v503 = vsel %vm474, %v462, 0
        %v506 = vsel %vm474, %v463, 0
        %v509 = vsel %vm474, %v464, 0
        %v512 = vsel %vm474, %v465, 0
        %v515 = vsel %vm474, %v466, 0
        %v518 = vsel %vm474, %v467, 0
        %v521 = vsel %vm474, %v468, 0
        %523 = vmatpush.msra.mxu0 0.0
        %524 = vmatpush.msra.mxu0 0.0
        %525 = vmatpush.msra.mxu0 0.0
        %526 = vmatpush.msra.mxu0 0.0
        %527 = vmatpush.msra.mxu0 0.0
        %528 = vmatpush.msra.mxu0 0.0
        %529 = vmatpush.msra.mxu0 0.0
        %530 = vmatpush.msra.mxu0 0.0
        %531 = vmatpush.msra.mxu0 0.0
        %532 = vmatpush.msra.mxu0 0.0
        %533 = vmatpush.msra.mxu0 0.0
        %534 = vmatpush.msra.mxu0 0.0
        %535 = vmatpush.msra.mxu0 0.0
        %536 = vmatpush.msra.mxu0 0.0
        %537 = vmatpush.msra.mxu0 0.0
        %538 = vmatpush.msra.mxu0 %v469
        %539 = vmatmul.f32.gmra.mxu0 %v476
        %v540 = vpop.f32.mrf.mxu0
        %v541 = vadd.f32 %v472, %v540
        %542 = vmatmul.f32.gmra.mxu0 %v479
        %v543 = vpop.f32.mrf.mxu0
        %v544 = vadd.f32 %v472, %v543
        %545 = vmatmul.f32.gmra.mxu0 %v482
        %v546 = vpop.f32.mrf.mxu0
        %v547 = vadd.f32 %v472, %v546
        %548 = vmatmul.f32.gmra.mxu0 %v485
        %v549 = vpop.f32.mrf.mxu0
        %v550 = vadd.f32 %v472, %v549
        %551 = vmatmul.f32.gmra.mxu0 %v488
        %v552 = vpop.f32.mrf.mxu0
        %v553 = vadd.f32 %v472, %v552
        %554 = vmatmul.f32.gmra.mxu0 %v491
        %v555 = vpop.f32.mrf.mxu0
        %v556 = vadd.f32 %v472, %v555
        %557 = vmatmul.f32.gmra.mxu0 %v494
        %v558 = vpop.f32.mrf.mxu0
        %v559 = vadd.f32 %v472, %v558
        %560 = vmatmul.f32.gmra.mxu0 %v497
        %v561 = vpop.f32.mrf.mxu0
        %v562 = vadd.f32 %v472, %v561
        %563 = vmatmul.f32.gmra.mxu0 %v500
        %v564 = vpop.f32.mrf.mxu0
        %v565 = vadd.f32 %v472, %v564
        %566 = vmatmul.f32.gmra.mxu0 %v503
        %v567 = vpop.f32.mrf.mxu0
        %v568 = vadd.f32 %v472, %v567
        %569 = vmatmul.f32.gmra.mxu0 %v506
        %v570 = vpop.f32.mrf.mxu0
        %v571 = vadd.f32 %v472, %v570
        %572 = vmatmul.f32.gmra.mxu0 %v509
        %v573 = vpop.f32.mrf.mxu0
        %v574 = vadd.f32 %v472, %v573
        %575 = vmatmul.f32.gmra.mxu0 %v512
        %v576 = vpop.f32.mrf.mxu0
        %v577 = vadd.f32 %v472, %v576
        %578 = vmatmul.f32.gmra.mxu0 %v515
        %v579 = vpop.f32.mrf.mxu0
        %v580 = vadd.f32 %v472, %v579
        %581 = vmatmul.f32.gmra.mxu0 %v518
        %v582 = vpop.f32.mrf.mxu0
        %v583 = vadd.f32 %v472, %v582
        %584 = vmatmul.f32.gmra.mxu0 %v521
        %v585 = vpop.f32.mrf.mxu0
        %v586 = vadd.f32 %v472, %v585
        %587 = vdwg.mxu0
        %v588 = vlaneseq
        %v589 = vshrl.u32 %v588, 7
        %v590 = vadd.s32 %v589, 8
        %v591 = vadd.s32 %v589, 16
        %v592 = vadd.s32 %v589, 24
        %v593 = vadd.s32 %v589, 32
        %v594 = vadd.s32 %v589, 40
        %v595 = vadd.s32 %v589, 48
        %v596 = vadd.s32 %v589, 56
        %v597 = vadd.s32 %v589, 64
        %v598 = vadd.s32 %v589, 72
        %v599 = vadd.s32 %v589, 80
        %v600 = vadd.s32 %v589, 88
        %v601 = vadd.s32 %v589, 96
        %v602 = vadd.s32 %v589, 104
        %v603 = vadd.s32 %v589, 112
        %v604 = vadd.s32 %v589, 120
        %v605 = vld [vmem:[%s6] sm:$0x7]
        %v606 = vld [vmem:[#allocation2] sm:$0xff]
        %v607 = vld [vmem:[#allocation2 + $0x8] sm:$0xff]
        %v608 = vld [vmem:[#allocation2 + $0x10] sm:$0xff]
        %v609 = vld [vmem:[#allocation2 + $0x18] sm:$0xff]
        %v610 = vld [vmem:[#allocation2 + $0x20] sm:$0xff]
        %v611 = vld [vmem:[#allocation2 + $0x28] sm:$0xff]
        %v612 = vld [vmem:[#allocation2 + $0x30] sm:$0xff]
        %v613 = vld [vmem:[#allocation2 + $0x38] sm:$0xff]
        %v614 = vld [vmem:[#allocation2 + $0x40] sm:$0xff]
        %v615 = vld [vmem:[#allocation2 + $0x48] sm:$0xff]
        %v616 = vld [vmem:[#allocation2 + $0x50] sm:$0xff]
        %v617 = vld [vmem:[#allocation2 + $0x58] sm:$0xff]
        %v618 = vld [vmem:[#allocation2 + $0x60] sm:$0xff]
        %v619 = vld [vmem:[#allocation2 + $0x68] sm:$0xff]
        %v620 = vld [vmem:[#allocation2 + $0x70] sm:$0xff]
        %v621 = vld [vmem:[#allocation2 + $0x78] sm:$0xff]
        %v622 = vld [vmem:[#allocation2 + $0x80] sm:$0xff]
        %v623 = vld [vmem:[#allocation2 + $0x88] sm:$0xff]
        %v624 = vld [vmem:[#allocation2 + $0x90] sm:$0xff]
        %v625 = vld [vmem:[#allocation2 + $0x98] sm:$0xff]
        %v626 = vld [vmem:[#allocation2 + $0xa0] sm:$0xff]
        %v627 = vld [vmem:[#allocation2 + $0xa8] sm:$0xff]
        %v628 = vld [vmem:[#allocation2 + $0xb0] sm:$0xff]
        %v629 = vld [vmem:[#allocation2 + $0xb8] sm:$0xff]
        %v630 = vld [vmem:[#allocation2 + $0xc0] sm:$0xff]
        %v631 = vld [vmem:[#allocation2 + $0xc8] sm:$0xff]
        %v632 = vld [vmem:[#allocation2 + $0xd0] sm:$0xff]
        %v633 = vld [vmem:[#allocation2 + $0xd8] sm:$0xff]
        %v634 = vld [vmem:[#allocation2 + $0xe0] sm:$0xff]
        %v635 = vld [vmem:[#allocation2 + $0xe8] sm:$0xff]
        %v636 = vld [vmem:[#allocation2 + $0xf0] sm:$0xff]
        %v637 = vld [vmem:[#allocation2 + $0xf8] sm:$0xff]
        %v638 = vld [vmem:[#allocation2 + $0x100] sm:$0xff]
        %v639 = vld [vmem:[#allocation2 + $0x108] sm:$0xff]
        %v640 = vld [vmem:[#allocation2 + $0x110] sm:$0xff]
        %v641 = vld [vmem:[#allocation2 + $0x118] sm:$0xff]
        %v642 = vld [vmem:[#allocation2 + $0x120] sm:$0xff]
        %v643 = vld [vmem:[#allocation2 + $0x128] sm:$0xff]
        %v644 = vld [vmem:[#allocation2 + $0x130] sm:$0xff]
        %v645 = vld [vmem:[#allocation2 + $0x138] sm:$0xff]
        %v646 = vld [vmem:[#allocation2 + $0x140] sm:$0xff]
        %v647 = vld [vmem:[#allocation2 + $0x148] sm:$0xff]
        %v648 = vld [vmem:[#allocation2 + $0x150] sm:$0xff]
        %v649 = vld [vmem:[#allocation2 + $0x158] sm:$0xff]
        %v650 = vld [vmem:[#allocation2 + $0x160] sm:$0xff]
        %v651 = vld [vmem:[#allocation2 + $0x168] sm:$0xff]
        %v652 = vld [vmem:[#allocation2 + $0x170] sm:$0xff]
        %v653 = vld [vmem:[#allocation2 + $0x178] sm:$0xff]
        %654 = vmatpush.msra.mxu0 %v651
        %655 = vmatpush.msra.mxu0 %v648
        %656 = vmatpush.msra.mxu0 %v645
        %657 = vmatpush.msra.mxu0 %v642
        %658 = vmatpush.msra.mxu0 %v639
        %659 = vmatpush.msra.mxu0 %v636
        %660 = vmatpush.msra.mxu0 %v633
        %661 = vmatpush.msra.mxu0 %v630
        %662 = vmatpush.msra.mxu0 %v627
        %663 = vmatpush.msra.mxu0 %v624
        %664 = vmatpush.msra.mxu0 %v621
        %665 = vmatpush.msra.mxu0 %v618
        %666 = vmatpush.msra.mxu0 %v615
        %667 = vmatpush.msra.mxu0 %v612
        %668 = vmatpush.msra.mxu0 %v609
        %669 = vmatpush.msra.mxu0 %v606
        %670 = vmatmul.f32.gmra.mxu0 %v541
        %v671 = vpop.f32.mrf.mxu0
        %v672 = vadd.f32 0.0, %v671
        %673 = vmatmul.f32.gmra.mxu0 %v544
        %v674 = vpop.f32.mrf.mxu0
        %v675 = vadd.f32 0.0, %v674
        %676 = vmatmul.f32.gmra.mxu0 %v547
        %v677 = vpop.f32.mrf.mxu0
        %v678 = vadd.f32 0.0, %v677
        %679 = vmatmul.f32.gmra.mxu0 %v550
        %v680 = vpop.f32.mrf.mxu0
        %v681 = vadd.f32 0.0, %v680
        %682 = vmatmul.f32.gmra.mxu0 %v553
        %v683 = vpop.f32.mrf.mxu0
        %v684 = vadd.f32 0.0, %v683
        %685 = vmatmul.f32.gmra.mxu0 %v556
        %v686 = vpop.f32.mrf.mxu0
        %v687 = vadd.f32 0.0, %v686
        %688 = vmatmul.f32.gmra.mxu0 %v559
        %v689 = vpop.f32.mrf.mxu0
        %v690 = vadd.f32 0.0, %v689
        %691 = vmatmul.f32.gmra.mxu0 %v562
        %v692 = vpop.f32.mrf.mxu0
        %v693 = vadd.f32 0.0, %v692
        %694 = vmatmul.f32.gmra.mxu0 %v565
        %v695 = vpop.f32.mrf.mxu0
        %v696 = vadd.f32 0.0, %v695
        %697 = vmatmul.f32.gmra.mxu0 %v568
        %v698 = vpop.f32.mrf.mxu0
        %v699 = vadd.f32 0.0, %v698
        %700 = vmatmul.f32.gmra.mxu0 %v571
        %v701 = vpop.f32.mrf.mxu0
        %v702 = vadd.f32 0.0, %v701
        %703 = vmatmul.f32.gmra.mxu0 %v574
        %v704 = vpop.f32.mrf.mxu0
        %v705 = vadd.f32 0.0, %v704
        %706 = vmatmul.f32.gmra.mxu0 %v577
        %v707 = vpop.f32.mrf.mxu0
        %v708 = vadd.f32 0.0, %v707
        %709 = vmatmul.f32.gmra.mxu0 %v580
        %v710 = vpop.f32.mrf.mxu0
        %v711 = vadd.f32 0.0, %v710
        %712 = vmatmul.f32.gmra.mxu0 %v583
        %v713 = vpop.f32.mrf.mxu0
        %v714 = vadd.f32 0.0, %v713
        %715 = vmatmul.f32.gmra.mxu0 %v586
        %v716 = vpop.f32.mrf.mxu0
        %v717 = vadd.f32 0.0, %v716
        %718 = vdwg.mxu0
        %719 = vmatpush.msra.mxu0 %v652
        %720 = vmatpush.msra.mxu0 %v649
        %721 = vmatpush.msra.mxu0 %v646
        %722 = vmatpush.msra.mxu0 %v643
        %723 = vmatpush.msra.mxu0 %v640
        %724 = vmatpush.msra.mxu0 %v637
        %725 = vmatpush.msra.mxu0 %v634
        %726 = vmatpush.msra.mxu0 %v631
        %727 = vmatpush.msra.mxu0 %v628
        %728 = vmatpush.msra.mxu0 %v625
        %729 = vmatpush.msra.mxu0 %v622
        %730 = vmatpush.msra.mxu0 %v619
        %731 = vmatpush.msra.mxu0 %v616
        %732 = vmatpush.msra.mxu0 %v613
        %733 = vmatpush.msra.mxu0 %v610
        %734 = vmatpush.msra.mxu0 %v607
        %735 = vmatmul.f32.gmra.mxu0 %v541
        %v736 = vpop.f32.mrf.mxu0
        %v737 = vadd.f32 0.0, %v736
        %738 = vmatmul.f32.gmra.mxu0 %v544
        %v739 = vpop.f32.mrf.mxu0
        %v740 = vadd.f32 0.0, %v739
        %741 = vmatmul.f32.gmra.mxu0 %v547
        %v742 = vpop.f32.mrf.mxu0
        %v743 = vadd.f32 0.0, %v742
        %744 = vmatmul.f32.gmra.mxu0 %v550
        %v745 = vpop.f32.mrf.mxu0
        %v746 = vadd.f32 0.0, %v745
        %747 = vmatmul.f32.gmra.mxu0 %v553
        %v748 = vpop.f32.mrf.mxu0
        %v749 = vadd.f32 0.0, %v748
        %750 = vmatmul.f32.gmra.mxu0 %v556
        %v751 = vpop.f32.mrf.mxu0
        %v752 = vadd.f32 0.0, %v751
        %753 = vmatmul.f32.gmra.mxu0 %v559
        %v754 = vpop.f32.mrf.mxu0
        %v755 = vadd.f32 0.0, %v754
        %756 = vmatmul.f32.gmra.mxu0 %v562
        %v757 = vpop.f32.mrf.mxu0
        %v758 = vadd.f32 0.0, %v757
        %759 = vmatmul.f32.gmra.mxu0 %v565
        %v760 = vpop.f32.mrf.mxu0
        %v761 = vadd.f32 0.0, %v760
        %762 = vmatmul.f32.gmra.mxu0 %v568
        %v763 = vpop.f32.mrf.mxu0
        %v764 = vadd.f32 0.0, %v763
        %765 = vmatmul.f32.gmra.mxu0 %v571
        %v766 = vpop.f32.mrf.mxu0
        %v767 = vadd.f32 0.0, %v766
        %768 = vmatmul.f32.gmra.mxu0 %v574
        %v769 = vpop.f32.mrf.mxu0
        %v770 = vadd.f32 0.0, %v769
        %771 = vmatmul.f32.gmra.mxu0 %v577
        %v772 = vpop.f32.mrf.mxu0
        %v773 = vadd.f32 0.0, %v772
        %774 = vmatmul.f32.gmra.mxu0 %v580
        %v775 = vpop.f32.mrf.mxu0
        %v776 = vadd.f32 0.0, %v775
        %777 = vmatmul.f32.gmra.mxu0 %v583
        %v778 = vpop.f32.mrf.mxu0
        %v779 = vadd.f32 0.0, %v778
        %780 = vmatmul.f32.gmra.mxu0 %v586
        %v781 = vpop.f32.mrf.mxu0
        %v782 = vadd.f32 0.0, %v781
        %783 = vdwg.mxu0
        %784 = vmatpush.msra.mxu0 %v653
        %785 = vmatpush.msra.mxu0 %v650
        %786 = vmatpush.msra.mxu0 %v647
        %787 = vmatpush.msra.mxu0 %v644
        %788 = vmatpush.msra.mxu0 %v641
        %789 = vmatpush.msra.mxu0 %v638
        %790 = vmatpush.msra.mxu0 %v635
        %791 = vmatpush.msra.mxu0 %v632
        %792 = vmatpush.msra.mxu0 %v629
        %793 = vmatpush.msra.mxu0 %v626
        %794 = vmatpush.msra.mxu0 %v623
        %795 = vmatpush.msra.mxu0 %v620
        %796 = vmatpush.msra.mxu0 %v617
        %797 = vmatpush.msra.mxu0 %v614
        %798 = vmatpush.msra.mxu0 %v611
        %799 = vmatpush.msra.mxu0 %v608
        %800 = vmatmul.f32.gmra.mxu0 %v541
        %v801 = vpop.f32.mrf.mxu0
        %v802 = vadd.f32 0.0, %v801
        %803 = vmatmul.f32.gmra.mxu0 %v544
        %v804 = vpop.f32.mrf.mxu0
        %v805 = vadd.f32 0.0, %v804
        %806 = vmatmul.f32.gmra.mxu0 %v547
        %v807 = vpop.f32.mrf.mxu0
        %v808 = vadd.f32 0.0, %v807
        %809 = vmatmul.f32.gmra.mxu0 %v550
        %v810 = vpop.f32.mrf.mxu0
        %v811 = vadd.f32 0.0, %v810
        %812 = vmatmul.f32.gmra.mxu0 %v553
        %v813 = vpop.f32.mrf.mxu0
        %v814 = vadd.f32 0.0, %v813
        %815 = vmatmul.f32.gmra.mxu0 %v556
        %v816 = vpop.f32.mrf.mxu0
        %v817 = vadd.f32 0.0, %v816
        %818 = vmatmul.f32.gmra.mxu0 %v559
        %v819 = vpop.f32.mrf.mxu0
        %v820 = vadd.f32 0.0, %v819
        %821 = vmatmul.f32.gmra.mxu0 %v562
        %v822 = vpop.f32.mrf.mxu0
        %v823 = vadd.f32 0.0, %v822
        %824 = vmatmul.f32.gmra.mxu0 %v565
        %v825 = vpop.f32.mrf.mxu0
        %v826 = vadd.f32 0.0, %v825
        %827 = vmatmul.f32.gmra.mxu0 %v568
        %v828 = vpop.f32.mrf.mxu0
        %v829 = vadd.f32 0.0, %v828
        %830 = vmatmul.f32.gmra.mxu0 %v571
        %v831 = vpop.f32.mrf.mxu0
        %v832 = vadd.f32 0.0, %v831
        %833 = vmatmul.f32.gmra.mxu0 %v574
        %v834 = vpop.f32.mrf.mxu0
        %v835 = vadd.f32 0.0, %v834
        %836 = vmatmul.f32.gmra.mxu0 %v577
        %v837 = vpop.f32.mrf.mxu0
        %v838 = vadd.f32 0.0, %v837
        %839 = vmatmul.f32.gmra.mxu0 %v580
        %v840 = vpop.f32.mrf.mxu0
        %v841 = vadd.f32 0.0, %v840
        %842 = vmatmul.f32.gmra.mxu0 %v583
        %v843 = vpop.f32.mrf.mxu0
        %v844 = vadd.f32 0.0, %v843
        %845 = vmatmul.f32.gmra.mxu0 %v586
        %v846 = vpop.f32.mrf.mxu0
        %v847 = vadd.f32 0.0, %v846
        %848 = vdwg.mxu0
        %vm849 = vcmp.ge.s32.totalorder %v589, 1
        %vm850 = vcmp.ge.s32.totalorder %v590, 1
        %vm851 = vcmp.ge.s32.totalorder %v591, 1
        %vm852 = vcmp.ge.s32.totalorder %v592, 1
        %vm853 = vcmp.ge.s32.totalorder %v593, 1
        %vm854 = vcmp.ge.s32.totalorder %v594, 1
        %vm855 = vcmp.ge.s32.totalorder %v595, 1
        %vm856 = vcmp.ge.s32.totalorder %v596, 1
        %vm857 = vcmp.ge.s32.totalorder %v597, 1
        %vm858 = vcmp.ge.s32.totalorder %v598, 1
        %vm859 = vcmp.ge.s32.totalorder %v599, 1
        %vm860 = vcmp.ge.s32.totalorder %v600, 1
        %vm861 = vcmp.ge.s32.totalorder %v601, 1
        %vm862 = vcmp.ge.s32.totalorder %v602, 1
        %vm863 = vcmp.ge.s32.totalorder %v603, 1
        %vm864 = vcmp.ge.s32.totalorder %v604, 1
        %v865 = vsel %vm849, 1, 0
        %v866 = vsel %vm850, 1, 0
        %v867 = vsel %vm851, 1, 0
        %v868 = vsel %vm852, 1, 0
        %v869 = vsel %vm853, 1, 0
        %v870 = vsel %vm854, 1, 0
        %v871 = vsel %vm855, 1, 0
        %v872 = vsel %vm856, 1, 0
        %v873 = vsel %vm857, 1, 0
        %v874 = vsel %vm858, 1, 0
        %v875 = vsel %vm859, 1, 0
        %v876 = vsel %vm860, 1, 0
        %v877 = vsel %vm861, 1, 0
        %v878 = vsel %vm862, 1, 0
        %v879 = vsel %vm863, 1, 0
        %v880 = vsel %vm864, 1, 0
        %v881 = vcvt.s32.f32 %v865
        %v882 = vcvt.s32.f32 %v866
        %v883 = vcvt.s32.f32 %v867
        %v884 = vcvt.s32.f32 %v868
        %v885 = vcvt.s32.f32 %v869
        %v886 = vcvt.s32.f32 %v870
        %v887 = vcvt.s32.f32 %v871
        %v888 = vcvt.s32.f32 %v872
        %v889 = vcvt.s32.f32 %v873
        %v890 = vcvt.s32.f32 %v874
        %v891 = vcvt.s32.f32 %v875
        %v892 = vcvt.s32.f32 %v876
        %v893 = vcvt.s32.f32 %v877
        %v894 = vcvt.s32.f32 %v878
        %v895 = vcvt.s32.f32 %v879
        %v896 = vcvt.s32.f32 %v880
        %vm897 = vcmp.lt.s32.totalorder %v589, 15
        %vm898 = vcmp.lt.s32.totalorder %v590, 15
        %vm899 = vcmp.lt.s32.totalorder %v591, 15
        %vm900 = vcmp.lt.s32.totalorder %v592, 15
        %vm901 = vcmp.lt.s32.totalorder %v593, 15
        %vm902 = vcmp.lt.s32.totalorder %v594, 15
        %vm903 = vcmp.lt.s32.totalorder %v595, 15
        %vm904 = vcmp.lt.s32.totalorder %v596, 15
        %vm905 = vcmp.lt.s32.totalorder %v597, 15
        %vm906 = vcmp.lt.s32.totalorder %v598, 15
        %vm907 = vcmp.lt.s32.totalorder %v599, 15
        %vm908 = vcmp.lt.s32.totalorder %v600, 15
        %vm909 = vcmp.lt.s32.totalorder %v601, 15
        %vm910 = vcmp.lt.s32.totalorder %v602, 15
        %vm911 = vcmp.lt.s32.totalorder %v603, 15
        %vm912 = vcmp.lt.s32.totalorder %v604, 15
        %v913 = vsel %vm897, 1, 0
        %v914 = vsel %vm898, 1, 0
        %v915 = vsel %vm899, 1, 0
        %v916 = vsel %vm900, 1, 0
        %v917 = vsel %vm901, 1, 0
        %v918 = vsel %vm902, 1, 0
        %v919 = vsel %vm903, 1, 0
        %v920 = vsel %vm904, 1, 0
        %v921 = vsel %vm905, 1, 0
        %v922 = vsel %vm906, 1, 0
        %v923 = vsel %vm907, 1, 0
        %v924 = vsel %vm908, 1, 0
        %v925 = vsel %vm909, 1, 0
        %v926 = vsel %vm910, 1, 0
        %v927 = vsel %vm911, 1, 0
        %v928 = vsel %vm912, 1, 0
        %v929 = vcvt.s32.f32 %v913
        %v930 = vcvt.s32.f32 %v914
        %v931 = vcvt.s32.f32 %v915
        %v932 = vcvt.s32.f32 %v916
        %v933 = vcvt.s32.f32 %v917
        %v934 = vcvt.s32.f32 %v918
        %v935 = vcvt.s32.f32 %v919
        %v936 = vcvt.s32.f32 %v920
        %v937 = vcvt.s32.f32 %v921
        %v938 = vcvt.s32.f32 %v922
        %v939 = vcvt.s32.f32 %v923
        %v940 = vcvt.s32.f32 %v924
        %v941 = vcvt.s32.f32 %v925
        %v942 = vcvt.s32.f32 %v926
        %v943 = vcvt.s32.f32 %v927
        %v944 = vcvt.s32.f32 %v928
        %v945 = vrot.slane %v737, 7
        %v946 = vrot.slane %v740, 7
        %v947 = vrot.slane %v743, 7
        %v948 = vrot.slane %v746, 7
        %v949 = vrot.slane %v749, 7
        %v950 = vrot.slane %v752, 7
        %v951 = vrot.slane %v755, 7
        %v952 = vrot.slane %v758, 7
        %v953 = vrot.slane %v761, 7
        %v954 = vrot.slane %v764, 7
        %v955 = vrot.slane %v767, 7
        %v956 = vrot.slane %v770, 7
        %v957 = vrot.slane %v773, 7
        %v958 = vrot.slane %v776, 7
        %v959 = vrot.slane %v779, 7
        %v960 = vrot.slane %v782, 7
        %vm961 = vcmp.lt.s32.totalorder %v589, 1
        %v962 = vsel %vm961, %v959, %v960
        %v963 = vsel %vm961, %v958, %v959
        %v964 = vsel %vm961, %v957, %v958
        %v965 = vsel %vm961, %v956, %v957
        %v966 = vsel %vm961, %v955, %v956
        %v967 = vsel %vm961, %v954, %v955
        %v968 = vsel %vm961, %v953, %v954
        %v969 = vsel %vm961, %v952, %v953
        %v970 = vsel %vm961, %v951, %v952
        %v971 = vsel %vm961, %v950, %v951
        %v972 = vsel %vm961, %v949, %v950
        %v973 = vsel %vm961, %v948, %v949
        %v974 = vsel %vm961, %v947, %v948
        %v975 = vsel %vm961, %v946, %v947
        %v976 = vsel %vm961, %v945, %v946
        %v977 = vsel %vm961, %v960, %v945
        %v978 = vmul.f32 %v977, %v881
        %v979 = vmul.f32 %v976, %v882
        %v980 = vmul.f32 %v975, %v883
        %v981 = vmul.f32 %v974, %v884
        %v982 = vmul.f32 %v973, %v885
        %v983 = vmul.f32 %v972, %v886
        %v984 = vmul.f32 %v971, %v887
        %v985 = vmul.f32 %v970, %v888
        %v986 = vmul.f32 %v969, %v889
        %v987 = vmul.f32 %v968, %v890
        %v988 = vmul.f32 %v967, %v891
        %v989 = vmul.f32 %v966, %v892
        %v990 = vmul.f32 %v965, %v893
        %v991 = vmul.f32 %v964, %v894
        %v992 = vmul.f32 %v963, %v895
        %v993 = vmul.f32 %v962, %v896
        %v994 = vrot.slane %v737, 1
        %v995 = vrot.slane %v740, 1
        %v996 = vrot.slane %v743, 1
        %v997 = vrot.slane %v746, 1
        %v998 = vrot.slane %v749, 1
        %v999 = vrot.slane %v752, 1
        %v1000 = vrot.slane %v755, 1
        %v1001 = vrot.slane %v758, 1
        %v1002 = vrot.slane %v761, 1
        %v1003 = vrot.slane %v764, 1
        %v1004 = vrot.slane %v767, 1
        %v1005 = vrot.slane %v770, 1
        %v1006 = vrot.slane %v773, 1
        %v1007 = vrot.slane %v776, 1
        %v1008 = vrot.slane %v779, 1
        %v1009 = vrot.slane %v782, 1
        %vm1010 = vcmp.lt.s32.totalorder %v589, 7
        %v1011 = vsel %vm1010, %v1008, %v1009
        %v1012 = vsel %vm1010, %v1007, %v1008
        %v1013 = vsel %vm1010, %v1006, %v1007
        %v1014 = vsel %vm1010, %v1005, %v1006
        %v1015 = vsel %vm1010, %v1004, %v1005
        %v1016 = vsel %vm1010, %v1003, %v1004
        %v1017 = vsel %vm1010, %v1002, %v1003
        %v1018 = vsel %vm1010, %v1001, %v1002
        %v1019 = vsel %vm1010, %v1000, %v1001
        %v1020 = vsel %vm1010, %v999, %v1000
        %v1021 = vsel %vm1010, %v998, %v999
        %v1022 = vsel %vm1010, %v997, %v998
        %v1023 = vsel %vm1010, %v996, %v997
        %v1024 = vsel %vm1010, %v995, %v996
        %v1025 = vsel %vm1010, %v994, %v995
        %v1026 = vsel %vm1010, %v1009, %v994
        %v1027 = vmul.f32 %v1025, %v929
        %v1028 = vmul.f32 %v1024, %v930
        %v1029 = vmul.f32 %v1023, %v931
        %v1030 = vmul.f32 %v1022, %v932
        %v1031 = vmul.f32 %v1021, %v933
        %v1032 = vmul.f32 %v1020, %v934
        %v1033 = vmul.f32 %v1019, %v935
        %v1034 = vmul.f32 %v1018, %v936
        %v1035 = vmul.f32 %v1017, %v937
        %v1036 = vmul.f32 %v1016, %v938
        %v1037 = vmul.f32 %v1015, %v939
        %v1038 = vmul.f32 %v1014, %v940
        %v1039 = vmul.f32 %v1013, %v941
        %v1040 = vmul.f32 %v1012, %v942
        %v1041 = vmul.f32 %v1011, %v943
        %v1042 = vmul.f32 %v1026, %v944
        %v1043 = vrot.slane %v802, 7
        %v1044 = vrot.slane %v805, 7
        %v1045 = vrot.slane %v808, 7
        %v1046 = vrot.slane %v811, 7
        %v1047 = vrot.slane %v814, 7
        %v1048 = vrot.slane %v817, 7
        %v1049 = vrot.slane %v820, 7
        %v1050 = vrot.slane %v823, 7
        %v1051 = vrot.slane %v826, 7
        %v1052 = vrot.slane %v829, 7
        %v1053 = vrot.slane %v832, 7
        %v1054 = vrot.slane %v835, 7
        %v1055 = vrot.slane %v838, 7
        %v1056 = vrot.slane %v841, 7
        %v1057 = vrot.slane %v844, 7
        %v1058 = vrot.slane %v847, 7
        %v1059 = vsel %vm961, %v1057, %v1058
        %v1060 = vsel %vm961, %v1056, %v1057
        %v1061 = vsel %vm961, %v1055, %v1056
        %v1062 = vsel %vm961, %v1054, %v1055
        %v1063 = vsel %vm961, %v1053, %v1054
        %v1064 = vsel %vm961, %v1052, %v1053
        %v1065 = vsel %vm961, %v1051, %v1052
        %v1066 = vsel %vm961, %v1050, %v1051
        %v1067 = vsel %vm961, %v1049, %v1050
        %v1068 = vsel %vm961, %v1048, %v1049
        %v1069 = vsel %vm961, %v1047, %v1048
        %v1070 = vsel %vm961, %v1046, %v1047
        %v1071 = vsel %vm961, %v1045, %v1046
        %v1072 = vsel %vm961, %v1044, %v1045
        %v1073 = vsel %vm961, %v1043, %v1044
        %v1074 = vsel %vm961, %v1058, %v1043
        %v1075 = vmul.f32 %v1074, %v881
        %v1076 = vmul.f32 %v1073, %v882
        %v1077 = vmul.f32 %v1072, %v883
        %v1078 = vmul.f32 %v1071, %v884
        %v1079 = vmul.f32 %v1070, %v885
        %v1080 = vmul.f32 %v1069, %v886
        %v1081 = vmul.f32 %v1068, %v887
        %v1082 = vmul.f32 %v1067, %v888
        %v1083 = vmul.f32 %v1066, %v889
        %v1084 = vmul.f32 %v1065, %v890
        %v1085 = vmul.f32 %v1064, %v891
        %v1086 = vmul.f32 %v1063, %v892
        %v1087 = vmul.f32 %v1062, %v893
        %v1088 = vmul.f32 %v1061, %v894
        %v1089 = vmul.f32 %v1060, %v895
        %v1090 = vmul.f32 %v1059, %v896
        %v1091 = vperm.slane %v605, 0
        %v1092 = vadd.f32 %v1075, %v1091
        %v1093 = vadd.f32 %v1076, %v1091
        %v1094 = vadd.f32 %v1077, %v1091
        %v1095 = vadd.f32 %v1078, %v1091
        %v1096 = vadd.f32 %v1079, %v1091
        %v1097 = vadd.f32 %v1080, %v1091
        %v1098 = vadd.f32 %v1081, %v1091
        %v1099 = vadd.f32 %v1082, %v1091
        %v1100 = vadd.f32 %v1083, %v1091
        %v1101 = vadd.f32 %v1084, %v1091
        %v1102 = vadd.f32 %v1085, %v1091
        %v1103 = vadd.f32 %v1086, %v1091
        %v1104 = vadd.f32 %v1087, %v1091
        %v1105 = vadd.f32 %v1088, %v1091
        %v1106 = vadd.f32 %v1089, %v1091
        %v1107 = vadd.f32 %v1090, %v1091
        %v1108 = vperm.slane %v605, 1
        %v1109 = vadd.f32 %v802, %v1108
        %v1110 = vadd.f32 %v805, %v1108
        %v1111 = vadd.f32 %v808, %v1108
        %v1112 = vadd.f32 %v811, %v1108
        %v1113 = vadd.f32 %v814, %v1108
        %v1114 = vadd.f32 %v817, %v1108
        %v1115 = vadd.f32 %v820, %v1108
        %v1116 = vadd.f32 %v823, %v1108
        %v1117 = vadd.f32 %v826, %v1108
        %v1118 = vadd.f32 %v829, %v1108
        %v1119 = vadd.f32 %v832, %v1108
        %v1120 = vadd.f32 %v835, %v1108
        %v1121 = vadd.f32 %v838, %v1108
        %v1122 = vadd.f32 %v841, %v1108
        %v1123 = vadd.f32 %v844, %v1108
        %v1124 = vadd.f32 %v847, %v1108
        %v1125 = vrot.slane %v802, 1
        %v1126 = vrot.slane %v805, 1
        %v1127 = vrot.slane %v808, 1
        %v1128 = vrot.slane %v811, 1
        %v1129 = vrot.slane %v814, 1
        %v1130 = vrot.slane %v817, 1
        %v1131 = vrot.slane %v820, 1
        %v1132 = vrot.slane %v823, 1
        %v1133 = vrot.slane %v826, 1
        %v1134 = vrot.slane %v829, 1
        %v1135 = vrot.slane %v832, 1
        %v1136 = vrot.slane %v835, 1
        %v1137 = vrot.slane %v838, 1
        %v1138 = vrot.slane %v841, 1
        %v1139 = vrot.slane %v844, 1
        %v1140 = vrot.slane %v847, 1
        %v1141 = vsel %vm1010, %v1139, %v1140
        %v1142 = vsel %vm1010, %v1138, %v1139
        %v1143 = vsel %vm1010, %v1137, %v1138
        %v1144 = vsel %vm1010, %v1136, %v1137
        %v1145 = vsel %vm1010, %v1135, %v1136
        %v1146 = vsel %vm1010, %v1134, %v1135
        %v1147 = vsel %vm1010, %v1133, %v1134
        %v1148 = vsel %vm1010, %v1132, %v1133
        %v1149 = vsel %vm1010, %v1131, %v1132
        %v1150 = vsel %vm1010, %v1130, %v1131
        %v1151 = vsel %vm1010, %v1129, %v1130
        %v1152 = vsel %vm1010, %v1128, %v1129
        %v1153 = vsel %vm1010, %v1127, %v1128
        %v1154 = vsel %vm1010, %v1126, %v1127
        %v1155 = vsel %vm1010, %v1125, %v1126
        %v1156 = vsel %vm1010, %v1140, %v1125
        %v1157 = vmul.f32 %v1155, %v929
        %v1158 = vmul.f32 %v1154, %v930
        %v1159 = vmul.f32 %v1153, %v931
        %v1160 = vmul.f32 %v1152, %v932
        %v1161 = vmul.f32 %v1151, %v933
        %v1162 = vmul.f32 %v1150, %v934
        %v1163 = vmul.f32 %v1149, %v935
        %v1164 = vmul.f32 %v1148, %v936
        %v1165 = vmul.f32 %v1147, %v937
        %v1166 = vmul.f32 %v1146, %v938
        %v1167 = vmul.f32 %v1145, %v939
        %v1168 = vmul.f32 %v1144, %v940
        %v1169 = vmul.f32 %v1143, %v941
        %v1170 = vmul.f32 %v1142, %v942
        %v1171 = vmul.f32 %v1141, %v943
        %v1172 = vmul.f32 %v1156, %v944
        %v1173 = vperm.slane %v605, 2
        %v1174 = vadd.f32 %v1157, %v1173
        %v1175 = vadd.f32 %v1158, %v1173
        %v1176 = vadd.f32 %v1159, %v1173
        %v1177 = vadd.f32 %v1160, %v1173
        %v1178 = vadd.f32 %v1161, %v1173
        %v1179 = vadd.f32 %v1162, %v1173
        %v1180 = vadd.f32 %v1163, %v1173
        %v1181 = vadd.f32 %v1164, %v1173
        %v1182 = vadd.f32 %v1165, %v1173
        %v1183 = vadd.f32 %v1166, %v1173
        %v1184 = vadd.f32 %v1167, %v1173
        %v1185 = vadd.f32 %v1168, %v1173
        %v1186 = vadd.f32 %v1169, %v1173
        %v1187 = vadd.f32 %v1170, %v1173
        %v1188 = vadd.f32 %v1171, %v1173
        %v1189 = vadd.f32 %v1172, %v1173
        %v1190 = vmul.f32 %v672, %v978
        %v1191 = vmul.f32 %v675, %v979
        %v1192 = vmul.f32 %v678, %v980
        %v1193 = vmul.f32 %v681, %v981
        %v1194 = vmul.f32 %v684, %v982
        %v1195 = vmul.f32 %v687, %v983
        %v1196 = vmul.f32 %v690, %v984
        %v1197 = vmul.f32 %v693, %v985
        %v1198 = vmul.f32 %v696, %v986
        %v1199 = vmul.f32 %v699, %v987
        %v1200 = vmul.f32 %v702, %v988
        %v1201 = vmul.f32 %v705, %v989
        %v1202 = vmul.f32 %v708, %v990
        %v1203 = vmul.f32 %v711, %v991
        %v1204 = vmul.f32 %v714, %v992
        %v1205 = vmul.f32 %v717, %v993
        %v1206 = vmul.f32 %v672, %v737
        %v1207 = vmul.f32 %v675, %v740
        %v1208 = vmul.f32 %v678, %v743
        %v1209 = vmul.f32 %v681, %v746
        %v1210 = vmul.f32 %v684, %v749
        %v1211 = vmul.f32 %v687, %v752
        %v1212 = vmul.f32 %v690, %v755
        %v1213 = vmul.f32 %v693, %v758
        %v1214 = vmul.f32 %v696, %v761
        %v1215 = vmul.f32 %v699, %v764
        %v1216 = vmul.f32 %v702, %v767
        %v1217 = vmul.f32 %v705, %v770
        %v1218 = vmul.f32 %v708, %v773
        %v1219 = vmul.f32 %v711, %v776
        %v1220 = vmul.f32 %v714, %v779
        %v1221 = vmul.f32 %v717, %v782
        %v1222 = vmul.f32 %v672, %v1027
        %v1223 = vmul.f32 %v675, %v1028
        %v1224 = vmul.f32 %v678, %v1029
        %v1225 = vmul.f32 %v681, %v1030
        %v1226 = vmul.f32 %v684, %v1031
        %v1227 = vmul.f32 %v687, %v1032
        %v1228 = vmul.f32 %v690, %v1033
        %v1229 = vmul.f32 %v693, %v1034
        %v1230 = vmul.f32 %v696, %v1035
        %v1231 = vmul.f32 %v699, %v1036
        %v1232 = vmul.f32 %v702, %v1037
        %v1233 = vmul.f32 %v705, %v1038
        %v1234 = vmul.f32 %v708, %v1039
        %v1235 = vmul.f32 %v711, %v1040
        %v1236 = vmul.f32 %v714, %v1041
        %v1237 = vmul.f32 %v717, %v1042
        %v1238 = vmax.f32 %v1190, %v1206
        %v1239 = vmax.f32 %v1191, %v1207
        %v1240 = vmax.f32 %v1192, %v1208
        %v1241 = vmax.f32 %v1193, %v1209
        %v1242 = vmax.f32 %v1194, %v1210
        %v1243 = vmax.f32 %v1195, %v1211
        %v1244 = vmax.f32 %v1196, %v1212
        %v1245 = vmax.f32 %v1197, %v1213
        %v1246 = vmax.f32 %v1198, %v1214
        %v1247 = vmax.f32 %v1199, %v1215
        %v1248 = vmax.f32 %v1200, %v1216
        %v1249 = vmax.f32 %v1201, %v1217
        %v1250 = vmax.f32 %v1202, %v1218
        %v1251 = vmax.f32 %v1203, %v1219
        %v1252 = vmax.f32 %v1204, %v1220
        %v1253 = vmax.f32 %v1205, %v1221
        %v1254 = vmax.f32 %v1238, %v1222
        %v1255 = vmax.f32 %v1239, %v1223
        %v1256 = vmax.f32 %v1240, %v1224
        %v1257 = vmax.f32 %v1241, %v1225
        %v1258 = vmax.f32 %v1242, %v1226
        %v1259 = vmax.f32 %v1243, %v1227
        %v1260 = vmax.f32 %v1244, %v1228
        %v1261 = vmax.f32 %v1245, %v1229
        %v1262 = vmax.f32 %v1246, %v1230
        %v1263 = vmax.f32 %v1247, %v1231
        %v1264 = vmax.f32 %v1248, %v1232
        %v1265 = vmax.f32 %v1249, %v1233
        %v1266 = vmax.f32 %v1250, %v1234
        %v1267 = vmax.f32 %v1251, %v1235
        %v1268 = vmax.f32 %v1252, %v1236
        %v1269 = vmax.f32 %v1253, %v1237
        %v1270 = vsub.f32 %v1190, %v1254
        %v1271 = vsub.f32 %v1191, %v1255
        %v1272 = vsub.f32 %v1192, %v1256
        %v1273 = vsub.f32 %v1193, %v1257
        %v1274 = vsub.f32 %v1194, %v1258
        %v1275 = vsub.f32 %v1195, %v1259
        %v1276 = vsub.f32 %v1196, %v1260
        %v1277 = vsub.f32 %v1197, %v1261
        %v1278 = vsub.f32 %v1198, %v1262
        %v1279 = vsub.f32 %v1199, %v1263
        %v1280 = vsub.f32 %v1200, %v1264
        %v1281 = vsub.f32 %v1201, %v1265
        %v1282 = vsub.f32 %v1202, %v1266
        %v1283 = vsub.f32 %v1203, %v1267
        %v1284 = vsub.f32 %v1204, %v1268
        %v1285 = vsub.f32 %v1205, %v1269
        %v1286 = vmul.f32 %v1270, 1.442695
        %v1287 = vpow.pop %v1286
        %v1288 = vmul.f32 %v1271, 1.442695
        %v1289 = vpow.pop %v1288
        %v1290 = vmul.f32 %v1272, 1.442695
        %v1291 = vpow.pop %v1290
        %v1292 = vmul.f32 %v1273, 1.442695
        %v1293 = vpow.pop %v1292
        %v1294 = vmul.f32 %v1274, 1.442695
        %v1295 = vpow.pop %v1294
        %v1296 = vmul.f32 %v1275, 1.442695
        %v1297 = vpow.pop %v1296
        %v1298 = vmul.f32 %v1276, 1.442695
        %v1299 = vpow.pop %v1298
        %v1300 = vmul.f32 %v1277, 1.442695
        %v1301 = vpow.pop %v1300
        %v1302 = vmul.f32 %v1278, 1.442695
        %v1303 = vpow.pop %v1302
        %v1304 = vmul.f32 %v1279, 1.442695
        %v1305 = vpow.pop %v1304
        %v1306 = vmul.f32 %v1280, 1.442695
        %v1307 = vpow.pop %v1306
        %v1308 = vmul.f32 %v1281, 1.442695
        %v1309 = vpow.pop %v1308
        %v1310 = vmul.f32 %v1282, 1.442695
        %v1311 = vpow.pop %v1310
        %v1312 = vmul.f32 %v1283, 1.442695
        %v1313 = vpow.pop %v1312
        %v1314 = vmul.f32 %v1284, 1.442695
        %v1315 = vpow.pop %v1314
        %v1316 = vmul.f32 %v1285, 1.442695
        %v1317 = vpow.pop %v1316
        %v1318 = vsub.f32 %v1206, %v1254
        %v1319 = vsub.f32 %v1207, %v1255
        %v1320 = vsub.f32 %v1208, %v1256
        %v1321 = vsub.f32 %v1209, %v1257
        %v1322 = vsub.f32 %v1210, %v1258
        %v1323 = vsub.f32 %v1211, %v1259
        %v1324 = vsub.f32 %v1212, %v1260
        %v1325 = vsub.f32 %v1213, %v1261
        %v1326 = vsub.f32 %v1214, %v1262
        %v1327 = vsub.f32 %v1215, %v1263
        %v1328 = vsub.f32 %v1216, %v1264
        %v1329 = vsub.f32 %v1217, %v1265
        %v1330 = vsub.f32 %v1218, %v1266
        %v1331 = vsub.f32 %v1219, %v1267
        %v1332 = vsub.f32 %v1220, %v1268
        %v1333 = vsub.f32 %v1221, %v1269
        %v1334 = vmul.f32 %v1318, 1.442695
        %v1335 = vpow.pop %v1334
        %v1336 = vmul.f32 %v1319, 1.442695
        %v1337 = vpow.pop %v1336
        %v1338 = vmul.f32 %v1320, 1.442695
        %v1339 = vpow.pop %v1338
        %v1340 = vmul.f32 %v1321, 1.442695
        %v1341 = vpow.pop %v1340
        %v1342 = vmul.f32 %v1322, 1.442695
        %v1343 = vpow.pop %v1342
        %v1344 = vmul.f32 %v1323, 1.442695
        %v1345 = vpow.pop %v1344
        %v1346 = vmul.f32 %v1324, 1.442695
        %v1347 = vpow.pop %v1346
        %v1348 = vmul.f32 %v1325, 1.442695
        %v1349 = vpow.pop %v1348
        %v1350 = vmul.f32 %v1326, 1.442695
        %v1351 = vpow.pop %v1350
        %v1352 = vmul.f32 %v1327, 1.442695
        %v1353 = vpow.pop %v1352
        %v1354 = vmul.f32 %v1328, 1.442695
        %v1355 = vpow.pop %v1354
        %v1356 = vmul.f32 %v1329, 1.442695
        %v1357 = vpow.pop %v1356
        %v1358 = vmul.f32 %v1330, 1.442695
        %v1359 = vpow.pop %v1358
        %v1360 = vmul.f32 %v1331, 1.442695
        %v1361 = vpow.pop %v1360
        %v1362 = vmul.f32 %v1332, 1.442695
        %v1363 = vpow.pop %v1362
        %v1364 = vmul.f32 %v1333, 1.442695
        %v1365 = vpow.pop %v1364
        %v1366 = vsub.f32 %v1222, %v1254
        %v1367 = vsub.f32 %v1223, %v1255
        %v1368 = vsub.f32 %v1224, %v1256
        %v1369 = vsub.f32 %v1225, %v1257
        %v1370 = vsub.f32 %v1226, %v1258
        %v1371 = vsub.f32 %v1227, %v1259
        %v1372 = vsub.f32 %v1228, %v1260
        %v1373 = vsub.f32 %v1229, %v1261
        %v1374 = vsub.f32 %v1230, %v1262
        %v1375 = vsub.f32 %v1231, %v1263
        %v1376 = vsub.f32 %v1232, %v1264
        %v1377 = vsub.f32 %v1233, %v1265
        %v1378 = vsub.f32 %v1234, %v1266
        %v1379 = vsub.f32 %v1235, %v1267
        %v1380 = vsub.f32 %v1236, %v1268
        %v1381 = vsub.f32 %v1237, %v1269
        %v1382 = vmul.f32 %v1366, 1.442695
        %v1383 = vpow.pop %v1382
        %v1384 = vmul.f32 %v1367, 1.442695
        %v1385 = vpow.pop %v1384
        %v1386 = vmul.f32 %v1368, 1.442695
        %v1387 = vpow.pop %v1386
        %v1388 = vmul.f32 %v1369, 1.442695
        %v1389 = vpow.pop %v1388
        %v1390 = vmul.f32 %v1370, 1.442695
        %v1391 = vpow.pop %v1390
        %v1392 = vmul.f32 %v1371, 1.442695
        %v1393 = vpow.pop %v1392
        %v1394 = vmul.f32 %v1372, 1.442695
        %v1395 = vpow.pop %v1394
        %v1396 = vmul.f32 %v1373, 1.442695
        %v1397 = vpow.pop %v1396
        %v1398 = vmul.f32 %v1374, 1.442695
        %v1399 = vpow.pop %v1398
        %v1400 = vmul.f32 %v1375, 1.442695
        %v1401 = vpow.pop %v1400
        %v1402 = vmul.f32 %v1376, 1.442695
        %v1403 = vpow.pop %v1402
        %v1404 = vmul.f32 %v1377, 1.442695
        %v1405 = vpow.pop %v1404
        %v1406 = vmul.f32 %v1378, 1.442695
        %v1407 = vpow.pop %v1406
        %v1408 = vmul.f32 %v1379, 1.442695
        %v1409 = vpow.pop %v1408
        %v1410 = vmul.f32 %v1380, 1.442695
        %v1411 = vpow.pop %v1410
        %v1412 = vmul.f32 %v1381, 1.442695
        %v1413 = vpow.pop %v1412
        %v1414 = vadd.f32 %v1287, %v1335
        %v1415 = vadd.f32 %v1289, %v1337
        %v1416 = vadd.f32 %v1291, %v1339
        %v1417 = vadd.f32 %v1293, %v1341
        %v1418 = vadd.f32 %v1295, %v1343
        %v1419 = vadd.f32 %v1297, %v1345
        %v1420 = vadd.f32 %v1299, %v1347
        %v1421 = vadd.f32 %v1301, %v1349
        %v1422 = vadd.f32 %v1303, %v1351
        %v1423 = vadd.f32 %v1305, %v1353
        %v1424 = vadd.f32 %v1307, %v1355
        %v1425 = vadd.f32 %v1309, %v1357
        %v1426 = vadd.f32 %v1311, %v1359
        %v1427 = vadd.f32 %v1313, %v1361
        %v1428 = vadd.f32 %v1315, %v1363
        %v1429 = vadd.f32 %v1317, %v1365
        %v1430 = vadd.f32 %v1414, %v1383
        %v1431 = vadd.f32 %v1415, %v1385
        %v1432 = vadd.f32 %v1416, %v1387
        %v1433 = vadd.f32 %v1417, %v1389
        %v1434 = vadd.f32 %v1418, %v1391
        %v1435 = vadd.f32 %v1419, %v1393
        %v1436 = vadd.f32 %v1420, %v1395
        %v1437 = vadd.f32 %v1421, %v1397
        %v1438 = vadd.f32 %v1422, %v1399
        %v1439 = vadd.f32 %v1423, %v1401
        %v1440 = vadd.f32 %v1424, %v1403
        %v1441 = vadd.f32 %v1425, %v1405
        %v1442 = vadd.f32 %v1426, %v1407
        %v1443 = vadd.f32 %v1427, %v1409
        %v1444 = vadd.f32 %v1428, %v1411
        %v1445 = vadd.f32 %v1429, %v1413
        %v1446 = vmul.f32 %v1287, %v1092
        %v1447 = vmul.f32 %v1289, %v1093
        %v1448 = vmul.f32 %v1291, %v1094
        %v1449 = vmul.f32 %v1293, %v1095
        %v1450 = vmul.f32 %v1295, %v1096
        %v1451 = vmul.f32 %v1297, %v1097
        %v1452 = vmul.f32 %v1299, %v1098
        %v1453 = vmul.f32 %v1301, %v1099
        %v1454 = vmul.f32 %v1303, %v1100
        %v1455 = vmul.f32 %v1305, %v1101
        %v1456 = vmul.f32 %v1307, %v1102
        %v1457 = vmul.f32 %v1309, %v1103
        %v1458 = vmul.f32 %v1311, %v1104
        %v1459 = vmul.f32 %v1313, %v1105
        %v1460 = vmul.f32 %v1315, %v1106
        %v1461 = vmul.f32 %v1317, %v1107
        %v1462 = vmul.f32 %v1335, %v1109
        %v1463 = vmul.f32 %v1337, %v1110
        %v1464 = vmul.f32 %v1339, %v1111
        %v1465 = vmul.f32 %v1341, %v1112
        %v1466 = vmul.f32 %v1343, %v1113
        %v1467 = vmul.f32 %v1345, %v1114
        %v1468 = vmul.f32 %v1347, %v1115
        %v1469 = vmul.f32 %v1349, %v1116
        %v1470 = vmul.f32 %v1351, %v1117
        %v1471 = vmul.f32 %v1353, %v1118
        %v1472 = vmul.f32 %v1355, %v1119
        %v1473 = vmul.f32 %v1357, %v1120
        %v1474 = vmul.f32 %v1359, %v1121
        %v1475 = vmul.f32 %v1361, %v1122
        %v1476 = vmul.f32 %v1363, %v1123
        %v1477 = vmul.f32 %v1365, %v1124
        %v1478 = vadd.f32 %v1446, %v1462
        %v1479 = vadd.f32 %v1447, %v1463
        %v1480 = vadd.f32 %v1448, %v1464
        %v1481 = vadd.f32 %v1449, %v1465
        %v1482 = vadd.f32 %v1450, %v1466
        %v1483 = vadd.f32 %v1451, %v1467
        %v1484 = vadd.f32 %v1452, %v1468
        %v1485 = vadd.f32 %v1453, %v1469
        %v1486 = vadd.f32 %v1454, %v1470
        %v1487 = vadd.f32 %v1455, %v1471
        %v1488 = vadd.f32 %v1456, %v1472
        %v1489 = vadd.f32 %v1457, %v1473
        %v1490 = vadd.f32 %v1458, %v1474
        %v1491 = vadd.f32 %v1459, %v1475
        %v1492 = vadd.f32 %v1460, %v1476
        %v1493 = vadd.f32 %v1461, %v1477
        %v1494 = vmul.f32 %v1383, %v1174
        %v1495 = vmul.f32 %v1385, %v1175
        %v1496 = vmul.f32 %v1387, %v1176
        %v1497 = vmul.f32 %v1389, %v1177
        %v1498 = vmul.f32 %v1391, %v1178
        %v1499 = vmul.f32 %v1393, %v1179
        %v1500 = vmul.f32 %v1395, %v1180
        %v1501 = vmul.f32 %v1397, %v1181
        %v1502 = vmul.f32 %v1399, %v1182
        %v1503 = vmul.f32 %v1401, %v1183
        %v1504 = vmul.f32 %v1403, %v1184
        %v1505 = vmul.f32 %v1405, %v1185
        %v1506 = vmul.f32 %v1407, %v1186
        %v1507 = vmul.f32 %v1409, %v1187
        %v1508 = vmul.f32 %v1411, %v1188
        %v1509 = vmul.f32 %v1413, %v1189
        %v1510 = vadd.f32 %v1478, %v1494
        %v1511 = vadd.f32 %v1479, %v1495
        %v1512 = vadd.f32 %v1480, %v1496
        %v1513 = vadd.f32 %v1481, %v1497
        %v1514 = vadd.f32 %v1482, %v1498
        %v1515 = vadd.f32 %v1483, %v1499
        %v1516 = vadd.f32 %v1484, %v1500
        %v1517 = vadd.f32 %v1485, %v1501
        %v1518 = vadd.f32 %v1486, %v1502
        %v1519 = vadd.f32 %v1487, %v1503
        %v1520 = vadd.f32 %v1488, %v1504
        %v1521 = vadd.f32 %v1489, %v1505
        %v1522 = vadd.f32 %v1490, %v1506
        %v1523 = vadd.f32 %v1491, %v1507
        %v1524 = vadd.f32 %v1492, %v1508
        %v1525 = vadd.f32 %v1493, %v1509
        %v1526 = vrcp.pop %v1430
        %v1527 = vmul.f32 %v1430, %v1526
        %v1528 = vsub.f32 1.0, %v1527
        %v1529 = vmul.f32 %v1526, %v1528
        %v1530 = vadd.f32 %v1526, %v1529
        %vm1531 = vweird.f32 %v1430
        %vm1532 = vweird.f32 %v1526
        %vm1533 = vmor %vm1531, %vm1532
        %v1534 = vsel %vm1533, %v1526, %v1530
        %v1535 = vand.u32 2147483647, %v1430
        %vm1536 = vcmp.eq.f32.partialorder %v1535, 8.507059e+37
        %v1537 = vand.u32 %v1430, 2147483648
        %v1538 = vor.u32 1.1754944e-38, %v1537
        %v1539 = vsel %vm1536, %v1538, %v1534
        %v1540 = vrcp.pop %v1431
        %v1541 = vmul.f32 %v1431, %v1540
        %v1542 = vsub.f32 1.0, %v1541
        %v1543 = vmul.f32 %v1540, %v1542
        %v1544 = vadd.f32 %v1540, %v1543
        %vm1545 = vweird.f32 %v1431
        %vm1546 = vweird.f32 %v1540
        %vm1547 = vmor %vm1545, %vm1546
        %v1548 = vsel %vm1547, %v1540, %v1544
        %v1549 = vand.u32 2147483647, %v1431
        %vm1550 = vcmp.eq.f32.partialorder %v1549, 8.507059e+37
        %v1551 = vand.u32 %v1431, 2147483648
        %v1552 = vor.u32 1.1754944e-38, %v1551
        %v1553 = vsel %vm1550, %v1552, %v1548
        %v1554 = vrcp.pop %v1432
        %v1555 = vmul.f32 %v1432, %v1554
        %v1556 = vsub.f32 1.0, %v1555
        %v1557 = vmul.f32 %v1554, %v1556
        %v1558 = vadd.f32 %v1554, %v1557
        %vm1559 = vweird.f32 %v1432
        %vm1560 = vweird.f32 %v1554
        %vm1561 = vmor %vm1559, %vm1560
        %v1562 = vsel %vm1561, %v1554, %v1558
        %v1563 = vand.u32 2147483647, %v1432
        %vm1564 = vcmp.eq.f32.partialorder %v1563, 8.507059e+37
        %v1565 = vand.u32 %v1432, 2147483648
        %v1566 = vor.u32 1.1754944e-38, %v1565
        %v1567 = vsel %vm1564, %v1566, %v1562
        %v1568 = vrcp.pop %v1433
        %v1569 = vmul.f32 %v1433, %v1568
        %v1570 = vsub.f32 1.0, %v1569
        %v1571 = vmul.f32 %v1568, %v1570
        %v1572 = vadd.f32 %v1568, %v1571
        %vm1573 = vweird.f32 %v1433
        %vm1574 = vweird.f32 %v1568
        %vm1575 = vmor %vm1573, %vm1574
        %v1576 = vsel %vm1575, %v1568, %v1572
        %v1577 = vand.u32 2147483647, %v1433
        %vm1578 = vcmp.eq.f32.partialorder %v1577, 8.507059e+37
        %v1579 = vand.u32 %v1433, 2147483648
        %v1580 = vor.u32 1.1754944e-38, %v1579
        %v1581 = vsel %vm1578, %v1580, %v1576
        %v1582 = vrcp.pop %v1434
        %v1583 = vmul.f32 %v1434, %v1582
        %v1584 = vsub.f32 1.0, %v1583
        %v1585 = vmul.f32 %v1582, %v1584
        %v1586 = vadd.f32 %v1582, %v1585
        %vm1587 = vweird.f32 %v1434
        %vm1588 = vweird.f32 %v1582
        %vm1589 = vmor %vm1587, %vm1588
        %v1590 = vsel %vm1589, %v1582, %v1586
        %v1591 = vand.u32 2147483647, %v1434
        %vm1592 = vcmp.eq.f32.partialorder %v1591, 8.507059e+37
        %v1593 = vand.u32 %v1434, 2147483648
        %v1594 = vor.u32 1.1754944e-38, %v1593
        %v1595 = vsel %vm1592, %v1594, %v1590
        %v1596 = vrcp.pop %v1435
        %v1597 = vmul.f32 %v1435, %v1596
        %v1598 = vsub.f32 1.0, %v1597
        %v1599 = vmul.f32 %v1596, %v1598
        %v1600 = vadd.f32 %v1596, %v1599
        %vm1601 = vweird.f32 %v1435
        %vm1602 = vweird.f32 %v1596
        %vm1603 = vmor %vm1601, %vm1602
        %v1604 = vsel %vm1603, %v1596, %v1600
        %v1605 = vand.u32 2147483647, %v1435
        %vm1606 = vcmp.eq.f32.partialorder %v1605, 8.507059e+37
        %v1607 = vand.u32 %v1435, 2147483648
        %v1608 = vor.u32 1.1754944e-38, %v1607
        %v1609 = vsel %vm1606, %v1608, %v1604
        %v1610 = vrcp.pop %v1436
        %v1611 = vmul.f32 %v1436, %v1610
        %v1612 = vsub.f32 1.0, %v1611
        %v1613 = vmul.f32 %v1610, %v1612
        %v1614 = vadd.f32 %v1610, %v1613
        %vm1615 = vweird.f32 %v1436
        %vm1616 = vweird.f32 %v1610
        %vm1617 = vmor %vm1615, %vm1616
        %v1618 = vsel %vm1617, %v1610, %v1614
        %v1619 = vand.u32 2147483647, %v1436
        %vm1620 = vcmp.eq.f32.partialorder %v1619, 8.507059e+37
        %v1621 = vand.u32 %v1436, 2147483648
        %v1622 = vor.u32 1.1754944e-38, %v1621
        %v1623 = vsel %vm1620, %v1622, %v1618
        %v1624 = vrcp.pop %v1437
        %v1625 = vmul.f32 %v1437, %v1624
        %v1626 = vsub.f32 1.0, %v1625
        %v1627 = vmul.f32 %v1624, %v1626
        %v1628 = vadd.f32 %v1624, %v1627
        %vm1629 = vweird.f32 %v1437
        %vm1630 = vweird.f32 %v1624
        %vm1631 = vmor %vm1629, %vm1630
        %v1632 = vsel %vm1631, %v1624, %v1628
        %v1633 = vand.u32 2147483647, %v1437
        %vm1634 = vcmp.eq.f32.partialorder %v1633, 8.507059e+37
        %v1635 = vand.u32 %v1437, 2147483648
        %v1636 = vor.u32 1.1754944e-38, %v1635
        %v1637 = vsel %vm1634, %v1636, %v1632
        %v1638 = vrcp.pop %v1438
        %v1639 = vmul.f32 %v1438, %v1638
        %v1640 = vsub.f32 1.0, %v1639
        %v1641 = vmul.f32 %v1638, %v1640
        %v1642 = vadd.f32 %v1638, %v1641
        %vm1643 = vweird.f32 %v1438
        %vm1644 = vweird.f32 %v1638
        %vm1645 = vmor %vm1643, %vm1644
        %v1646 = vsel %vm1645, %v1638, %v1642
        %v1647 = vand.u32 2147483647, %v1438
        %vm1648 = vcmp.eq.f32.partialorder %v1647, 8.507059e+37
        %v1649 = vand.u32 %v1438, 2147483648
        %v1650 = vor.u32 1.1754944e-38, %v1649
        %v1651 = vsel %vm1648, %v1650, %v1646
        %v1652 = vrcp.pop %v1439
        %v1653 = vmul.f32 %v1439, %v1652
        %v1654 = vsub.f32 1.0, %v1653
        %v1655 = vmul.f32 %v1652, %v1654
        %v1656 = vadd.f32 %v1652, %v1655
        %vm1657 = vweird.f32 %v1439
        %vm1658 = vweird.f32 %v1652
        %vm1659 = vmor %vm1657, %vm1658
        %v1660 = vsel %vm1659, %v1652, %v1656
        %v1661 = vand.u32 2147483647, %v1439
        %vm1662 = vcmp.eq.f32.partialorder %v1661, 8.507059e+37
        %v1663 = vand.u32 %v1439, 2147483648
        %v1664 = vor.u32 1.1754944e-38, %v1663
        %v1665 = vsel %vm1662, %v1664, %v1660
        %v1666 = vrcp.pop %v1440
        %v1667 = vmul.f32 %v1440, %v1666
        %v1668 = vsub.f32 1.0, %v1667
        %v1669 = vmul.f32 %v1666, %v1668
        %v1670 = vadd.f32 %v1666, %v1669
        %vm1671 = vweird.f32 %v1440
        %vm1672 = vweird.f32 %v1666
        %vm1673 = vmor %vm1671, %vm1672
        %v1674 = vsel %vm1673, %v1666, %v1670
        %v1675 = vand.u32 2147483647, %v1440
        %vm1676 = vcmp.eq.f32.partialorder %v1675, 8.507059e+37
        %v1677 = vand.u32 %v1440, 2147483648
        %v1678 = vor.u32 1.1754944e-38, %v1677
        %v1679 = vsel %vm1676, %v1678, %v1674
        %v1680 = vrcp.pop %v1441
        %v1681 = vmul.f32 %v1441, %v1680
        %v1682 = vsub.f32 1.0, %v1681
        %v1683 = vmul.f32 %v1680, %v1682
        %v1684 = vadd.f32 %v1680, %v1683
        %vm1685 = vweird.f32 %v1441
        %vm1686 = vweird.f32 %v1680
        %vm1687 = vmor %vm1685, %vm1686
        %v1688 = vsel %vm1687, %v1680, %v1684
        %v1689 = vand.u32 2147483647, %v1441
        %vm1690 = vcmp.eq.f32.partialorder %v1689, 8.507059e+37
        %v1691 = vand.u32 %v1441, 2147483648
        %v1692 = vor.u32 1.1754944e-38, %v1691
        %v1693 = vsel %vm1690, %v1692, %v1688
        %v1694 = vrcp.pop %v1442
        %v1695 = vmul.f32 %v1442, %v1694
        %v1696 = vsub.f32 1.0, %v1695
        %v1697 = vmul.f32 %v1694, %v1696
        %v1698 = vadd.f32 %v1694, %v1697
        %vm1699 = vweird.f32 %v1442
        %vm1700 = vweird.f32 %v1694
        %vm1701 = vmor %vm1699, %vm1700
        %v1702 = vsel %vm1701, %v1694, %v1698
        %v1703 = vand.u32 2147483647, %v1442
        %vm1704 = vcmp.eq.f32.partialorder %v1703, 8.507059e+37
        %v1705 = vand.u32 %v1442, 2147483648
        %v1706 = vor.u32 1.1754944e-38, %v1705
        %v1707 = vsel %vm1704, %v1706, %v1702
        %v1708 = vrcp.pop %v1443
        %v1709 = vmul.f32 %v1443, %v1708
        %v1710 = vsub.f32 1.0, %v1709
        %v1711 = vmul.f32 %v1708, %v1710
        %v1712 = vadd.f32 %v1708, %v1711
        %vm1713 = vweird.f32 %v1443
        %vm1714 = vweird.f32 %v1708
        %vm1715 = vmor %vm1713, %vm1714
        %v1716 = vsel %vm1715, %v1708, %v1712
        %v1717 = vand.u32 2147483647, %v1443
        %vm1718 = vcmp.eq.f32.partialorder %v1717, 8.507059e+37
        %v1719 = vand.u32 %v1443, 2147483648
        %v1720 = vor.u32 1.1754944e-38, %v1719
        %v1721 = vsel %vm1718, %v1720, %v1716
        %v1722 = vrcp.pop %v1444
        %v1723 = vmul.f32 %v1444, %v1722
        %v1724 = vsub.f32 1.0, %v1723
        %v1725 = vmul.f32 %v1722, %v1724
        %v1726 = vadd.f32 %v1722, %v1725
        %vm1727 = vweird.f32 %v1444
        %vm1728 = vweird.f32 %v1722
        %vm1729 = vmor %vm1727, %vm1728
        %v1730 = vsel %vm1729, %v1722, %v1726
        %v1731 = vand.u32 2147483647, %v1444
        %vm1732 = vcmp.eq.f32.partialorder %v1731, 8.507059e+37
        %v1733 = vand.u32 %v1444, 2147483648
        %v1734 = vor.u32 1.1754944e-38, %v1733
        %v1735 = vsel %vm1732, %v1734, %v1730
        %v1736 = vrcp.pop %v1445
        %v1737 = vmul.f32 %v1445, %v1736
        %v1738 = vsub.f32 1.0, %v1737
        %v1739 = vmul.f32 %v1736, %v1738
        %v1740 = vadd.f32 %v1736, %v1739
        %vm1741 = vweird.f32 %v1445
        %vm1742 = vweird.f32 %v1736
        %vm1743 = vmor %vm1741, %vm1742
        %v1744 = vsel %vm1743, %v1736, %v1740
        %v1745 = vand.u32 2147483647, %v1445
        %vm1746 = vcmp.eq.f32.partialorder %v1745, 8.507059e+37
        %v1747 = vand.u32 %v1445, 2147483648
        %v1748 = vor.u32 1.1754944e-38, %v1747
        %v1749 = vsel %vm1746, %v1748, %v1744
        %v1750 = vmul.f32 %v1510, %v1539
        %v1751 = vmul.f32 %v1511, %v1553
        %v1752 = vmul.f32 %v1512, %v1567
        %v1753 = vmul.f32 %v1513, %v1581
        %v1754 = vmul.f32 %v1514, %v1595
        %v1755 = vmul.f32 %v1515, %v1609
        %v1756 = vmul.f32 %v1516, %v1623
        %v1757 = vmul.f32 %v1517, %v1637
        %v1758 = vmul.f32 %v1518, %v1651
        %v1759 = vmul.f32 %v1519, %v1665
        %v1760 = vmul.f32 %v1520, %v1679
        %v1761 = vmul.f32 %v1521, %v1693
        %v1762 = vmul.f32 %v1522, %v1707
        %v1763 = vmul.f32 %v1523, %v1721
        %v1764 = vmul.f32 %v1524, %v1735
        %v1765 = vmul.f32 %v1525, %v1749
        %v1766 = vmax.f32 %v1750, 0.0
        %v1767 = vmax.f32 %v1751, 0.0
        %v1768 = vmax.f32 %v1752, 0.0
        %v1769 = vmax.f32 %v1753, 0.0
        %v1770 = vmax.f32 %v1754, 0.0
        %v1771 = vmax.f32 %v1755, 0.0
        %v1772 = vmax.f32 %v1756, 0.0
        %v1773 = vmax.f32 %v1757, 0.0
        %v1774 = vmax.f32 %v1758, 0.0
        %v1775 = vmax.f32 %v1759, 0.0
        %v1776 = vmax.f32 %v1760, 0.0
        %v1777 = vmax.f32 %v1761, 0.0
        %v1778 = vmax.f32 %v1762, 0.0
        %v1779 = vmax.f32 %v1763, 0.0
        %v1780 = vmax.f32 %v1764, 0.0
        %v1781 = vmax.f32 %v1765, 0.0
        %v1782 = vld [vmem:[%s7] sm:$0xff]
        %v1783 = vld [vmem:[%s7 + $0x8] sm:$0xff]
        %v1784 = vld [vmem:[%s7 + $0x10] sm:$0xff]
        %v1785 = vld [vmem:[%s7 + $0x18] sm:$0xff]
        %v1786 = vld [vmem:[%s7 + $0x20] sm:$0xff]
        %v1787 = vld [vmem:[%s7 + $0x28] sm:$0xff]
        %v1788 = vld [vmem:[%s7 + $0x30] sm:$0xff]
        %v1789 = vld [vmem:[%s7 + $0x38] sm:$0xff]
        %v1790 = vld [vmem:[%s7 + $0x40] sm:$0xff]
        %v1791 = vld [vmem:[%s7 + $0x48] sm:$0xff]
        %v1792 = vld [vmem:[%s7 + $0x50] sm:$0xff]
        %v1793 = vld [vmem:[%s7 + $0x58] sm:$0xff]
        %v1794 = vld [vmem:[%s7 + $0x60] sm:$0xff]
        %v1795 = vld [vmem:[%s7 + $0x68] sm:$0xff]
        %v1796 = vld [vmem:[%s7 + $0x70] sm:$0xff]
        %v1797 = vld [vmem:[%s7 + $0x78] sm:$0xff]
        %v1798 = vld [vmem:[%s8] sm:$0x1]
        %v1800 = vperm.slane %v1798, 0
        %1802 = vmatpush.msra.mxu0 %v1797
        %1803 = vmatpush.msra.mxu0 %v1796
        %1804 = vmatpush.msra.mxu0 %v1795
        %1805 = vmatpush.msra.mxu0 %v1794
        %1806 = vmatpush.msra.mxu0 %v1793
        %1807 = vmatpush.msra.mxu0 %v1792
        %1808 = vmatpush.msra.mxu0 %v1791
        %1809 = vmatpush.msra.mxu0 %v1790
        %1810 = vmatpush.msra.mxu0 %v1789
        %1811 = vmatpush.msra.mxu0 %v1788
        %1812 = vmatpush.msra.mxu0 %v1787
        %1813 = vmatpush.msra.mxu0 %v1786
        %1814 = vmatpush.msra.mxu0 %v1785
        %1815 = vmatpush.msra.mxu0 %v1784
        %1816 = vmatpush.msra.mxu0 %v1783
        %1817 = vmatpush.msra.mxu0 %v1782
        %1818 = vmatmul.f32.gmra.mxu0 %v1766
        %v1819 = vpop.f32.mrf.mxu0
        %v1820 = vadd.f32 %v1800, %v1819
        %1821 = vmatmul.f32.gmra.mxu0 %v1767
        %v1822 = vpop.f32.mrf.mxu0
        %v1823 = vadd.f32 %v1800, %v1822
        %1824 = vmatmul.f32.gmra.mxu0 %v1768
        %v1825 = vpop.f32.mrf.mxu0
        %v1826 = vadd.f32 %v1800, %v1825
        %1827 = vmatmul.f32.gmra.mxu0 %v1769
        %v1828 = vpop.f32.mrf.mxu0
        %v1829 = vadd.f32 %v1800, %v1828
        %1830 = vmatmul.f32.gmra.mxu0 %v1770
        %v1831 = vpop.f32.mrf.mxu0
        %v1832 = vadd.f32 %v1800, %v1831
        %1833 = vmatmul.f32.gmra.mxu0 %v1771
        %v1834 = vpop.f32.mrf.mxu0
        %v1835 = vadd.f32 %v1800, %v1834
        %1836 = vmatmul.f32.gmra.mxu0 %v1772
        %v1837 = vpop.f32.mrf.mxu0
        %v1838 = vadd.f32 %v1800, %v1837
        %1839 = vmatmul.f32.gmra.mxu0 %v1773
        %v1840 = vpop.f32.mrf.mxu0
        %v1841 = vadd.f32 %v1800, %v1840
        %1842 = vmatmul.f32.gmra.mxu0 %v1774
        %v1843 = vpop.f32.mrf.mxu0
        %v1844 = vadd.f32 %v1800, %v1843
        %1845 = vmatmul.f32.gmra.mxu0 %v1775
        %v1846 = vpop.f32.mrf.mxu0
        %v1847 = vadd.f32 %v1800, %v1846
        %1848 = vmatmul.f32.gmra.mxu0 %v1776
        %v1849 = vpop.f32.mrf.mxu0
        %v1850 = vadd.f32 %v1800, %v1849
        %1851 = vmatmul.f32.gmra.mxu0 %v1777
        %v1852 = vpop.f32.mrf.mxu0
        %v1853 = vadd.f32 %v1800, %v1852
        %1854 = vmatmul.f32.gmra.mxu0 %v1778
        %v1855 = vpop.f32.mrf.mxu0
        %v1856 = vadd.f32 %v1800, %v1855
        %1857 = vmatmul.f32.gmra.mxu0 %v1779
        %v1858 = vpop.f32.mrf.mxu0
        %v1859 = vadd.f32 %v1800, %v1858
        %1860 = vmatmul.f32.gmra.mxu0 %v1780
        %v1861 = vpop.f32.mrf.mxu0
        %v1862 = vadd.f32 %v1800, %v1861
        %1863 = vmatmul.f32.gmra.mxu0 %v1781
        %v1864 = vpop.f32.mrf.mxu0
        %v1865 = vadd.f32 %v1800, %v1864
        %1866 = vdwg.mxu0
        %v1867 = vadd.f32 %v541, %v1820
        %v1868 = vadd.f32 %v544, %v1823
        %v1869 = vadd.f32 %v547, %v1826
        %v1870 = vadd.f32 %v550, %v1829
        %v1871 = vadd.f32 %v553, %v1832
        %v1872 = vadd.f32 %v556, %v1835
        %v1873 = vadd.f32 %v559, %v1838
        %v1874 = vadd.f32 %v562, %v1841
        %v1875 = vadd.f32 %v565, %v1844
        %v1876 = vadd.f32 %v568, %v1847
        %v1877 = vadd.f32 %v571, %v1850
        %v1878 = vadd.f32 %v574, %v1853
        %v1879 = vadd.f32 %v577, %v1856
        %v1880 = vadd.f32 %v580, %v1859
        %v1881 = vadd.f32 %v583, %v1862
        %v1882 = vadd.f32 %v586, %v1865
        %1884 = vset.pattern.permute.xlu0 0
        %1885 = vperm.xlu0 %1884, %v436
        %v1886 = vpop.permute.xlu0 %1885
        %1889 = vset.pattern.permute.xlu0 0
        %1890 = vperm.xlu0 %1889, %v437
        %v1891 = vpop.permute.xlu0 %1890
        %1894 = vset.pattern.permute.xlu0 0
        %1895 = vperm.xlu0 %1894, %v438
        %v1896 = vpop.permute.xlu0 %1895
        %1899 = vset.pattern.permute.xlu0 0
        %1900 = vperm.xlu0 %1899, %v439
        %v1901 = vpop.permute.xlu0 %1900
        %1904 = vset.pattern.permute.xlu0 0
        %1905 = vperm.xlu0 %1904, %v440
        %v1906 = vpop.permute.xlu0 %1905
        %1909 = vset.pattern.permute.xlu0 0
        %1910 = vperm.xlu0 %1909, %v441
        %v1911 = vpop.permute.xlu0 %1910
        %1914 = vset.pattern.permute.xlu0 0
        %1915 = vperm.xlu0 %1914, %v442
        %v1916 = vpop.permute.xlu0 %1915
        %1919 = vset.pattern.permute.xlu0 0
        %1920 = vperm.xlu0 %1919, %v443
        %v1921 = vpop.permute.xlu0 %1920
        %1924 = vset.pattern.permute.xlu0 0
        %1925 = vperm.xlu0 %1924, %v444
        %v1926 = vpop.permute.xlu0 %1925
        %1929 = vset.pattern.permute.xlu0 0
        %1930 = vperm.xlu0 %1929, %v445
        %v1931 = vpop.permute.xlu0 %1930
        %1934 = vset.pattern.permute.xlu0 0
        %1935 = vperm.xlu0 %1934, %v446
        %v1936 = vpop.permute.xlu0 %1935
        %1939 = vset.pattern.permute.xlu0 0
        %1940 = vperm.xlu0 %1939, %v447
        %v1941 = vpop.permute.xlu0 %1940
        %1944 = vset.pattern.permute.xlu0 0
        %1945 = vperm.xlu0 %1944, %v448
        %v1946 = vpop.permute.xlu0 %1945
        %1949 = vset.pattern.permute.xlu0 0
        %1950 = vperm.xlu0 %1949, %v449
        %v1951 = vpop.permute.xlu0 %1950
        %1954 = vset.pattern.permute.xlu0 0
        %1955 = vperm.xlu0 %1954, %v450
        %v1956 = vpop.permute.xlu0 %1955
        %1959 = vset.pattern.permute.xlu0 0
        %1960 = vperm.xlu0 %1959, %v451
        %v1961 = vpop.permute.xlu0 %1960
        %v1963 = vmul.f32 %v1867, %v1886
        %v1964 = vmul.f32 %v1868, %v1891
        %v1965 = vmul.f32 %v1869, %v1896
        %v1966 = vmul.f32 %v1870, %v1901
        %v1967 = vmul.f32 %v1871, %v1906
        %v1968 = vmul.f32 %v1872, %v1911
        %v1969 = vmul.f32 %v1873, %v1916
        %v1970 = vmul.f32 %v1874, %v1921
        %v1971 = vmul.f32 %v1875, %v1926
        %v1972 = vmul.f32 %v1876, %v1931
        %v1973 = vmul.f32 %v1877, %v1936
        %v1974 = vmul.f32 %v1878, %v1941
        %v1975 = vmul.f32 %v1879, %v1946
        %v1976 = vmul.f32 %v1880, %v1951
        %v1977 = vmul.f32 %v1881, %v1956
        %v1978 = vmul.f32 %v1882, %v1961
        %s1979 = scalar_lea.vmem %s6, 4
        %v1980 = vld [vmem:[%s1979] sm:$0x7]
        %s1981 = scalar_lea.vmem [#allocation2], 384
        %v1982 = vld [vmem:[%s1981] sm:$0xff]
        %v1983 = vld [vmem:[%s1981 + $0x8] sm:$0xff]
        %v1984 = vld [vmem:[%s1981 + $0x10] sm:$0xff]
        %v1985 = vld [vmem:[%s1981 + $0x18] sm:$0xff]
        %v1986 = vld [vmem:[%s1981 + $0x20] sm:$0xff]
        %v1987 = vld [vmem:[%s1981 + $0x28] sm:$0xff]
        %v1988 = vld [vmem:[%s1981 + $0x30] sm:$0xff]
        %v1989 = vld [vmem:[%s1981 + $0x38] sm:$0xff]
        %v1990 = vld [vmem:[%s1981 + $0x40] sm:$0xff]
        %v1991 = vld [vmem:[%s1981 + $0x48] sm:$0xff]
        %v1992 = vld [vmem:[%s1981 + $0x50] sm:$0xff]
        %v1993 = vld [vmem:[%s1981 + $0x58] sm:$0xff]
        %v1994 = vld [vmem:[%s1981 + $0x60] sm:$0xff]
        %v1995 = vld [vmem:[%s1981 + $0x68] sm:$0xff]
        %v1996 = vld [vmem:[%s1981 + $0x70] sm:$0xff]
        %v1997 = vld [vmem:[%s1981 + $0x78] sm:$0xff]
        %v1998 = vld [vmem:[%s1981 + $0x80] sm:$0xff]
        %v1999 = vld [vmem:[%s1981 + $0x88] sm:$0xff]
        %v2000 = vld [vmem:[%s1981 + $0x90] sm:$0xff]
        %v2001 = vld [vmem:[%s1981 + $0x98] sm:$0xff]
        %v2002 = vld [vmem:[%s1981 + $0xa0] sm:$0xff]
        %v2003 = vld [vmem:[%s1981 + $0xa8] sm:$0xff]
        %v2004 = vld [vmem:[%s1981 + $0xb0] sm:$0xff]
        %v2005 = vld [vmem:[%s1981 + $0xb8] sm:$0xff]
        %v2006 = vld [vmem:[%s1981 + $0xc0] sm:$0xff]
        %v2007 = vld [vmem:[%s1981 + $0xc8] sm:$0xff]
        %v2008 = vld [vmem:[%s1981 + $0xd0] sm:$0xff]
        %v2009 = vld [vmem:[%s1981 + $0xd8] sm:$0xff]
        %v2010 = vld [vmem:[%s1981 + $0xe0] sm:$0xff]
        %v2011 = vld [vmem:[%s1981 + $0xe8] sm:$0xff]
        %v2012 = vld [vmem:[%s1981 + $0xf0] sm:$0xff]
        %v2013 = vld [vmem:[%s1981 + $0xf8] sm:$0xff]
        %v2014 = vld [vmem:[%s1981 + $0x100] sm:$0xff]
        %v2015 = vld [vmem:[%s1981 + $0x108] sm:$0xff]
        %v2016 = vld [vmem:[%s1981 + $0x110] sm:$0xff]
        %v2017 = vld [vmem:[%s1981 + $0x118] sm:$0xff]
        %v2018 = vld [vmem:[%s1981 + $0x120] sm:$0xff]
        %v2019 = vld [vmem:[%s1981 + $0x128] sm:$0xff]
        %v2020 = vld [vmem:[%s1981 + $0x130] sm:$0xff]
        %v2021 = vld [vmem:[%s1981 + $0x138] sm:$0xff]
        %v2022 = vld [vmem:[%s1981 + $0x140] sm:$0xff]
        %v2023 = vld [vmem:[%s1981 + $0x148] sm:$0xff]
        %v2024 = vld [vmem:[%s1981 + $0x150] sm:$0xff]
        %v2025 = vld [vmem:[%s1981 + $0x158] sm:$0xff]
        %v2026 = vld [vmem:[%s1981 + $0x160] sm:$0xff]
        %v2027 = vld [vmem:[%s1981 + $0x168] sm:$0xff]
        %v2028 = vld [vmem:[%s1981 + $0x170] sm:$0xff]
        %v2029 = vld [vmem:[%s1981 + $0x178] sm:$0xff]
        %2030 = vmatpush.msra.mxu0 %v2027
        %2031 = vmatpush.msra.mxu0 %v2024
        %2032 = vmatpush.msra.mxu0 %v2021
        %2033 = vmatpush.msra.mxu0 %v2018
        %2034 = vmatpush.msra.mxu0 %v2015
        %2035 = vmatpush.msra.mxu0 %v2012
        %2036 = vmatpush.msra.mxu0 %v2009
        %2037 = vmatpush.msra.mxu0 %v2006
        %2038 = vmatpush.msra.mxu0 %v2003
        %2039 = vmatpush.msra.mxu0 %v2000
        %2040 = vmatpush.msra.mxu0 %v1997
        %2041 = vmatpush.msra.mxu0 %v1994
        %2042 = vmatpush.msra.mxu0 %v1991
        %2043 = vmatpush.msra.mxu0 %v1988
        %2044 = vmatpush.msra.mxu0 %v1985
        %2045 = vmatpush.msra.mxu0 %v1982
        %2046 = vmatmul.f32.gmra.mxu0 %v1963
        %v2047 = vpop.f32.mrf.mxu0
        %v2048 = vadd.f32 0.0, %v2047
        %2049 = vmatmul.f32.gmra.mxu0 %v1964
        %v2050 = vpop.f32.mrf.mxu0
        %v2051 = vadd.f32 0.0, %v2050
        %2052 = vmatmul.f32.gmra.mxu0 %v1965
        %v2053 = vpop.f32.mrf.mxu0
        %v2054 = vadd.f32 0.0, %v2053
        %2055 = vmatmul.f32.gmra.mxu0 %v1966
        %v2056 = vpop.f32.mrf.mxu0
        %v2057 = vadd.f32 0.0, %v2056
        %2058 = vmatmul.f32.gmra.mxu0 %v1967
        %v2059 = vpop.f32.mrf.mxu0
        %v2060 = vadd.f32 0.0, %v2059
        %2061 = vmatmul.f32.gmra.mxu0 %v1968
        %v2062 = vpop.f32.mrf.mxu0
        %v2063 = vadd.f32 0.0, %v2062
        %2064 = vmatmul.f32.gmra.mxu0 %v1969
        %v2065 = vpop.f32.mrf.mxu0
        %v2066 = vadd.f32 0.0, %v2065
        %2067 = vmatmul.f32.gmra.mxu0 %v1970
        %v2068 = vpop.f32.mrf.mxu0
        %v2069 = vadd.f32 0.0, %v2068
        %2070 = vmatmul.f32.gmra.mxu0 %v1971
        %v2071 = vpop.f32.mrf.mxu0
        %v2072 = vadd.f32 0.0, %v2071
        %2073 = vmatmul.f32.gmra.mxu0 %v1972
        %v2074 = vpop.f32.mrf.mxu0
        %v2075 = vadd.f32 0.0, %v2074
        %2076 = vmatmul.f32.gmra.mxu0 %v1973
        %v2077 = vpop.f32.mrf.mxu0
        %v2078 = vadd.f32 0.0, %v2077
        %2079 = vmatmul.f32.gmra.mxu0 %v1974
        %v2080 = vpop.f32.mrf.mxu0
        %v2081 = vadd.f32 0.0, %v2080
        %2082 = vmatmul.f32.gmra.mxu0 %v1975
        %v2083 = vpop.f32.mrf.mxu0
        %v2084 = vadd.f32 0.0, %v2083
        %2085 = vmatmul.f32.gmra.mxu0 %v1976
        %v2086 = vpop.f32.mrf.mxu0
        %v2087 = vadd.f32 0.0, %v2086
        %2088 = vmatmul.f32.gmra.mxu0 %v1977
        %v2089 = vpop.f32.mrf.mxu0
        %v2090 = vadd.f32 0.0, %v2089
        %2091 = vmatmul.f32.gmra.mxu0 %v1978
        %v2092 = vpop.f32.mrf.mxu0
        %v2093 = vadd.f32 0.0, %v2092
        %2094 = vdwg.mxu0
        %2095 = vmatpush.msra.mxu0 %v2028
        %2096 = vmatpush.msra.mxu0 %v2025
        %2097 = vmatpush.msra.mxu0 %v2022
        %2098 = vmatpush.msra.mxu0 %v2019
        %2099 = vmatpush.msra.mxu0 %v2016
        %2100 = vmatpush.msra.mxu0 %v2013
        %2101 = vmatpush.msra.mxu0 %v2010
        %2102 = vmatpush.msra.mxu0 %v2007
        %2103 = vmatpush.msra.mxu0 %v2004
        %2104 = vmatpush.msra.mxu0 %v2001
        %2105 = vmatpush.msra.mxu0 %v1998
        %2106 = vmatpush.msra.mxu0 %v1995
        %2107 = vmatpush.msra.mxu0 %v1992
        %2108 = vmatpush.msra.mxu0 %v1989
        %2109 = vmatpush.msra.mxu0 %v1986
        %2110 = vmatpush.msra.mxu0 %v1983
        %2111 = vmatmul.f32.gmra.mxu0 %v1963
        %v2112 = vpop.f32.mrf.mxu0
        %v2113 = vadd.f32 0.0, %v2112
        %2114 = vmatmul.f32.gmra.mxu0 %v1964
        %v2115 = vpop.f32.mrf.mxu0
        %v2116 = vadd.f32 0.0, %v2115
        %2117 = vmatmul.f32.gmra.mxu0 %v1965
        %v2118 = vpop.f32.mrf.mxu0
        %v2119 = vadd.f32 0.0, %v2118
        %2120 = vmatmul.f32.gmra.mxu0 %v1966
        %v2121 = vpop.f32.mrf.mxu0
        %v2122 = vadd.f32 0.0, %v2121
        %2123 = vmatmul.f32.gmra.mxu0 %v1967
        %v2124 = vpop.f32.mrf.mxu0
        %v2125 = vadd.f32 0.0, %v2124
        %2126 = vmatmul.f32.gmra.mxu0 %v1968
        %v2127 = vpop.f32.mrf.mxu0
        %v2128 = vadd.f32 0.0, %v2127
        %2129 = vmatmul.f32.gmra.mxu0 %v1969
        %v2130 = vpop.f32.mrf.mxu0
        %v2131 = vadd.f32 0.0, %v2130
        %2132 = vmatmul.f32.gmra.mxu0 %v1970
        %v2133 = vpop.f32.mrf.mxu0
        %v2134 = vadd.f32 0.0, %v2133
        %2135 = vmatmul.f32.gmra.mxu0 %v1971
        %v2136 = vpop.f32.mrf.mxu0
        %v2137 = vadd.f32 0.0, %v2136
        %2138 = vmatmul.f32.gmra.mxu0 %v1972
        %v2139 = vpop.f32.mrf.mxu0
        %v2140 = vadd.f32 0.0, %v2139
        %2141 = vmatmul.f32.gmra.mxu0 %v1973
        %v2142 = vpop.f32.mrf.mxu0
        %v2143 = vadd.f32 0.0, %v2142
        %2144 = vmatmul.f32.gmra.mxu0 %v1974
        %v2145 = vpop.f32.mrf.mxu0
        %v2146 = vadd.f32 0.0, %v2145
        %2147 = vmatmul.f32.gmra.mxu0 %v1975
        %v2148 = vpop.f32.mrf.mxu0
        %v2149 = vadd.f32 0.0, %v2148
        %2150 = vmatmul.f32.gmra.mxu0 %v1976
        %v2151 = vpop.f32.mrf.mxu0
        %v2152 = vadd.f32 0.0, %v2151
        %2153 = vmatmul.f32.gmra.mxu0 %v1977
        %v2154 = vpop.f32.mrf.mxu0
        %v2155 = vadd.f32 0.0, %v2154
        %2156 = vmatmul.f32.gmra.mxu0 %v1978
        %v2157 = vpop.f32.mrf.mxu0
        %v2158 = vadd.f32 0.0, %v2157
        %2159 = vdwg.mxu0
        %2160 = vmatpush.msra.mxu0 %v2029
        %2161 = vmatpush.msra.mxu0 %v2026
        %2162 = vmatpush.msra.mxu0 %v2023
        %2163 = vmatpush.msra.mxu0 %v2020
        %2164 = vmatpush.msra.mxu0 %v2017
        %2165 = vmatpush.msra.mxu0 %v2014
        %2166 = vmatpush.msra.mxu0 %v2011
        %2167 = vmatpush.msra.mxu0 %v2008
        %2168 = vmatpush.msra.mxu0 %v2005
        %2169 = vmatpush.msra.mxu0 %v2002
        %2170 = vmatpush.msra.mxu0 %v1999
        %2171 = vmatpush.msra.mxu0 %v1996
        %2172 = vmatpush.msra.mxu0 %v1993
        %2173 = vmatpush.msra.mxu0 %v1990
        %2174 = vmatpush.msra.mxu0 %v1987
        %2175 = vmatpush.msra.mxu0 %v1984
        %2176 = vmatmul.f32.gmra.mxu0 %v1963
        %v2177 = vpop.f32.mrf.mxu0
        %v2178 = vadd.f32 0.0, %v2177
        %2179 = vmatmul.f32.gmra.mxu0 %v1964
        %v2180 = vpop.f32.mrf.mxu0
        %v2181 = vadd.f32 0.0, %v2180
        %2182 = vmatmul.f32.gmra.mxu0 %v1965
        %v2183 = vpop.f32.mrf.mxu0
        %v2184 = vadd.f32 0.0, %v2183
        %2185 = vmatmul.f32.gmra.mxu0 %v1966
        %v2186 = vpop.f32.mrf.mxu0
        %v2187 = vadd.f32 0.0, %v2186
        %2188 = vmatmul.f32.gmra.mxu0 %v1967
        %v2189 = vpop.f32.mrf.mxu0
        %v2190 = vadd.f32 0.0, %v2189
        %2191 = vmatmul.f32.gmra.mxu0 %v1968
        %v2192 = vpop.f32.mrf.mxu0
        %v2193 = vadd.f32 0.0, %v2192
        %2194 = vmatmul.f32.gmra.mxu0 %v1969
        %v2195 = vpop.f32.mrf.mxu0
        %v2196 = vadd.f32 0.0, %v2195
        %2197 = vmatmul.f32.gmra.mxu0 %v1970
        %v2198 = vpop.f32.mrf.mxu0
        %v2199 = vadd.f32 0.0, %v2198
        %2200 = vmatmul.f32.gmra.mxu0 %v1971
        %v2201 = vpop.f32.mrf.mxu0
        %v2202 = vadd.f32 0.0, %v2201
        %2203 = vmatmul.f32.gmra.mxu0 %v1972
        %v2204 = vpop.f32.mrf.mxu0
        %v2205 = vadd.f32 0.0, %v2204
        %2206 = vmatmul.f32.gmra.mxu0 %v1973
        %v2207 = vpop.f32.mrf.mxu0
        %v2208 = vadd.f32 0.0, %v2207
        %2209 = vmatmul.f32.gmra.mxu0 %v1974
        %v2210 = vpop.f32.mrf.mxu0
        %v2211 = vadd.f32 0.0, %v2210
        %2212 = vmatmul.f32.gmra.mxu0 %v1975
        %v2213 = vpop.f32.mrf.mxu0
        %v2214 = vadd.f32 0.0, %v2213
        %2215 = vmatmul.f32.gmra.mxu0 %v1976
        %v2216 = vpop.f32.mrf.mxu0
        %v2217 = vadd.f32 0.0, %v2216
        %2218 = vmatmul.f32.gmra.mxu0 %v1977
        %v2219 = vpop.f32.mrf.mxu0
        %v2220 = vadd.f32 0.0, %v2219
        %2221 = vmatmul.f32.gmra.mxu0 %v1978
        %v2222 = vpop.f32.mrf.mxu0
        %v2223 = vadd.f32 0.0, %v2222
        %2224 = vdwg.mxu0
        %vm2225 = vcmp.ge.s32.totalorder %v589, 2
        %vm2226 = vcmp.ge.s32.totalorder %v590, 2
        %vm2227 = vcmp.ge.s32.totalorder %v591, 2
        %vm2228 = vcmp.ge.s32.totalorder %v592, 2
        %vm2229 = vcmp.ge.s32.totalorder %v593, 2
        %vm2230 = vcmp.ge.s32.totalorder %v594, 2
        %vm2231 = vcmp.ge.s32.totalorder %v595, 2
        %vm2232 = vcmp.ge.s32.totalorder %v596, 2
        %vm2233 = vcmp.ge.s32.totalorder %v597, 2
        %vm2234 = vcmp.ge.s32.totalorder %v598, 2
        %vm2235 = vcmp.ge.s32.totalorder %v599, 2
        %vm2236 = vcmp.ge.s32.totalorder %v600, 2
        %vm2237 = vcmp.ge.s32.totalorder %v601, 2
        %vm2238 = vcmp.ge.s32.totalorder %v602, 2
        %vm2239 = vcmp.ge.s32.totalorder %v603, 2
        %vm2240 = vcmp.ge.s32.totalorder %v604, 2
        %v2241 = vsel %vm2225, 1, 0
        %v2242 = vsel %vm2226, 1, 0
        %v2243 = vsel %vm2227, 1, 0
        %v2244 = vsel %vm2228, 1, 0
        %v2245 = vsel %vm2229, 1, 0
        %v2246 = vsel %vm2230, 1, 0
        %v2247 = vsel %vm2231, 1, 0
        %v2248 = vsel %vm2232, 1, 0
        %v2249 = vsel %vm2233, 1, 0
        %v2250 = vsel %vm2234, 1, 0
        %v2251 = vsel %vm2235, 1, 0
        %v2252 = vsel %vm2236, 1, 0
        %v2253 = vsel %vm2237, 1, 0
        %v2254 = vsel %vm2238, 1, 0
        %v2255 = vsel %vm2239, 1, 0
        %v2256 = vsel %vm2240, 1, 0
        %v2257 = vcvt.s32.f32 %v2241
        %v2258 = vcvt.s32.f32 %v2242
        %v2259 = vcvt.s32.f32 %v2243
        %v2260 = vcvt.s32.f32 %v2244
        %v2261 = vcvt.s32.f32 %v2245
        %v2262 = vcvt.s32.f32 %v2246
        %v2263 = vcvt.s32.f32 %v2247
        %v2264 = vcvt.s32.f32 %v2248
        %v2265 = vcvt.s32.f32 %v2249
        %v2266 = vcvt.s32.f32 %v2250
        %v2267 = vcvt.s32.f32 %v2251
        %v2268 = vcvt.s32.f32 %v2252
        %v2269 = vcvt.s32.f32 %v2253
        %v2270 = vcvt.s32.f32 %v2254
        %v2271 = vcvt.s32.f32 %v2255
        %v2272 = vcvt.s32.f32 %v2256
        %vm2273 = vcmp.lt.s32.totalorder %v589, 14
        %vm2274 = vcmp.lt.s32.totalorder %v590, 14
        %vm2275 = vcmp.lt.s32.totalorder %v591, 14
        %vm2276 = vcmp.lt.s32.totalorder %v592, 14
        %vm2277 = vcmp.lt.s32.totalorder %v593, 14
        %vm2278 = vcmp.lt.s32.totalorder %v594, 14
        %vm2279 = vcmp.lt.s32.totalorder %v595, 14
        %vm2280 = vcmp.lt.s32.totalorder %v596, 14
        %vm2281 = vcmp.lt.s32.totalorder %v597, 14
        %vm2282 = vcmp.lt.s32.totalorder %v598, 14
        %vm2283 = vcmp.lt.s32.totalorder %v599, 14
        %vm2284 = vcmp.lt.s32.totalorder %v600, 14
        %vm2285 = vcmp.lt.s32.totalorder %v601, 14
        %vm2286 = vcmp.lt.s32.totalorder %v602, 14
        %vm2287 = vcmp.lt.s32.totalorder %v603, 14
        %vm2288 = vcmp.lt.s32.totalorder %v604, 14
        %v2289 = vsel %vm2273, 1, 0
        %v2290 = vsel %vm2274, 1, 0
        %v2291 = vsel %vm2275, 1, 0
        %v2292 = vsel %vm2276, 1, 0
        %v2293 = vsel %vm2277, 1, 0
        %v2294 = vsel %vm2278, 1, 0
        %v2295 = vsel %vm2279, 1, 0
        %v2296 = vsel %vm2280, 1, 0
        %v2297 = vsel %vm2281, 1, 0
        %v2298 = vsel %vm2282, 1, 0
        %v2299 = vsel %vm2283, 1, 0
        %v2300 = vsel %vm2284, 1, 0
        %v2301 = vsel %vm2285, 1, 0
        %v2302 = vsel %vm2286, 1, 0
        %v2303 = vsel %vm2287, 1, 0
        %v2304 = vsel %vm2288, 1, 0
        %v2305 = vcvt.s32.f32 %v2289
        %v2306 = vcvt.s32.f32 %v2290
        %v2307 = vcvt.s32.f32 %v2291
        %v2308 = vcvt.s32.f32 %v2292
        %v2309 = vcvt.s32.f32 %v2293
        %v2310 = vcvt.s32.f32 %v2294
        %v2311 = vcvt.s32.f32 %v2295
        %v2312 = vcvt.s32.f32 %v2296
        %v2313 = vcvt.s32.f32 %v2297
        %v2314 = vcvt.s32.f32 %v2298
        %v2315 = vcvt.s32.f32 %v2299
        %v2316 = vcvt.s32.f32 %v2300
        %v2317 = vcvt.s32.f32 %v2301
        %v2318 = vcvt.s32.f32 %v2302
        %v2319 = vcvt.s32.f32 %v2303
        %v2320 = vcvt.s32.f32 %v2304
        %v2321 = vrot.slane %v2113, 6
        %v2322 = vrot.slane %v2116, 6
        %v2323 = vrot.slane %v2119, 6
        %v2324 = vrot.slane %v2122, 6
        %v2325 = vrot.slane %v2125, 6
        %v2326 = vrot.slane %v2128, 6
        %v2327 = vrot.slane %v2131, 6
        %v2328 = vrot.slane %v2134, 6
        %v2329 = vrot.slane %v2137, 6
        %v2330 = vrot.slane %v2140, 6
        %v2331 = vrot.slane %v2143, 6
        %v2332 = vrot.slane %v2146, 6
        %v2333 = vrot.slane %v2149, 6
        %v2334 = vrot.slane %v2152, 6
        %v2335 = vrot.slane %v2155, 6
        %v2336 = vrot.slane %v2158, 6
        %vm2337 = vcmp.lt.s32.totalorder %v589, 2
        %v2338 = vsel %vm2337, %v2335, %v2336
        %v2339 = vsel %vm2337, %v2334, %v2335
        %v2340 = vsel %vm2337, %v2333, %v2334
        %v2341 = vsel %vm2337, %v2332, %v2333
        %v2342 = vsel %vm2337, %v2331, %v2332
        %v2343 = vsel %vm2337, %v2330, %v2331
        %v2344 = vsel %vm2337, %v2329, %v2330
        %v2345 = vsel %vm2337, %v2328, %v2329
        %v2346 = vsel %vm2337, %v2327, %v2328
        %v2347 = vsel %vm2337, %v2326, %v2327
        %v2348 = vsel %vm2337, %v2325, %v2326
        %v2349 = vsel %vm2337, %v2324, %v2325
        %v2350 = vsel %vm2337, %v2323, %v2324
        %v2351 = vsel %vm2337, %v2322, %v2323
        %v2352 = vsel %vm2337, %v2321, %v2322
        %v2353 = vsel %vm2337, %v2336, %v2321
        %v2354 = vmul.f32 %v2353, %v2257
        %v2355 = vmul.f32 %v2352, %v2258
        %v2356 = vmul.f32 %v2351, %v2259
        %v2357 = vmul.f32 %v2350, %v2260
        %v2358 = vmul.f32 %v2349, %v2261
        %v2359 = vmul.f32 %v2348, %v2262
        %v2360 = vmul.f32 %v2347, %v2263
        %v2361 = vmul.f32 %v2346, %v2264
        %v2362 = vmul.f32 %v2345, %v2265
        %v2363 = vmul.f32 %v2344, %v2266
        %v2364 = vmul.f32 %v2343, %v2267
        %v2365 = vmul.f32 %v2342, %v2268
        %v2366 = vmul.f32 %v2341, %v2269
        %v2367 = vmul.f32 %v2340, %v2270
        %v2368 = vmul.f32 %v2339, %v2271
        %v2369 = vmul.f32 %v2338, %v2272
        %v2370 = vrot.slane %v2113, 2
        %v2371 = vrot.slane %v2116, 2
        %v2372 = vrot.slane %v2119, 2
        %v2373 = vrot.slane %v2122, 2
        %v2374 = vrot.slane %v2125, 2
        %v2375 = vrot.slane %v2128, 2
        %v2376 = vrot.slane %v2131, 2
        %v2377 = vrot.slane %v2134, 2
        %v2378 = vrot.slane %v2137, 2
        %v2379 = vrot.slane %v2140, 2
        %v2380 = vrot.slane %v2143, 2
        %v2381 = vrot.slane %v2146, 2
        %v2382 = vrot.slane %v2149, 2
        %v2383 = vrot.slane %v2152, 2
        %v2384 = vrot.slane %v2155, 2
        %v2385 = vrot.slane %v2158, 2
        %vm2386 = vcmp.lt.s32.totalorder %v589, 6
        %v2387 = vsel %vm2386, %v2384, %v2385
        %v2388 = vsel %vm2386, %v2383, %v2384
        %v2389 = vsel %vm2386, %v2382, %v2383
        %v2390 = vsel %vm2386, %v2381, %v2382
        %v2391 = vsel %vm2386, %v2380, %v2381
        %v2392 = vsel %vm2386, %v2379, %v2380
        %v2393 = vsel %vm2386, %v2378, %v2379
        %v2394 = vsel %vm2386, %v2377, %v2378
        %v2395 = vsel %vm2386, %v2376, %v2377
        %v2396 = vsel %vm2386, %v2375, %v2376
        %v2397 = vsel %vm2386, %v2374, %v2375
        %v2398 = vsel %vm2386, %v2373, %v2374
        %v2399 = vsel %vm2386, %v2372, %v2373
        %v2400 = vsel %vm2386, %v2371, %v2372
        %v2401 = vsel %vm2386, %v2370, %v2371
        %v2402 = vsel %vm2386, %v2385, %v2370
        %v2403 = vmul.f32 %v2401, %v2305
        %v2404 = vmul.f32 %v2400, %v2306
        %v2405 = vmul.f32 %v2399, %v2307
        %v2406 = vmul.f32 %v2398, %v2308
        %v2407 = vmul.f32 %v2397, %v2309
        %v2408 = vmul.f32 %v2396, %v2310
        %v2409 = vmul.f32 %v2395, %v2311
        %v2410 = vmul.f32 %v2394, %v2312
        %v2411 = vmul.f32 %v2393, %v2313
        %v2412 = vmul.f32 %v2392, %v2314
        %v2413 = vmul.f32 %v2391, %v2315
        %v2414 = vmul.f32 %v2390, %v2316
        %v2415 = vmul.f32 %v2389, %v2317
        %v2416 = vmul.f32 %v2388, %v2318
        %v2417 = vmul.f32 %v2387, %v2319
        %v2418 = vmul.f32 %v2402, %v2320
        %v2419 = vrot.slane %v2178, 6
        %v2420 = vrot.slane %v2181, 6
        %v2421 = vrot.slane %v2184, 6
        %v2422 = vrot.slane %v2187, 6
        %v2423 = vrot.slane %v2190, 6
        %v2424 = vrot.slane %v2193, 6
        %v2425 = vrot.slane %v2196, 6
        %v2426 = vrot.slane %v2199, 6
        %v2427 = vrot.slane %v2202, 6
        %v2428 = vrot.slane %v2205, 6
        %v2429 = vrot.slane %v2208, 6
        %v2430 = vrot.slane %v2211, 6
        %v2431 = vrot.slane %v2214, 6
        %v2432 = vrot.slane %v2217, 6
        %v2433 = vrot.slane %v2220, 6
        %v2434 = vrot.slane %v2223, 6
        %v2435 = vsel %vm2337, %v2433, %v2434
        %v2436 = vsel %vm2337, %v2432, %v2433
        %v2437 = vsel %vm2337, %v2431, %v2432
        %v2438 = vsel %vm2337, %v2430, %v2431
        %v2439 = vsel %vm2337, %v2429, %v2430
        %v2440 = vsel %vm2337, %v2428, %v2429
        %v2441 = vsel %vm2337, %v2427, %v2428
        %v2442 = vsel %vm2337, %v2426, %v2427
        %v2443 = vsel %vm2337, %v2425, %v2426
        %v2444 = vsel %vm2337, %v2424, %v2425
        %v2445 = vsel %vm2337, %v2423, %v2424
        %v2446 = vsel %vm2337, %v2422, %v2423
        %v2447 = vsel %vm2337, %v2421, %v2422
        %v2448 = vsel %vm2337, %v2420, %v2421
        %v2449 = vsel %vm2337, %v2419, %v2420
        %v2450 = vsel %vm2337, %v2434, %v2419
        %v2451 = vmul.f32 %v2450, %v2257
        %v2452 = vmul.f32 %v2449, %v2258
        %v2453 = vmul.f32 %v2448, %v2259
        %v2454 = vmul.f32 %v2447, %v2260
        %v2455 = vmul.f32 %v2446, %v2261
        %v2456 = vmul.f32 %v2445, %v2262
        %v2457 = vmul.f32 %v2444, %v2263
        %v2458 = vmul.f32 %v2443, %v2264
        %v2459 = vmul.f32 %v2442, %v2265
        %v2460 = vmul.f32 %v2441, %v2266
        %v2461 = vmul.f32 %v2440, %v2267
        %v2462 = vmul.f32 %v2439, %v2268
        %v2463 = vmul.f32 %v2438, %v2269
        %v2464 = vmul.f32 %v2437, %v2270
        %v2465 = vmul.f32 %v2436, %v2271
        %v2466 = vmul.f32 %v2435, %v2272
        %v2467 = vperm.slane %v1980, 0
        %v2468 = vadd.f32 %v2451, %v2467
        %v2469 = vadd.f32 %v2452, %v2467
        %v2470 = vadd.f32 %v2453, %v2467
        %v2471 = vadd.f32 %v2454, %v2467
        %v2472 = vadd.f32 %v2455, %v2467
        %v2473 = vadd.f32 %v2456, %v2467
        %v2474 = vadd.f32 %v2457, %v2467
        %v2475 = vadd.f32 %v2458, %v2467
        %v2476 = vadd.f32 %v2459, %v2467
        %v2477 = vadd.f32 %v2460, %v2467
        %v2478 = vadd.f32 %v2461, %v2467
        %v2479 = vadd.f32 %v2462, %v2467
        %v2480 = vadd.f32 %v2463, %v2467
        %v2481 = vadd.f32 %v2464, %v2467
        %v2482 = vadd.f32 %v2465, %v2467
        %v2483 = vadd.f32 %v2466, %v2467
        %v2484 = vperm.slane %v1980, 1
        %v2485 = vadd.f32 %v2178, %v2484
        %v2486 = vadd.f32 %v2181, %v2484
        %v2487 = vadd.f32 %v2184, %v2484
        %v2488 = vadd.f32 %v2187, %v2484
        %v2489 = vadd.f32 %v2190, %v2484
        %v2490 = vadd.f32 %v2193, %v2484
        %v2491 = vadd.f32 %v2196, %v2484
        %v2492 = vadd.f32 %v2199, %v2484
        %v2493 = vadd.f32 %v2202, %v2484
        %v2494 = vadd.f32 %v2205, %v2484
        %v2495 = vadd.f32 %v2208, %v2484
        %v2496 = vadd.f32 %v2211, %v2484
        %v2497 = vadd.f32 %v2214, %v2484
        %v2498 = vadd.f32 %v2217, %v2484
        %v2499 = vadd.f32 %v2220, %v2484
        %v2500 = vadd.f32 %v2223, %v2484
        %v2501 = vrot.slane %v2178, 2
        %v2502 = vrot.slane %v2181, 2
        %v2503 = vrot.slane %v2184, 2
        %v2504 = vrot.slane %v2187, 2
        %v2505 = vrot.slane %v2190, 2
        %v2506 = vrot.slane %v2193, 2
        %v2507 = vrot.slane %v2196, 2
        %v2508 = vrot.slane %v2199, 2
        %v2509 = vrot.slane %v2202, 2
        %v2510 = vrot.slane %v2205, 2
        %v2511 = vrot.slane %v2208, 2
        %v2512 = vrot.slane %v2211, 2
        %v2513 = vrot.slane %v2214, 2
        %v2514 = vrot.slane %v2217, 2
        %v2515 = vrot.slane %v2220, 2
        %v2516 = vrot.slane %v2223, 2
        %v2517 = vsel %vm2386, %v2515, %v2516
        %v2518 = vsel %vm2386, %v2514, %v2515
        %v2519 = vsel %vm2386, %v2513, %v2514
        %v2520 = vsel %vm2386, %v2512, %v2513
        %v2521 = vsel %vm2386, %v2511, %v2512
        %v2522 = vsel %vm2386, %v2510, %v2511
        %v2523 = vsel %vm2386, %v2509, %v2510
        %v2524 = vsel %vm2386, %v2508, %v2509
        %v2525 = vsel %vm2386, %v2507, %v2508
        %v2526 = vsel %vm2386, %v2506, %v2507
        %v2527 = vsel %vm2386, %v2505, %v2506
        %v2528 = vsel %vm2386, %v2504, %v2505
        %v2529 = vsel %vm2386, %v2503, %v2504
        %v2530 = vsel %vm2386, %v2502, %v2503
        %v2531 = vsel %vm2386, %v2501, %v2502
        %v2532 = vsel %vm2386, %v2516, %v2501
        %v2533 = vmul.f32 %v2531, %v2305
        %v2534 = vmul.f32 %v2530, %v2306
        %v2535 = vmul.f32 %v2529, %v2307
        %v2536 = vmul.f32 %v2528, %v2308
        %v2537 = vmul.f32 %v2527, %v2309
        %v2538 = vmul.f32 %v2526, %v2310
        %v2539 = vmul.f32 %v2525, %v2311
        %v2540 = vmul.f32 %v2524, %v2312
        %v2541 = vmul.f32 %v2523, %v2313
        %v2542 = vmul.f32 %v2522, %v2314
        %v2543 = vmul.f32 %v2521, %v2315
        %v2544 = vmul.f32 %v2520, %v2316
        %v2545 = vmul.f32 %v2519, %v2317
        %v2546 = vmul.f32 %v2518, %v2318
        %v2547 = vmul.f32 %v2517, %v2319
        %v2548 = vmul.f32 %v2532, %v2320
        %v2549 = vperm.slane %v1980, 2
        %v2550 = vadd.f32 %v2533, %v2549
        %v2551 = vadd.f32 %v2534, %v2549
        %v2552 = vadd.f32 %v2535, %v2549
        %v2553 = vadd.f32 %v2536, %v2549
        %v2554 = vadd.f32 %v2537, %v2549
        %v2555 = vadd.f32 %v2538, %v2549
        %v2556 = vadd.f32 %v2539, %v2549
        %v2557 = vadd.f32 %v2540, %v2549
        %v2558 = vadd.f32 %v2541, %v2549
        %v2559 = vadd.f32 %v2542, %v2549
        %v2560 = vadd.f32 %v2543, %v2549
        %v2561 = vadd.f32 %v2544, %v2549
        %v2562 = vadd.f32 %v2545, %v2549
        %v2563 = vadd.f32 %v2546, %v2549
        %v2564 = vadd.f32 %v2547, %v2549
        %v2565 = vadd.f32 %v2548, %v2549
        %v2566 = vmul.f32 %v2048, %v2354
        %v2567 = vmul.f32 %v2051, %v2355
        %v2568 = vmul.f32 %v2054, %v2356
        %v2569 = vmul.f32 %v2057, %v2357
        %v2570 = vmul.f32 %v2060, %v2358
        %v2571 = vmul.f32 %v2063, %v2359
        %v2572 = vmul.f32 %v2066, %v2360
        %v2573 = vmul.f32 %v2069, %v2361
        %v2574 = vmul.f32 %v2072, %v2362
        %v2575 = vmul.f32 %v2075, %v2363
        %v2576 = vmul.f32 %v2078, %v2364
        %v2577 = vmul.f32 %v2081, %v2365
        %v2578 = vmul.f32 %v2084, %v2366
        %v2579 = vmul.f32 %v2087, %v2367
        %v2580 = vmul.f32 %v2090, %v2368
        %v2581 = vmul.f32 %v2093, %v2369
        %v2582 = vmul.f32 %v2048, %v2113
        %v2583 = vmul.f32 %v2051, %v2116
        %v2584 = vmul.f32 %v2054, %v2119
        %v2585 = vmul.f32 %v2057, %v2122
        %v2586 = vmul.f32 %v2060, %v2125
        %v2587 = vmul.f32 %v2063, %v2128
        %v2588 = vmul.f32 %v2066, %v2131
        %v2589 = vmul.f32 %v2069, %v2134
        %v2590 = vmul.f32 %v2072, %v2137
        %v2591 = vmul.f32 %v2075, %v2140
        %v2592 = vmul.f32 %v2078, %v2143
        %v2593 = vmul.f32 %v2081, %v2146
        %v2594 = vmul.f32 %v2084, %v2149
        %v2595 = vmul.f32 %v2087, %v2152
        %v2596 = vmul.f32 %v2090, %v2155
        %v2597 = vmul.f32 %v2093, %v2158
        %v2598 = vmul.f32 %v2048, %v2403
        %v2599 = vmul.f32 %v2051, %v2404
        %v2600 = vmul.f32 %v2054, %v2405
        %v2601 = vmul.f32 %v2057, %v2406
        %v2602 = vmul.f32 %v2060, %v2407
        %v2603 = vmul.f32 %v2063, %v2408
        %v2604 = vmul.f32 %v2066, %v2409
        %v2605 = vmul.f32 %v2069, %v2410
        %v2606 = vmul.f32 %v2072, %v2411
        %v2607 = vmul.f32 %v2075, %v2412
        %v2608 = vmul.f32 %v2078, %v2413
        %v2609 = vmul.f32 %v2081, %v2414
        %v2610 = vmul.f32 %v2084, %v2415
        %v2611 = vmul.f32 %v2087, %v2416
        %v2612 = vmul.f32 %v2090, %v2417
        %v2613 = vmul.f32 %v2093, %v2418
        %v2614 = vmax.f32 %v2566, %v2582
        %v2615 = vmax.f32 %v2567, %v2583
        %v2616 = vmax.f32 %v2568, %v2584
        %v2617 = vmax.f32 %v2569, %v2585
        %v2618 = vmax.f32 %v2570, %v2586
        %v2619 = vmax.f32 %v2571, %v2587
        %v2620 = vmax.f32 %v2572, %v2588
        %v2621 = vmax.f32 %v2573, %v2589
        %v2622 = vmax.f32 %v2574, %v2590
        %v2623 = vmax.f32 %v2575, %v2591
        %v2624 = vmax.f32 %v2576, %v2592
        %v2625 = vmax.f32 %v2577, %v2593
        %v2626 = vmax.f32 %v2578, %v2594
        %v2627 = vmax.f32 %v2579, %v2595
        %v2628 = vmax.f32 %v2580, %v2596
        %v2629 = vmax.f32 %v2581, %v2597
        %v2630 = vmax.f32 %v2614, %v2598
        %v2631 = vmax.f32 %v2615, %v2599
        %v2632 = vmax.f32 %v2616, %v2600
        %v2633 = vmax.f32 %v2617, %v2601
        %v2634 = vmax.f32 %v2618, %v2602
        %v2635 = vmax.f32 %v2619, %v2603
        %v2636 = vmax.f32 %v2620, %v2604
        %v2637 = vmax.f32 %v2621, %v2605
        %v2638 = vmax.f32 %v2622, %v2606
        %v2639 = vmax.f32 %v2623, %v2607
        %v2640 = vmax.f32 %v2624, %v2608
        %v2641 = vmax.f32 %v2625, %v2609
        %v2642 = vmax.f32 %v2626, %v2610
        %v2643 = vmax.f32 %v2627, %v2611
        %v2644 = vmax.f32 %v2628, %v2612
        %v2645 = vmax.f32 %v2629, %v2613
        %v2646 = vsub.f32 %v2566, %v2630
        %v2647 = vsub.f32 %v2567, %v2631
        %v2648 = vsub.f32 %v2568, %v2632
        %v2649 = vsub.f32 %v2569, %v2633
        %v2650 = vsub.f32 %v2570, %v2634
        %v2651 = vsub.f32 %v2571, %v2635
        %v2652 = vsub.f32 %v2572, %v2636
        %v2653 = vsub.f32 %v2573, %v2637
        %v2654 = vsub.f32 %v2574, %v2638
        %v2655 = vsub.f32 %v2575, %v2639
        %v2656 = vsub.f32 %v2576, %v2640
        %v2657 = vsub.f32 %v2577, %v2641
        %v2658 = vsub.f32 %v2578, %v2642
        %v2659 = vsub.f32 %v2579, %v2643
        %v2660 = vsub.f32 %v2580, %v2644
        %v2661 = vsub.f32 %v2581, %v2645
        %v2662 = vmul.f32 %v2646, 1.442695
        %v2663 = vpow.pop %v2662
        %v2664 = vmul.f32 %v2647, 1.442695
        %v2665 = vpow.pop %v2664
        %v2666 = vmul.f32 %v2648, 1.442695
        %v2667 = vpow.pop %v2666
        %v2668 = vmul.f32 %v2649, 1.442695
        %v2669 = vpow.pop %v2668
        %v2670 = vmul.f32 %v2650, 1.442695
        %v2671 = vpow.pop %v2670
        %v2672 = vmul.f32 %v2651, 1.442695
        %v2673 = vpow.pop %v2672
        %v2674 = vmul.f32 %v2652, 1.442695
        %v2675 = vpow.pop %v2674
        %v2676 = vmul.f32 %v2653, 1.442695
        %v2677 = vpow.pop %v2676
        %v2678 = vmul.f32 %v2654, 1.442695
        %v2679 = vpow.pop %v2678
        %v2680 = vmul.f32 %v2655, 1.442695
        %v2681 = vpow.pop %v2680
        %v2682 = vmul.f32 %v2656, 1.442695
        %v2683 = vpow.pop %v2682
        %v2684 = vmul.f32 %v2657, 1.442695
        %v2685 = vpow.pop %v2684
        %v2686 = vmul.f32 %v2658, 1.442695
        %v2687 = vpow.pop %v2686
        %v2688 = vmul.f32 %v2659, 1.442695
        %v2689 = vpow.pop %v2688
        %v2690 = vmul.f32 %v2660, 1.442695
        %v2691 = vpow.pop %v2690
        %v2692 = vmul.f32 %v2661, 1.442695
        %v2693 = vpow.pop %v2692
        %v2694 = vsub.f32 %v2582, %v2630
        %v2695 = vsub.f32 %v2583, %v2631
        %v2696 = vsub.f32 %v2584, %v2632
        %v2697 = vsub.f32 %v2585, %v2633
        %v2698 = vsub.f32 %v2586, %v2634
        %v2699 = vsub.f32 %v2587, %v2635
        %v2700 = vsub.f32 %v2588, %v2636
        %v2701 = vsub.f32 %v2589, %v2637
        %v2702 = vsub.f32 %v2590, %v2638
        %v2703 = vsub.f32 %v2591, %v2639
        %v2704 = vsub.f32 %v2592, %v2640
        %v2705 = vsub.f32 %v2593, %v2641
        %v2706 = vsub.f32 %v2594, %v2642
        %v2707 = vsub.f32 %v2595, %v2643
        %v2708 = vsub.f32 %v2596, %v2644
        %v2709 = vsub.f32 %v2597, %v2645
        %v2710 = vmul.f32 %v2694, 1.442695
        %v2711 = vpow.pop %v2710
        %v2712 = vmul.f32 %v2695, 1.442695
        %v2713 = vpow.pop %v2712
        %v2714 = vmul.f32 %v2696, 1.442695
        %v2715 = vpow.pop %v2714
        %v2716 = vmul.f32 %v2697, 1.442695
        %v2717 = vpow.pop %v2716
        %v2718 = vmul.f32 %v2698, 1.442695
        %v2719 = vpow.pop %v2718
        %v2720 = vmul.f32 %v2699, 1.442695
        %v2721 = vpow.pop %v2720
        %v2722 = vmul.f32 %v2700, 1.442695
        %v2723 = vpow.pop %v2722
        %v2724 = vmul.f32 %v2701, 1.442695
        %v2725 = vpow.pop %v2724
        %v2726 = vmul.f32 %v2702, 1.442695
        %v2727 = vpow.pop %v2726
        %v2728 = vmul.f32 %v2703, 1.442695
        %v2729 = vpow.pop %v2728
        %v2730 = vmul.f32 %v2704, 1.442695
        %v2731 = vpow.pop %v2730
        %v2732 = vmul.f32 %v2705, 1.442695
        %v2733 = vpow.pop %v2732
        %v2734 = vmul.f32 %v2706, 1.442695
        %v2735 = vpow.pop %v2734
        %v2736 = vmul.f32 %v2707, 1.442695
        %v2737 = vpow.pop %v2736
        %v2738 = vmul.f32 %v2708, 1.442695
        %v2739 = vpow.pop %v2738
        %v2740 = vmul.f32 %v2709, 1.442695
        %v2741 = vpow.pop %v2740
        %v2742 = vsub.f32 %v2598, %v2630
        %v2743 = vsub.f32 %v2599, %v2631
        %v2744 = vsub.f32 %v2600, %v2632
        %v2745 = vsub.f32 %v2601, %v2633
        %v2746 = vsub.f32 %v2602, %v2634
        %v2747 = vsub.f32 %v2603, %v2635
        %v2748 = vsub.f32 %v2604, %v2636
        %v2749 = vsub.f32 %v2605, %v2637
        %v2750 = vsub.f32 %v2606, %v2638
        %v2751 = vsub.f32 %v2607, %v2639
        %v2752 = vsub.f32 %v2608, %v2640
        %v2753 = vsub.f32 %v2609, %v2641
        %v2754 = vsub.f32 %v2610, %v2642
        %v2755 = vsub.f32 %v2611, %v2643
        %v2756 = vsub.f32 %v2612, %v2644
        %v2757 = vsub.f32 %v2613, %v2645
        %v2758 = vmul.f32 %v2742, 1.442695
        %v2759 = vpow.pop %v2758
        %v2760 = vmul.f32 %v2743, 1.442695
        %v2761 = vpow.pop %v2760
        %v2762 = vmul.f32 %v2744, 1.442695
        %v2763 = vpow.pop %v2762
        %v2764 = vmul.f32 %v2745, 1.442695
        %v2765 = vpow.pop %v2764
        %v2766 = vmul.f32 %v2746, 1.442695
        %v2767 = vpow.pop %v2766
        %v2768 = vmul.f32 %v2747, 1.442695
        %v2769 = vpow.pop %v2768
        %v2770 = vmul.f32 %v2748, 1.442695
        %v2771 = vpow.pop %v2770
        %v2772 = vmul.f32 %v2749, 1.442695
        %v2773 = vpow.pop %v2772
        %v2774 = vmul.f32 %v2750, 1.442695
        %v2775 = vpow.pop %v2774
        %v2776 = vmul.f32 %v2751, 1.442695
        %v2777 = vpow.pop %v2776
        %v2778 = vmul.f32 %v2752, 1.442695
        %v2779 = vpow.pop %v2778
        %v2780 = vmul.f32 %v2753, 1.442695
        %v2781 = vpow.pop %v2780
        %v2782 = vmul.f32 %v2754, 1.442695
        %v2783 = vpow.pop %v2782
        %v2784 = vmul.f32 %v2755, 1.442695
        %v2785 = vpow.pop %v2784
        %v2786 = vmul.f32 %v2756, 1.442695
        %v2787 = vpow.pop %v2786
        %v2788 = vmul.f32 %v2757, 1.442695
        %v2789 = vpow.pop %v2788
        %v2790 = vadd.f32 %v2663, %v2711
        %v2791 = vadd.f32 %v2665, %v2713
        %v2792 = vadd.f32 %v2667, %v2715
        %v2793 = vadd.f32 %v2669, %v2717
        %v2794 = vadd.f32 %v2671, %v2719
        %v2795 = vadd.f32 %v2673, %v2721
        %v2796 = vadd.f32 %v2675, %v2723
        %v2797 = vadd.f32 %v2677, %v2725
        %v2798 = vadd.f32 %v2679, %v2727
        %v2799 = vadd.f32 %v2681, %v2729
        %v2800 = vadd.f32 %v2683, %v2731
        %v2801 = vadd.f32 %v2685, %v2733
        %v2802 = vadd.f32 %v2687, %v2735
        %v2803 = vadd.f32 %v2689, %v2737
        %v2804 = vadd.f32 %v2691, %v2739
        %v2805 = vadd.f32 %v2693, %v2741
        %v2806 = vadd.f32 %v2790, %v2759
        %v2807 = vadd.f32 %v2791, %v2761
        %v2808 = vadd.f32 %v2792, %v2763
        %v2809 = vadd.f32 %v2793, %v2765
        %v2810 = vadd.f32 %v2794, %v2767
        %v2811 = vadd.f32 %v2795, %v2769
        %v2812 = vadd.f32 %v2796, %v2771
        %v2813 = vadd.f32 %v2797, %v2773
        %v2814 = vadd.f32 %v2798, %v2775
        %v2815 = vadd.f32 %v2799, %v2777
        %v2816 = vadd.f32 %v2800, %v2779
        %v2817 = vadd.f32 %v2801, %v2781
        %v2818 = vadd.f32 %v2802, %v2783
        %v2819 = vadd.f32 %v2803, %v2785
        %v2820 = vadd.f32 %v2804, %v2787
        %v2821 = vadd.f32 %v2805, %v2789
        %v2822 = vmul.f32 %v2663, %v2468
        %v2823 = vmul.f32 %v2665, %v2469
        %v2824 = vmul.f32 %v2667, %v2470
        %v2825 = vmul.f32 %v2669, %v2471
        %v2826 = vmul.f32 %v2671, %v2472
        %v2827 = vmul.f32 %v2673, %v2473
        %v2828 = vmul.f32 %v2675, %v2474
        %v2829 = vmul.f32 %v2677, %v2475
        %v2830 = vmul.f32 %v2679, %v2476
        %v2831 = vmul.f32 %v2681, %v2477
        %v2832 = vmul.f32 %v2683, %v2478
        %v2833 = vmul.f32 %v2685, %v2479
        %v2834 = vmul.f32 %v2687, %v2480
        %v2835 = vmul.f32 %v2689, %v2481
        %v2836 = vmul.f32 %v2691, %v2482
        %v2837 = vmul.f32 %v2693, %v2483
        %v2838 = vmul.f32 %v2711, %v2485
        %v2839 = vmul.f32 %v2713, %v2486
        %v2840 = vmul.f32 %v2715, %v2487
        %v2841 = vmul.f32 %v2717, %v2488
        %v2842 = vmul.f32 %v2719, %v2489
        %v2843 = vmul.f32 %v2721, %v2490
        %v2844 = vmul.f32 %v2723, %v2491
        %v2845 = vmul.f32 %v2725, %v2492
        %v2846 = vmul.f32 %v2727, %v2493
        %v2847 = vmul.f32 %v2729, %v2494
        %v2848 = vmul.f32 %v2731, %v2495
        %v2849 = vmul.f32 %v2733, %v2496
        %v2850 = vmul.f32 %v2735, %v2497
        %v2851 = vmul.f32 %v2737, %v2498
        %v2852 = vmul.f32 %v2739, %v2499
        %v2853 = vmul.f32 %v2741, %v2500
        %v2854 = vadd.f32 %v2822, %v2838
        %v2855 = vadd.f32 %v2823, %v2839
        %v2856 = vadd.f32 %v2824, %v2840
        %v2857 = vadd.f32 %v2825, %v2841
        %v2858 = vadd.f32 %v2826, %v2842
        %v2859 = vadd.f32 %v2827, %v2843
        %v2860 = vadd.f32 %v2828, %v2844
        %v2861 = vadd.f32 %v2829, %v2845
        %v2862 = vadd.f32 %v2830, %v2846
        %v2863 = vadd.f32 %v2831, %v2847
        %v2864 = vadd.f32 %v2832, %v2848
        %v2865 = vadd.f32 %v2833, %v2849
        %v2866 = vadd.f32 %v2834, %v2850
        %v2867 = vadd.f32 %v2835, %v2851
        %v2868 = vadd.f32 %v2836, %v2852
        %v2869 = vadd.f32 %v2837, %v2853
        %v2870 = vmul.f32 %v2759, %v2550
        %v2871 = vmul.f32 %v2761, %v2551
        %v2872 = vmul.f32 %v2763, %v2552
        %v2873 = vmul.f32 %v2765, %v2553
        %v2874 = vmul.f32 %v2767, %v2554
        %v2875 = vmul.f32 %v2769, %v2555
        %v2876 = vmul.f32 %v2771, %v2556
        %v2877 = vmul.f32 %v2773, %v2557
        %v2878 = vmul.f32 %v2775, %v2558
        %v2879 = vmul.f32 %v2777, %v2559
        %v2880 = vmul.f32 %v2779, %v2560
        %v2881 = vmul.f32 %v2781, %v2561
        %v2882 = vmul.f32 %v2783, %v2562
        %v2883 = vmul.f32 %v2785, %v2563
        %v2884 = vmul.f32 %v2787, %v2564
        %v2885 = vmul.f32 %v2789, %v2565
        %v2886 = vadd.f32 %v2854, %v2870
        %v2887 = vadd.f32 %v2855, %v2871
        %v2888 = vadd.f32 %v2856, %v2872
        %v2889 = vadd.f32 %v2857, %v2873
        %v2890 = vadd.f32 %v2858, %v2874
        %v2891 = vadd.f32 %v2859, %v2875
        %v2892 = vadd.f32 %v2860, %v2876
        %v2893 = vadd.f32 %v2861, %v2877
        %v2894 = vadd.f32 %v2862, %v2878
        %v2895 = vadd.f32 %v2863, %v2879
        %v2896 = vadd.f32 %v2864, %v2880
        %v2897 = vadd.f32 %v2865, %v2881
        %v2898 = vadd.f32 %v2866, %v2882
        %v2899 = vadd.f32 %v2867, %v2883
        %v2900 = vadd.f32 %v2868, %v2884
        %v2901 = vadd.f32 %v2869, %v2885
        %v2902 = vrcp.pop %v2806
        %v2903 = vmul.f32 %v2806, %v2902
        %v2904 = vsub.f32 1.0, %v2903
        %v2905 = vmul.f32 %v2902, %v2904
        %v2906 = vadd.f32 %v2902, %v2905
        %vm2907 = vweird.f32 %v2806
        %vm2908 = vweird.f32 %v2902
        %vm2909 = vmor %vm2907, %vm2908
        %v2910 = vsel %vm2909, %v2902, %v2906
        %v2911 = vand.u32 2147483647, %v2806
        %vm2912 = vcmp.eq.f32.partialorder %v2911, 8.507059e+37
        %v2913 = vand.u32 %v2806, 2147483648
        %v2914 = vor.u32 1.1754944e-38, %v2913
        %v2915 = vsel %vm2912, %v2914, %v2910
        %v2916 = vrcp.pop %v2807
        %v2917 = vmul.f32 %v2807, %v2916
        %v2918 = vsub.f32 1.0, %v2917
        %v2919 = vmul.f32 %v2916, %v2918
        %v2920 = vadd.f32 %v2916, %v2919
        %vm2921 = vweird.f32 %v2807
        %vm2922 = vweird.f32 %v2916
        %vm2923 = vmor %vm2921, %vm2922
        %v2924 = vsel %vm2923, %v2916, %v2920
        %v2925 = vand.u32 2147483647, %v2807
        %vm2926 = vcmp.eq.f32.partialorder %v2925, 8.507059e+37
        %v2927 = vand.u32 %v2807, 2147483648
        %v2928 = vor.u32 1.1754944e-38, %v2927
        %v2929 = vsel %vm2926, %v2928, %v2924
        %v2930 = vrcp.pop %v2808
        %v2931 = vmul.f32 %v2808, %v2930
        %v2932 = vsub.f32 1.0, %v2931
        %v2933 = vmul.f32 %v2930, %v2932
        %v2934 = vadd.f32 %v2930, %v2933
        %vm2935 = vweird.f32 %v2808
        %vm2936 = vweird.f32 %v2930
        %vm2937 = vmor %vm2935, %vm2936
        %v2938 = vsel %vm2937, %v2930, %v2934
        %v2939 = vand.u32 2147483647, %v2808
        %vm2940 = vcmp.eq.f32.partialorder %v2939, 8.507059e+37
        %v2941 = vand.u32 %v2808, 2147483648
        %v2942 = vor.u32 1.1754944e-38, %v2941
        %v2943 = vsel %vm2940, %v2942, %v2938
        %v2944 = vrcp.pop %v2809
        %v2945 = vmul.f32 %v2809, %v2944
        %v2946 = vsub.f32 1.0, %v2945
        %v2947 = vmul.f32 %v2944, %v2946
        %v2948 = vadd.f32 %v2944, %v2947
        %vm2949 = vweird.f32 %v2809
        %vm2950 = vweird.f32 %v2944
        %vm2951 = vmor %vm2949, %vm2950
        %v2952 = vsel %vm2951, %v2944, %v2948
        %v2953 = vand.u32 2147483647, %v2809
        %vm2954 = vcmp.eq.f32.partialorder %v2953, 8.507059e+37
        %v2955 = vand.u32 %v2809, 2147483648
        %v2956 = vor.u32 1.1754944e-38, %v2955
        %v2957 = vsel %vm2954, %v2956, %v2952
        %v2958 = vrcp.pop %v2810
        %v2959 = vmul.f32 %v2810, %v2958
        %v2960 = vsub.f32 1.0, %v2959
        %v2961 = vmul.f32 %v2958, %v2960
        %v2962 = vadd.f32 %v2958, %v2961
        %vm2963 = vweird.f32 %v2810
        %vm2964 = vweird.f32 %v2958
        %vm2965 = vmor %vm2963, %vm2964
        %v2966 = vsel %vm2965, %v2958, %v2962
        %v2967 = vand.u32 2147483647, %v2810
        %vm2968 = vcmp.eq.f32.partialorder %v2967, 8.507059e+37
        %v2969 = vand.u32 %v2810, 2147483648
        %v2970 = vor.u32 1.1754944e-38, %v2969
        %v2971 = vsel %vm2968, %v2970, %v2966
        %v2972 = vrcp.pop %v2811
        %v2973 = vmul.f32 %v2811, %v2972
        %v2974 = vsub.f32 1.0, %v2973
        %v2975 = vmul.f32 %v2972, %v2974
        %v2976 = vadd.f32 %v2972, %v2975
        %vm2977 = vweird.f32 %v2811
        %vm2978 = vweird.f32 %v2972
        %vm2979 = vmor %vm2977, %vm2978
        %v2980 = vsel %vm2979, %v2972, %v2976
        %v2981 = vand.u32 2147483647, %v2811
        %vm2982 = vcmp.eq.f32.partialorder %v2981, 8.507059e+37
        %v2983 = vand.u32 %v2811, 2147483648
        %v2984 = vor.u32 1.1754944e-38, %v2983
        %v2985 = vsel %vm2982, %v2984, %v2980
        %v2986 = vrcp.pop %v2812
        %v2987 = vmul.f32 %v2812, %v2986
        %v2988 = vsub.f32 1.0, %v2987
        %v2989 = vmul.f32 %v2986, %v2988
        %v2990 = vadd.f32 %v2986, %v2989
        %vm2991 = vweird.f32 %v2812
        %vm2992 = vweird.f32 %v2986
        %vm2993 = vmor %vm2991, %vm2992
        %v2994 = vsel %vm2993, %v2986, %v2990
        %v2995 = vand.u32 2147483647, %v2812
        %vm2996 = vcmp.eq.f32.partialorder %v2995, 8.507059e+37
        %v2997 = vand.u32 %v2812, 2147483648
        %v2998 = vor.u32 1.1754944e-38, %v2997
        %v2999 = vsel %vm2996, %v2998, %v2994
        %v3000 = vrcp.pop %v2813
        %v3001 = vmul.f32 %v2813, %v3000
        %v3002 = vsub.f32 1.0, %v3001
        %v3003 = vmul.f32 %v3000, %v3002
        %v3004 = vadd.f32 %v3000, %v3003
        %vm3005 = vweird.f32 %v2813
        %vm3006 = vweird.f32 %v3000
        %vm3007 = vmor %vm3005, %vm3006
        %v3008 = vsel %vm3007, %v3000, %v3004
        %v3009 = vand.u32 2147483647, %v2813
        %vm3010 = vcmp.eq.f32.partialorder %v3009, 8.507059e+37
        %v3011 = vand.u32 %v2813, 2147483648
        %v3012 = vor.u32 1.1754944e-38, %v3011
        %v3013 = vsel %vm3010, %v3012, %v3008
        %v3014 = vrcp.pop %v2814
        %v3015 = vmul.f32 %v2814, %v3014
        %v3016 = vsub.f32 1.0, %v3015
        %v3017 = vmul.f32 %v3014, %v3016
        %v3018 = vadd.f32 %v3014, %v3017
        %vm3019 = vweird.f32 %v2814
        %vm3020 = vweird.f32 %v3014
        %vm3021 = vmor %vm3019, %vm3020
        %v3022 = vsel %vm3021, %v3014, %v3018
        %v3023 = vand.u32 2147483647, %v2814
        %vm3024 = vcmp.eq.f32.partialorder %v3023, 8.507059e+37
        %v3025 = vand.u32 %v2814, 2147483648
        %v3026 = vor.u32 1.1754944e-38, %v3025
        %v3027 = vsel %vm3024, %v3026, %v3022
        %v3028 = vrcp.pop %v2815
        %v3029 = vmul.f32 %v2815, %v3028
        %v3030 = vsub.f32 1.0, %v3029
        %v3031 = vmul.f32 %v3028, %v3030
        %v3032 = vadd.f32 %v3028, %v3031
        %vm3033 = vweird.f32 %v2815
        %vm3034 = vweird.f32 %v3028
        %vm3035 = vmor %vm3033, %vm3034
        %v3036 = vsel %vm3035, %v3028, %v3032
        %v3037 = vand.u32 2147483647, %v2815
        %vm3038 = vcmp.eq.f32.partialorder %v3037, 8.507059e+37
        %v3039 = vand.u32 %v2815, 2147483648
        %v3040 = vor.u32 1.1754944e-38, %v3039
        %v3041 = vsel %vm3038, %v3040, %v3036
        %v3042 = vrcp.pop %v2816
        %v3043 = vmul.f32 %v2816, %v3042
        %v3044 = vsub.f32 1.0, %v3043
        %v3045 = vmul.f32 %v3042, %v3044
        %v3046 = vadd.f32 %v3042, %v3045
        %vm3047 = vweird.f32 %v2816
        %vm3048 = vweird.f32 %v3042
        %vm3049 = vmor %vm3047, %vm3048
        %v3050 = vsel %vm3049, %v3042, %v3046
        %v3051 = vand.u32 2147483647, %v2816
        %vm3052 = vcmp.eq.f32.partialorder %v3051, 8.507059e+37
        %v3053 = vand.u32 %v2816, 2147483648
        %v3054 = vor.u32 1.1754944e-38, %v3053
        %v3055 = vsel %vm3052, %v3054, %v3050
        %v3056 = vrcp.pop %v2817
        %v3057 = vmul.f32 %v2817, %v3056
        %v3058 = vsub.f32 1.0, %v3057
        %v3059 = vmul.f32 %v3056, %v3058
        %v3060 = vadd.f32 %v3056, %v3059
        %vm3061 = vweird.f32 %v2817
        %vm3062 = vweird.f32 %v3056
        %vm3063 = vmor %vm3061, %vm3062
        %v3064 = vsel %vm3063, %v3056, %v3060
        %v3065 = vand.u32 2147483647, %v2817
        %vm3066 = vcmp.eq.f32.partialorder %v3065, 8.507059e+37
        %v3067 = vand.u32 %v2817, 2147483648
        %v3068 = vor.u32 1.1754944e-38, %v3067
        %v3069 = vsel %vm3066, %v3068, %v3064
        %v3070 = vrcp.pop %v2818
        %v3071 = vmul.f32 %v2818, %v3070
        %v3072 = vsub.f32 1.0, %v3071
        %v3073 = vmul.f32 %v3070, %v3072
        %v3074 = vadd.f32 %v3070, %v3073
        %vm3075 = vweird.f32 %v2818
        %vm3076 = vweird.f32 %v3070
        %vm3077 = vmor %vm3075, %vm3076
        %v3078 = vsel %vm3077, %v3070, %v3074
        %v3079 = vand.u32 2147483647, %v2818
        %vm3080 = vcmp.eq.f32.partialorder %v3079, 8.507059e+37
        %v3081 = vand.u32 %v2818, 2147483648
        %v3082 = vor.u32 1.1754944e-38, %v3081
        %v3083 = vsel %vm3080, %v3082, %v3078
        %v3084 = vrcp.pop %v2819
        %v3085 = vmul.f32 %v2819, %v3084
        %v3086 = vsub.f32 1.0, %v3085
        %v3087 = vmul.f32 %v3084, %v3086
        %v3088 = vadd.f32 %v3084, %v3087
        %vm3089 = vweird.f32 %v2819
        %vm3090 = vweird.f32 %v3084
        %vm3091 = vmor %vm3089, %vm3090
        %v3092 = vsel %vm3091, %v3084, %v3088
        %v3093 = vand.u32 2147483647, %v2819
        %vm3094 = vcmp.eq.f32.partialorder %v3093, 8.507059e+37
        %v3095 = vand.u32 %v2819, 2147483648
        %v3096 = vor.u32 1.1754944e-38, %v3095
        %v3097 = vsel %vm3094, %v3096, %v3092
        %v3098 = vrcp.pop %v2820
        %v3099 = vmul.f32 %v2820, %v3098
        %v3100 = vsub.f32 1.0, %v3099
        %v3101 = vmul.f32 %v3098, %v3100
        %v3102 = vadd.f32 %v3098, %v3101
        %vm3103 = vweird.f32 %v2820
        %vm3104 = vweird.f32 %v3098
        %vm3105 = vmor %vm3103, %vm3104
        %v3106 = vsel %vm3105, %v3098, %v3102
        %v3107 = vand.u32 2147483647, %v2820
        %vm3108 = vcmp.eq.f32.partialorder %v3107, 8.507059e+37
        %v3109 = vand.u32 %v2820, 2147483648
        %v3110 = vor.u32 1.1754944e-38, %v3109
        %v3111 = vsel %vm3108, %v3110, %v3106
        %v3112 = vrcp.pop %v2821
        %v3113 = vmul.f32 %v2821, %v3112
        %v3114 = vsub.f32 1.0, %v3113
        %v3115 = vmul.f32 %v3112, %v3114
        %v3116 = vadd.f32 %v3112, %v3115
        %vm3117 = vweird.f32 %v2821
        %vm3118 = vweird.f32 %v3112
        %vm3119 = vmor %vm3117, %vm3118
        %v3120 = vsel %vm3119, %v3112, %v3116
        %v3121 = vand.u32 2147483647, %v2821
        %vm3122 = vcmp.eq.f32.partialorder %v3121, 8.507059e+37
        %v3123 = vand.u32 %v2821, 2147483648
        %v3124 = vor.u32 1.1754944e-38, %v3123
        %v3125 = vsel %vm3122, %v3124, %v3120
        %v3126 = vmul.f32 %v2886, %v2915
        %v3127 = vmul.f32 %v2887, %v2929
        %v3128 = vmul.f32 %v2888, %v2943
        %v3129 = vmul.f32 %v2889, %v2957
        %v3130 = vmul.f32 %v2890, %v2971
        %v3131 = vmul.f32 %v2891, %v2985
        %v3132 = vmul.f32 %v2892, %v2999
        %v3133 = vmul.f32 %v2893, %v3013
        %v3134 = vmul.f32 %v2894, %v3027
        %v3135 = vmul.f32 %v2895, %v3041
        %v3136 = vmul.f32 %v2896, %v3055
        %v3137 = vmul.f32 %v2897, %v3069
        %v3138 = vmul.f32 %v2898, %v3083
        %v3139 = vmul.f32 %v2899, %v3097
        %v3140 = vmul.f32 %v2900, %v3111
        %v3141 = vmul.f32 %v2901, %v3125
        %v3142 = vmax.f32 %v3126, 0.0
        %v3143 = vmax.f32 %v3127, 0.0
        %v3144 = vmax.f32 %v3128, 0.0
        %v3145 = vmax.f32 %v3129, 0.0
        %v3146 = vmax.f32 %v3130, 0.0
        %v3147 = vmax.f32 %v3131, 0.0
        %v3148 = vmax.f32 %v3132, 0.0
        %v3149 = vmax.f32 %v3133, 0.0
        %v3150 = vmax.f32 %v3134, 0.0
        %v3151 = vmax.f32 %v3135, 0.0
        %v3152 = vmax.f32 %v3136, 0.0
        %v3153 = vmax.f32 %v3137, 0.0
        %v3154 = vmax.f32 %v3138, 0.0
        %v3155 = vmax.f32 %v3139, 0.0
        %v3156 = vmax.f32 %v3140, 0.0
        %v3157 = vmax.f32 %v3141, 0.0
        %s3158 = scalar_lea.vmem %s7, 128
        %v3159 = vld [vmem:[%s3158] sm:$0xff]
        %v3160 = vld [vmem:[%s3158 + $0x8] sm:$0xff]
        %v3161 = vld [vmem:[%s3158 + $0x10] sm:$0xff]
        %v3162 = vld [vmem:[%s3158 + $0x18] sm:$0xff]
        %v3163 = vld [vmem:[%s3158 + $0x20] sm:$0xff]
        %v3164 = vld [vmem:[%s3158 + $0x28] sm:$0xff]
        %v3165 = vld [vmem:[%s3158 + $0x30] sm:$0xff]
        %v3166 = vld [vmem:[%s3158 + $0x38] sm:$0xff]
        %v3167 = vld [vmem:[%s3158 + $0x40] sm:$0xff]
        %v3168 = vld [vmem:[%s3158 + $0x48] sm:$0xff]
        %v3169 = vld [vmem:[%s3158 + $0x50] sm:$0xff]
        %v3170 = vld [vmem:[%s3158 + $0x58] sm:$0xff]
        %v3171 = vld [vmem:[%s3158 + $0x60] sm:$0xff]
        %v3172 = vld [vmem:[%s3158 + $0x68] sm:$0xff]
        %v3173 = vld [vmem:[%s3158 + $0x70] sm:$0xff]
        %v3174 = vld [vmem:[%s3158 + $0x78] sm:$0xff]
        %s3175 = scalar_lea.vmem %s8, 1
        %v3176 = vld [vmem:[%s3175] sm:$0x1]
        %v3178 = vperm.slane %v3176, 0
        %3180 = vmatpush.msra.mxu0 %v3174
        %3181 = vmatpush.msra.mxu0 %v3173
        %3182 = vmatpush.msra.mxu0 %v3172
        %3183 = vmatpush.msra.mxu0 %v3171
        %3184 = vmatpush.msra.mxu0 %v3170
        %3185 = vmatpush.msra.mxu0 %v3169
        %3186 = vmatpush.msra.mxu0 %v3168
        %3187 = vmatpush.msra.mxu0 %v3167
        %3188 = vmatpush.msra.mxu0 %v3166
        %3189 = vmatpush.msra.mxu0 %v3165
        %3190 = vmatpush.msra.mxu0 %v3164
        %3191 = vmatpush.msra.mxu0 %v3163
        %3192 = vmatpush.msra.mxu0 %v3162
        %3193 = vmatpush.msra.mxu0 %v3161
        %3194 = vmatpush.msra.mxu0 %v3160
        %3195 = vmatpush.msra.mxu0 %v3159
        %3196 = vmatmul.f32.gmra.mxu0 %v3142
        %v3197 = vpop.f32.mrf.mxu0
        %v3198 = vadd.f32 %v3178, %v3197
        %3199 = vmatmul.f32.gmra.mxu0 %v3143
        %v3200 = vpop.f32.mrf.mxu0
        %v3201 = vadd.f32 %v3178, %v3200
        %3202 = vmatmul.f32.gmra.mxu0 %v3144
        %v3203 = vpop.f32.mrf.mxu0
        %v3204 = vadd.f32 %v3178, %v3203
        %3205 = vmatmul.f32.gmra.mxu0 %v3145
        %v3206 = vpop.f32.mrf.mxu0
        %v3207 = vadd.f32 %v3178, %v3206
        %3208 = vmatmul.f32.gmra.mxu0 %v3146
        %v3209 = vpop.f32.mrf.mxu0
        %v3210 = vadd.f32 %v3178, %v3209
        %3211 = vmatmul.f32.gmra.mxu0 %v3147
        %v3212 = vpop.f32.mrf.mxu0
        %v3213 = vadd.f32 %v3178, %v3212
        %3214 = vmatmul.f32.gmra.mxu0 %v3148
        %v3215 = vpop.f32.mrf.mxu0
        %v3216 = vadd.f32 %v3178, %v3215
        %3217 = vmatmul.f32.gmra.mxu0 %v3149
        %v3218 = vpop.f32.mrf.mxu0
        %v3219 = vadd.f32 %v3178, %v3218
        %3220 = vmatmul.f32.gmra.mxu0 %v3150
        %v3221 = vpop.f32.mrf.mxu0
        %v3222 = vadd.f32 %v3178, %v3221
        %3223 = vmatmul.f32.gmra.mxu0 %v3151
        %v3224 = vpop.f32.mrf.mxu0
        %v3225 = vadd.f32 %v3178, %v3224
        %3226 = vmatmul.f32.gmra.mxu0 %v3152
        %v3227 = vpop.f32.mrf.mxu0
        %v3228 = vadd.f32 %v3178, %v3227
        %3229 = vmatmul.f32.gmra.mxu0 %v3153
        %v3230 = vpop.f32.mrf.mxu0
        %v3231 = vadd.f32 %v3178, %v3230
        %3232 = vmatmul.f32.gmra.mxu0 %v3154
        %v3233 = vpop.f32.mrf.mxu0
        %v3234 = vadd.f32 %v3178, %v3233
        %3235 = vmatmul.f32.gmra.mxu0 %v3155
        %v3236 = vpop.f32.mrf.mxu0
        %v3237 = vadd.f32 %v3178, %v3236
        %3238 = vmatmul.f32.gmra.mxu0 %v3156
        %v3239 = vpop.f32.mrf.mxu0
        %v3240 = vadd.f32 %v3178, %v3239
        %3241 = vmatmul.f32.gmra.mxu0 %v3157
        %v3242 = vpop.f32.mrf.mxu0
        %v3243 = vadd.f32 %v3178, %v3242
        %3244 = vdwg.mxu0
        %v3245 = vadd.f32 %v1963, %v3198
        %v3246 = vadd.f32 %v1964, %v3201
        %v3247 = vadd.f32 %v1965, %v3204
        %v3248 = vadd.f32 %v1966, %v3207
        %v3249 = vadd.f32 %v1967, %v3210
        %v3250 = vadd.f32 %v1968, %v3213
        %v3251 = vadd.f32 %v1969, %v3216
        %v3252 = vadd.f32 %v1970, %v3219
        %v3253 = vadd.f32 %v1971, %v3222
        %v3254 = vadd.f32 %v1972, %v3225
        %v3255 = vadd.f32 %v1973, %v3228
        %v3256 = vadd.f32 %v1974, %v3231
        %v3257 = vadd.f32 %v1975, %v3234
        %v3258 = vadd.f32 %v1976, %v3237
        %v3259 = vadd.f32 %v1977, %v3240
        %v3260 = vadd.f32 %v1978, %v3243
        %v3261 = vmul.f32 %v3245, %v1886
        %v3262 = vmul.f32 %v3246, %v1891
        %v3263 = vmul.f32 %v3247, %v1896
        %v3264 = vmul.f32 %v3248, %v1901
        %v3265 = vmul.f32 %v3249, %v1906
        %v3266 = vmul.f32 %v3250, %v1911
        %v3267 = vmul.f32 %v3251, %v1916
        %v3268 = vmul.f32 %v3252, %v1921
        %v3269 = vmul.f32 %v3253, %v1926
        %v3270 = vmul.f32 %v3254, %v1931
        %v3271 = vmul.f32 %v3255, %v1936
        %v3272 = vmul.f32 %v3256, %v1941
        %v3273 = vmul.f32 %v3257, %v1946
        %v3274 = vmul.f32 %v3258, %v1951
        %v3275 = vmul.f32 %v3259, %v1956
        %v3276 = vmul.f32 %v3260, %v1961
        %s3277 = scalar_lea.vmem %s6, 8
        %v3278 = vld [vmem:[%s3277] sm:$0x7]
        %s3279 = scalar_lea.vmem [#allocation2], 768
        %v3280 = vld [vmem:[%s3279] sm:$0xff]
        %v3281 = vld [vmem:[%s3279 + $0x8] sm:$0xff]
        %v3282 = vld [vmem:[%s3279 + $0x10] sm:$0xff]
        %v3283 = vld [vmem:[%s3279 + $0x18] sm:$0xff]
        %v3284 = vld [vmem:[%s3279 + $0x20] sm:$0xff]
        %v3285 = vld [vmem:[%s3279 + $0x28] sm:$0xff]
        %v3286 = vld [vmem:[%s3279 + $0x30] sm:$0xff]
        %v3287 = vld [vmem:[%s3279 + $0x38] sm:$0xff]
        %v3288 = vld [vmem:[%s3279 + $0x40] sm:$0xff]
        %v3289 = vld [vmem:[%s3279 + $0x48] sm:$0xff]
        %v3290 = vld [vmem:[%s3279 + $0x50] sm:$0xff]
        %v3291 = vld [vmem:[%s3279 + $0x58] sm:$0xff]
        %v3292 = vld [vmem:[%s3279 + $0x60] sm:$0xff]
        %v3293 = vld [vmem:[%s3279 + $0x68] sm:$0xff]
        %v3294 = vld [vmem:[%s3279 + $0x70] sm:$0xff]
        %v3295 = vld [vmem:[%s3279 + $0x78] sm:$0xff]
        %v3296 = vld [vmem:[%s3279 + $0x80] sm:$0xff]
        %v3297 = vld [vmem:[%s3279 + $0x88] sm:$0xff]
        %v3298 = vld [vmem:[%s3279 + $0x90] sm:$0xff]
        %v3299 = vld [vmem:[%s3279 + $0x98] sm:$0xff]
        %v3300 = vld [vmem:[%s3279 + $0xa0] sm:$0xff]
        %v3301 = vld [vmem:[%s3279 + $0xa8] sm:$0xff]
        %v3302 = vld [vmem:[%s3279 + $0xb0] sm:$0xff]
        %v3303 = vld [vmem:[%s3279 + $0xb8] sm:$0xff]
        %v3304 = vld [vmem:[%s3279 + $0xc0] sm:$0xff]
        %v3305 = vld [vmem:[%s3279 + $0xc8] sm:$0xff]
        %v3306 = vld [vmem:[%s3279 + $0xd0] sm:$0xff]
        %v3307 = vld [vmem:[%s3279 + $0xd8] sm:$0xff]
        %v3308 = vld [vmem:[%s3279 + $0xe0] sm:$0xff]
        %v3309 = vld [vmem:[%s3279 + $0xe8] sm:$0xff]
        %v3310 = vld [vmem:[%s3279 + $0xf0] sm:$0xff]
        %v3311 = vld [vmem:[%s3279 + $0xf8] sm:$0xff]
        %v3312 = vld [vmem:[%s3279 + $0x100] sm:$0xff]
        %v3313 = vld [vmem:[%s3279 + $0x108] sm:$0xff]
        %v3314 = vld [vmem:[%s3279 + $0x110] sm:$0xff]
        %v3315 = vld [vmem:[%s3279 + $0x118] sm:$0xff]
        %v3316 = vld [vmem:[%s3279 + $0x120] sm:$0xff]
        %v3317 = vld [vmem:[%s3279 + $0x128] sm:$0xff]
        %v3318 = vld [vmem:[%s3279 + $0x130] sm:$0xff]
        %v3319 = vld [vmem:[%s3279 + $0x138] sm:$0xff]
        %v3320 = vld [vmem:[%s3279 + $0x140] sm:$0xff]
        %v3321 = vld [vmem:[%s3279 + $0x148] sm:$0xff]
        %v3322 = vld [vmem:[%s3279 + $0x150] sm:$0xff]
        %v3323 = vld [vmem:[%s3279 + $0x158] sm:$0xff]
        %v3324 = vld [vmem:[%s3279 + $0x160] sm:$0xff]
        %v3325 = vld [vmem:[%s3279 + $0x168] sm:$0xff]
        %v3326 = vld [vmem:[%s3279 + $0x170] sm:$0xff]
        %v3327 = vld [vmem:[%s3279 + $0x178] sm:$0xff]
        %3328 = vmatpush.msra.mxu0 %v3325
        %3329 = vmatpush.msra.mxu0 %v3322
        %3330 = vmatpush.msra.mxu0 %v3319
        %3331 = vmatpush.msra.mxu0 %v3316
        %3332 = vmatpush.msra.mxu0 %v3313
        %3333 = vmatpush.msra.mxu0 %v3310
        %3334 = vmatpush.msra.mxu0 %v3307
        %3335 = vmatpush.msra.mxu0 %v3304
        %3336 = vmatpush.msra.mxu0 %v3301
        %3337 = vmatpush.msra.mxu0 %v3298
        %3338 = vmatpush.msra.mxu0 %v3295
        %3339 = vmatpush.msra.mxu0 %v3292
        %3340 = vmatpush.msra.mxu0 %v3289
        %3341 = vmatpush.msra.mxu0 %v3286
        %3342 = vmatpush.msra.mxu0 %v3283
        %3343 = vmatpush.msra.mxu0 %v3280
        %3344 = vmatmul.f32.gmra.mxu0 %v3261
        %v3345 = vpop.f32.mrf.mxu0
        %v3346 = vadd.f32 0.0, %v3345
        %3347 = vmatmul.f32.gmra.mxu0 %v3262
        %v3348 = vpop.f32.mrf.mxu0
        %v3349 = vadd.f32 0.0, %v3348
        %3350 = vmatmul.f32.gmra.mxu0 %v3263
        %v3351 = vpop.f32.mrf.mxu0
        %v3352 = vadd.f32 0.0, %v3351
        %3353 = vmatmul.f32.gmra.mxu0 %v3264
        %v3354 = vpop.f32.mrf.mxu0
        %v3355 = vadd.f32 0.0, %v3354
        %3356 = vmatmul.f32.gmra.mxu0 %v3265
        %v3357 = vpop.f32.mrf.mxu0
        %v3358 = vadd.f32 0.0, %v3357
        %3359 = vmatmul.f32.gmra.mxu0 %v3266
        %v3360 = vpop.f32.mrf.mxu0
        %v3361 = vadd.f32 0.0, %v3360
        %3362 = vmatmul.f32.gmra.mxu0 %v3267
        %v3363 = vpop.f32.mrf.mxu0
        %v3364 = vadd.f32 0.0, %v3363
        %3365 = vmatmul.f32.gmra.mxu0 %v3268
        %v3366 = vpop.f32.mrf.mxu0
        %v3367 = vadd.f32 0.0, %v3366
        %3368 = vmatmul.f32.gmra.mxu0 %v3269
        %v3369 = vpop.f32.mrf.mxu0
        %v3370 = vadd.f32 0.0, %v3369
        %3371 = vmatmul.f32.gmra.mxu0 %v3270
        %v3372 = vpop.f32.mrf.mxu0
        %v3373 = vadd.f32 0.0, %v3372
        %3374 = vmatmul.f32.gmra.mxu0 %v3271
        %v3375 = vpop.f32.mrf.mxu0
        %v3376 = vadd.f32 0.0, %v3375
        %3377 = vmatmul.f32.gmra.mxu0 %v3272
        %v3378 = vpop.f32.mrf.mxu0
        %v3379 = vadd.f32 0.0, %v3378
        %3380 = vmatmul.f32.gmra.mxu0 %v3273
        %v3381 = vpop.f32.mrf.mxu0
        %v3382 = vadd.f32 0.0, %v3381
        %3383 = vmatmul.f32.gmra.mxu0 %v3274
        %v3384 = vpop.f32.mrf.mxu0
        %v3385 = vadd.f32 0.0, %v3384
        %3386 = vmatmul.f32.gmra.mxu0 %v3275
        %v3387 = vpop.f32.mrf.mxu0
        %v3388 = vadd.f32 0.0, %v3387
        %3389 = vmatmul.f32.gmra.mxu0 %v3276
        %v3390 = vpop.f32.mrf.mxu0
        %v3391 = vadd.f32 0.0, %v3390
        %3392 = vdwg.mxu0
        %3393 = vmatpush.msra.mxu0 %v3326
        %3394 = vmatpush.msra.mxu0 %v3323
        %3395 = vmatpush.msra.mxu0 %v3320
        %3396 = vmatpush.msra.mxu0 %v3317
        %3397 = vmatpush.msra.mxu0 %v3314
        %3398 = vmatpush.msra.mxu0 %v3311
        %3399 = vmatpush.msra.mxu0 %v3308
        %3400 = vmatpush.msra.mxu0 %v3305
        %3401 = vmatpush.msra.mxu0 %v3302
        %3402 = vmatpush.msra.mxu0 %v3299
        %3403 = vmatpush.msra.mxu0 %v3296
        %3404 = vmatpush.msra.mxu0 %v3293
        %3405 = vmatpush.msra.mxu0 %v3290
        %3406 = vmatpush.msra.mxu0 %v3287
        %3407 = vmatpush.msra.mxu0 %v3284
        %3408 = vmatpush.msra.mxu0 %v3281
        %3409 = vmatmul.f32.gmra.mxu0 %v3261
        %v3410 = vpop.f32.mrf.mxu0
        %v3411 = vadd.f32 0.0, %v3410
        %3412 = vmatmul.f32.gmra.mxu0 %v3262
        %v3413 = vpop.f32.mrf.mxu0
        %v3414 = vadd.f32 0.0, %v3413
        %3415 = vmatmul.f32.gmra.mxu0 %v3263
        %v3416 = vpop.f32.mrf.mxu0
        %v3417 = vadd.f32 0.0, %v3416
        %3418 = vmatmul.f32.gmra.mxu0 %v3264
        %v3419 = vpop.f32.mrf.mxu0
        %v3420 = vadd.f32 0.0, %v3419
        %3421 = vmatmul.f32.gmra.mxu0 %v3265
        %v3422 = vpop.f32.mrf.mxu0
        %v3423 = vadd.f32 0.0, %v3422
        %3424 = vmatmul.f32.gmra.mxu0 %v3266
        %v3425 = vpop.f32.mrf.mxu0
        %v3426 = vadd.f32 0.0, %v3425
        %3427 = vmatmul.f32.gmra.mxu0 %v3267
        %v3428 = vpop.f32.mrf.mxu0
        %v3429 = vadd.f32 0.0, %v3428
        %3430 = vmatmul.f32.gmra.mxu0 %v3268
        %v3431 = vpop.f32.mrf.mxu0
        %v3432 = vadd.f32 0.0, %v3431
        %3433 = vmatmul.f32.gmra.mxu0 %v3269
        %v3434 = vpop.f32.mrf.mxu0
        %v3435 = vadd.f32 0.0, %v3434
        %3436 = vmatmul.f32.gmra.mxu0 %v3270
        %v3437 = vpop.f32.mrf.mxu0
        %v3438 = vadd.f32 0.0, %v3437
        %3439 = vmatmul.f32.gmra.mxu0 %v3271
        %v3440 = vpop.f32.mrf.mxu0
        %v3441 = vadd.f32 0.0, %v3440
        %3442 = vmatmul.f32.gmra.mxu0 %v3272
        %v3443 = vpop.f32.mrf.mxu0
        %v3444 = vadd.f32 0.0, %v3443
        %3445 = vmatmul.f32.gmra.mxu0 %v3273
        %v3446 = vpop.f32.mrf.mxu0
        %v3447 = vadd.f32 0.0, %v3446
        %3448 = vmatmul.f32.gmra.mxu0 %v3274
        %v3449 = vpop.f32.mrf.mxu0
        %v3450 = vadd.f32 0.0, %v3449
        %3451 = vmatmul.f32.gmra.mxu0 %v3275
        %v3452 = vpop.f32.mrf.mxu0
        %v3453 = vadd.f32 0.0, %v3452
        %3454 = vmatmul.f32.gmra.mxu0 %v3276
        %v3455 = vpop.f32.mrf.mxu0
        %v3456 = vadd.f32 0.0, %v3455
        %3457 = vdwg.mxu0
        %3458 = vmatpush.msra.mxu0 %v3327
        %3459 = vmatpush.msra.mxu0 %v3324
        %3460 = vmatpush.msra.mxu0 %v3321
        %3461 = vmatpush.msra.mxu0 %v3318
        %3462 = vmatpush.msra.mxu0 %v3315
        %3463 = vmatpush.msra.mxu0 %v3312
        %3464 = vmatpush.msra.mxu0 %v3309
        %3465 = vmatpush.msra.mxu0 %v3306
        %3466 = vmatpush.msra.mxu0 %v3303
        %3467 = vmatpush.msra.mxu0 %v3300
        %3468 = vmatpush.msra.mxu0 %v3297
        %3469 = vmatpush.msra.mxu0 %v3294
        %3470 = vmatpush.msra.mxu0 %v3291
        %3471 = vmatpush.msra.mxu0 %v3288
        %3472 = vmatpush.msra.mxu0 %v3285
        %3473 = vmatpush.msra.mxu0 %v3282
        %3474 = vmatmul.f32.gmra.mxu0 %v3261
        %v3475 = vpop.f32.mrf.mxu0
        %v3476 = vadd.f32 0.0, %v3475
        %3477 = vmatmul.f32.gmra.mxu0 %v3262
        %v3478 = vpop.f32.mrf.mxu0
        %v3479 = vadd.f32 0.0, %v3478
        %3480 = vmatmul.f32.gmra.mxu0 %v3263
        %v3481 = vpop.f32.mrf.mxu0
        %v3482 = vadd.f32 0.0, %v3481
        %3483 = vmatmul.f32.gmra.mxu0 %v3264
        %v3484 = vpop.f32.mrf.mxu0
        %v3485 = vadd.f32 0.0, %v3484
        %3486 = vmatmul.f32.gmra.mxu0 %v3265
        %v3487 = vpop.f32.mrf.mxu0
        %v3488 = vadd.f32 0.0, %v3487
        %3489 = vmatmul.f32.gmra.mxu0 %v3266
        %v3490 = vpop.f32.mrf.mxu0
        %v3491 = vadd.f32 0.0, %v3490
        %3492 = vmatmul.f32.gmra.mxu0 %v3267
        %v3493 = vpop.f32.mrf.mxu0
        %v3494 = vadd.f32 0.0, %v3493
        %3495 = vmatmul.f32.gmra.mxu0 %v3268
        %v3496 = vpop.f32.mrf.mxu0
        %v3497 = vadd.f32 0.0, %v3496
        %3498 = vmatmul.f32.gmra.mxu0 %v3269
        %v3499 = vpop.f32.mrf.mxu0
        %v3500 = vadd.f32 0.0, %v3499
        %3501 = vmatmul.f32.gmra.mxu0 %v3270
        %v3502 = vpop.f32.mrf.mxu0
        %v3503 = vadd.f32 0.0, %v3502
        %3504 = vmatmul.f32.gmra.mxu0 %v3271
        %v3505 = vpop.f32.mrf.mxu0
        %v3506 = vadd.f32 0.0, %v3505
        %3507 = vmatmul.f32.gmra.mxu0 %v3272
        %v3508 = vpop.f32.mrf.mxu0
        %v3509 = vadd.f32 0.0, %v3508
        %3510 = vmatmul.f32.gmra.mxu0 %v3273
        %v3511 = vpop.f32.mrf.mxu0
        %v3512 = vadd.f32 0.0, %v3511
        %3513 = vmatmul.f32.gmra.mxu0 %v3274
        %v3514 = vpop.f32.mrf.mxu0
        %v3515 = vadd.f32 0.0, %v3514
        %3516 = vmatmul.f32.gmra.mxu0 %v3275
        %v3517 = vpop.f32.mrf.mxu0
        %v3518 = vadd.f32 0.0, %v3517
        %3519 = vmatmul.f32.gmra.mxu0 %v3276
        %v3520 = vpop.f32.mrf.mxu0
        %v3521 = vadd.f32 0.0, %v3520
        %3522 = vdwg.mxu0
        %vm3523 = vcmp.ge.s32.totalorder %v589, 4
        %vm3524 = vcmp.ge.s32.totalorder %v590, 4
        %vm3525 = vcmp.ge.s32.totalorder %v591, 4
        %vm3526 = vcmp.ge.s32.totalorder %v592, 4
        %vm3527 = vcmp.ge.s32.totalorder %v593, 4
        %vm3528 = vcmp.ge.s32.totalorder %v594, 4
        %vm3529 = vcmp.ge.s32.totalorder %v595, 4
        %vm3530 = vcmp.ge.s32.totalorder %v596, 4
        %vm3531 = vcmp.ge.s32.totalorder %v597, 4
        %vm3532 = vcmp.ge.s32.totalorder %v598, 4
        %vm3533 = vcmp.ge.s32.totalorder %v599, 4
        %vm3534 = vcmp.ge.s32.totalorder %v600, 4
        %vm3535 = vcmp.ge.s32.totalorder %v601, 4
        %vm3536 = vcmp.ge.s32.totalorder %v602, 4
        %vm3537 = vcmp.ge.s32.totalorder %v603, 4
        %vm3538 = vcmp.ge.s32.totalorder %v604, 4
        %v3539 = vsel %vm3523, 1, 0
        %v3540 = vsel %vm3524, 1, 0
        %v3541 = vsel %vm3525, 1, 0
        %v3542 = vsel %vm3526, 1, 0
        %v3543 = vsel %vm3527, 1, 0
        %v3544 = vsel %vm3528, 1, 0
        %v3545 = vsel %vm3529, 1, 0
        %v3546 = vsel %vm3530, 1, 0
        %v3547 = vsel %vm3531, 1, 0
        %v3548 = vsel %vm3532, 1, 0
        %v3549 = vsel %vm3533, 1, 0
        %v3550 = vsel %vm3534, 1, 0
        %v3551 = vsel %vm3535, 1, 0
        %v3552 = vsel %vm3536, 1, 0
        %v3553 = vsel %vm3537, 1, 0
        %v3554 = vsel %vm3538, 1, 0
        %v3555 = vcvt.s32.f32 %v3539
        %v3556 = vcvt.s32.f32 %v3540
        %v3557 = vcvt.s32.f32 %v3541
        %v3558 = vcvt.s32.f32 %v3542
        %v3559 = vcvt.s32.f32 %v3543
        %v3560 = vcvt.s32.f32 %v3544
        %v3561 = vcvt.s32.f32 %v3545
        %v3562 = vcvt.s32.f32 %v3546
        %v3563 = vcvt.s32.f32 %v3547
        %v3564 = vcvt.s32.f32 %v3548
        %v3565 = vcvt.s32.f32 %v3549
        %v3566 = vcvt.s32.f32 %v3550
        %v3567 = vcvt.s32.f32 %v3551
        %v3568 = vcvt.s32.f32 %v3552
        %v3569 = vcvt.s32.f32 %v3553
        %v3570 = vcvt.s32.f32 %v3554
        %vm3571 = vcmp.lt.s32.totalorder %v589, 12
        %vm3572 = vcmp.lt.s32.totalorder %v590, 12
        %vm3573 = vcmp.lt.s32.totalorder %v591, 12
        %vm3574 = vcmp.lt.s32.totalorder %v592, 12
        %vm3575 = vcmp.lt.s32.totalorder %v593, 12
        %vm3576 = vcmp.lt.s32.totalorder %v594, 12
        %vm3577 = vcmp.lt.s32.totalorder %v595, 12
        %vm3578 = vcmp.lt.s32.totalorder %v596, 12
        %vm3579 = vcmp.lt.s32.totalorder %v597, 12
        %vm3580 = vcmp.lt.s32.totalorder %v598, 12
        %vm3581 = vcmp.lt.s32.totalorder %v599, 12
        %vm3582 = vcmp.lt.s32.totalorder %v600, 12
        %vm3583 = vcmp.lt.s32.totalorder %v601, 12
        %vm3584 = vcmp.lt.s32.totalorder %v602, 12
        %vm3585 = vcmp.lt.s32.totalorder %v603, 12
        %vm3586 = vcmp.lt.s32.totalorder %v604, 12
        %v3587 = vsel %vm3571, 1, 0
        %v3588 = vsel %vm3572, 1, 0
        %v3589 = vsel %vm3573, 1, 0
        %v3590 = vsel %vm3574, 1, 0
        %v3591 = vsel %vm3575, 1, 0
        %v3592 = vsel %vm3576, 1, 0
        %v3593 = vsel %vm3577, 1, 0
        %v3594 = vsel %vm3578, 1, 0
        %v3595 = vsel %vm3579, 1, 0
        %v3596 = vsel %vm3580, 1, 0
        %v3597 = vsel %vm3581, 1, 0
        %v3598 = vsel %vm3582, 1, 0
        %v3599 = vsel %vm3583, 1, 0
        %v3600 = vsel %vm3584, 1, 0
        %v3601 = vsel %vm3585, 1, 0
        %v3602 = vsel %vm3586, 1, 0
        %v3603 = vcvt.s32.f32 %v3587
        %v3604 = vcvt.s32.f32 %v3588
        %v3605 = vcvt.s32.f32 %v3589
        %v3606 = vcvt.s32.f32 %v3590
        %v3607 = vcvt.s32.f32 %v3591
        %v3608 = vcvt.s32.f32 %v3592
        %v3609 = vcvt.s32.f32 %v3593
        %v3610 = vcvt.s32.f32 %v3594
        %v3611 = vcvt.s32.f32 %v3595
        %v3612 = vcvt.s32.f32 %v3596
        %v3613 = vcvt.s32.f32 %v3597
        %v3614 = vcvt.s32.f32 %v3598
        %v3615 = vcvt.s32.f32 %v3599
        %v3616 = vcvt.s32.f32 %v3600
        %v3617 = vcvt.s32.f32 %v3601
        %v3618 = vcvt.s32.f32 %v3602
        %v3619 = vrot.slane %v3411, 4
        %v3620 = vrot.slane %v3414, 4
        %v3621 = vrot.slane %v3417, 4
        %v3622 = vrot.slane %v3420, 4
        %v3623 = vrot.slane %v3423, 4
        %v3624 = vrot.slane %v3426, 4
        %v3625 = vrot.slane %v3429, 4
        %v3626 = vrot.slane %v3432, 4
        %v3627 = vrot.slane %v3435, 4
        %v3628 = vrot.slane %v3438, 4
        %v3629 = vrot.slane %v3441, 4
        %v3630 = vrot.slane %v3444, 4
        %v3631 = vrot.slane %v3447, 4
        %v3632 = vrot.slane %v3450, 4
        %v3633 = vrot.slane %v3453, 4
        %v3634 = vrot.slane %v3456, 4
        %vm3635 = vcmp.lt.s32.totalorder %v589, 4
        %v3636 = vsel %vm3635, %v3633, %v3634
        %v3637 = vsel %vm3635, %v3632, %v3633
        %v3638 = vsel %vm3635, %v3631, %v3632
        %v3639 = vsel %vm3635, %v3630, %v3631
        %v3640 = vsel %vm3635, %v3629, %v3630
        %v3641 = vsel %vm3635, %v3628, %v3629
        %v3642 = vsel %vm3635, %v3627, %v3628
        %v3643 = vsel %vm3635, %v3626, %v3627
        %v3644 = vsel %vm3635, %v3625, %v3626
        %v3645 = vsel %vm3635, %v3624, %v3625
        %v3646 = vsel %vm3635, %v3623, %v3624
        %v3647 = vsel %vm3635, %v3622, %v3623
        %v3648 = vsel %vm3635, %v3621, %v3622
        %v3649 = vsel %vm3635, %v3620, %v3621
        %v3650 = vsel %vm3635, %v3619, %v3620
        %v3651 = vsel %vm3635, %v3634, %v3619
        %v3652 = vmul.f32 %v3651, %v3555
        %v3653 = vmul.f32 %v3650, %v3556
        %v3654 = vmul.f32 %v3649, %v3557
        %v3655 = vmul.f32 %v3648, %v3558
        %v3656 = vmul.f32 %v3647, %v3559
        %v3657 = vmul.f32 %v3646, %v3560
        %v3658 = vmul.f32 %v3645, %v3561
        %v3659 = vmul.f32 %v3644, %v3562
        %v3660 = vmul.f32 %v3643, %v3563
        %v3661 = vmul.f32 %v3642, %v3564
        %v3662 = vmul.f32 %v3641, %v3565
        %v3663 = vmul.f32 %v3640, %v3566
        %v3664 = vmul.f32 %v3639, %v3567
        %v3665 = vmul.f32 %v3638, %v3568
        %v3666 = vmul.f32 %v3637, %v3569
        %v3667 = vmul.f32 %v3636, %v3570
        %v3668 = vmul.f32 %v3650, %v3603
        %v3669 = vmul.f32 %v3649, %v3604
        %v3670 = vmul.f32 %v3648, %v3605
        %v3671 = vmul.f32 %v3647, %v3606
        %v3672 = vmul.f32 %v3646, %v3607
        %v3673 = vmul.f32 %v3645, %v3608
        %v3674 = vmul.f32 %v3644, %v3609
        %v3675 = vmul.f32 %v3643, %v3610
        %v3676 = vmul.f32 %v3642, %v3611
        %v3677 = vmul.f32 %v3641, %v3612
        %v3678 = vmul.f32 %v3640, %v3613
        %v3679 = vmul.f32 %v3639, %v3614
        %v3680 = vmul.f32 %v3638, %v3615
        %v3681 = vmul.f32 %v3637, %v3616
        %v3682 = vmul.f32 %v3636, %v3617
        %v3683 = vmul.f32 %v3651, %v3618
        %v3684 = vrot.slane %v3476, 4
        %v3685 = vrot.slane %v3479, 4
        %v3686 = vrot.slane %v3482, 4
        %v3687 = vrot.slane %v3485, 4
        %v3688 = vrot.slane %v3488, 4
        %v3689 = vrot.slane %v3491, 4
        %v3690 = vrot.slane %v3494, 4
        %v3691 = vrot.slane %v3497, 4
        %v3692 = vrot.slane %v3500, 4
        %v3693 = vrot.slane %v3503, 4
        %v3694 = vrot.slane %v3506, 4
        %v3695 = vrot.slane %v3509, 4
        %v3696 = vrot.slane %v3512, 4
        %v3697 = vrot.slane %v3515, 4
        %v3698 = vrot.slane %v3518, 4
        %v3699 = vrot.slane %v3521, 4
        %v3700 = vsel %vm3635, %v3698, %v3699
        %v3701 = vsel %vm3635, %v3697, %v3698
        %v3702 = vsel %vm3635, %v3696, %v3697
        %v3703 = vsel %vm3635, %v3695, %v3696
        %v3704 = vsel %vm3635, %v3694, %v3695
        %v3705 = vsel %vm3635, %v3693, %v3694
        %v3706 = vsel %vm3635, %v3692, %v3693
        %v3707 = vsel %vm3635, %v3691, %v3692
        %v3708 = vsel %vm3635, %v3690, %v3691
        %v3709 = vsel %vm3635, %v3689, %v3690
        %v3710 = vsel %vm3635, %v3688, %v3689
        %v3711 = vsel %vm3635, %v3687, %v3688
        %v3712 = vsel %vm3635, %v3686, %v3687
        %v3713 = vsel %vm3635, %v3685, %v3686
        %v3714 = vsel %vm3635, %v3684, %v3685
        %v3715 = vsel %vm3635, %v3699, %v3684
        %v3716 = vmul.f32 %v3715, %v3555
        %v3717 = vmul.f32 %v3714, %v3556
        %v3718 = vmul.f32 %v3713, %v3557
        %v3719 = vmul.f32 %v3712, %v3558
        %v3720 = vmul.f32 %v3711, %v3559
        %v3721 = vmul.f32 %v3710, %v3560
        %v3722 = vmul.f32 %v3709, %v3561
        %v3723 = vmul.f32 %v3708, %v3562
        %v3724 = vmul.f32 %v3707, %v3563
        %v3725 = vmul.f32 %v3706, %v3564
        %v3726 = vmul.f32 %v3705, %v3565
        %v3727 = vmul.f32 %v3704, %v3566
        %v3728 = vmul.f32 %v3703, %v3567
        %v3729 = vmul.f32 %v3702, %v3568
        %v3730 = vmul.f32 %v3701, %v3569
        %v3731 = vmul.f32 %v3700, %v3570
        %v3732 = vperm.slane %v3278, 0
        %v3733 = vadd.f32 %v3716, %v3732
        %v3734 = vadd.f32 %v3717, %v3732
        %v3735 = vadd.f32 %v3718, %v3732
        %v3736 = vadd.f32 %v3719, %v3732
        %v3737 = vadd.f32 %v3720, %v3732
        %v3738 = vadd.f32 %v3721, %v3732
        %v3739 = vadd.f32 %v3722, %v3732
        %v3740 = vadd.f32 %v3723, %v3732
        %v3741 = vadd.f32 %v3724, %v3732
        %v3742 = vadd.f32 %v3725, %v3732
        %v3743 = vadd.f32 %v3726, %v3732
        %v3744 = vadd.f32 %v3727, %v3732
        %v3745 = vadd.f32 %v3728, %v3732
        %v3746 = vadd.f32 %v3729, %v3732
        %v3747 = vadd.f32 %v3730, %v3732
        %v3748 = vadd.f32 %v3731, %v3732
        %v3749 = vperm.slane %v3278, 1
        %v3750 = vadd.f32 %v3476, %v3749
        %v3751 = vadd.f32 %v3479, %v3749
        %v3752 = vadd.f32 %v3482, %v3749
        %v3753 = vadd.f32 %v3485, %v3749
        %v3754 = vadd.f32 %v3488, %v3749
        %v3755 = vadd.f32 %v3491, %v3749
        %v3756 = vadd.f32 %v3494, %v3749
        %v3757 = vadd.f32 %v3497, %v3749
        %v3758 = vadd.f32 %v3500, %v3749
        %v3759 = vadd.f32 %v3503, %v3749
        %v3760 = vadd.f32 %v3506, %v3749
        %v3761 = vadd.f32 %v3509, %v3749
        %v3762 = vadd.f32 %v3512, %v3749
        %v3763 = vadd.f32 %v3515, %v3749
        %v3764 = vadd.f32 %v3518, %v3749
        %v3765 = vadd.f32 %v3521, %v3749
        %v3766 = vmul.f32 %v3714, %v3603
        %v3767 = vmul.f32 %v3713, %v3604
        %v3768 = vmul.f32 %v3712, %v3605
        %v3769 = vmul.f32 %v3711, %v3606
        %v3770 = vmul.f32 %v3710, %v3607
        %v3771 = vmul.f32 %v3709, %v3608
        %v3772 = vmul.f32 %v3708, %v3609
        %v3773 = vmul.f32 %v3707, %v3610
        %v3774 = vmul.f32 %v3706, %v3611
        %v3775 = vmul.f32 %v3705, %v3612
        %v3776 = vmul.f32 %v3704, %v3613
        %v3777 = vmul.f32 %v3703, %v3614
        %v3778 = vmul.f32 %v3702, %v3615
        %v3779 = vmul.f32 %v3701, %v3616
        %v3780 = vmul.f32 %v3700, %v3617
        %v3781 = vmul.f32 %v3715, %v3618
        %v3782 = vperm.slane %v3278, 2
        %v3783 = vadd.f32 %v3766, %v3782
        %v3784 = vadd.f32 %v3767, %v3782
        %v3785 = vadd.f32 %v3768, %v3782
        %v3786 = vadd.f32 %v3769, %v3782
        %v3787 = vadd.f32 %v3770, %v3782
        %v3788 = vadd.f32 %v3771, %v3782
        %v3789 = vadd.f32 %v3772, %v3782
        %v3790 = vadd.f32 %v3773, %v3782
        %v3791 = vadd.f32 %v3774, %v3782
        %v3792 = vadd.f32 %v3775, %v3782
        %v3793 = vadd.f32 %v3776, %v3782
        %v3794 = vadd.f32 %v3777, %v3782
        %v3795 = vadd.f32 %v3778, %v3782
        %v3796 = vadd.f32 %v3779, %v3782
        %v3797 = vadd.f32 %v3780, %v3782
        %v3798 = vadd.f32 %v3781, %v3782
        %v3799 = vmul.f32 %v3346, %v3652
        %v3800 = vmul.f32 %v3349, %v3653
        %v3801 = vmul.f32 %v3352, %v3654
        %v3802 = vmul.f32 %v3355, %v3655
        %v3803 = vmul.f32 %v3358, %v3656
        %v3804 = vmul.f32 %v3361, %v3657
        %v3805 = vmul.f32 %v3364, %v3658
        %v3806 = vmul.f32 %v3367, %v3659
        %v3807 = vmul.f32 %v3370, %v3660
        %v3808 = vmul.f32 %v3373, %v3661
        %v3809 = vmul.f32 %v3376, %v3662
        %v3810 = vmul.f32 %v3379, %v3663
        %v3811 = vmul.f32 %v3382, %v3664
        %v3812 = vmul.f32 %v3385, %v3665
        %v3813 = vmul.f32 %v3388, %v3666
        %v3814 = vmul.f32 %v3391, %v3667
        %v3815 = vmul.f32 %v3346, %v3411
        %v3816 = vmul.f32 %v3349, %v3414
        %v3817 = vmul.f32 %v3352, %v3417
        %v3818 = vmul.f32 %v3355, %v3420
        %v3819 = vmul.f32 %v3358, %v3423
        %v3820 = vmul.f32 %v3361, %v3426
        %v3821 = vmul.f32 %v3364, %v3429
        %v3822 = vmul.f32 %v3367, %v3432
        %v3823 = vmul.f32 %v3370, %v3435
        %v3824 = vmul.f32 %v3373, %v3438
        %v3825 = vmul.f32 %v3376, %v3441
        %v3826 = vmul.f32 %v3379, %v3444
        %v3827 = vmul.f32 %v3382, %v3447
        %v3828 = vmul.f32 %v3385, %v3450
        %v3829 = vmul.f32 %v3388, %v3453
        %v3830 = vmul.f32 %v3391, %v3456
        %v3831 = vmul.f32 %v3346, %v3668
        %v3832 = vmul.f32 %v3349, %v3669
        %v3833 = vmul.f32 %v3352, %v3670
        %v3834 = vmul.f32 %v3355, %v3671
        %v3835 = vmul.f32 %v3358, %v3672
        %v3836 = vmul.f32 %v3361, %v3673
        %v3837 = vmul.f32 %v3364, %v3674
        %v3838 = vmul.f32 %v3367, %v3675
        %v3839 = vmul.f32 %v3370, %v3676
        %v3840 = vmul.f32 %v3373, %v3677
        %v3841 = vmul.f32 %v3376, %v3678
        %v3842 = vmul.f32 %v3379, %v3679
        %v3843 = vmul.f32 %v3382, %v3680
        %v3844 = vmul.f32 %v3385, %v3681
        %v3845 = vmul.f32 %v3388, %v3682
        %v3846 = vmul.f32 %v3391, %v3683
        %v3847 = vmax.f32 %v3799, %v3815
        %v3848 = vmax.f32 %v3800, %v3816
        %v3849 = vmax.f32 %v3801, %v3817
        %v3850 = vmax.f32 %v3802, %v3818
        %v3851 = vmax.f32 %v3803, %v3819
        %v3852 = vmax.f32 %v3804, %v3820
        %v3853 = vmax.f32 %v3805, %v3821
        %v3854 = vmax.f32 %v3806, %v3822
        %v3855 = vmax.f32 %v3807, %v3823
        %v3856 = vmax.f32 %v3808, %v3824
        %v3857 = vmax.f32 %v3809, %v3825
        %v3858 = vmax.f32 %v3810, %v3826
        %v3859 = vmax.f32 %v3811, %v3827
        %v3860 = vmax.f32 %v3812, %v3828
        %v3861 = vmax.f32 %v3813, %v3829
        %v3862 = vmax.f32 %v3814, %v3830
        %v3863 = vmax.f32 %v3847, %v3831
        %v3864 = vmax.f32 %v3848, %v3832
        %v3865 = vmax.f32 %v3849, %v3833
        %v3866 = vmax.f32 %v3850, %v3834
        %v3867 = vmax.f32 %v3851, %v3835
        %v3868 = vmax.f32 %v3852, %v3836
        %v3869 = vmax.f32 %v3853, %v3837
        %v3870 = vmax.f32 %v3854, %v3838
        %v3871 = vmax.f32 %v3855, %v3839
        %v3872 = vmax.f32 %v3856, %v3840
        %v3873 = vmax.f32 %v3857, %v3841
        %v3874 = vmax.f32 %v3858, %v3842
        %v3875 = vmax.f32 %v3859, %v3843
        %v3876 = vmax.f32 %v3860, %v3844
        %v3877 = vmax.f32 %v3861, %v3845
        %v3878 = vmax.f32 %v3862, %v3846
        %v3879 = vsub.f32 %v3799, %v3863
        %v3880 = vsub.f32 %v3800, %v3864
        %v3881 = vsub.f32 %v3801, %v3865
        %v3882 = vsub.f32 %v3802, %v3866
        %v3883 = vsub.f32 %v3803, %v3867
        %v3884 = vsub.f32 %v3804, %v3868
        %v3885 = vsub.f32 %v3805, %v3869
        %v3886 = vsub.f32 %v3806, %v3870
        %v3887 = vsub.f32 %v3807, %v3871
        %v3888 = vsub.f32 %v3808, %v3872
        %v3889 = vsub.f32 %v3809, %v3873
        %v3890 = vsub.f32 %v3810, %v3874
        %v3891 = vsub.f32 %v3811, %v3875
        %v3892 = vsub.f32 %v3812, %v3876
        %v3893 = vsub.f32 %v3813, %v3877
        %v3894 = vsub.f32 %v3814, %v3878
        %v3895 = vmul.f32 %v3879, 1.442695
        %v3896 = vpow.pop %v3895
        %v3897 = vmul.f32 %v3880, 1.442695
        %v3898 = vpow.pop %v3897
        %v3899 = vmul.f32 %v3881, 1.442695
        %v3900 = vpow.pop %v3899
        %v3901 = vmul.f32 %v3882, 1.442695
        %v3902 = vpow.pop %v3901
        %v3903 = vmul.f32 %v3883, 1.442695
        %v3904 = vpow.pop %v3903
        %v3905 = vmul.f32 %v3884, 1.442695
        %v3906 = vpow.pop %v3905
        %v3907 = vmul.f32 %v3885, 1.442695
        %v3908 = vpow.pop %v3907
        %v3909 = vmul.f32 %v3886, 1.442695
        %v3910 = vpow.pop %v3909
        %v3911 = vmul.f32 %v3887, 1.442695
        %v3912 = vpow.pop %v3911
        %v3913 = vmul.f32 %v3888, 1.442695
        %v3914 = vpow.pop %v3913
        %v3915 = vmul.f32 %v3889, 1.442695
        %v3916 = vpow.pop %v3915
        %v3917 = vmul.f32 %v3890, 1.442695
        %v3918 = vpow.pop %v3917
        %v3919 = vmul.f32 %v3891, 1.442695
        %v3920 = vpow.pop %v3919
        %v3921 = vmul.f32 %v3892, 1.442695
        %v3922 = vpow.pop %v3921
        %v3923 = vmul.f32 %v3893, 1.442695
        %v3924 = vpow.pop %v3923
        %v3925 = vmul.f32 %v3894, 1.442695
        %v3926 = vpow.pop %v3925
        %v3927 = vsub.f32 %v3815, %v3863
        %v3928 = vsub.f32 %v3816, %v3864
        %v3929 = vsub.f32 %v3817, %v3865
        %v3930 = vsub.f32 %v3818, %v3866
        %v3931 = vsub.f32 %v3819, %v3867
        %v3932 = vsub.f32 %v3820, %v3868
        %v3933 = vsub.f32 %v3821, %v3869
        %v3934 = vsub.f32 %v3822, %v3870
        %v3935 = vsub.f32 %v3823, %v3871
        %v3936 = vsub.f32 %v3824, %v3872
        %v3937 = vsub.f32 %v3825, %v3873
        %v3938 = vsub.f32 %v3826, %v3874
        %v3939 = vsub.f32 %v3827, %v3875
        %v3940 = vsub.f32 %v3828, %v3876
        %v3941 = vsub.f32 %v3829, %v3877
        %v3942 = vsub.f32 %v3830, %v3878
        %v3943 = vmul.f32 %v3927, 1.442695
        %v3944 = vpow.pop %v3943
        %v3945 = vmul.f32 %v3928, 1.442695
        %v3946 = vpow.pop %v3945
        %v3947 = vmul.f32 %v3929, 1.442695
        %v3948 = vpow.pop %v3947
        %v3949 = vmul.f32 %v3930, 1.442695
        %v3950 = vpow.pop %v3949
        %v3951 = vmul.f32 %v3931, 1.442695
        %v3952 = vpow.pop %v3951
        %v3953 = vmul.f32 %v3932, 1.442695
        %v3954 = vpow.pop %v3953
        %v3955 = vmul.f32 %v3933, 1.442695
        %v3956 = vpow.pop %v3955
        %v3957 = vmul.f32 %v3934, 1.442695
        %v3958 = vpow.pop %v3957
        %v3959 = vmul.f32 %v3935, 1.442695
        %v3960 = vpow.pop %v3959
        %v3961 = vmul.f32 %v3936, 1.442695
        %v3962 = vpow.pop %v3961
        %v3963 = vmul.f32 %v3937, 1.442695
        %v3964 = vpow.pop %v3963
        %v3965 = vmul.f32 %v3938, 1.442695
        %v3966 = vpow.pop %v3965
        %v3967 = vmul.f32 %v3939, 1.442695
        %v3968 = vpow.pop %v3967
        %v3969 = vmul.f32 %v3940, 1.442695
        %v3970 = vpow.pop %v3969
        %v3971 = vmul.f32 %v3941, 1.442695
        %v3972 = vpow.pop %v3971
        %v3973 = vmul.f32 %v3942, 1.442695
        %v3974 = vpow.pop %v3973
        %v3975 = vsub.f32 %v3831, %v3863
        %v3976 = vsub.f32 %v3832, %v3864
        %v3977 = vsub.f32 %v3833, %v3865
        %v3978 = vsub.f32 %v3834, %v3866
        %v3979 = vsub.f32 %v3835, %v3867
        %v3980 = vsub.f32 %v3836, %v3868
        %v3981 = vsub.f32 %v3837, %v3869
        %v3982 = vsub.f32 %v3838, %v3870
        %v3983 = vsub.f32 %v3839, %v3871
        %v3984 = vsub.f32 %v3840, %v3872
        %v3985 = vsub.f32 %v3841, %v3873
        %v3986 = vsub.f32 %v3842, %v3874
        %v3987 = vsub.f32 %v3843, %v3875
        %v3988 = vsub.f32 %v3844, %v3876
        %v3989 = vsub.f32 %v3845, %v3877
        %v3990 = vsub.f32 %v3846, %v3878
        %v3991 = vmul.f32 %v3975, 1.442695
        %v3992 = vpow.pop %v3991
        %v3993 = vmul.f32 %v3976, 1.442695
        %v3994 = vpow.pop %v3993
        %v3995 = vmul.f32 %v3977, 1.442695
        %v3996 = vpow.pop %v3995
        %v3997 = vmul.f32 %v3978, 1.442695
        %v3998 = vpow.pop %v3997
        %v3999 = vmul.f32 %v3979, 1.442695
        %v4000 = vpow.pop %v3999
        %v4001 = vmul.f32 %v3980, 1.442695
        %v4002 = vpow.pop %v4001
        %v4003 = vmul.f32 %v3981, 1.442695
        %v4004 = vpow.pop %v4003
        %v4005 = vmul.f32 %v3982, 1.442695
        %v4006 = vpow.pop %v4005
        %v4007 = vmul.f32 %v3983, 1.442695
        %v4008 = vpow.pop %v4007
        %v4009 = vmul.f32 %v3984, 1.442695
        %v4010 = vpow.pop %v4009
        %v4011 = vmul.f32 %v3985, 1.442695
        %v4012 = vpow.pop %v4011
        %v4013 = vmul.f32 %v3986, 1.442695
        %v4014 = vpow.pop %v4013
        %v4015 = vmul.f32 %v3987, 1.442695
        %v4016 = vpow.pop %v4015
        %v4017 = vmul.f32 %v3988, 1.442695
        %v4018 = vpow.pop %v4017
        %v4019 = vmul.f32 %v3989, 1.442695
        %v4020 = vpow.pop %v4019
        %v4021 = vmul.f32 %v3990, 1.442695
        %v4022 = vpow.pop %v4021
        %v4023 = vadd.f32 %v3896, %v3944
        %v4024 = vadd.f32 %v3898, %v3946
        %v4025 = vadd.f32 %v3900, %v3948
        %v4026 = vadd.f32 %v3902, %v3950
        %v4027 = vadd.f32 %v3904, %v3952
        %v4028 = vadd.f32 %v3906, %v3954
        %v4029 = vadd.f32 %v3908, %v3956
        %v4030 = vadd.f32 %v3910, %v3958
        %v4031 = vadd.f32 %v3912, %v3960
        %v4032 = vadd.f32 %v3914, %v3962
        %v4033 = vadd.f32 %v3916, %v3964
        %v4034 = vadd.f32 %v3918, %v3966
        %v4035 = vadd.f32 %v3920, %v3968
        %v4036 = vadd.f32 %v3922, %v3970
        %v4037 = vadd.f32 %v3924, %v3972
        %v4038 = vadd.f32 %v3926, %v3974
        %v4039 = vadd.f32 %v4023, %v3992
        %v4040 = vadd.f32 %v4024, %v3994
        %v4041 = vadd.f32 %v4025, %v3996
        %v4042 = vadd.f32 %v4026, %v3998
        %v4043 = vadd.f32 %v4027, %v4000
        %v4044 = vadd.f32 %v4028, %v4002
        %v4045 = vadd.f32 %v4029, %v4004
        %v4046 = vadd.f32 %v4030, %v4006
        %v4047 = vadd.f32 %v4031, %v4008
        %v4048 = vadd.f32 %v4032, %v4010
        %v4049 = vadd.f32 %v4033, %v4012
        %v4050 = vadd.f32 %v4034, %v4014
        %v4051 = vadd.f32 %v4035, %v4016
        %v4052 = vadd.f32 %v4036, %v4018
        %v4053 = vadd.f32 %v4037, %v4020
        %v4054 = vadd.f32 %v4038, %v4022
        %v4055 = vmul.f32 %v3896, %v3733
        %v4056 = vmul.f32 %v3898, %v3734
        %v4057 = vmul.f32 %v3900, %v3735
        %v4058 = vmul.f32 %v3902, %v3736
        %v4059 = vmul.f32 %v3904, %v3737
        %v4060 = vmul.f32 %v3906, %v3738
        %v4061 = vmul.f32 %v3908, %v3739
        %v4062 = vmul.f32 %v3910, %v3740
        %v4063 = vmul.f32 %v3912, %v3741
        %v4064 = vmul.f32 %v3914, %v3742
        %v4065 = vmul.f32 %v3916, %v3743
        %v4066 = vmul.f32 %v3918, %v3744
        %v4067 = vmul.f32 %v3920, %v3745
        %v4068 = vmul.f32 %v3922, %v3746
        %v4069 = vmul.f32 %v3924, %v3747
        %v4070 = vmul.f32 %v3926, %v3748
        %v4071 = vmul.f32 %v3944, %v3750
        %v4072 = vmul.f32 %v3946, %v3751
        %v4073 = vmul.f32 %v3948, %v3752
        %v4074 = vmul.f32 %v3950, %v3753
        %v4075 = vmul.f32 %v3952, %v3754
        %v4076 = vmul.f32 %v3954, %v3755
        %v4077 = vmul.f32 %v3956, %v3756
        %v4078 = vmul.f32 %v3958, %v3757
        %v4079 = vmul.f32 %v3960, %v3758
        %v4080 = vmul.f32 %v3962, %v3759
        %v4081 = vmul.f32 %v3964, %v3760
        %v4082 = vmul.f32 %v3966, %v3761
        %v4083 = vmul.f32 %v3968, %v3762
        %v4084 = vmul.f32 %v3970, %v3763
        %v4085 = vmul.f32 %v3972, %v3764
        %v4086 = vmul.f32 %v3974, %v3765
        %v4087 = vadd.f32 %v4055, %v4071
        %v4088 = vadd.f32 %v4056, %v4072
        %v4089 = vadd.f32 %v4057, %v4073
        %v4090 = vadd.f32 %v4058, %v4074
        %v4091 = vadd.f32 %v4059, %v4075
        %v4092 = vadd.f32 %v4060, %v4076
        %v4093 = vadd.f32 %v4061, %v4077
        %v4094 = vadd.f32 %v4062, %v4078
        %v4095 = vadd.f32 %v4063, %v4079
        %v4096 = vadd.f32 %v4064, %v4080
        %v4097 = vadd.f32 %v4065, %v4081
        %v4098 = vadd.f32 %v4066, %v4082
        %v4099 = vadd.f32 %v4067, %v4083
        %v4100 = vadd.f32 %v4068, %v4084
        %v4101 = vadd.f32 %v4069, %v4085
        %v4102 = vadd.f32 %v4070, %v4086
        %v4103 = vmul.f32 %v3992, %v3783
        %v4104 = vmul.f32 %v3994, %v3784
        %v4105 = vmul.f32 %v3996, %v3785
        %v4106 = vmul.f32 %v3998, %v3786
        %v4107 = vmul.f32 %v4000, %v3787
        %v4108 = vmul.f32 %v4002, %v3788
        %v4109 = vmul.f32 %v4004, %v3789
        %v4110 = vmul.f32 %v4006, %v3790
        %v4111 = vmul.f32 %v4008, %v3791
        %v4112 = vmul.f32 %v4010, %v3792
        %v4113 = vmul.f32 %v4012, %v3793
        %v4114 = vmul.f32 %v4014, %v3794
        %v4115 = vmul.f32 %v4016, %v3795
        %v4116 = vmul.f32 %v4018, %v3796
        %v4117 = vmul.f32 %v4020, %v3797
        %v4118 = vmul.f32 %v4022, %v3798
        %v4119 = vadd.f32 %v4087, %v4103
        %v4120 = vadd.f32 %v4088, %v4104
        %v4121 = vadd.f32 %v4089, %v4105
        %v4122 = vadd.f32 %v4090, %v4106
        %v4123 = vadd.f32 %v4091, %v4107
        %v4124 = vadd.f32 %v4092, %v4108
        %v4125 = vadd.f32 %v4093, %v4109
        %v4126 = vadd.f32 %v4094, %v4110
        %v4127 = vadd.f32 %v4095, %v4111
        %v4128 = vadd.f32 %v4096, %v4112
        %v4129 = vadd.f32 %v4097, %v4113
        %v4130 = vadd.f32 %v4098, %v4114
        %v4131 = vadd.f32 %v4099, %v4115
        %v4132 = vadd.f32 %v4100, %v4116
        %v4133 = vadd.f32 %v4101, %v4117
        %v4134 = vadd.f32 %v4102, %v4118
        %v4135 = vrcp.pop %v4039
        %v4136 = vmul.f32 %v4039, %v4135
        %v4137 = vsub.f32 1.0, %v4136
        %v4138 = vmul.f32 %v4135, %v4137
        %v4139 = vadd.f32 %v4135, %v4138
        %vm4140 = vweird.f32 %v4039
        %vm4141 = vweird.f32 %v4135
        %vm4142 = vmor %vm4140, %vm4141
        %v4143 = vsel %vm4142, %v4135, %v4139
        %v4144 = vand.u32 2147483647, %v4039
        %vm4145 = vcmp.eq.f32.partialorder %v4144, 8.507059e+37
        %v4146 = vand.u32 %v4039, 2147483648
        %v4147 = vor.u32 1.1754944e-38, %v4146
        %v4148 = vsel %vm4145, %v4147, %v4143
        %v4149 = vrcp.pop %v4040
        %v4150 = vmul.f32 %v4040, %v4149
        %v4151 = vsub.f32 1.0, %v4150
        %v4152 = vmul.f32 %v4149, %v4151
        %v4153 = vadd.f32 %v4149, %v4152
        %vm4154 = vweird.f32 %v4040
        %vm4155 = vweird.f32 %v4149
        %vm4156 = vmor %vm4154, %vm4155
        %v4157 = vsel %vm4156, %v4149, %v4153
        %v4158 = vand.u32 2147483647, %v4040
        %vm4159 = vcmp.eq.f32.partialorder %v4158, 8.507059e+37
        %v4160 = vand.u32 %v4040, 2147483648
        %v4161 = vor.u32 1.1754944e-38, %v4160
        %v4162 = vsel %vm4159, %v4161, %v4157
        %v4163 = vrcp.pop %v4041
        %v4164 = vmul.f32 %v4041, %v4163
        %v4165 = vsub.f32 1.0, %v4164
        %v4166 = vmul.f32 %v4163, %v4165
        %v4167 = vadd.f32 %v4163, %v4166
        %vm4168 = vweird.f32 %v4041
        %vm4169 = vweird.f32 %v4163
        %vm4170 = vmor %vm4168, %vm4169
        %v4171 = vsel %vm4170, %v4163, %v4167
        %v4172 = vand.u32 2147483647, %v4041
        %vm4173 = vcmp.eq.f32.partialorder %v4172, 8.507059e+37
        %v4174 = vand.u32 %v4041, 2147483648
        %v4175 = vor.u32 1.1754944e-38, %v4174
        %v4176 = vsel %vm4173, %v4175, %v4171
        %v4177 = vrcp.pop %v4042
        %v4178 = vmul.f32 %v4042, %v4177
        %v4179 = vsub.f32 1.0, %v4178
        %v4180 = vmul.f32 %v4177, %v4179
        %v4181 = vadd.f32 %v4177, %v4180
        %vm4182 = vweird.f32 %v4042
        %vm4183 = vweird.f32 %v4177
        %vm4184 = vmor %vm4182, %vm4183
        %v4185 = vsel %vm4184, %v4177, %v4181
        %v4186 = vand.u32 2147483647, %v4042
        %vm4187 = vcmp.eq.f32.partialorder %v4186, 8.507059e+37
        %v4188 = vand.u32 %v4042, 2147483648
        %v4189 = vor.u32 1.1754944e-38, %v4188
        %v4190 = vsel %vm4187, %v4189, %v4185
        %v4191 = vrcp.pop %v4043
        %v4192 = vmul.f32 %v4043, %v4191
        %v4193 = vsub.f32 1.0, %v4192
        %v4194 = vmul.f32 %v4191, %v4193
        %v4195 = vadd.f32 %v4191, %v4194
        %vm4196 = vweird.f32 %v4043
        %vm4197 = vweird.f32 %v4191
        %vm4198 = vmor %vm4196, %vm4197
        %v4199 = vsel %vm4198, %v4191, %v4195
        %v4200 = vand.u32 2147483647, %v4043
        %vm4201 = vcmp.eq.f32.partialorder %v4200, 8.507059e+37
        %v4202 = vand.u32 %v4043, 2147483648
        %v4203 = vor.u32 1.1754944e-38, %v4202
        %v4204 = vsel %vm4201, %v4203, %v4199
        %v4205 = vrcp.pop %v4044
        %v4206 = vmul.f32 %v4044, %v4205
        %v4207 = vsub.f32 1.0, %v4206
        %v4208 = vmul.f32 %v4205, %v4207
        %v4209 = vadd.f32 %v4205, %v4208
        %vm4210 = vweird.f32 %v4044
        %vm4211 = vweird.f32 %v4205
        %vm4212 = vmor %vm4210, %vm4211
        %v4213 = vsel %vm4212, %v4205, %v4209
        %v4214 = vand.u32 2147483647, %v4044
        %vm4215 = vcmp.eq.f32.partialorder %v4214, 8.507059e+37
        %v4216 = vand.u32 %v4044, 2147483648
        %v4217 = vor.u32 1.1754944e-38, %v4216
        %v4218 = vsel %vm4215, %v4217, %v4213
        %v4219 = vrcp.pop %v4045
        %v4220 = vmul.f32 %v4045, %v4219
        %v4221 = vsub.f32 1.0, %v4220
        %v4222 = vmul.f32 %v4219, %v4221
        %v4223 = vadd.f32 %v4219, %v4222
        %vm4224 = vweird.f32 %v4045
        %vm4225 = vweird.f32 %v4219
        %vm4226 = vmor %vm4224, %vm4225
        %v4227 = vsel %vm4226, %v4219, %v4223
        %v4228 = vand.u32 2147483647, %v4045
        %vm4229 = vcmp.eq.f32.partialorder %v4228, 8.507059e+37
        %v4230 = vand.u32 %v4045, 2147483648
        %v4231 = vor.u32 1.1754944e-38, %v4230
        %v4232 = vsel %vm4229, %v4231, %v4227
        %v4233 = vrcp.pop %v4046
        %v4234 = vmul.f32 %v4046, %v4233
        %v4235 = vsub.f32 1.0, %v4234
        %v4236 = vmul.f32 %v4233, %v4235
        %v4237 = vadd.f32 %v4233, %v4236
        %vm4238 = vweird.f32 %v4046
        %vm4239 = vweird.f32 %v4233
        %vm4240 = vmor %vm4238, %vm4239
        %v4241 = vsel %vm4240, %v4233, %v4237
        %v4242 = vand.u32 2147483647, %v4046
        %vm4243 = vcmp.eq.f32.partialorder %v4242, 8.507059e+37
        %v4244 = vand.u32 %v4046, 2147483648
        %v4245 = vor.u32 1.1754944e-38, %v4244
        %v4246 = vsel %vm4243, %v4245, %v4241
        %v4247 = vrcp.pop %v4047
        %v4248 = vmul.f32 %v4047, %v4247
        %v4249 = vsub.f32 1.0, %v4248
        %v4250 = vmul.f32 %v4247, %v4249
        %v4251 = vadd.f32 %v4247, %v4250
        %vm4252 = vweird.f32 %v4047
        %vm4253 = vweird.f32 %v4247
        %vm4254 = vmor %vm4252, %vm4253
        %v4255 = vsel %vm4254, %v4247, %v4251
        %v4256 = vand.u32 2147483647, %v4047
        %vm4257 = vcmp.eq.f32.partialorder %v4256, 8.507059e+37
        %v4258 = vand.u32 %v4047, 2147483648
        %v4259 = vor.u32 1.1754944e-38, %v4258
        %v4260 = vsel %vm4257, %v4259, %v4255
        %v4261 = vrcp.pop %v4048
        %v4262 = vmul.f32 %v4048, %v4261
        %v4263 = vsub.f32 1.0, %v4262
        %v4264 = vmul.f32 %v4261, %v4263
        %v4265 = vadd.f32 %v4261, %v4264
        %vm4266 = vweird.f32 %v4048
        %vm4267 = vweird.f32 %v4261
        %vm4268 = vmor %vm4266, %vm4267
        %v4269 = vsel %vm4268, %v4261, %v4265
        %v4270 = vand.u32 2147483647, %v4048
        %vm4271 = vcmp.eq.f32.partialorder %v4270, 8.507059e+37
        %v4272 = vand.u32 %v4048, 2147483648
        %v4273 = vor.u32 1.1754944e-38, %v4272
        %v4274 = vsel %vm4271, %v4273, %v4269
        %v4275 = vrcp.pop %v4049
        %v4276 = vmul.f32 %v4049, %v4275
        %v4277 = vsub.f32 1.0, %v4276
        %v4278 = vmul.f32 %v4275, %v4277
        %v4279 = vadd.f32 %v4275, %v4278
        %vm4280 = vweird.f32 %v4049
        %vm4281 = vweird.f32 %v4275
        %vm4282 = vmor %vm4280, %vm4281
        %v4283 = vsel %vm4282, %v4275, %v4279
        %v4284 = vand.u32 2147483647, %v4049
        %vm4285 = vcmp.eq.f32.partialorder %v4284, 8.507059e+37
        %v4286 = vand.u32 %v4049, 2147483648
        %v4287 = vor.u32 1.1754944e-38, %v4286
        %v4288 = vsel %vm4285, %v4287, %v4283
        %v4289 = vrcp.pop %v4050
        %v4290 = vmul.f32 %v4050, %v4289
        %v4291 = vsub.f32 1.0, %v4290
        %v4292 = vmul.f32 %v4289, %v4291
        %v4293 = vadd.f32 %v4289, %v4292
        %vm4294 = vweird.f32 %v4050
        %vm4295 = vweird.f32 %v4289
        %vm4296 = vmor %vm4294, %vm4295
        %v4297 = vsel %vm4296, %v4289, %v4293
        %v4298 = vand.u32 2147483647, %v4050
        %vm4299 = vcmp.eq.f32.partialorder %v4298, 8.507059e+37
        %v4300 = vand.u32 %v4050, 2147483648
        %v4301 = vor.u32 1.1754944e-38, %v4300
        %v4302 = vsel %vm4299, %v4301, %v4297
        %v4303 = vrcp.pop %v4051
        %v4304 = vmul.f32 %v4051, %v4303
        %v4305 = vsub.f32 1.0, %v4304
        %v4306 = vmul.f32 %v4303, %v4305
        %v4307 = vadd.f32 %v4303, %v4306
        %vm4308 = vweird.f32 %v4051
        %vm4309 = vweird.f32 %v4303
        %vm4310 = vmor %vm4308, %vm4309
        %v4311 = vsel %vm4310, %v4303, %v4307
        %v4312 = vand.u32 2147483647, %v4051
        %vm4313 = vcmp.eq.f32.partialorder %v4312, 8.507059e+37
        %v4314 = vand.u32 %v4051, 2147483648
        %v4315 = vor.u32 1.1754944e-38, %v4314
        %v4316 = vsel %vm4313, %v4315, %v4311
        %v4317 = vrcp.pop %v4052
        %v4318 = vmul.f32 %v4052, %v4317
        %v4319 = vsub.f32 1.0, %v4318
        %v4320 = vmul.f32 %v4317, %v4319
        %v4321 = vadd.f32 %v4317, %v4320
        %vm4322 = vweird.f32 %v4052
        %vm4323 = vweird.f32 %v4317
        %vm4324 = vmor %vm4322, %vm4323
        %v4325 = vsel %vm4324, %v4317, %v4321
        %v4326 = vand.u32 2147483647, %v4052
        %vm4327 = vcmp.eq.f32.partialorder %v4326, 8.507059e+37
        %v4328 = vand.u32 %v4052, 2147483648
        %v4329 = vor.u32 1.1754944e-38, %v4328
        %v4330 = vsel %vm4327, %v4329, %v4325
        %v4331 = vrcp.pop %v4053
        %v4332 = vmul.f32 %v4053, %v4331
        %v4333 = vsub.f32 1.0, %v4332
        %v4334 = vmul.f32 %v4331, %v4333
        %v4335 = vadd.f32 %v4331, %v4334
        %vm4336 = vweird.f32 %v4053
        %vm4337 = vweird.f32 %v4331
        %vm4338 = vmor %vm4336, %vm4337
        %v4339 = vsel %vm4338, %v4331, %v4335
        %v4340 = vand.u32 2147483647, %v4053
        %vm4341 = vcmp.eq.f32.partialorder %v4340, 8.507059e+37
        %v4342 = vand.u32 %v4053, 2147483648
        %v4343 = vor.u32 1.1754944e-38, %v4342
        %v4344 = vsel %vm4341, %v4343, %v4339
        %v4345 = vrcp.pop %v4054
        %v4346 = vmul.f32 %v4054, %v4345
        %v4347 = vsub.f32 1.0, %v4346
        %v4348 = vmul.f32 %v4345, %v4347
        %v4349 = vadd.f32 %v4345, %v4348
        %vm4350 = vweird.f32 %v4054
        %vm4351 = vweird.f32 %v4345
        %vm4352 = vmor %vm4350, %vm4351
        %v4353 = vsel %vm4352, %v4345, %v4349
        %v4354 = vand.u32 2147483647, %v4054
        %vm4355 = vcmp.eq.f32.partialorder %v4354, 8.507059e+37
        %v4356 = vand.u32 %v4054, 2147483648
        %v4357 = vor.u32 1.1754944e-38, %v4356
        %v4358 = vsel %vm4355, %v4357, %v4353
        %v4359 = vmul.f32 %v4119, %v4148
        %v4360 = vmul.f32 %v4120, %v4162
        %v4361 = vmul.f32 %v4121, %v4176
        %v4362 = vmul.f32 %v4122, %v4190
        %v4363 = vmul.f32 %v4123, %v4204
        %v4364 = vmul.f32 %v4124, %v4218
        %v4365 = vmul.f32 %v4125, %v4232
        %v4366 = vmul.f32 %v4126, %v4246
        %v4367 = vmul.f32 %v4127, %v4260
        %v4368 = vmul.f32 %v4128, %v4274
        %v4369 = vmul.f32 %v4129, %v4288
        %v4370 = vmul.f32 %v4130, %v4302
        %v4371 = vmul.f32 %v4131, %v4316
        %v4372 = vmul.f32 %v4132, %v4330
        %v4373 = vmul.f32 %v4133, %v4344
        %v4374 = vmul.f32 %v4134, %v4358
        %v4375 = vmax.f32 %v4359, 0.0
        %v4376 = vmax.f32 %v4360, 0.0
        %v4377 = vmax.f32 %v4361, 0.0
        %v4378 = vmax.f32 %v4362, 0.0
        %v4379 = vmax.f32 %v4363, 0.0
        %v4380 = vmax.f32 %v4364, 0.0
        %v4381 = vmax.f32 %v4365, 0.0
        %v4382 = vmax.f32 %v4366, 0.0
        %v4383 = vmax.f32 %v4367, 0.0
        %v4384 = vmax.f32 %v4368, 0.0
        %v4385 = vmax.f32 %v4369, 0.0
        %v4386 = vmax.f32 %v4370, 0.0
        %v4387 = vmax.f32 %v4371, 0.0
        %v4388 = vmax.f32 %v4372, 0.0
        %v4389 = vmax.f32 %v4373, 0.0
        %v4390 = vmax.f32 %v4374, 0.0
        %s4391 = scalar_lea.vmem %s7, 256
        %v4392 = vld [vmem:[%s4391] sm:$0xff]
        %v4393 = vld [vmem:[%s4391 + $0x8] sm:$0xff]
        %v4394 = vld [vmem:[%s4391 + $0x10] sm:$0xff]
        %v4395 = vld [vmem:[%s4391 + $0x18] sm:$0xff]
        %v4396 = vld [vmem:[%s4391 + $0x20] sm:$0xff]
        %v4397 = vld [vmem:[%s4391 + $0x28] sm:$0xff]
        %v4398 = vld [vmem:[%s4391 + $0x30] sm:$0xff]
        %v4399 = vld [vmem:[%s4391 + $0x38] sm:$0xff]
        %v4400 = vld [vmem:[%s4391 + $0x40] sm:$0xff]
        %v4401 = vld [vmem:[%s4391 + $0x48] sm:$0xff]
        %v4402 = vld [vmem:[%s4391 + $0x50] sm:$0xff]
        %v4403 = vld [vmem:[%s4391 + $0x58] sm:$0xff]
        %v4404 = vld [vmem:[%s4391 + $0x60] sm:$0xff]
        %v4405 = vld [vmem:[%s4391 + $0x68] sm:$0xff]
        %v4406 = vld [vmem:[%s4391 + $0x70] sm:$0xff]
        %v4407 = vld [vmem:[%s4391 + $0x78] sm:$0xff]
        %s4408 = scalar_lea.vmem %s8, 2
        %v4409 = vld [vmem:[%s4408] sm:$0x1]
        %v4411 = vperm.slane %v4409, 0
        %4413 = vmatpush.msra.mxu0 %v4407
        %4414 = vmatpush.msra.mxu0 %v4406
        %4415 = vmatpush.msra.mxu0 %v4405
        %4416 = vmatpush.msra.mxu0 %v4404
        %4417 = vmatpush.msra.mxu0 %v4403
        %4418 = vmatpush.msra.mxu0 %v4402
        %4419 = vmatpush.msra.mxu0 %v4401
        %4420 = vmatpush.msra.mxu0 %v4400
        %4421 = vmatpush.msra.mxu0 %v4399
        %4422 = vmatpush.msra.mxu0 %v4398
        %4423 = vmatpush.msra.mxu0 %v4397
        %4424 = vmatpush.msra.mxu0 %v4396
        %4425 = vmatpush.msra.mxu0 %v4395
        %4426 = vmatpush.msra.mxu0 %v4394
        %4427 = vmatpush.msra.mxu0 %v4393
        %4428 = vmatpush.msra.mxu0 %v4392
        %4429 = vmatmul.f32.gmra.mxu0 %v4375
        %v4430 = vpop.f32.mrf.mxu0
        %v4431 = vadd.f32 %v4411, %v4430
        %4432 = vmatmul.f32.gmra.mxu0 %v4376
        %v4433 = vpop.f32.mrf.mxu0
        %v4434 = vadd.f32 %v4411, %v4433
        %4435 = vmatmul.f32.gmra.mxu0 %v4377
        %v4436 = vpop.f32.mrf.mxu0
        %v4437 = vadd.f32 %v4411, %v4436
        %4438 = vmatmul.f32.gmra.mxu0 %v4378
        %v4439 = vpop.f32.mrf.mxu0
        %v4440 = vadd.f32 %v4411, %v4439
        %4441 = vmatmul.f32.gmra.mxu0 %v4379
        %v4442 = vpop.f32.mrf.mxu0
        %v4443 = vadd.f32 %v4411, %v4442
        %4444 = vmatmul.f32.gmra.mxu0 %v4380
        %v4445 = vpop.f32.mrf.mxu0
        %v4446 = vadd.f32 %v4411, %v4445
        %4447 = vmatmul.f32.gmra.mxu0 %v4381
        %v4448 = vpop.f32.mrf.mxu0
        %v4449 = vadd.f32 %v4411, %v4448
        %4450 = vmatmul.f32.gmra.mxu0 %v4382
        %v4451 = vpop.f32.mrf.mxu0
        %v4452 = vadd.f32 %v4411, %v4451
        %4453 = vmatmul.f32.gmra.mxu0 %v4383
        %v4454 = vpop.f32.mrf.mxu0
        %v4455 = vadd.f32 %v4411, %v4454
        %4456 = vmatmul.f32.gmra.mxu0 %v4384
        %v4457 = vpop.f32.mrf.mxu0
        %v4458 = vadd.f32 %v4411, %v4457
        %4459 = vmatmul.f32.gmra.mxu0 %v4385
        %v4460 = vpop.f32.mrf.mxu0
        %v4461 = vadd.f32 %v4411, %v4460
        %4462 = vmatmul.f32.gmra.mxu0 %v4386
        %v4463 = vpop.f32.mrf.mxu0
        %v4464 = vadd.f32 %v4411, %v4463
        %4465 = vmatmul.f32.gmra.mxu0 %v4387
        %v4466 = vpop.f32.mrf.mxu0
        %v4467 = vadd.f32 %v4411, %v4466
        %4468 = vmatmul.f32.gmra.mxu0 %v4388
        %v4469 = vpop.f32.mrf.mxu0
        %v4470 = vadd.f32 %v4411, %v4469
        %4471 = vmatmul.f32.gmra.mxu0 %v4389
        %v4472 = vpop.f32.mrf.mxu0
        %v4473 = vadd.f32 %v4411, %v4472
        %4474 = vmatmul.f32.gmra.mxu0 %v4390
        %v4475 = vpop.f32.mrf.mxu0
        %v4476 = vadd.f32 %v4411, %v4475
        %4477 = vdwg.mxu0
        %v4478 = vadd.f32 %v3261, %v4431
        %v4479 = vadd.f32 %v3262, %v4434
        %v4480 = vadd.f32 %v3263, %v4437
        %v4481 = vadd.f32 %v3264, %v4440
        %v4482 = vadd.f32 %v3265, %v4443
        %v4483 = vadd.f32 %v3266, %v4446
        %v4484 = vadd.f32 %v3267, %v4449
        %v4485 = vadd.f32 %v3268, %v4452
        %v4486 = vadd.f32 %v3269, %v4455
        %v4487 = vadd.f32 %v3270, %v4458
        %v4488 = vadd.f32 %v3271, %v4461
        %v4489 = vadd.f32 %v3272, %v4464
        %v4490 = vadd.f32 %v3273, %v4467
        %v4491 = vadd.f32 %v3274, %v4470
        %v4492 = vadd.f32 %v3275, %v4473
        %v4493 = vadd.f32 %v3276, %v4476
        %v4494 = vmul.f32 %v4478, %v1886
        %v4495 = vmul.f32 %v4479, %v1891
        %v4496 = vmul.f32 %v4480, %v1896
        %v4497 = vmul.f32 %v4481, %v1901
        %v4498 = vmul.f32 %v4482, %v1906
        %v4499 = vmul.f32 %v4483, %v1911
        %v4500 = vmul.f32 %v4484, %v1916
        %v4501 = vmul.f32 %v4485, %v1921
        %v4502 = vmul.f32 %v4486, %v1926
        %v4503 = vmul.f32 %v4487, %v1931
        %v4504 = vmul.f32 %v4488, %v1936
        %v4505 = vmul.f32 %v4489, %v1941
        %v4506 = vmul.f32 %v4490, %v1946
        %v4507 = vmul.f32 %v4491, %v1951
        %v4508 = vmul.f32 %v4492, %v1956
        %v4509 = vmul.f32 %v4493, %v1961
        %v4510 = vld [vmem:[%s9] sm:$0xff]
        %v4511 = vld [vmem:[%s10] sm:$0xff]
        %4513 = vset.pattern.permute.xlu0 0
        %4514 = vperm.xlu0 %4513, %v4511
        %v4515 = vpop.permute.xlu0 %4514
        %4517 = vmatpush.xpose.msra.mxu0 %v4509
        %4518 = vmatpush.xpose.msra.mxu0 %v4508
        %4519 = vmatpush.xpose.msra.mxu0 %v4507
        %4520 = vmatpush.xpose.msra.mxu0 %v4506
        %4521 = vmatpush.xpose.msra.mxu0 %v4505
        %4522 = vmatpush.xpose.msra.mxu0 %v4504
        %4523 = vmatpush.xpose.msra.mxu0 %v4503
        %4524 = vmatpush.xpose.msra.mxu0 %v4502
        %4525 = vmatpush.xpose.msra.mxu0 %v4501
        %4526 = vmatpush.xpose.msra.mxu0 %v4500
        %4527 = vmatpush.xpose.msra.mxu0 %v4499
        %4528 = vmatpush.xpose.msra.mxu0 %v4498
        %4529 = vmatpush.xpose.msra.mxu0 %v4497
        %4530 = vmatpush.xpose.msra.mxu0 %v4496
        %4531 = vmatpush.xpose.msra.mxu0 %v4495
        %4532 = vmatpush.xpose.msra.mxu0 %v4494
        %4533 = vmatmul.f32.gmra.mxu0 %v4510
        %v4534 = vpop.f32.mrf.mxu0
        %v4535 = vadd.f32 %v4515, %v4534
        %4536 = vdwg.mxu0
        %v4538 = vperm.slane %v452, 0
        %v4540 = vmul.f32 %v4535, %v4538
        %4541 = vst [vmem:[%s422] sm:$0xff] %v4540
        %s4542 = sand.u32 %s280, 1
        %s4543 = scalar_lea.sflag [#allocation4], %s4542
        %s4544 = sand.u32 %s280, 1
        %s4545 = smul.addr %s4544, 8
        %s4546 = scalar_lea.vmem [#allocation5], %s4545
        // Predicated region
        $region69: #{tpu_custom_call.1} parent=63 // pred_check
          %p4547 = pneg %p290
        $region70: #{tpu_custom_call.1} parent=63 // pred_check_branch
          %4549 = sbr.rel (%p4547) target = $region72
        $region71: #{tpu_custom_call.1} parent=63 // pred_region
          %4551 = vsyncadd %s4543, 0
          %s4552 = smul.addr %s26, 8
          %s4553 = scalar_lea.hbm %s11, %s4552
          %s4555 = sshll.u32 %s4546, 4
          %s4556 = int_to_ptr.vmem [resolvable:$true] %s4555
          %s4557 = sshll.u32 %s4553, 4
          %s4558 = int_to_ptr.hbm [resolvable:$true] %s4557
          %4560 = dma.vmem_to_hbm [thread:$0]  %s4556, 128, %s4558, %s4543
        $region72: #{tpu_custom_call.1} parent=63 // pred_fallthru
          _
      $region64: #{tpu_custom_call.1} parent=5 // pred_fallthru
        _
      %p4561 = scmp.le.s32.totalorder 2, %s21
      // Predicated region
      $region73: #{tpu_custom_call.1} parent=5 // pred_check
        %p4562 = pneg %p4561
      $region74: #{tpu_custom_call.1} parent=5 // pred_check_branch
        %4564 = sbr.rel (%p4562) target = $region76
      $region75: #{tpu_custom_call.1} parent=5 // pred_region
        %s4565 = ssub.s32 %s21, 2
        // Predicated region
        $region77: #{tpu_custom_call.1} parent=75 // pred_check
          %p4566 = pneg %p296
        $region78: #{tpu_custom_call.1} parent=75 // pred_check_branch
          %4568 = sbr.rel (%p4566) target = $region80
        $region79: #{tpu_custom_call.1} parent=75 // pred_region
          %s4569 = sand.u32 %s281, 1
          %s4570 = scalar_lea.sflag [#allocation4], %s4569
          %s4571 = sand.u32 %s281, 1
          %s4572 = smul.addr %s4571, 8
          %s4573 = scalar_lea.vmem [#allocation5], %s4572
          %4575 = dma.done %s4570, 128
        $region80: #{tpu_custom_call.1} parent=75 // pred_fallthru
          _
      $region76: #{tpu_custom_call.1} parent=5 // pred_fallthru
        _
    $region6: #{tpu_custom_call.1} parent=1 // loop_footer
      %s25 = sadd.s32 1, %s21
    $region7: #{tpu_custom_call.1} parent=1 // loop_footer_branch
      %20 = sbr.rel target = $region3
    $region8: #{tpu_custom_call.1} parent=1 // loop_exit
      _
    %4576 = vsyncpa [#allocation3], 1
    %s4577 = scalar_lea.sflag [#allocation3], 1
    %4578 = vsyncpa %s4577, 1
    %4579 = vsyncpa [#allocation4], 1
    %s4580 = scalar_lea.sflag [#allocation4], 1
    %4581 = vsyncpa %s4580, 1

// kernel: tpu_custom_call.1
$region0: #{tpu_custom_call.1}
  #allocation0 [shape = 'u32[]', space=smem, size = 0x4, offset = 0x4, fixed_abs, tag = 'smem constant byte address 0x4 - core index']
  #allocation1 [shape = 'u32[72,128]{1,0:T(1,128)}', space=vmem, size = 0x9000, scoped, tag = 'internal scratch']
  %s0 = inlined_call_operand.vmem [shape: f32[2,128,8], index: 0, kind: input, shape index: {}]
  %s1 = inlined_call_operand.vmem [shape: f32[2,128,1], index: 1, kind: input, shape index: {}]
  %s2 = inlined_call_operand.vmem [shape: f32[2,1,128], index: 2, kind: input, shape index: {}]
  %s3 = inlined_call_operand.vmem [shape: f32[8,128], index: 3, kind: input, shape index: {}]
  %s4 = inlined_call_operand.vmem [shape: f32[1,128], index: 4, kind: input, shape index: {}]
  %s5 = inlined_call_operand.hbm [shape: f32[3,128,384], index: 5, kind: input, shape index: {}]
  %s6 = inlined_call_operand.vmem [shape: f32[3,3,128], index: 6, kind: input, shape index: {}]
  %s7 = inlined_call_operand.vmem [shape: f32[3,128,128], index: 7, kind: input, shape index: {}]
  %s8 = inlined_call_operand.vmem [shape: f32[3,1,128], index: 8, kind: input, shape index: {}]
  %s9 = inlined_call_operand.vmem [shape: f32[8,128], index: 9, kind: input, shape index: {}]
  %s10 = inlined_call_operand.vmem [shape: f32[8,1], index: 10, kind: input, shape index: {}]
  %s11 = inlined_call_operand.hbm [shape: f32[2,8,128], index: 11, kind: output, shape index: {}]
  %s12 = sld [smem:[#allocation0]]
  $region81: #{tpu_custom_call.1} parent=0
    _
  %s14 = ssub.s32 1, %s12
  %s15 = scalar_select 0, %s14, %s12
  $region1: #{tpu_custom_call.1} parent=0
    #allocation2 [shape = 'u8[589824]{0}', space=vmem, size = 0x90000, scoped, tag = 'input window, operand 5, single buffered']
    #allocation3 [shape = 's32[2]{0}', space=sflag, size = 0x8, scoped, tag = 'scoped memory for tpu_custom_call.1']
    #allocation4 [shape = 's32[2]{0}', space=sflag, size = 0x8, scoped, tag = 'scoped memory for tpu_custom_call.1']
    #allocation5 [shape = 'u8[8192]{0}', space=vmem, size = 0x2000, scoped, tag = 'output window, operand 0']
    %16 = vsyncpa [#allocation3], 0
    %17 = vsyncpa [#allocation4], 0
    %s18 = scalar_lea.sflag [#allocation4], 1
    %19 = vsyncpa %s18, 0
    loop: start=0, step=1, limit=4
    $region2: #{tpu_custom_call.1} parent=1 // loop_pre_header
      _
    $region3: #{tpu_custom_call.1} parent=1 // loop_header
      %s21 = sphi 0, %s25
      %p22 = scmp.ge.s32.totalorder %s21, 4
      %s31 = sphi 0, %s33
      %s34 = sphi 0, %s31
      %s35 = sphi 0, %s34
      %s51 = sphi 0, %s35
      %s57 = sphi 0, %s59
      %s60 = sphi 0, %s57
      %s61 = sphi 0, %s60
      %s77 = sphi 0, %s61
      %s83 = sphi 0, %s85
      %s86 = sphi 0, %s83
      %s87 = sphi 0, %s86
      %s103 = sphi 0, %s87
      %s107 = sphi 0, %s107
      %s109 = sphi 0, %s107
      %s110 = sphi 0, %s109
      %s124 = sphi 0, %s110
      %s128 = sphi 0, %s128
      %s130 = sphi 0, %s128
      %s131 = sphi 0, %s130
      %s145 = sphi 0, %s131
      %s149 = sphi 0, %s149
      %s151 = sphi 0, %s149
      %s152 = sphi 0, %s151
      %s166 = sphi 0, %s152
      %s170 = sphi 0, %s170
      %s172 = sphi 0, %s170
      %s173 = sphi 0, %s172
      %s187 = sphi 0, %s173
      %s191 = sphi 0, %s191
      %s193 = sphi 0, %s191
      %s194 = sphi 0, %s193
      %s208 = sphi 0, %s194
      %s212 = sphi 0, %s212
      %s214 = sphi 0, %s212
      %s215 = sphi 0, %s214
      %s229 = sphi 0, %s215
      %s233 = sphi 0, %s233
      %s235 = sphi 0, %s233
      %s236 = sphi 0, %s235
      %s250 = sphi 0, %s236
      %s254 = sphi 0, %s254
      %s256 = sphi 0, %s254
      %s257 = sphi 0, %s256
      %s271 = sphi 0, %s257
      %s277 = sphi 0, %s279
      %s280 = sphi 0, %s277
      %s281 = sphi 0, %s280
      %s297 = sphi 0, %s281
    $region4: #{tpu_custom_call.1} parent=1 // loop_header_branch
      %24 = sbr.rel (%p22) target = $region8
    $region5: #{tpu_custom_call.1} parent=1 // loop_body
      %s26 = ssub.s32 %s21, 1
      %s27 = ssub.s32 %s21, 2
      %s28 = sadd.s32 %s21, 1
      %s29 = ssub.s32 %s21, %s28
      %p30 = scmp.eq.s32.totalorder %s29, 0
      %s32 = sadd.s32 %s31, 1
      %s33 = scalar_select %p30, %s31, %s32
      %p36 = pneg %p30
      %p37 = scmp.eq.s32.totalorder %s21, 1
      %p38 = por %p36, %p37
      %p39 = scmp.ne.s32.totalorder %s31, %s34
      %p40 = scmp.eq.s32.totalorder %s21, 0
      %p41 = por %p39, %p40
      %p42 = scmp.ne.s32.totalorder %s31, %s34
      %p43 = scmp.eq.s32.totalorder %s26, 1
      %p44 = por %p42, %p43
      %p45 = scmp.ne.s32.totalorder %s34, %s35
      %p46 = scmp.eq.s32.totalorder %s26, 0
      %p47 = por %p45, %p46
      %p48 = scmp.ne.s32.totalorder %s34, %s35
      %p49 = scmp.eq.s32.totalorder %s27, 1
      %p50 = por %p48, %p49
      %p52 = scmp.ne.s32.totalorder %s35, %s51
      %p53 = scmp.eq.s32.totalorder %s27, 0
      %p54 = por %p52, %p53
      %s55 = ssub.s32 %s21, %s28
      %p56 = scmp.eq.s32.totalorder %s55, 0
      %s58 = sadd.s32 %s57, 1
      %s59 = scalar_select %p56, %s57, %s58
      %p62 = pneg %p56
      %p63 = scmp.eq.s32.totalorder %s21, 1
      %p64 = por %p62, %p63
      %p65 = scmp.ne.s32.totalorder %s57, %s60
      %p66 = scmp.eq.s32.totalorder %s21, 0
      %p67 = por %p65, %p66
      %p68 = scmp.ne.s32.totalorder %s57, %s60
      %p69 = scmp.eq.s32.totalorder %s26, 1
      %p70 = por %p68, %p69
      %p71 = scmp.ne.s32.totalorder %s60, %s61
      %p72 = scmp.eq.s32.totalorder %s26, 0
      %p73 = por %p71, %p72
      %p74 = scmp.ne.s32.totalorder %s60, %s61
      %p75 = scmp.eq.s32.totalorder %s27, 1
      %p76 = por %p74, %p75
      %p78 = scmp.ne.s32.totalorder %s61, %s77
      %p79 = scmp.eq.s32.totalorder %s27, 0
      %p80 = por %p78, %p79
      %s81 = ssub.s32 %s21, %s28
      %p82 = scmp.eq.s32.totalorder %s81, 0
      %s84 = sadd.s32 %s83, 1
      %s85 = scalar_select %p82, %s83, %s84
      %p88 = pneg %p82
      %p89 = scmp.eq.s32.totalorder %s21, 1
      %p90 = por %p88, %p89
      %p91 = scmp.ne.s32.totalorder %s83, %s86
      %p92 = scmp.eq.s32.totalorder %s21, 0
      %p93 = por %p91, %p92
      %p94 = scmp.ne.s32.totalorder %s83, %s86
      %p95 = scmp.eq.s32.totalorder %s26, 1
      %p96 = por %p94, %p95
      %p97 = scmp.ne.s32.totalorder %s86, %s87
      %p98 = scmp.eq.s32.totalorder %s26, 0
      %p99 = por %p97, %p98
      %p100 = scmp.ne.s32.totalorder %s86, %s87
      %p101 = scmp.eq.s32.totalorder %s27, 1
      %p102 = por %p100, %p101
      %p104 = scmp.ne.s32.totalorder %s87, %s103
      %p105 = scmp.eq.s32.totalorder %s27, 0
      %p106 = por %p104, %p105
      %s108 = sadd.s32 %s107, 1
      %p111 = scmp.eq.s32.totalorder %s21, 1
      %p112 = scmp.ne.s32.totalorder %s107, %s109
      %p113 = scmp.eq.s32.totalorder %s21, 0
      %p114 = por %p112, %p113
      %p115 = scmp.ne.s32.totalorder %s107, %s109
      %p116 = scmp.eq.s32.totalorder %s26, 1
      %p117 = por %p115, %p116
      %p118 = scmp.ne.s32.totalorder %s109, %s110
      %p119 = scmp.eq.s32.totalorder %s26, 0
      %p120 = por %p118, %p119
      %p121 = scmp.ne.s32.totalorder %s109, %s110
      %p122 = scmp.eq.s32.totalorder %s27, 1
      %p123 = por %p121, %p122
      %p125 = scmp.ne.s32.totalorder %s110, %s124
      %p126 = scmp.eq.s32.totalorder %s27, 0
      %p127 = por %p125, %p126
      %s129 = sadd.s32 %s128, 1
      %p132 = scmp.eq.s32.totalorder %s21, 1
      %p133 = scmp.ne.s32.totalorder %s128, %s130
      %p134 = scmp.eq.s32.totalorder %s21, 0
      %p135 = por %p133, %p134
      %p136 = scmp.ne.s32.totalorder %s128, %s130
      %p137 = scmp.eq.s32.totalorder %s26, 1
      %p138 = por %p136, %p137
      %p139 = scmp.ne.s32.totalorder %s130, %s131
      %p140 = scmp.eq.s32.totalorder %s26, 0
      %p141 = por %p139, %p140
      %p142 = scmp.ne.s32.totalorder %s130, %s131
      %p143 = scmp.eq.s32.totalorder %s27, 1
      %p144 = por %p142, %p143
      %p146 = scmp.ne.s32.totalorder %s131, %s145
      %p147 = scmp.eq.s32.totalorder %s27, 0
      %p148 = por %p146, %p147
      %s150 = sadd.s32 %s149, 1
      %p153 = scmp.eq.s32.totalorder %s21, 1
      %p154 = scmp.ne.s32.totalorder %s149, %s151
      %p155 = scmp.eq.s32.totalorder %s21, 0
      %p156 = por %p154, %p155
      %p157 = scmp.ne.s32.totalorder %s149, %s151
      %p158 = scmp.eq.s32.totalorder %s26, 1
      %p159 = por %p157, %p158
      %p160 = scmp.ne.s32.totalorder %s151, %s152
      %p161 = scmp.eq.s32.totalorder %s26, 0
      %p162 = por %p160, %p161
      %p163 = scmp.ne.s32.totalorder %s151, %s152
      %p164 = scmp.eq.s32.totalorder %s27, 1
      %p165 = por %p163, %p164
      %p167 = scmp.ne.s32.totalorder %s152, %s166
      %p168 = scmp.eq.s32.totalorder %s27, 0
      %p169 = por %p167, %p168
      %s171 = sadd.s32 %s170, 1
      %p174 = scmp.eq.s32.totalorder %s21, 1
      %p175 = scmp.ne.s32.totalorder %s170, %s172
      %p176 = scmp.eq.s32.totalorder %s21, 0
      %p177 = por %p175, %p176
      %p178 = scmp.ne.s32.totalorder %s170, %s172
      %p179 = scmp.eq.s32.totalorder %s26, 1
      %p180 = por %p178, %p179
      %p181 = scmp.ne.s32.totalorder %s172, %s173
      %p182 = scmp.eq.s32.totalorder %s26, 0
      %p183 = por %p181, %p182
      %p184 = scmp.ne.s32.totalorder %s172, %s173
      %p185 = scmp.eq.s32.totalorder %s27, 1
      %p186 = por %p184, %p185
      %p188 = scmp.ne.s32.totalorder %s173, %s187
      %p189 = scmp.eq.s32.totalorder %s27, 0
      %p190 = por %p188, %p189
      %s192 = sadd.s32 %s191, 1
      %p195 = scmp.eq.s32.totalorder %s21, 1
      %p196 = scmp.ne.s32.totalorder %s191, %s193
      %p197 = scmp.eq.s32.totalorder %s21, 0
      %p198 = por %p196, %p197
      %p199 = scmp.ne.s32.totalorder %s191, %s193
      %p200 = scmp.eq.s32.totalorder %s26, 1
      %p201 = por %p199, %p200
      %p202 = scmp.ne.s32.totalorder %s193, %s194
      %p203 = scmp.eq.s32.totalorder %s26, 0
      %p204 = por %p202, %p203
      %p205 = scmp.ne.s32.totalorder %s193, %s194
      %p206 = scmp.eq.s32.totalorder %s27, 1
      %p207 = por %p205, %p206
      %p209 = scmp.ne.s32.totalorder %s194, %s208
      %p210 = scmp.eq.s32.totalorder %s27, 0
      %p211 = por %p209, %p210
      %s213 = sadd.s32 %s212, 1
      %p216 = scmp.eq.s32.totalorder %s21, 1
      %p217 = scmp.ne.s32.totalorder %s212, %s214
      %p218 = scmp.eq.s32.totalorder %s21, 0
      %p219 = por %p217, %p218
      %p220 = scmp.ne.s32.totalorder %s212, %s214
      %p221 = scmp.eq.s32.totalorder %s26, 1
      %p222 = por %p220, %p221
      %p223 = scmp.ne.s32.totalorder %s214, %s215
      %p224 = scmp.eq.s32.totalorder %s26, 0
      %p225 = por %p223, %p224
      %p226 = scmp.ne.s32.totalorder %s214, %s215
      %p227 = scmp.eq.s32.totalorder %s27, 1
      %p228 = por %p226, %p227
      %p230 = scmp.ne.s32.totalorder %s215, %s229
      %p231 = scmp.eq.s32.totalorder %s27, 0
      %p232 = por %p230, %p231
      %s234 = sadd.s32 %s233, 1
      %p237 = scmp.eq.s32.totalorder %s21, 1
      %p238 = scmp.ne.s32.totalorder %s233, %s235
      %p239 = scmp.eq.s32.totalorder %s21, 0
      %p240 = por %p238, %p239
      %p241 = scmp.ne.s32.totalorder %s233, %s235
      %p242 = scmp.eq.s32.totalorder %s26, 1
      %p243 = por %p241, %p242
      %p244 = scmp.ne.s32.totalorder %s235, %s236
      %p245 = scmp.eq.s32.totalorder %s26, 0
      %p246 = por %p244, %p245
      %p247 = scmp.ne.s32.totalorder %s235, %s236
      %p248 = scmp.eq.s32.totalorder %s27, 1
      %p249 = por %p247, %p248
      %p251 = scmp.ne.s32.totalorder %s236, %s250
      %p252 = scmp.eq.s32.totalorder %s27, 0
      %p253 = por %p251, %p252
      %s255 = sadd.s32 %s254, 1
      %p258 = scmp.eq.s32.totalorder %s21, 1
      %p259 = scmp.ne.s32.totalorder %s254, %s256
      %p260 = scmp.eq.s32.totalorder %s21, 0
      %p261 = por %p259, %p260
      %p262 = scmp.ne.s32.totalorder %s254, %s256
      %p263 = scmp.eq.s32.totalorder %s26, 1
      %p264 = por %p262, %p263
      %p265 = scmp.ne.s32.totalorder %s256, %s257
      %p266 = scmp.eq.s32.totalorder %s26, 0
      %p267 = por %p265, %p266
      %p268 = scmp.ne.s32.totalorder %s256, %s257
      %p269 = scmp.eq.s32.totalorder %s27, 1
      %p270 = por %p268, %p269
      %p272 = scmp.ne.s32.totalorder %s257, %s271
      %p273 = scmp.eq.s32.totalorder %s27, 0
      %p274 = por %p272, %p273
      %s275 = ssub.s32 %s21, %s28
      %p276 = scmp.eq.s32.totalorder %s275, 0
      %s278 = sadd.s32 %s277, 1
      %s279 = scalar_select %p276, %s277, %s278
      %p282 = pneg %p276
      %p283 = scmp.eq.s32.totalorder %s21, 1
      %p284 = por %p282, %p283
      %p285 = scmp.ne.s32.totalorder %s277, %s280
      %p286 = scmp.eq.s32.totalorder %s21, 0
      %p287 = por %p285, %p286
      %p288 = scmp.ne.s32.totalorder %s277, %s280
      %p289 = scmp.eq.s32.totalorder %s26, 1
      %p290 = por %p288, %p289
      %p291 = scmp.ne.s32.totalorder %s280, %s281
      %p292 = scmp.eq.s32.totalorder %s26, 0
      %p293 = por %p291, %p292
      %p294 = scmp.ne.s32.totalorder %s280, %s281
      %p295 = scmp.eq.s32.totalorder %s27, 1
      %p296 = por %p294, %p295
      %p298 = scmp.ne.s32.totalorder %s281, %s297
      %p299 = scmp.eq.s32.totalorder %s27, 0
      %p300 = por %p298, %p299
      %p301 = scmp.le.s32.totalorder 1, %s21
      %p302 = scmp.lt.s32.totalorder %s21, 3
      %p303 = pnand %p301, %p302
      %p304 = pneg %p303
      // Predicated region
      $region9: #{tpu_custom_call.1} parent=5 // pred_check
        _
      $region10: #{tpu_custom_call.1} parent=5 // pred_check_branch
        %306 = sbr.rel (%p303) target = $region12
      $region11: #{tpu_custom_call.1} parent=5 // pred_region
        %s307 = ssub.s32 %s21, 1
        // Predicated region
        $region13: #{tpu_custom_call.1} parent=11 // pred_check
          %p308 = pneg %p120
        $region14: #{tpu_custom_call.1} parent=11 // pred_check_branch
          %310 = sbr.rel (%p308) target = $region16
        $region15: #{tpu_custom_call.1} parent=11 // pred_region
          _
        $region16: #{tpu_custom_call.1} parent=11 // pred_fallthru
          _
        // Predicated region
        $region17: #{tpu_custom_call.1} parent=11 // pred_check
          %p311 = pneg %p141
        $region18: #{tpu_custom_call.1} parent=11 // pred_check_branch
          %313 = sbr.rel (%p311) target = $region20
        $region19: #{tpu_custom_call.1} parent=11 // pred_region
          _
        $region20: #{tpu_custom_call.1} parent=11 // pred_fallthru
          _
        // Predicated region
        $region21: #{tpu_custom_call.1} parent=11 // pred_check
          %p314 = pneg %p162
        $region22: #{tpu_custom_call.1} parent=11 // pred_check_branch
          %316 = sbr.rel (%p314) target = $region24
        $region23: #{tpu_custom_call.1} parent=11 // pred_region
          %318 = vsyncadd [#allocation3], 0
          %s319 = sshll.u32 %s5, 4
          %s320 = int_to_ptr.hbm [resolvable:$true] %s319
          %s321 = sshll.u32 [#allocation2], 4
          %s322 = int_to_ptr.vmem [resolvable:$true] %s321
          %327 = dma.hbm_to_vmem [thread:$0]  %s320, 18432, %s322, [#allocation3], 384, 384, 24
        $region24: #{tpu_custom_call.1} parent=11 // pred_fallthru
          _
        // Predicated region
        $region25: #{tpu_custom_call.1} parent=11 // pred_check
          %p328 = pneg %p183
        $region26: #{tpu_custom_call.1} parent=11 // pred_check_branch
          %330 = sbr.rel (%p328) target = $region28
        $region27: #{tpu_custom_call.1} parent=11 // pred_region
          _
        $region28: #{tpu_custom_call.1} parent=11 // pred_fallthru
          _
        // Predicated region
        $region29: #{tpu_custom_call.1} parent=11 // pred_check
          %p331 = pneg %p204
        $region30: #{tpu_custom_call.1} parent=11 // pred_check_branch
          %333 = sbr.rel (%p331) target = $region32
        $region31: #{tpu_custom_call.1} parent=11 // pred_region
          _
        $region32: #{tpu_custom_call.1} parent=11 // pred_fallthru
          _
        // Predicated region
        $region33: #{tpu_custom_call.1} parent=11 // pred_check
          %p334 = pneg %p225
        $region34: #{tpu_custom_call.1} parent=11 // pred_check_branch
          %336 = sbr.rel (%p334) target = $region36
        $region35: #{tpu_custom_call.1} parent=11 // pred_region
          _
        $region36: #{tpu_custom_call.1} parent=11 // pred_fallthru
          _
        // Predicated region
        $region37: #{tpu_custom_call.1} parent=11 // pred_check
          %p337 = pneg %p246
        $region38: #{tpu_custom_call.1} parent=11 // pred_check_branch
          %339 = sbr.rel (%p337) target = $region40
        $region39: #{tpu_custom_call.1} parent=11 // pred_region
          _
        $region40: #{tpu_custom_call.1} parent=11 // pred_fallthru
          _
        // Predicated region
        $region41: #{tpu_custom_call.1} parent=11 // pred_check
          %p340 = pneg %p267
        $region42: #{tpu_custom_call.1} parent=11 // pred_check_branch
          %342 = sbr.rel (%p340) target = $region44
        $region43: #{tpu_custom_call.1} parent=11 // pred_region
          _
        $region44: #{tpu_custom_call.1} parent=11 // pred_fallthru
          _
      $region12: #{tpu_custom_call.1} parent=5 // pred_fallthru
        _
      %p343 = scmp.lt.s32.totalorder %s21, 2
      // Predicated region
      $region45: #{tpu_custom_call.1} parent=5 // pred_check
        %p344 = pneg %p343
      $region46: #{tpu_custom_call.1} parent=5 // pred_check_branch
        %346 = sbr.rel (%p344) target = $region48
      $region47: #{tpu_custom_call.1} parent=5 // pred_region
        // Predicated region
        $region49: #{tpu_custom_call.1} parent=47 // pred_check
          %p347 = pneg %p41
        $region50: #{tpu_custom_call.1} parent=47 // pred_check_branch
          %349 = sbr.rel (%p347) target = $region52
        $region51: #{tpu_custom_call.1} parent=47 // pred_region
          %p350 = scmp.lt.s32.totalorder %s21, 1
          %s351 = scalar_select %p350, %s21, 1
          %s352 = smul.addr %s351, 16
          %s353 = smul.addr %s352, 8
          %s354 = scalar_lea.vmem %s0, %s353
        $region52: #{tpu_custom_call.1} parent=47 // pred_fallthru
          _
        // Predicated region
        $region53: #{tpu_custom_call.1} parent=47 // pred_check
          %p355 = pneg %p67
        $region54: #{tpu_custom_call.1} parent=47 // pred_check_branch
          %357 = sbr.rel (%p355) target = $region56
        $region55: #{tpu_custom_call.1} parent=47 // pred_region
          %p358 = scmp.lt.s32.totalorder %s21, 1
          %s359 = scalar_select %p358, %s21, 1
          %s360 = smul.addr %s359, 16
          %s361 = smul.addr %s360, 8
          %s362 = scalar_lea.vmem %s1, %s361
        $region56: #{tpu_custom_call.1} parent=47 // pred_fallthru
          _
        // Predicated region
        $region57: #{tpu_custom_call.1} parent=47 // pred_check
          %p363 = pneg %p93
        $region58: #{tpu_custom_call.1} parent=47 // pred_check_branch
          %365 = sbr.rel (%p363) target = $region60
        $region59: #{tpu_custom_call.1} parent=47 // pred_region
          %p366 = scmp.lt.s32.totalorder %s21, 1
          %s367 = scalar_select %p366, %s21, 1
          %s368 = scalar_lea.vmem %s2, %s367
        $region60: #{tpu_custom_call.1} parent=47 // pred_fallthru
          _
      $region48: #{tpu_custom_call.1} parent=5 // pred_fallthru
        _
      %p369 = scmp.le.s32.totalorder 1, %s21
      %p370 = scmp.lt.s32.totalorder %s21, 3
      %p371 = pnand %p369, %p370
      %p372 = pneg %p371
      // Predicated region
      $region61: #{tpu_custom_call.1} parent=5 // pred_check
        _
      $region62: #{tpu_custom_call.1} parent=5 // pred_check_branch
        %374 = sbr.rel (%p371) target = $region64
      $region63: #{tpu_custom_call.1} parent=5 // pred_region
        %s375 = ssub.s32 %s21, 1
        // Predicated region
        $region65: #{tpu_custom_call.1} parent=63 // pred_check
          %p376 = pneg %p162
        $region66: #{tpu_custom_call.1} parent=63 // pred_check_branch
          %378 = sbr.rel (%p376) target = $region68
        $region67: #{tpu_custom_call.1} parent=63 // pred_region
          %380 = dma.done [#allocation3], 18432
        $region68: #{tpu_custom_call.1} parent=63 // pred_fallthru
          _
        %p381 = scmp.lt.s32.totalorder %s26, 1
        %s382 = scalar_select %p381, %s26, 1
        %s383 = smul.addr %s382, 16
        %s384 = smul.addr %s383, 8
        %s385 = scalar_lea.vmem %s0, %s384
        %p386 = pneg %p47
        %p387 = pneg %p44
        %p388 = scmp.lt.s32.totalorder %s26, 1
        %s389 = scalar_select %p388, %s26, 1
        %s390 = smul.addr %s389, 16
        %s391 = smul.addr %s390, 8
        %s392 = scalar_lea.vmem %s1, %s391
        %p393 = pneg %p73
        %p394 = pneg %p70
        %p395 = scmp.lt.s32.totalorder %s26, 1
        %s396 = scalar_select %p395, %s26, 1
        %s397 = scalar_lea.vmem %s2, %s396
        %p398 = pneg %p99
        %p399 = pneg %p96
        %p400 = pneg %p120
        %p401 = pneg %p117
        %p402 = pneg %p141
        %p403 = pneg %p138
        %p404 = pneg %p162
        %p405 = pneg %p159
        %p406 = pneg %p183
        %p407 = pneg %p180
        %p408 = pneg %p204
        %p409 = pneg %p201
        %p410 = pneg %p225
        %p411 = pneg %p222
        %p412 = pneg %p246
        %p413 = pneg %p243
        %p414 = pneg %p267
        %p415 = pneg %p264
        %p416 = pneg %p293
        %p417 = pneg %p290
        %s418 = sand.u32 %s280, 1
        %s419 = scalar_lea.sflag [#allocation4], %s418
        %s420 = sand.u32 %s280, 1
        %s421 = smul.addr %s420, 8
        %s422 = scalar_lea.vmem [#allocation5], %s421
        %p423 = scmp.lt.s32.totalorder %s26, 1
        %s424 = scalar_select %p423, %s26, 1
        %s425 = smul.addr %s424, 16
        %s426 = smul.addr %s425, 8
        %s427 = scalar_lea.vmem %s0, %s426
        %p428 = scmp.lt.s32.totalorder %s26, 1
        %s429 = scalar_select %p428, %s26, 1
        %s430 = smul.addr %s429, 16
        %s431 = smul.addr %s430, 8
        %s432 = scalar_lea.vmem %s1, %s431
        %p433 = scmp.lt.s32.totalorder %s26, 1
        %s434 = scalar_select %p433, %s26, 1
        %s435 = scalar_lea.vmem %s2, %s434
        %v436 = vld [vmem:[%s432] sm:$0xff]
        %v437 = vld [vmem:[%s432 + $0x8] sm:$0xff]
        %v438 = vld [vmem:[%s432 + $0x10] sm:$0xff]
        %v439 = vld [vmem:[%s432 + $0x18] sm:$0xff]
        %v440 = vld [vmem:[%s432 + $0x20] sm:$0xff]
        %v441 = vld [vmem:[%s432 + $0x28] sm:$0xff]
        %v442 = vld [vmem:[%s432 + $0x30] sm:$0xff]
        %v443 = vld [vmem:[%s432 + $0x38] sm:$0xff]
        %v444 = vld [vmem:[%s432 + $0x40] sm:$0xff]
        %v445 = vld [vmem:[%s432 + $0x48] sm:$0xff]
        %v446 = vld [vmem:[%s432 + $0x50] sm:$0xff]
        %v447 = vld [vmem:[%s432 + $0x58] sm:$0xff]
        %v448 = vld [vmem:[%s432 + $0x60] sm:$0xff]
        %v449 = vld [vmem:[%s432 + $0x68] sm:$0xff]
        %v450 = vld [vmem:[%s432 + $0x70] sm:$0xff]
        %v451 = vld [vmem:[%s432 + $0x78] sm:$0xff]
        %v452 = vld [vmem:[%s435] sm:$0x1]
        %v453 = vld [vmem:[%s427] sm:$0xff]
        %v454 = vld [vmem:[%s427 + $0x8] sm:$0xff]
        %v455 = vld [vmem:[%s427 + $0x10] sm:$0xff]
        %v456 = vld [vmem:[%s427 + $0x18] sm:$0xff]
        %v457 = vld [vmem:[%s427 + $0x20] sm:$0xff]
        %v458 = vld [vmem:[%s427 + $0x28] sm:$0xff]
        %v459 = vld [vmem:[%s427 + $0x30] sm:$0xff]
        %v460 = vld [vmem:[%s427 + $0x38] sm:$0xff]
        %v461 = vld [vmem:[%s427 + $0x40] sm:$0xff]
        %v462 = vld [vmem:[%s427 + $0x48] sm:$0xff]
        %v463 = vld [vmem:[%s427 + $0x50] sm:$0xff]
        %v464 = vld [vmem:[%s427 + $0x58] sm:$0xff]
        %v465 = vld [vmem:[%s427 + $0x60] sm:$0xff]
        %v466 = vld [vmem:[%s427 + $0x68] sm:$0xff]
        %v467 = vld [vmem:[%s427 + $0x70] sm:$0xff]
        %v468 = vld [vmem:[%s427 + $0x78] sm:$0xff]
        %v469 = vld [vmem:[%s3] sm:$0xff]
        %v470 = vld [vmem:[%s4] sm:$0x1]
        %v472 = vperm.slane %v470, 0
        %vm474 = vcmask 64512
        %v476 = vsel %vm474, %v453, 0
        %v479 = vsel %vm474, %v454, 0
        %v482 = vsel %vm474, %v455, 0
        %v485 = vsel %vm474, %v456, 0
        %v488 = vsel %vm474, %v457, 0
        %v491 = vsel %vm474, %v458, 0
        %v494 = vsel %vm474, %v459, 0
        %v497 = vsel %vm474, %v460, 0
        %v500 = vsel %vm474, %v461, 0
        %v503 = vsel %vm474, %v462, 0
        %v506 = vsel %vm474, %v463, 0
        %v509 = vsel %vm474, %v464, 0
        %v512 = vsel %vm474, %v465, 0
        %v515 = vsel %vm474, %v466, 0
        %v518 = vsel %vm474, %v467, 0
        %v521 = vsel %vm474, %v468, 0
        %523 = vmatpush.msra.mxu0 0.0
        %524 = vmatpush.msra.mxu0 0.0
        %525 = vmatpush.msra.mxu0 0.0
        %526 = vmatpush.msra.mxu0 0.0
        %527 = vmatpush.msra.mxu0 0.0
        %528 = vmatpush.msra.mxu0 0.0
        %529 = vmatpush.msra.mxu0 0.0
        %530 = vmatpush.msra.mxu0 0.0
        %531 = vmatpush.msra.mxu0 0.0
        %532 = vmatpush.msra.mxu0 0.0
        %533 = vmatpush.msra.mxu0 0.0
        %534 = vmatpush.msra.mxu0 0.0
        %535 = vmatpush.msra.mxu0 0.0
        %536 = vmatpush.msra.mxu0 0.0
        %537 = vmatpush.msra.mxu0 0.0
        %538 = vmatpush.msra.mxu0 %v469
        %539 = vmatmul.f32.gmra.mxu0 %v476
        %v540 = vpop.f32.mrf.mxu0
        %v541 = vadd.f32 %v472, %v540
        %542 = vmatmul.f32.gmra.mxu0 %v479
        %v543 = vpop.f32.mrf.mxu0
        %v544 = vadd.f32 %v472, %v543
        %545 = vmatmul.f32.gmra.mxu0 %v482
        %v546 = vpop.f32.mrf.mxu0
        %v547 = vadd.f32 %v472, %v546
        %548 = vmatmul.f32.gmra.mxu0 %v485
        %v549 = vpop.f32.mrf.mxu0
        %v550 = vadd.f32 %v472, %v549
        %551 = vmatmul.f32.gmra.mxu0 %v488
        %v552 = vpop.f32.mrf.mxu0
        %v553 = vadd.f32 %v472, %v552
        %554 = vmatmul.f32.gmra.mxu0 %v491
        %v555 = vpop.f32.mrf.mxu0
        %v556 = vadd.f32 %v472, %v555
        %557 = vmatmul.f32.gmra.mxu0 %v494
        %v558 = vpop.f32.mrf.mxu0
        %v559 = vadd.f32 %v472, %v558
        %560 = vmatmul.f32.gmra.mxu0 %v497
        %v561 = vpop.f32.mrf.mxu0
        %v562 = vadd.f32 %v472, %v561
        %563 = vmatmul.f32.gmra.mxu0 %v500
        %v564 = vpop.f32.mrf.mxu0
        %v565 = vadd.f32 %v472, %v564
        %566 = vmatmul.f32.gmra.mxu0 %v503
        %v567 = vpop.f32.mrf.mxu0
        %v568 = vadd.f32 %v472, %v567
        %569 = vmatmul.f32.gmra.mxu0 %v506
        %v570 = vpop.f32.mrf.mxu0
        %v571 = vadd.f32 %v472, %v570
        %572 = vmatmul.f32.gmra.mxu0 %v509
        %v573 = vpop.f32.mrf.mxu0
        %v574 = vadd.f32 %v472, %v573
        %575 = vmatmul.f32.gmra.mxu0 %v512
        %v576 = vpop.f32.mrf.mxu0
        %v577 = vadd.f32 %v472, %v576
        %578 = vmatmul.f32.gmra.mxu0 %v515
        %v579 = vpop.f32.mrf.mxu0
        %v580 = vadd.f32 %v472, %v579
        %581 = vmatmul.f32.gmra.mxu0 %v518
        %v582 = vpop.f32.mrf.mxu0
        %v583 = vadd.f32 %v472, %v582
        %584 = vmatmul.f32.gmra.mxu0 %v521
        %v585 = vpop.f32.mrf.mxu0
        %v586 = vadd.f32 %v472, %v585
        %587 = vdwg.mxu0
        %v588 = vlaneseq
        %v589 = vshrl.u32 %v588, 7
        %v590 = vadd.s32 %v589, 8
        %v591 = vadd.s32 %v589, 16
        %v592 = vadd.s32 %v589, 24
        %v593 = vadd.s32 %v589, 32
        %v594 = vadd.s32 %v589, 40
        %v595 = vadd.s32 %v589, 48
        %v596 = vadd.s32 %v589, 56
        %v597 = vadd.s32 %v589, 64
        %v598 = vadd.s32 %v589, 72
        %v599 = vadd.s32 %v589, 80
        %v600 = vadd.s32 %v589, 88
        %v601 = vadd.s32 %v589, 96
        %v602 = vadd.s32 %v589, 104
        %v603 = vadd.s32 %v589, 112
        %v604 = vadd.s32 %v589, 120
        %v605 = vld [vmem:[%s6] sm:$0x7]
        %v606 = vld [vmem:[#allocation2] sm:$0xff]
        %v607 = vld [vmem:[#allocation2 + $0x8] sm:$0xff]
        %v608 = vld [vmem:[#allocation2 + $0x10] sm:$0xff]
        %v609 = vld [vmem:[#allocation2 + $0x18] sm:$0xff]
        %v610 = vld [vmem:[#allocation2 + $0x20] sm:$0xff]
        %v611 = vld [vmem:[#allocation2 + $0x28] sm:$0xff]
        %v612 = vld [vmem:[#allocation2 + $0x30] sm:$0xff]
        %v613 = vld [vmem:[#allocation2 + $0x38] sm:$0xff]
        %v614 = vld [vmem:[#allocation2 + $0x40] sm:$0xff]
        %v615 = vld [vmem:[#allocation2 + $0x48] sm:$0xff]
        %v616 = vld [vmem:[#allocation2 + $0x50] sm:$0xff]
        %v617 = vld [vmem:[#allocation2 + $0x58] sm:$0xff]
        %v618 = vld [vmem:[#allocation2 + $0x60] sm:$0xff]
        %v619 = vld [vmem:[#allocation2 + $0x68] sm:$0xff]
        %v620 = vld [vmem:[#allocation2 + $0x70] sm:$0xff]
        %v621 = vld [vmem:[#allocation2 + $0x78] sm:$0xff]
        %v622 = vld [vmem:[#allocation2 + $0x80] sm:$0xff]
        %v623 = vld [vmem:[#allocation2 + $0x88] sm:$0xff]
        %v624 = vld [vmem:[#allocation2 + $0x90] sm:$0xff]
        %v625 = vld [vmem:[#allocation2 + $0x98] sm:$0xff]
        %v626 = vld [vmem:[#allocation2 + $0xa0] sm:$0xff]
        %v627 = vld [vmem:[#allocation2 + $0xa8] sm:$0xff]
        %v628 = vld [vmem:[#allocation2 + $0xb0] sm:$0xff]
        %v629 = vld [vmem:[#allocation2 + $0xb8] sm:$0xff]
        %v630 = vld [vmem:[#allocation2 + $0xc0] sm:$0xff]
        %v631 = vld [vmem:[#allocation2 + $0xc8] sm:$0xff]
        %v632 = vld [vmem:[#allocation2 + $0xd0] sm:$0xff]
        %v633 = vld [vmem:[#allocation2 + $0xd8] sm:$0xff]
        %v634 = vld [vmem:[#allocation2 + $0xe0] sm:$0xff]
        %v635 = vld [vmem:[#allocation2 + $0xe8] sm:$0xff]
        %v636 = vld [vmem:[#allocation2 + $0xf0] sm:$0xff]
        %v637 = vld [vmem:[#allocation2 + $0xf8] sm:$0xff]
        %v638 = vld [vmem:[#allocation2 + $0x100] sm:$0xff]
        %v639 = vld [vmem:[#allocation2 + $0x108] sm:$0xff]
        %v640 = vld [vmem:[#allocation2 + $0x110] sm:$0xff]
        %v641 = vld [vmem:[#allocation2 + $0x118] sm:$0xff]
        %v642 = vld [vmem:[#allocation2 + $0x120] sm:$0xff]
        %v643 = vld [vmem:[#allocation2 + $0x128] sm:$0xff]
        %v644 = vld [vmem:[#allocation2 + $0x130] sm:$0xff]
        %v645 = vld [vmem:[#allocation2 + $0x138] sm:$0xff]
        %v646 = vld [vmem:[#allocation2 + $0x140] sm:$0xff]
        %v647 = vld [vmem:[#allocation2 + $0x148] sm:$0xff]
        %v648 = vld [vmem:[#allocation2 + $0x150] sm:$0xff]
        %v649 = vld [vmem:[#allocation2 + $0x158] sm:$0xff]
        %v650 = vld [vmem:[#allocation2 + $0x160] sm:$0xff]
        %v651 = vld [vmem:[#allocation2 + $0x168] sm:$0xff]
        %v652 = vld [vmem:[#allocation2 + $0x170] sm:$0xff]
        %v653 = vld [vmem:[#allocation2 + $0x178] sm:$0xff]
        %654 = vmatpush.msra.mxu0 %v651
        %655 = vmatpush.msra.mxu0 %v648
        %656 = vmatpush.msra.mxu0 %v645
        %657 = vmatpush.msra.mxu0 %v642
        %658 = vmatpush.msra.mxu0 %v639
        %659 = vmatpush.msra.mxu0 %v636
        %660 = vmatpush.msra.mxu0 %v633
        %661 = vmatpush.msra.mxu0 %v630
        %662 = vmatpush.msra.mxu0 %v627
        %663 = vmatpush.msra.mxu0 %v624
        %664 = vmatpush.msra.mxu0 %v621
        %665 = vmatpush.msra.mxu0 %v618
        %666 = vmatpush.msra.mxu0 %v615
        %667 = vmatpush.msra.mxu0 %v612
        %668 = vmatpush.msra.mxu0 %v609
        %669 = vmatpush.msra.mxu0 %v606
        %670 = vmatmul.f32.gmra.mxu0 %v541
        %v671 = vpop.f32.mrf.mxu0
        %v672 = vadd.f32 0.0, %v671
        %673 = vmatmul.f32.gmra.mxu0 %v544
        %v674 = vpop.f32.mrf.mxu0
        %v675 = vadd.f32 0.0, %v674
        %676 = vmatmul.f32.gmra.mxu0 %v547
        %v677 = vpop.f32.mrf.mxu0
        %v678 = vadd.f32 0.0, %v677
        %679 = vmatmul.f32.gmra.mxu0 %v550
        %v680 = vpop.f32.mrf.mxu0
        %v681 = vadd.f32 0.0, %v680
        %682 = vmatmul.f32.gmra.mxu0 %v553
        %v683 = vpop.f32.mrf.mxu0
        %v684 = vadd.f32 0.0, %v683
        %685 = vmatmul.f32.gmra.mxu0 %v556
        %v686 = vpop.f32.mrf.mxu0
        %v687 = vadd.f32 0.0, %v686
        %688 = vmatmul.f32.gmra.mxu0 %v559
        %v689 = vpop.f32.mrf.mxu0
        %v690 = vadd.f32 0.0, %v689
        %691 = vmatmul.f32.gmra.mxu0 %v562
        %v692 = vpop.f32.mrf.mxu0
        %v693 = vadd.f32 0.0, %v692
        %694 = vmatmul.f32.gmra.mxu0 %v565
        %v695 = vpop.f32.mrf.mxu0
        %v696 = vadd.f32 0.0, %v695
        %697 = vmatmul.f32.gmra.mxu0 %v568
        %v698 = vpop.f32.mrf.mxu0
        %v699 = vadd.f32 0.0, %v698
        %700 = vmatmul.f32.gmra.mxu0 %v571
        %v701 = vpop.f32.mrf.mxu0
        %v702 = vadd.f32 0.0, %v701
        %703 = vmatmul.f32.gmra.mxu0 %v574
        %v704 = vpop.f32.mrf.mxu0
        %v705 = vadd.f32 0.0, %v704
        %706 = vmatmul.f32.gmra.mxu0 %v577
        %v707 = vpop.f32.mrf.mxu0
        %v708 = vadd.f32 0.0, %v707
        %709 = vmatmul.f32.gmra.mxu0 %v580
        %v710 = vpop.f32.mrf.mxu0
        %v711 = vadd.f32 0.0, %v710
        %712 = vmatmul.f32.gmra.mxu0 %v583
        %v713 = vpop.f32.mrf.mxu0
        %v714 = vadd.f32 0.0, %v713
        %715 = vmatmul.f32.gmra.mxu0 %v586
        %v716 = vpop.f32.mrf.mxu0
        %v717 = vadd.f32 0.0, %v716
        %718 = vdwg.mxu0
        %719 = vmatpush.msra.mxu0 %v652
        %720 = vmatpush.msra.mxu0 %v649
        %721 = vmatpush.msra.mxu0 %v646
        %722 = vmatpush.msra.mxu0 %v643
        %723 = vmatpush.msra.mxu0 %v640
        %724 = vmatpush.msra.mxu0 %v637
        %725 = vmatpush.msra.mxu0 %v634
        %726 = vmatpush.msra.mxu0 %v631
        %727 = vmatpush.msra.mxu0 %v628
        %728 = vmatpush.msra.mxu0 %v625
        %729 = vmatpush.msra.mxu0 %v622
        %730 = vmatpush.msra.mxu0 %v619
        %731 = vmatpush.msra.mxu0 %v616
        %732 = vmatpush.msra.mxu0 %v613
        %733 = vmatpush.msra.mxu0 %v610
        %734 = vmatpush.msra.mxu0 %v607
        %735 = vmatmul.f32.gmra.mxu0 %v541
        %v736 = vpop.f32.mrf.mxu0
        %v737 = vadd.f32 0.0, %v736
        %738 = vmatmul.f32.gmra.mxu0 %v544
        %v739 = vpop.f32.mrf.mxu0
        %v740 = vadd.f32 0.0, %v739
        %741 = vmatmul.f32.gmra.mxu0 %v547
        %v742 = vpop.f32.mrf.mxu0
        %v743 = vadd.f32 0.0, %v742
        %744 = vmatmul.f32.gmra.mxu0 %v550
        %v745 = vpop.f32.mrf.mxu0
        %v746 = vadd.f32 0.0, %v745
        %747 = vmatmul.f32.gmra.mxu0 %v553
        %v748 = vpop.f32.mrf.mxu0
        %v749 = vadd.f32 0.0, %v748
        %750 = vmatmul.f32.gmra.mxu0 %v556
        %v751 = vpop.f32.mrf.mxu0
        %v752 = vadd.f32 0.0, %v751
        %753 = vmatmul.f32.gmra.mxu0 %v559
        %v754 = vpop.f32.mrf.mxu0
        %v755 = vadd.f32 0.0, %v754
        %756 = vmatmul.f32.gmra.mxu0 %v562
        %v757 = vpop.f32.mrf.mxu0
        %v758 = vadd.f32 0.0, %v757
        %759 = vmatmul.f32.gmra.mxu0 %v565
        %v760 = vpop.f32.mrf.mxu0
        %v761 = vadd.f32 0.0, %v760
        %762 = vmatmul.f32.gmra.mxu0 %v568
        %v763 = vpop.f32.mrf.mxu0
        %v764 = vadd.f32 0.0, %v763
        %765 = vmatmul.f32.gmra.mxu0 %v571
        %v766 = vpop.f32.mrf.mxu0
        %v767 = vadd.f32 0.0, %v766
        %768 = vmatmul.f32.gmra.mxu0 %v574
        %v769 = vpop.f32.mrf.mxu0
        %v770 = vadd.f32 0.0, %v769
        %771 = vmatmul.f32.gmra.mxu0 %v577
        %v772 = vpop.f32.mrf.mxu0
        %v773 = vadd.f32 0.0, %v772
        %774 = vmatmul.f32.gmra.mxu0 %v580
        %v775 = vpop.f32.mrf.mxu0
        %v776 = vadd.f32 0.0, %v775
        %777 = vmatmul.f32.gmra.mxu0 %v583
        %v778 = vpop.f32.mrf.mxu0
        %v779 = vadd.f32 0.0, %v778
        %780 = vmatmul.f32.gmra.mxu0 %v586
        %v781 = vpop.f32.mrf.mxu0
        %v782 = vadd.f32 0.0, %v781
        %783 = vdwg.mxu0
        %784 = vmatpush.msra.mxu0 %v653
        %785 = vmatpush.msra.mxu0 %v650
        %786 = vmatpush.msra.mxu0 %v647
        %787 = vmatpush.msra.mxu0 %v644
        %788 = vmatpush.msra.mxu0 %v641
        %789 = vmatpush.msra.mxu0 %v638
        %790 = vmatpush.msra.mxu0 %v635
        %791 = vmatpush.msra.mxu0 %v632
        %792 = vmatpush.msra.mxu0 %v629
        %793 = vmatpush.msra.mxu0 %v626
        %794 = vmatpush.msra.mxu0 %v623
        %795 = vmatpush.msra.mxu0 %v620
        %796 = vmatpush.msra.mxu0 %v617
        %797 = vmatpush.msra.mxu0 %v614
        %798 = vmatpush.msra.mxu0 %v611
        %799 = vmatpush.msra.mxu0 %v608
        %800 = vmatmul.f32.gmra.mxu0 %v541
        %v801 = vpop.f32.mrf.mxu0
        %v802 = vadd.f32 0.0, %v801
        %803 = vmatmul.f32.gmra.mxu0 %v544
        %v804 = vpop.f32.mrf.mxu0
        %v805 = vadd.f32 0.0, %v804
        %806 = vmatmul.f32.gmra.mxu0 %v547
        %v807 = vpop.f32.mrf.mxu0
        %v808 = vadd.f32 0.0, %v807
        %809 = vmatmul.f32.gmra.mxu0 %v550
        %v810 = vpop.f32.mrf.mxu0
        %v811 = vadd.f32 0.0, %v810
        %812 = vmatmul.f32.gmra.mxu0 %v553
        %v813 = vpop.f32.mrf.mxu0
        %v814 = vadd.f32 0.0, %v813
        %815 = vmatmul.f32.gmra.mxu0 %v556
        %v816 = vpop.f32.mrf.mxu0
        %v817 = vadd.f32 0.0, %v816
        %818 = vmatmul.f32.gmra.mxu0 %v559
        %v819 = vpop.f32.mrf.mxu0
        %v820 = vadd.f32 0.0, %v819
        %821 = vmatmul.f32.gmra.mxu0 %v562
        %v822 = vpop.f32.mrf.mxu0
        %v823 = vadd.f32 0.0, %v822
        %824 = vmatmul.f32.gmra.mxu0 %v565
        %v825 = vpop.f32.mrf.mxu0
        %v826 = vadd.f32 0.0, %v825
        %827 = vmatmul.f32.gmra.mxu0 %v568
        %v828 = vpop.f32.mrf.mxu0
        %v829 = vadd.f32 0.0, %v828
        %830 = vmatmul.f32.gmra.mxu0 %v571
        %v831 = vpop.f32.mrf.mxu0
        %v832 = vadd.f32 0.0, %v831
        %833 = vmatmul.f32.gmra.mxu0 %v574
        %v834 = vpop.f32.mrf.mxu0
        %v835 = vadd.f32 0.0, %v834
        %836 = vmatmul.f32.gmra.mxu0 %v577
        %v837 = vpop.f32.mrf.mxu0
        %v838 = vadd.f32 0.0, %v837
        %839 = vmatmul.f32.gmra.mxu0 %v580
        %v840 = vpop.f32.mrf.mxu0
        %v841 = vadd.f32 0.0, %v840
        %842 = vmatmul.f32.gmra.mxu0 %v583
        %v843 = vpop.f32.mrf.mxu0
        %v844 = vadd.f32 0.0, %v843
        %845 = vmatmul.f32.gmra.mxu0 %v586
        %v846 = vpop.f32.mrf.mxu0
        %v847 = vadd.f32 0.0, %v846
        %848 = vdwg.mxu0
        %vm849 = vcmp.ge.s32.totalorder %v589, 1
        %vm850 = vcmp.ge.s32.totalorder %v590, 1
        %vm851 = vcmp.ge.s32.totalorder %v591, 1
        %vm852 = vcmp.ge.s32.totalorder %v592, 1
        %vm853 = vcmp.ge.s32.totalorder %v593, 1
        %vm854 = vcmp.ge.s32.totalorder %v594, 1
        %vm855 = vcmp.ge.s32.totalorder %v595, 1
        %vm856 = vcmp.ge.s32.totalorder %v596, 1
        %vm857 = vcmp.ge.s32.totalorder %v597, 1
        %vm858 = vcmp.ge.s32.totalorder %v598, 1
        %vm859 = vcmp.ge.s32.totalorder %v599, 1
        %vm860 = vcmp.ge.s32.totalorder %v600, 1
        %vm861 = vcmp.ge.s32.totalorder %v601, 1
        %vm862 = vcmp.ge.s32.totalorder %v602, 1
        %vm863 = vcmp.ge.s32.totalorder %v603, 1
        %vm864 = vcmp.ge.s32.totalorder %v604, 1
        %v865 = vsel %vm849, 1, 0
        %v866 = vsel %vm850, 1, 0
        %v867 = vsel %vm851, 1, 0
        %v868 = vsel %vm852, 1, 0
        %v869 = vsel %vm853, 1, 0
        %v870 = vsel %vm854, 1, 0
        %v871 = vsel %vm855, 1, 0
        %v872 = vsel %vm856, 1, 0
        %v873 = vsel %vm857, 1, 0
        %v874 = vsel %vm858, 1, 0
        %v875 = vsel %vm859, 1, 0
        %v876 = vsel %vm860, 1, 0
        %v877 = vsel %vm861, 1, 0
        %v878 = vsel %vm862, 1, 0
        %v879 = vsel %vm863, 1, 0
        %v880 = vsel %vm864, 1, 0
        %v881 = vcvt.s32.f32 %v865
        %v882 = vcvt.s32.f32 %v866
        %v883 = vcvt.s32.f32 %v867
        %v884 = vcvt.s32.f32 %v868
        %v885 = vcvt.s32.f32 %v869
        %v886 = vcvt.s32.f32 %v870
        %v887 = vcvt.s32.f32 %v871
        %v888 = vcvt.s32.f32 %v872
        %v889 = vcvt.s32.f32 %v873
        %v890 = vcvt.s32.f32 %v874
        %v891 = vcvt.s32.f32 %v875
        %v892 = vcvt.s32.f32 %v876
        %v893 = vcvt.s32.f32 %v877
        %v894 = vcvt.s32.f32 %v878
        %v895 = vcvt.s32.f32 %v879
        %v896 = vcvt.s32.f32 %v880
        %vm897 = vcmp.lt.s32.totalorder %v589, 15
        %vm898 = vcmp.lt.s32.totalorder %v590, 15
        %vm899 = vcmp.lt.s32.totalorder %v591, 15
        %vm900 = vcmp.lt.s32.totalorder %v592, 15
        %vm901 = vcmp.lt.s32.totalorder %v593, 15
        %vm902 = vcmp.lt.s32.totalorder %v594, 15
        %vm903 = vcmp.lt.s32.totalorder %v595, 15
        %vm904 = vcmp.lt.s32.totalorder %v596, 15
        %vm905 = vcmp.lt.s32.totalorder %v597, 15
        %vm906 = vcmp.lt.s32.totalorder %v598, 15
        %vm907 = vcmp.lt.s32.totalorder %v599, 15
        %vm908 = vcmp.lt.s32.totalorder %v600, 15
        %vm909 = vcmp.lt.s32.totalorder %v601, 15
        %vm910 = vcmp.lt.s32.totalorder %v602, 15
        %vm911 = vcmp.lt.s32.totalorder %v603, 15
        %vm912 = vcmp.lt.s32.totalorder %v604, 15
        %v913 = vsel %vm897, 1, 0
        %v914 = vsel %vm898, 1, 0
        %v915 = vsel %vm899, 1, 0
        %v916 = vsel %vm900, 1, 0
        %v917 = vsel %vm901, 1, 0
        %v918 = vsel %vm902, 1, 0
        %v919 = vsel %vm903, 1, 0
        %v920 = vsel %vm904, 1, 0
        %v921 = vsel %vm905, 1, 0
        %v922 = vsel %vm906, 1, 0
        %v923 = vsel %vm907, 1, 0
        %v924 = vsel %vm908, 1, 0
        %v925 = vsel %vm909, 1, 0
        %v926 = vsel %vm910, 1, 0
        %v927 = vsel %vm911, 1, 0
        %v928 = vsel %vm912, 1, 0
        %v929 = vcvt.s32.f32 %v913
        %v930 = vcvt.s32.f32 %v914
        %v931 = vcvt.s32.f32 %v915
        %v932 = vcvt.s32.f32 %v916
        %v933 = vcvt.s32.f32 %v917
        %v934 = vcvt.s32.f32 %v918
        %v935 = vcvt.s32.f32 %v919
        %v936 = vcvt.s32.f32 %v920
        %v937 = vcvt.s32.f32 %v921
        %v938 = vcvt.s32.f32 %v922
        %v939 = vcvt.s32.f32 %v923
        %v940 = vcvt.s32.f32 %v924
        %v941 = vcvt.s32.f32 %v925
        %v942 = vcvt.s32.f32 %v926
        %v943 = vcvt.s32.f32 %v927
        %v944 = vcvt.s32.f32 %v928
        %v945 = vrot.slane %v737, 7
        %v946 = vrot.slane %v740, 7
        %v947 = vrot.slane %v743, 7
        %v948 = vrot.slane %v746, 7
        %v949 = vrot.slane %v749, 7
        %v950 = vrot.slane %v752, 7
        %v951 = vrot.slane %v755, 7
        %v952 = vrot.slane %v758, 7
        %v953 = vrot.slane %v761, 7
        %v954 = vrot.slane %v764, 7
        %v955 = vrot.slane %v767, 7
        %v956 = vrot.slane %v770, 7
        %v957 = vrot.slane %v773, 7
        %v958 = vrot.slane %v776, 7
        %v959 = vrot.slane %v779, 7
        %v960 = vrot.slane %v782, 7
        %vm961 = vcmp.lt.s32.totalorder %v589, 1
        %v962 = vsel %vm961, %v959, %v960
        %v963 = vsel %vm961, %v958, %v959
        %v964 = vsel %vm961, %v957, %v958
        %v965 = vsel %vm961, %v956, %v957
        %v966 = vsel %vm961, %v955, %v956
        %v967 = vsel %vm961, %v954, %v955
        %v968 = vsel %vm961, %v953, %v954
        %v969 = vsel %vm961, %v952, %v953
        %v970 = vsel %vm961, %v951, %v952
        %v971 = vsel %vm961, %v950, %v951
        %v972 = vsel %vm961, %v949, %v950
        %v973 = vsel %vm961, %v948, %v949
        %v974 = vsel %vm961, %v947, %v948
        %v975 = vsel %vm961, %v946, %v947
        %v976 = vsel %vm961, %v945, %v946
        %v977 = vsel %vm961, %v960, %v945
        %v978 = vmul.f32 %v977, %v881
        %v979 = vmul.f32 %v976, %v882
        %v980 = vmul.f32 %v975, %v883
        %v981 = vmul.f32 %v974, %v884
        %v982 = vmul.f32 %v973, %v885
        %v983 = vmul.f32 %v972, %v886
        %v984 = vmul.f32 %v971, %v887
        %v985 = vmul.f32 %v970, %v888
        %v986 = vmul.f32 %v969, %v889
        %v987 = vmul.f32 %v968, %v890
        %v988 = vmul.f32 %v967, %v891
        %v989 = vmul.f32 %v966, %v892
        %v990 = vmul.f32 %v965, %v893
        %v991 = vmul.f32 %v964, %v894
        %v992 = vmul.f32 %v963, %v895
        %v993 = vmul.f32 %v962, %v896
        %v994 = vrot.slane %v737, 1
        %v995 = vrot.slane %v740, 1
        %v996 = vrot.slane %v743, 1
        %v997 = vrot.slane %v746, 1
        %v998 = vrot.slane %v749, 1
        %v999 = vrot.slane %v752, 1
        %v1000 = vrot.slane %v755, 1
        %v1001 = vrot.slane %v758, 1
        %v1002 = vrot.slane %v761, 1
        %v1003 = vrot.slane %v764, 1
        %v1004 = vrot.slane %v767, 1
        %v1005 = vrot.slane %v770, 1
        %v1006 = vrot.slane %v773, 1
        %v1007 = vrot.slane %v776, 1
        %v1008 = vrot.slane %v779, 1
        %v1009 = vrot.slane %v782, 1
        %vm1010 = vcmp.lt.s32.totalorder %v589, 7
        %v1011 = vsel %vm1010, %v1008, %v1009
        %v1012 = vsel %vm1010, %v1007, %v1008
        %v1013 = vsel %vm1010, %v1006, %v1007
        %v1014 = vsel %vm1010, %v1005, %v1006
        %v1015 = vsel %vm1010, %v1004, %v1005
        %v1016 = vsel %vm1010, %v1003, %v1004
        %v1017 = vsel %vm1010, %v1002, %v1003
        %v1018 = vsel %vm1010, %v1001, %v1002
        %v1019 = vsel %vm1010, %v1000, %v1001
        %v1020 = vsel %vm1010, %v999, %v1000
        %v1021 = vsel %vm1010, %v998, %v999
        %v1022 = vsel %vm1010, %v997, %v998
        %v1023 = vsel %vm1010, %v996, %v997
        %v1024 = vsel %vm1010, %v995, %v996
        %v1025 = vsel %vm1010, %v994, %v995
        %v1026 = vsel %vm1010, %v1009, %v994
        %v1027 = vmul.f32 %v1025, %v929
        %v1028 = vmul.f32 %v1024, %v930
        %v1029 = vmul.f32 %v1023, %v931
        %v1030 = vmul.f32 %v1022, %v932
        %v1031 = vmul.f32 %v1021, %v933
        %v1032 = vmul.f32 %v1020, %v934
        %v1033 = vmul.f32 %v1019, %v935
        %v1034 = vmul.f32 %v1018, %v936
        %v1035 = vmul.f32 %v1017, %v937
        %v1036 = vmul.f32 %v1016, %v938
        %v1037 = vmul.f32 %v1015, %v939
        %v1038 = vmul.f32 %v1014, %v940
        %v1039 = vmul.f32 %v1013, %v941
        %v1040 = vmul.f32 %v1012, %v942
        %v1041 = vmul.f32 %v1011, %v943
        %v1042 = vmul.f32 %v1026, %v944
        %v1043 = vrot.slane %v802, 7
        %v1044 = vrot.slane %v805, 7
        %v1045 = vrot.slane %v808, 7
        %v1046 = vrot.slane %v811, 7
        %v1047 = vrot.slane %v814, 7
        %v1048 = vrot.slane %v817, 7
        %v1049 = vrot.slane %v820, 7
        %v1050 = vrot.slane %v823, 7
        %v1051 = vrot.slane %v826, 7
        %v1052 = vrot.slane %v829, 7
        %v1053 = vrot.slane %v832, 7
        %v1054 = vrot.slane %v835, 7
        %v1055 = vrot.slane %v838, 7
        %v1056 = vrot.slane %v841, 7
        %v1057 = vrot.slane %v844, 7
        %v1058 = vrot.slane %v847, 7
        %v1059 = vsel %vm961, %v1057, %v1058
        %v1060 = vsel %vm961, %v1056, %v1057
        %v1061 = vsel %vm961, %v1055, %v1056
        %v1062 = vsel %vm961, %v1054, %v1055
        %v1063 = vsel %vm961, %v1053, %v1054
        %v1064 = vsel %vm961, %v1052, %v1053
        %v1065 = vsel %vm961, %v1051, %v1052
        %v1066 = vsel %vm961, %v1050, %v1051
        %v1067 = vsel %vm961, %v1049, %v1050
        %v1068 = vsel %vm961, %v1048, %v1049
        %v1069 = vsel %vm961, %v1047, %v1048
        %v1070 = vsel %vm961, %v1046, %v1047
        %v1071 = vsel %vm961, %v1045, %v1046
        %v1072 = vsel %vm961, %v1044, %v1045
        %v1073 = vsel %vm961, %v1043, %v1044
        %v1074 = vsel %vm961, %v1058, %v1043
        %v1075 = vmul.f32 %v1074, %v881
        %v1076 = vmul.f32 %v1073, %v882
        %v1077 = vmul.f32 %v1072, %v883
        %v1078 = vmul.f32 %v1071, %v884
        %v1079 = vmul.f32 %v1070, %v885
        %v1080 = vmul.f32 %v1069, %v886
        %v1081 = vmul.f32 %v1068, %v887
        %v1082 = vmul.f32 %v1067, %v888
        %v1083 = vmul.f32 %v1066, %v889
        %v1084 = vmul.f32 %v1065, %v890
        %v1085 = vmul.f32 %v1064, %v891
        %v1086 = vmul.f32 %v1063, %v892
        %v1087 = vmul.f32 %v1062, %v893
        %v1088 = vmul.f32 %v1061, %v894
        %v1089 = vmul.f32 %v1060, %v895
        %v1090 = vmul.f32 %v1059, %v896
        %v1091 = vperm.slane %v605, 0
        %v1092 = vadd.f32 %v1075, %v1091
        %v1093 = vadd.f32 %v1076, %v1091
        %v1094 = vadd.f32 %v1077, %v1091
        %v1095 = vadd.f32 %v1078, %v1091
        %v1096 = vadd.f32 %v1079, %v1091
        %v1097 = vadd.f32 %v1080, %v1091
        %v1098 = vadd.f32 %v1081, %v1091
        %v1099 = vadd.f32 %v1082, %v1091
        %v1100 = vadd.f32 %v1083, %v1091
        %v1101 = vadd.f32 %v1084, %v1091
        %v1102 = vadd.f32 %v1085, %v1091
        %v1103 = vadd.f32 %v1086, %v1091
        %v1104 = vadd.f32 %v1087, %v1091
        %v1105 = vadd.f32 %v1088, %v1091
        %v1106 = vadd.f32 %v1089, %v1091
        %v1107 = vadd.f32 %v1090, %v1091
        %v1108 = vperm.slane %v605, 1
        %v1109 = vadd.f32 %v802, %v1108
        %v1110 = vadd.f32 %v805, %v1108
        %v1111 = vadd.f32 %v808, %v1108
        %v1112 = vadd.f32 %v811, %v1108
        %v1113 = vadd.f32 %v814, %v1108
        %v1114 = vadd.f32 %v817, %v1108
        %v1115 = vadd.f32 %v820, %v1108
        %v1116 = vadd.f32 %v823, %v1108
        %v1117 = vadd.f32 %v826, %v1108
        %v1118 = vadd.f32 %v829, %v1108
        %v1119 = vadd.f32 %v832, %v1108
        %v1120 = vadd.f32 %v835, %v1108
        %v1121 = vadd.f32 %v838, %v1108
        %v1122 = vadd.f32 %v841, %v1108
        %v1123 = vadd.f32 %v844, %v1108
        %v1124 = vadd.f32 %v847, %v1108
        %v1125 = vrot.slane %v802, 1
        %v1126 = vrot.slane %v805, 1
        %v1127 = vrot.slane %v808, 1
        %v1128 = vrot.slane %v811, 1
        %v1129 = vrot.slane %v814, 1
        %v1130 = vrot.slane %v817, 1
        %v1131 = vrot.slane %v820, 1
        %v1132 = vrot.slane %v823, 1
        %v1133 = vrot.slane %v826, 1
        %v1134 = vrot.slane %v829, 1
        %v1135 = vrot.slane %v832, 1
        %v1136 = vrot.slane %v835, 1
        %v1137 = vrot.slane %v838, 1
        %v1138 = vrot.slane %v841, 1
        %v1139 = vrot.slane %v844, 1
        %v1140 = vrot.slane %v847, 1
        %v1141 = vsel %vm1010, %v1139, %v1140
        %v1142 = vsel %vm1010, %v1138, %v1139
        %v1143 = vsel %vm1010, %v1137, %v1138
        %v1144 = vsel %vm1010, %v1136, %v1137
        %v1145 = vsel %vm1010, %v1135, %v1136
        %v1146 = vsel %vm1010, %v1134, %v1135
        %v1147 = vsel %vm1010, %v1133, %v1134
        %v1148 = vsel %vm1010, %v1132, %v1133
        %v1149 = vsel %vm1010, %v1131, %v1132
        %v1150 = vsel %vm1010, %v1130, %v1131
        %v1151 = vsel %vm1010, %v1129, %v1130
        %v1152 = vsel %vm1010, %v1128, %v1129
        %v1153 = vsel %vm1010, %v1127, %v1128
        %v1154 = vsel %vm1010, %v1126, %v1127
        %v1155 = vsel %vm1010, %v1125, %v1126
        %v1156 = vsel %vm1010, %v1140, %v1125
        %v1157 = vmul.f32 %v1155, %v929
        %v1158 = vmul.f32 %v1154, %v930
        %v1159 = vmul.f32 %v1153, %v931
        %v1160 = vmul.f32 %v1152, %v932
        %v1161 = vmul.f32 %v1151, %v933
        %v1162 = vmul.f32 %v1150, %v934
        %v1163 = vmul.f32 %v1149, %v935
        %v1164 = vmul.f32 %v1148, %v936
        %v1165 = vmul.f32 %v1147, %v937
        %v1166 = vmul.f32 %v1146, %v938
        %v1167 = vmul.f32 %v1145, %v939
        %v1168 = vmul.f32 %v1144, %v940
        %v1169 = vmul.f32 %v1143, %v941
        %v1170 = vmul.f32 %v1142, %v942
        %v1171 = vmul.f32 %v1141, %v943
        %v1172 = vmul.f32 %v1156, %v944
        %v1173 = vperm.slane %v605, 2
        %v1174 = vadd.f32 %v1157, %v1173
        %v1175 = vadd.f32 %v1158, %v1173
        %v1176 = vadd.f32 %v1159, %v1173
        %v1177 = vadd.f32 %v1160, %v1173
        %v1178 = vadd.f32 %v1161, %v1173
        %v1179 = vadd.f32 %v1162, %v1173
        %v1180 = vadd.f32 %v1163, %v1173
        %v1181 = vadd.f32 %v1164, %v1173
        %v1182 = vadd.f32 %v1165, %v1173
        %v1183 = vadd.f32 %v1166, %v1173
        %v1184 = vadd.f32 %v1167, %v1173
        %v1185 = vadd.f32 %v1168, %v1173
        %v1186 = vadd.f32 %v1169, %v1173
        %v1187 = vadd.f32 %v1170, %v1173
        %v1188 = vadd.f32 %v1171, %v1173
        %v1189 = vadd.f32 %v1172, %v1173
        %v1190 = vmul.f32 %v672, %v978
        %v1191 = vmul.f32 %v675, %v979
        %v1192 = vmul.f32 %v678, %v980
        %v1193 = vmul.f32 %v681, %v981
        %v1194 = vmul.f32 %v684, %v982
        %v1195 = vmul.f32 %v687, %v983
        %v1196 = vmul.f32 %v690, %v984
        %v1197 = vmul.f32 %v693, %v985
        %v1198 = vmul.f32 %v696, %v986
        %v1199 = vmul.f32 %v699, %v987
        %v1200 = vmul.f32 %v702, %v988
        %v1201 = vmul.f32 %v705, %v989
        %v1202 = vmul.f32 %v708, %v990
        %v1203 = vmul.f32 %v711, %v991
        %v1204 = vmul.f32 %v714, %v992
        %v1205 = vmul.f32 %v717, %v993
        %v1206 = vmul.f32 %v672, %v737
        %v1207 = vmul.f32 %v675, %v740
        %v1208 = vmul.f32 %v678, %v743
        %v1209 = vmul.f32 %v681, %v746
        %v1210 = vmul.f32 %v684, %v749
        %v1211 = vmul.f32 %v687, %v752
        %v1212 = vmul.f32 %v690, %v755
        %v1213 = vmul.f32 %v693, %v758
        %v1214 = vmul.f32 %v696, %v761
        %v1215 = vmul.f32 %v699, %v764
        %v1216 = vmul.f32 %v702, %v767
        %v1217 = vmul.f32 %v705, %v770
        %v1218 = vmul.f32 %v708, %v773
        %v1219 = vmul.f32 %v711, %v776
        %v1220 = vmul.f32 %v714, %v779
        %v1221 = vmul.f32 %v717, %v782
        %v1222 = vmul.f32 %v672, %v1027
        %v1223 = vmul.f32 %v675, %v1028
        %v1224 = vmul.f32 %v678, %v1029
        %v1225 = vmul.f32 %v681, %v1030
        %v1226 = vmul.f32 %v684, %v1031
        %v1227 = vmul.f32 %v687, %v1032
        %v1228 = vmul.f32 %v690, %v1033
        %v1229 = vmul.f32 %v693, %v1034
        %v1230 = vmul.f32 %v696, %v1035
        %v1231 = vmul.f32 %v699, %v1036
        %v1232 = vmul.f32 %v702, %v1037
        %v1233 = vmul.f32 %v705, %v1038
        %v1234 = vmul.f32 %v708, %v1039
        %v1235 = vmul.f32 %v711, %v1040
        %v1236 = vmul.f32 %v714, %v1041
        %v1237 = vmul.f32 %v717, %v1042
        %v1238 = vmax.f32 %v1190, %v1206
        %v1239 = vmax.f32 %v1191, %v1207
        %v1240 = vmax.f32 %v1192, %v1208
        %v1241 = vmax.f32 %v1193, %v1209
        %v1242 = vmax.f32 %v1194, %v1210
        %v1243 = vmax.f32 %v1195, %v1211
        %v1244 = vmax.f32 %v1196, %v1212
        %v1245 = vmax.f32 %v1197, %v1213
        %v1246 = vmax.f32 %v1198, %v1214
        %v1247 = vmax.f32 %v1199, %v1215
        %v1248 = vmax.f32 %v1200, %v1216
        %v1249 = vmax.f32 %v1201, %v1217
        %v1250 = vmax.f32 %v1202, %v1218
        %v1251 = vmax.f32 %v1203, %v1219
        %v1252 = vmax.f32 %v1204, %v1220
        %v1253 = vmax.f32 %v1205, %v1221
        %v1254 = vmax.f32 %v1238, %v1222
        %v1255 = vmax.f32 %v1239, %v1223
        %v1256 = vmax.f32 %v1240, %v1224
        %v1257 = vmax.f32 %v1241, %v1225
        %v1258 = vmax.f32 %v1242, %v1226
        %v1259 = vmax.f32 %v1243, %v1227
        %v1260 = vmax.f32 %v1244, %v1228
        %v1261 = vmax.f32 %v1245, %v1229
        %v1262 = vmax.f32 %v1246, %v1230
        %v1263 = vmax.f32 %v1247, %v1231
        %v1264 = vmax.f32 %v1248, %v1232
        %v1265 = vmax.f32 %v1249, %v1233
        %v1266 = vmax.f32 %v1250, %v1234
        %v1267 = vmax.f32 %v1251, %v1235
        %v1268 = vmax.f32 %v1252, %v1236
        %v1269 = vmax.f32 %v1253, %v1237
        %v1270 = vsub.f32 %v1190, %v1254
        %v1271 = vsub.f32 %v1191, %v1255
        %v1272 = vsub.f32 %v1192, %v1256
        %v1273 = vsub.f32 %v1193, %v1257
        %v1274 = vsub.f32 %v1194, %v1258
        %v1275 = vsub.f32 %v1195, %v1259
        %v1276 = vsub.f32 %v1196, %v1260
        %v1277 = vsub.f32 %v1197, %v1261
        %v1278 = vsub.f32 %v1198, %v1262
        %v1279 = vsub.f32 %v1199, %v1263
        %v1280 = vsub.f32 %v1200, %v1264
        %v1281 = vsub.f32 %v1201, %v1265
        %v1282 = vsub.f32 %v1202, %v1266
        %v1283 = vsub.f32 %v1203, %v1267
        %v1284 = vsub.f32 %v1204, %v1268
        %v1285 = vsub.f32 %v1205, %v1269
        %v1286 = vmul.f32 %v1270, 1.442695
        %v1287 = vpow.pop %v1286
        %v1288 = vmul.f32 %v1271, 1.442695
        %v1289 = vpow.pop %v1288
        %v1290 = vmul.f32 %v1272, 1.442695
        %v1291 = vpow.pop %v1290
        %v1292 = vmul.f32 %v1273, 1.442695
        %v1293 = vpow.pop %v1292
        %v1294 = vmul.f32 %v1274, 1.442695
        %v1295 = vpow.pop %v1294
        %v1296 = vmul.f32 %v1275, 1.442695
        %v1297 = vpow.pop %v1296
        %v1298 = vmul.f32 %v1276, 1.442695
        %v1299 = vpow.pop %v1298
        %v1300 = vmul.f32 %v1277, 1.442695
        %v1301 = vpow.pop %v1300
        %v1302 = vmul.f32 %v1278, 1.442695
        %v1303 = vpow.pop %v1302
        %v1304 = vmul.f32 %v1279, 1.442695
        %v1305 = vpow.pop %v1304
        %v1306 = vmul.f32 %v1280, 1.442695
        %v1307 = vpow.pop %v1306
        %v1308 = vmul.f32 %v1281, 1.442695
        %v1309 = vpow.pop %v1308
        %v1310 = vmul.f32 %v1282, 1.442695
        %v1311 = vpow.pop %v1310
        %v1312 = vmul.f32 %v1283, 1.442695
        %v1313 = vpow.pop %v1312
        %v1314 = vmul.f32 %v1284, 1.442695
        %v1315 = vpow.pop %v1314
        %v1316 = vmul.f32 %v1285, 1.442695
        %v1317 = vpow.pop %v1316
        %v1318 = vsub.f32 %v1206, %v1254
        %v1319 = vsub.f32 %v1207, %v1255
        %v1320 = vsub.f32 %v1208, %v1256
        %v1321 = vsub.f32 %v1209, %v1257
        %v1322 = vsub.f32 %v1210, %v1258
        %v1323 = vsub.f32 %v1211, %v1259
        %v1324 = vsub.f32 %v1212, %v1260
        %v1325 = vsub.f32 %v1213, %v1261
        %v1326 = vsub.f32 %v1214, %v1262
        %v1327 = vsub.f32 %v1215, %v1263
        %v1328 = vsub.f32 %v1216, %v1264
        %v1329 = vsub.f32 %v1217, %v1265
        %v1330 = vsub.f32 %v1218, %v1266
        %v1331 = vsub.f32 %v1219, %v1267
        %v1332 = vsub.f32 %v1220, %v1268
        %v1333 = vsub.f32 %v1221, %v1269
        %v1334 = vmul.f32 %v1318, 1.442695
        %v1335 = vpow.pop %v1334
        %v1336 = vmul.f32 %v1319, 1.442695
        %v1337 = vpow.pop %v1336
        %v1338 = vmul.f32 %v1320, 1.442695
        %v1339 = vpow.pop %v1338
        %v1340 = vmul.f32 %v1321, 1.442695
        %v1341 = vpow.pop %v1340
        %v1342 = vmul.f32 %v1322, 1.442695
        %v1343 = vpow.pop %v1342
        %v1344 = vmul.f32 %v1323, 1.442695
        %v1345 = vpow.pop %v1344
        %v1346 = vmul.f32 %v1324, 1.442695
        %v1347 = vpow.pop %v1346
        %v1348 = vmul.f32 %v1325, 1.442695
        %v1349 = vpow.pop %v1348
        %v1350 = vmul.f32 %v1326, 1.442695
        %v1351 = vpow.pop %v1350
        %v1352 = vmul.f32 %v1327, 1.442695
        %v1353 = vpow.pop %v1352
        %v1354 = vmul.f32 %v1328, 1.442695
        %v1355 = vpow.pop %v1354
        %v1356 = vmul.f32 %v1329, 1.442695
        %v1357 = vpow.pop %v1356
        %v1358 = vmul.f32 %v1330, 1.442695
        %v1359 = vpow.pop %v1358
        %v1360 = vmul.f32 %v1331, 1.442695
        %v1361 = vpow.pop %v1360
        %v1362 = vmul.f32 %v1332, 1.442695
        %v1363 = vpow.pop %v1362
        %v1364 = vmul.f32 %v1333, 1.442695
        %v1365 = vpow.pop %v1364
        %v1366 = vsub.f32 %v1222, %v1254
        %v1367 = vsub.f32 %v1223, %v1255
        %v1368 = vsub.f32 %v1224, %v1256
        %v1369 = vsub.f32 %v1225, %v1257
        %v1370 = vsub.f32 %v1226, %v1258
        %v1371 = vsub.f32 %v1227, %v1259
        %v1372 = vsub.f32 %v1228, %v1260
        %v1373 = vsub.f32 %v1229, %v1261
        %v1374 = vsub.f32 %v1230, %v1262
        %v1375 = vsub.f32 %v1231, %v1263
        %v1376 = vsub.f32 %v1232, %v1264
        %v1377 = vsub.f32 %v1233, %v1265
        %v1378 = vsub.f32 %v1234, %v1266
        %v1379 = vsub.f32 %v1235, %v1267
        %v1380 = vsub.f32 %v1236, %v1268
        %v1381 = vsub.f32 %v1237, %v1269
        %v1382 = vmul.f32 %v1366, 1.442695
        %v1383 = vpow.pop %v1382
        %v1384 = vmul.f32 %v1367, 1.442695
        %v1385 = vpow.pop %v1384
        %v1386 = vmul.f32 %v1368, 1.442695
        %v1387 = vpow.pop %v1386
        %v1388 = vmul.f32 %v1369, 1.442695
        %v1389 = vpow.pop %v1388
        %v1390 = vmul.f32 %v1370, 1.442695
        %v1391 = vpow.pop %v1390
        %v1392 = vmul.f32 %v1371, 1.442695
        %v1393 = vpow.pop %v1392
        %v1394 = vmul.f32 %v1372, 1.442695
        %v1395 = vpow.pop %v1394
        %v1396 = vmul.f32 %v1373, 1.442695
        %v1397 = vpow.pop %v1396
        %v1398 = vmul.f32 %v1374, 1.442695
        %v1399 = vpow.pop %v1398
        %v1400 = vmul.f32 %v1375, 1.442695
        %v1401 = vpow.pop %v1400
        %v1402 = vmul.f32 %v1376, 1.442695
        %v1403 = vpow.pop %v1402
        %v1404 = vmul.f32 %v1377, 1.442695
        %v1405 = vpow.pop %v1404
        %v1406 = vmul.f32 %v1378, 1.442695
        %v1407 = vpow.pop %v1406
        %v1408 = vmul.f32 %v1379, 1.442695
        %v1409 = vpow.pop %v1408
        %v1410 = vmul.f32 %v1380, 1.442695
        %v1411 = vpow.pop %v1410
        %v1412 = vmul.f32 %v1381, 1.442695
        %v1413 = vpow.pop %v1412
        %v1414 = vadd.f32 %v1287, %v1335
        %v1415 = vadd.f32 %v1289, %v1337
        %v1416 = vadd.f32 %v1291, %v1339
        %v1417 = vadd.f32 %v1293, %v1341
        %v1418 = vadd.f32 %v1295, %v1343
        %v1419 = vadd.f32 %v1297, %v1345
        %v1420 = vadd.f32 %v1299, %v1347
        %v1421 = vadd.f32 %v1301, %v1349
        %v1422 = vadd.f32 %v1303, %v1351
        %v1423 = vadd.f32 %v1305, %v1353
        %v1424 = vadd.f32 %v1307, %v1355
        %v1425 = vadd.f32 %v1309, %v1357
        %v1426 = vadd.f32 %v1311, %v1359
        %v1427 = vadd.f32 %v1313, %v1361
        %v1428 = vadd.f32 %v1315, %v1363
        %v1429 = vadd.f32 %v1317, %v1365
        %v1430 = vadd.f32 %v1414, %v1383
        %v1431 = vadd.f32 %v1415, %v1385
        %v1432 = vadd.f32 %v1416, %v1387
        %v1433 = vadd.f32 %v1417, %v1389
        %v1434 = vadd.f32 %v1418, %v1391
        %v1435 = vadd.f32 %v1419, %v1393
        %v1436 = vadd.f32 %v1420, %v1395
        %v1437 = vadd.f32 %v1421, %v1397
        %v1438 = vadd.f32 %v1422, %v1399
        %v1439 = vadd.f32 %v1423, %v1401
        %v1440 = vadd.f32 %v1424, %v1403
        %v1441 = vadd.f32 %v1425, %v1405
        %v1442 = vadd.f32 %v1426, %v1407
        %v1443 = vadd.f32 %v1427, %v1409
        %v1444 = vadd.f32 %v1428, %v1411
        %v1445 = vadd.f32 %v1429, %v1413
        %v1446 = vmul.f32 %v1287, %v1092
        %v1447 = vmul.f32 %v1289, %v1093
        %v1448 = vmul.f32 %v1291, %v1094
        %v1449 = vmul.f32 %v1293, %v1095
        %v1450 = vmul.f32 %v1295, %v1096
        %v1451 = vmul.f32 %v1297, %v1097
        %v1452 = vmul.f32 %v1299, %v1098
        %v1453 = vmul.f32 %v1301, %v1099
        %v1454 = vmul.f32 %v1303, %v1100
        %v1455 = vmul.f32 %v1305, %v1101
        %v1456 = vmul.f32 %v1307, %v1102
        %v1457 = vmul.f32 %v1309, %v1103
        %v1458 = vmul.f32 %v1311, %v1104
        %v1459 = vmul.f32 %v1313, %v1105
        %v1460 = vmul.f32 %v1315, %v1106
        %v1461 = vmul.f32 %v1317, %v1107
        %v1462 = vmul.f32 %v1335, %v1109
        %v1463 = vmul.f32 %v1337, %v1110
        %v1464 = vmul.f32 %v1339, %v1111
        %v1465 = vmul.f32 %v1341, %v1112
        %v1466 = vmul.f32 %v1343, %v1113
        %v1467 = vmul.f32 %v1345, %v1114
        %v1468 = vmul.f32 %v1347, %v1115
        %v1469 = vmul.f32 %v1349, %v1116
        %v1470 = vmul.f32 %v1351, %v1117
        %v1471 = vmul.f32 %v1353, %v1118
        %v1472 = vmul.f32 %v1355, %v1119
        %v1473 = vmul.f32 %v1357, %v1120
        %v1474 = vmul.f32 %v1359, %v1121
        %v1475 = vmul.f32 %v1361, %v1122
        %v1476 = vmul.f32 %v1363, %v1123
        %v1477 = vmul.f32 %v1365, %v1124
        %v1478 = vadd.f32 %v1446, %v1462
        %v1479 = vadd.f32 %v1447, %v1463
        %v1480 = vadd.f32 %v1448, %v1464
        %v1481 = vadd.f32 %v1449, %v1465
        %v1482 = vadd.f32 %v1450, %v1466
        %v1483 = vadd.f32 %v1451, %v1467
        %v1484 = vadd.f32 %v1452, %v1468
        %v1485 = vadd.f32 %v1453, %v1469
        %v1486 = vadd.f32 %v1454, %v1470
        %v1487 = vadd.f32 %v1455, %v1471
        %v1488 = vadd.f32 %v1456, %v1472
        %v1489 = vadd.f32 %v1457, %v1473
        %v1490 = vadd.f32 %v1458, %v1474
        %v1491 = vadd.f32 %v1459, %v1475
        %v1492 = vadd.f32 %v1460, %v1476
        %v1493 = vadd.f32 %v1461, %v1477
        %v1494 = vmul.f32 %v1383, %v1174
        %v1495 = vmul.f32 %v1385, %v1175
        %v1496 = vmul.f32 %v1387, %v1176
        %v1497 = vmul.f32 %v1389, %v1177
        %v1498 = vmul.f32 %v1391, %v1178
        %v1499 = vmul.f32 %v1393, %v1179
        %v1500 = vmul.f32 %v1395, %v1180
        %v1501 = vmul.f32 %v1397, %v1181
        %v1502 = vmul.f32 %v1399, %v1182
        %v1503 = vmul.f32 %v1401, %v1183
        %v1504 = vmul.f32 %v1403, %v1184
        %v1505 = vmul.f32 %v1405, %v1185
        %v1506 = vmul.f32 %v1407, %v1186
        %v1507 = vmul.f32 %v1409, %v1187
        %v1508 = vmul.f32 %v1411, %v1188
        %v1509 = vmul.f32 %v1413, %v1189
        %v1510 = vadd.f32 %v1478, %v1494
        %v1511 = vadd.f32 %v1479, %v1495
        %v1512 = vadd.f32 %v1480, %v1496
        %v1513 = vadd.f32 %v1481, %v1497
        %v1514 = vadd.f32 %v1482, %v1498
        %v1515 = vadd.f32 %v1483, %v1499
        %v1516 = vadd.f32 %v1484, %v1500
        %v1517 = vadd.f32 %v1485, %v1501
        %v1518 = vadd.f32 %v1486, %v1502
        %v1519 = vadd.f32 %v1487, %v1503
        %v1520 = vadd.f32 %v1488, %v1504
        %v1521 = vadd.f32 %v1489, %v1505
        %v1522 = vadd.f32 %v1490, %v1506
        %v1523 = vadd.f32 %v1491, %v1507
        %v1524 = vadd.f32 %v1492, %v1508
        %v1525 = vadd.f32 %v1493, %v1509
        %v1526 = vrcp.pop %v1430
        %v1527 = vmul.f32 %v1430, %v1526
        %v1528 = vsub.f32 1.0, %v1527
        %v1529 = vmul.f32 %v1526, %v1528
        %v1530 = vadd.f32 %v1526, %v1529
        %vm1531 = vweird.f32 %v1430
        %vm1532 = vweird.f32 %v1526
        %vm1533 = vmor %vm1531, %vm1532
        %v1534 = vsel %vm1533, %v1526, %v1530
        %v1535 = vand.u32 2147483647, %v1430
        %vm1536 = vcmp.eq.f32.partialorder %v1535, 8.507059e+37
        %v1537 = vand.u32 %v1430, 2147483648
        %v1538 = vor.u32 1.1754944e-38, %v1537
        %v1539 = vsel %vm1536, %v1538, %v1534
        %v1540 = vrcp.pop %v1431
        %v1541 = vmul.f32 %v1431, %v1540
        %v1542 = vsub.f32 1.0, %v1541
        %v1543 = vmul.f32 %v1540, %v1542
        %v1544 = vadd.f32 %v1540, %v1543
        %vm1545 = vweird.f32 %v1431
        %vm1546 = vweird.f32 %v1540
        %vm1547 = vmor %vm1545, %vm1546
        %v1548 = vsel %vm1547, %v1540, %v1544
        %v1549 = vand.u32 2147483647, %v1431
        %vm1550 = vcmp.eq.f32.partialorder %v1549, 8.507059e+37
        %v1551 = vand.u32 %v1431, 2147483648
        %v1552 = vor.u32 1.1754944e-38, %v1551
        %v1553 = vsel %vm1550, %v1552, %v1548
        %v1554 = vrcp.pop %v1432
        %v1555 = vmul.f32 %v1432, %v1554
        %v1556 = vsub.f32 1.0, %v1555
        %v1557 = vmul.f32 %v1554, %v1556
        %v1558 = vadd.f32 %v1554, %v1557
        %vm1559 = vweird.f32 %v1432
        %vm1560 = vweird.f32 %v1554
        %vm1561 = vmor %vm1559, %vm1560
        %v1562 = vsel %vm1561, %v1554, %v1558
        %v1563 = vand.u32 2147483647, %v1432
        %vm1564 = vcmp.eq.f32.partialorder %v1563, 8.507059e+37
        %v1565 = vand.u32 %v1432, 2147483648
        %v1566 = vor.u32 1.1754944e-38, %v1565
        %v1567 = vsel %vm1564, %v1566, %v1562
        %v1568 = vrcp.pop %v1433
        %v1569 = vmul.f32 %v1433, %v1568
        %v1570 = vsub.f32 1.0, %v1569
        %v1571 = vmul.f32 %v1568, %v1570
        %v1572 = vadd.f32 %v1568, %v1571
        %vm1573 = vweird.f32 %v1433
        %vm1574 = vweird.f32 %v1568
        %vm1575 = vmor %vm1573, %vm1574
        %v1576 = vsel %vm1575, %v1568, %v1572
        %v1577 = vand.u32 2147483647, %v1433
        %vm1578 = vcmp.eq.f32.partialorder %v1577, 8.507059e+37
        %v1579 = vand.u32 %v1433, 2147483648
        %v1580 = vor.u32 1.1754944e-38, %v1579
        %v1581 = vsel %vm1578, %v1580, %v1576
        %v1582 = vrcp.pop %v1434
        %v1583 = vmul.f32 %v1434, %v1582
        %v1584 = vsub.f32 1.0, %v1583
        %v1585 = vmul.f32 %v1582, %v1584
        %v1586 = vadd.f32 %v1582, %v1585
        %vm1587 = vweird.f32 %v1434
        %vm1588 = vweird.f32 %v1582
        %vm1589 = vmor %vm1587, %vm1588
        %v1590 = vsel %vm1589, %v1582, %v1586
        %v1591 = vand.u32 2147483647, %v1434
        %vm1592 = vcmp.eq.f32.partialorder %v1591, 8.507059e+37
        %v1593 = vand.u32 %v1434, 2147483648
        %v1594 = vor.u32 1.1754944e-38, %v1593
        %v1595 = vsel %vm1592, %v1594, %v1590
        %v1596 = vrcp.pop %v1435
        %v1597 = vmul.f32 %v1435, %v1596
        %v1598 = vsub.f32 1.0, %v1597
        %v1599 = vmul.f32 %v1596, %v1598
        %v1600 = vadd.f32 %v1596, %v1599
        %vm1601 = vweird.f32 %v1435
        %vm1602 = vweird.f32 %v1596
        %vm1603 = vmor %vm1601, %vm1602
        %v1604 = vsel %vm1603, %v1596, %v1600
        %v1605 = vand.u32 2147483647, %v1435
        %vm1606 = vcmp.eq.f32.partialorder %v1605, 8.507059e+37
        %v1607 = vand.u32 %v1435, 2147483648
        %v1608 = vor.u32 1.1754944e-38, %v1607
        %v1609 = vsel %vm1606, %v1608, %v1604
        %v1610 = vrcp.pop %v1436
        %v1611 = vmul.f32 %v1436, %v1610
        %v1612 = vsub.f32 1.0, %v1611
        %v1613 = vmul.f32 %v1610, %v1612
        %v1614 = vadd.f32 %v1610, %v1613
        %vm1615 = vweird.f32 %v1436
        %vm1616 = vweird.f32 %v1610
        %vm1617 = vmor %vm1615, %vm1616
        %v1618 = vsel %vm1617, %v1610, %v1614
        %v1619 = vand.u32 2147483647, %v1436
        %vm1620 = vcmp.eq.f32.partialorder %v1619, 8.507059e+37
        %v1621 = vand.u32 %v1436, 2147483648
        %v1622 = vor.u32 1.1754944e-38, %v1621
        %v1623 = vsel %vm1620, %v1622, %v1618
        %v1624 = vrcp.pop %v1437
        %v1625 = vmul.f32 %v1437, %v1624
        %v1626 = vsub.f32 1.0, %v1625
        %v1627 = vmul.f32 %v1624, %v1626
        %v1628 = vadd.f32 %v1624, %v1627
        %vm1629 = vweird.f32 %v1437
        %vm1630 = vweird.f32 %v1624
        %vm1631 = vmor %vm1629, %vm1630
        %v1632 = vsel %vm1631, %v1624, %v1628
        %v1633 = vand.u32 2147483647, %v1437
        %vm1634 = vcmp.eq.f32.partialorder %v1633, 8.507059e+37
        %v1635 = vand.u32 %v1437, 2147483648
        %v1636 = vor.u32 1.1754944e-38, %v1635
        %v1637 = vsel %vm1634, %v1636, %v1632
        %v1638 = vrcp.pop %v1438
        %v1639 = vmul.f32 %v1438, %v1638
        %v1640 = vsub.f32 1.0, %v1639
        %v1641 = vmul.f32 %v1638, %v1640
        %v1642 = vadd.f32 %v1638, %v1641
        %vm1643 = vweird.f32 %v1438
        %vm1644 = vweird.f32 %v1638
        %vm1645 = vmor %vm1643, %vm1644
        %v1646 = vsel %vm1645, %v1638, %v1642
        %v1647 = vand.u32 2147483647, %v1438
        %vm1648 = vcmp.eq.f32.partialorder %v1647, 8.507059e+37
        %v1649 = vand.u32 %v1438, 2147483648
        %v1650 = vor.u32 1.1754944e-38, %v1649
        %v1651 = vsel %vm1648, %v1650, %v1646
        %v1652 = vrcp.pop %v1439
        %v1653 = vmul.f32 %v1439, %v1652
        %v1654 = vsub.f32 1.0, %v1653
        %v1655 = vmul.f32 %v1652, %v1654
        %v1656 = vadd.f32 %v1652, %v1655
        %vm1657 = vweird.f32 %v1439
        %vm1658 = vweird.f32 %v1652
        %vm1659 = vmor %vm1657, %vm1658
        %v1660 = vsel %vm1659, %v1652, %v1656
        %v1661 = vand.u32 2147483647, %v1439
        %vm1662 = vcmp.eq.f32.partialorder %v1661, 8.507059e+37
        %v1663 = vand.u32 %v1439, 2147483648
        %v1664 = vor.u32 1.1754944e-38, %v1663
        %v1665 = vsel %vm1662, %v1664, %v1660
        %v1666 = vrcp.pop %v1440
        %v1667 = vmul.f32 %v1440, %v1666
        %v1668 = vsub.f32 1.0, %v1667
        %v1669 = vmul.f32 %v1666, %v1668
        %v1670 = vadd.f32 %v1666, %v1669
        %vm1671 = vweird.f32 %v1440
        %vm1672 = vweird.f32 %v1666
        %vm1673 = vmor %vm1671, %vm1672
        %v1674 = vsel %vm1673, %v1666, %v1670
        %v1675 = vand.u32 2147483647, %v1440
        %vm1676 = vcmp.eq.f32.partialorder %v1675, 8.507059e+37
        %v1677 = vand.u32 %v1440, 2147483648
        %v1678 = vor.u32 1.1754944e-38, %v1677
        %v1679 = vsel %vm1676, %v1678, %v1674
        %v1680 = vrcp.pop %v1441
        %v1681 = vmul.f32 %v1441, %v1680
        %v1682 = vsub.f32 1.0, %v1681
        %v1683 = vmul.f32 %v1680, %v1682
        %v1684 = vadd.f32 %v1680, %v1683
        %vm1685 = vweird.f32 %v1441
        %vm1686 = vweird.f32 %v1680
        %vm1687 = vmor %vm1685, %vm1686
        %v1688 = vsel %vm1687, %v1680, %v1684
        %v1689 = vand.u32 2147483647, %v1441
        %vm1690 = vcmp.eq.f32.partialorder %v1689, 8.507059e+37
        %v1691 = vand.u32 %v1441, 2147483648
        %v1692 = vor.u32 1.1754944e-38, %v1691
        %v1693 = vsel %vm1690, %v1692, %v1688
        %v1694 = vrcp.pop %v1442
        %v1695 = vmul.f32 %v1442, %v1694
        %v1696 = vsub.f32 1.0, %v1695
        %v1697 = vmul.f32 %v1694, %v1696
        %v1698 = vadd.f32 %v1694, %v1697
        %vm1699 = vweird.f32 %v1442
        %vm1700 = vweird.f32 %v1694
        %vm1701 = vmor %vm1699, %vm1700
        %v1702 = vsel %vm1701, %v1694, %v1698
        %v1703 = vand.u32 2147483647, %v1442
        %vm1704 = vcmp.eq.f32.partialorder %v1703, 8.507059e+37
        %v1705 = vand.u32 %v1442, 2147483648
        %v1706 = vor.u32 1.1754944e-38, %v1705
        %v1707 = vsel %vm1704, %v1706, %v1702
        %v1708 = vrcp.pop %v1443
        %v1709 = vmul.f32 %v1443, %v1708
        %v1710 = vsub.f32 1.0, %v1709
        %v1711 = vmul.f32 %v1708, %v1710
        %v1712 = vadd.f32 %v1708, %v1711
        %vm1713 = vweird.f32 %v1443
        %vm1714 = vweird.f32 %v1708
        %vm1715 = vmor %vm1713, %vm1714
        %v1716 = vsel %vm1715, %v1708, %v1712
        %v1717 = vand.u32 2147483647, %v1443
        %vm1718 = vcmp.eq.f32.partialorder %v1717, 8.507059e+37
        %v1719 = vand.u32 %v1443, 2147483648
        %v1720 = vor.u32 1.1754944e-38, %v1719
        %v1721 = vsel %vm1718, %v1720, %v1716
        %v1722 = vrcp.pop %v1444
        %v1723 = vmul.f32 %v1444, %v1722
        %v1724 = vsub.f32 1.0, %v1723
        %v1725 = vmul.f32 %v1722, %v1724
        %v1726 = vadd.f32 %v1722, %v1725
        %vm1727 = vweird.f32 %v1444
        %vm1728 = vweird.f32 %v1722
        %vm1729 = vmor %vm1727, %vm1728
        %v1730 = vsel %vm1729, %v1722, %v1726
        %v1731 = vand.u32 2147483647, %v1444
        %vm1732 = vcmp.eq.f32.partialorder %v1731, 8.507059e+37
        %v1733 = vand.u32 %v1444, 2147483648
        %v1734 = vor.u32 1.1754944e-38, %v1733
        %v1735 = vsel %vm1732, %v1734, %v1730
        %v1736 = vrcp.pop %v1445
        %v1737 = vmul.f32 %v1445, %v1736
        %v1738 = vsub.f32 1.0, %v1737
        %v1739 = vmul.f32 %v1736, %v1738
        %v1740 = vadd.f32 %v1736, %v1739
        %vm1741 = vweird.f32 %v1445
        %vm1742 = vweird.f32 %v1736
        %vm1743 = vmor %vm1741, %vm1742
        %v1744 = vsel %vm1743, %v1736, %v1740
        %v1745 = vand.u32 2147483647, %v1445
        %vm1746 = vcmp.eq.f32.partialorder %v1745, 8.507059e+37
        %v1747 = vand.u32 %v1445, 2147483648
        %v1748 = vor.u32 1.1754944e-38, %v1747
        %v1749 = vsel %vm1746, %v1748, %v1744
        %v1750 = vmul.f32 %v1510, %v1539
        %v1751 = vmul.f32 %v1511, %v1553
        %v1752 = vmul.f32 %v1512, %v1567
        %v1753 = vmul.f32 %v1513, %v1581
        %v1754 = vmul.f32 %v1514, %v1595
        %v1755 = vmul.f32 %v1515, %v1609
        %v1756 = vmul.f32 %v1516, %v1623
        %v1757 = vmul.f32 %v1517, %v1637
        %v1758 = vmul.f32 %v1518, %v1651
        %v1759 = vmul.f32 %v1519, %v1665
        %v1760 = vmul.f32 %v1520, %v1679
        %v1761 = vmul.f32 %v1521, %v1693
        %v1762 = vmul.f32 %v1522, %v1707
        %v1763 = vmul.f32 %v1523, %v1721
        %v1764 = vmul.f32 %v1524, %v1735
        %v1765 = vmul.f32 %v1525, %v1749
        %v1766 = vmax.f32 %v1750, 0.0
        %v1767 = vmax.f32 %v1751, 0.0
        %v1768 = vmax.f32 %v1752, 0.0
        %v1769 = vmax.f32 %v1753, 0.0
        %v1770 = vmax.f32 %v1754, 0.0
        %v1771 = vmax.f32 %v1755, 0.0
        %v1772 = vmax.f32 %v1756, 0.0
        %v1773 = vmax.f32 %v1757, 0.0
        %v1774 = vmax.f32 %v1758, 0.0
        %v1775 = vmax.f32 %v1759, 0.0
        %v1776 = vmax.f32 %v1760, 0.0
        %v1777 = vmax.f32 %v1761, 0.0
        %v1778 = vmax.f32 %v1762, 0.0
        %v1779 = vmax.f32 %v1763, 0.0
        %v1780 = vmax.f32 %v1764, 0.0
        %v1781 = vmax.f32 %v1765, 0.0
        %v1782 = vld [vmem:[%s7] sm:$0xff]
        %v1783 = vld [vmem:[%s7 + $0x8] sm:$0xff]
        %v1784 = vld [vmem:[%s7 + $0x10] sm:$0xff]
        %v1785 = vld [vmem:[%s7 + $0x18] sm:$0xff]
        %v1786 = vld [vmem:[%s7 + $0x20] sm:$0xff]
        %v1787 = vld [vmem:[%s7 + $0x28] sm:$0xff]
        %v1788 = vld [vmem:[%s7 + $0x30] sm:$0xff]
        %v1789 = vld [vmem:[%s7 + $0x38] sm:$0xff]
        %v1790 = vld [vmem:[%s7 + $0x40] sm:$0xff]
        %v1791 = vld [vmem:[%s7 + $0x48] sm:$0xff]
        %v1792 = vld [vmem:[%s7 + $0x50] sm:$0xff]
        %v1793 = vld [vmem:[%s7 + $0x58] sm:$0xff]
        %v1794 = vld [vmem:[%s7 + $0x60] sm:$0xff]
        %v1795 = vld [vmem:[%s7 + $0x68] sm:$0xff]
        %v1796 = vld [vmem:[%s7 + $0x70] sm:$0xff]
        %v1797 = vld [vmem:[%s7 + $0x78] sm:$0xff]
        %v1798 = vld [vmem:[%s8] sm:$0x1]
        %v1800 = vperm.slane %v1798, 0
        %1802 = vmatpush.msra.mxu0 %v1797
        %1803 = vmatpush.msra.mxu0 %v1796
        %1804 = vmatpush.msra.mxu0 %v1795
        %1805 = vmatpush.msra.mxu0 %v1794
        %1806 = vmatpush.msra.mxu0 %v1793
        %1807 = vmatpush.msra.mxu0 %v1792
        %1808 = vmatpush.msra.mxu0 %v1791
        %1809 = vmatpush.msra.mxu0 %v1790
        %1810 = vmatpush.msra.mxu0 %v1789
        %1811 = vmatpush.msra.mxu0 %v1788
        %1812 = vmatpush.msra.mxu0 %v1787
        %1813 = vmatpush.msra.mxu0 %v1786
        %1814 = vmatpush.msra.mxu0 %v1785
        %1815 = vmatpush.msra.mxu0 %v1784
        %1816 = vmatpush.msra.mxu0 %v1783
        %1817 = vmatpush.msra.mxu0 %v1782
        %1818 = vmatmul.f32.gmra.mxu0 %v1766
        %v1819 = vpop.f32.mrf.mxu0
        %v1820 = vadd.f32 %v1800, %v1819
        %1821 = vmatmul.f32.gmra.mxu0 %v1767
        %v1822 = vpop.f32.mrf.mxu0
        %v1823 = vadd.f32 %v1800, %v1822
        %1824 = vmatmul.f32.gmra.mxu0 %v1768
        %v1825 = vpop.f32.mrf.mxu0
        %v1826 = vadd.f32 %v1800, %v1825
        %1827 = vmatmul.f32.gmra.mxu0 %v1769
        %v1828 = vpop.f32.mrf.mxu0
        %v1829 = vadd.f32 %v1800, %v1828
        %1830 = vmatmul.f32.gmra.mxu0 %v1770
        %v1831 = vpop.f32.mrf.mxu0
        %v1832 = vadd.f32 %v1800, %v1831
        %1833 = vmatmul.f32.gmra.mxu0 %v1771
        %v1834 = vpop.f32.mrf.mxu0
        %v1835 = vadd.f32 %v1800, %v1834
        %1836 = vmatmul.f32.gmra.mxu0 %v1772
        %v1837 = vpop.f32.mrf.mxu0
        %v1838 = vadd.f32 %v1800, %v1837
        %1839 = vmatmul.f32.gmra.mxu0 %v1773
        %v1840 = vpop.f32.mrf.mxu0
        %v1841 = vadd.f32 %v1800, %v1840
        %1842 = vmatmul.f32.gmra.mxu0 %v1774
        %v1843 = vpop.f32.mrf.mxu0
        %v1844 = vadd.f32 %v1800, %v1843
        %1845 = vmatmul.f32.gmra.mxu0 %v1775
        %v1846 = vpop.f32.mrf.mxu0
        %v1847 = vadd.f32 %v1800, %v1846
        %1848 = vmatmul.f32.gmra.mxu0 %v1776
        %v1849 = vpop.f32.mrf.mxu0
        %v1850 = vadd.f32 %v1800, %v1849
        %1851 = vmatmul.f32.gmra.mxu0 %v1777
        %v1852 = vpop.f32.mrf.mxu0
        %v1853 = vadd.f32 %v1800, %v1852
        %1854 = vmatmul.f32.gmra.mxu0 %v1778
        %v1855 = vpop.f32.mrf.mxu0
        %v1856 = vadd.f32 %v1800, %v1855
        %1857 = vmatmul.f32.gmra.mxu0 %v1779
        %v1858 = vpop.f32.mrf.mxu0
        %v1859 = vadd.f32 %v1800, %v1858
        %1860 = vmatmul.f32.gmra.mxu0 %v1780
        %v1861 = vpop.f32.mrf.mxu0
        %v1862 = vadd.f32 %v1800, %v1861
        %1863 = vmatmul.f32.gmra.mxu0 %v1781
        %v1864 = vpop.f32.mrf.mxu0
        %v1865 = vadd.f32 %v1800, %v1864
        %1866 = vdwg.mxu0
        %v1867 = vadd.f32 %v541, %v1820
        %v1868 = vadd.f32 %v544, %v1823
        %v1869 = vadd.f32 %v547, %v1826
        %v1870 = vadd.f32 %v550, %v1829
        %v1871 = vadd.f32 %v553, %v1832
        %v1872 = vadd.f32 %v556, %v1835
        %v1873 = vadd.f32 %v559, %v1838
        %v1874 = vadd.f32 %v562, %v1841
        %v1875 = vadd.f32 %v565, %v1844
        %v1876 = vadd.f32 %v568, %v1847
        %v1877 = vadd.f32 %v571, %v1850
        %v1878 = vadd.f32 %v574, %v1853
        %v1879 = vadd.f32 %v577, %v1856
        %v1880 = vadd.f32 %v580, %v1859
        %v1881 = vadd.f32 %v583, %v1862
        %v1882 = vadd.f32 %v586, %v1865
        %1884 = vset.pattern.permute.xlu0 0
        %1885 = vperm.xlu0 %1884, %v436
        %v1886 = vpop.permute.xlu0 %1885
        %1889 = vset.pattern.permute.xlu0 0
        %1890 = vperm.xlu0 %1889, %v437
        %v1891 = vpop.permute.xlu0 %1890
        %1894 = vset.pattern.permute.xlu0 0
        %1895 = vperm.xlu0 %1894, %v438
        %v1896 = vpop.permute.xlu0 %1895
        %1899 = vset.pattern.permute.xlu0 0
        %1900 = vperm.xlu0 %1899, %v439
        %v1901 = vpop.permute.xlu0 %1900
        %1904 = vset.pattern.permute.xlu0 0
        %1905 = vperm.xlu0 %1904, %v440
        %v1906 = vpop.permute.xlu0 %1905
        %1909 = vset.pattern.permute.xlu0 0
        %1910 = vperm.xlu0 %1909, %v441
        %v1911 = vpop.permute.xlu0 %1910
        %1914 = vset.pattern.permute.xlu0 0
        %1915 = vperm.xlu0 %1914, %v442
        %v1916 = vpop.permute.xlu0 %1915
        %1919 = vset.pattern.permute.xlu0 0
        %1920 = vperm.xlu0 %1919, %v443
        %v1921 = vpop.permute.xlu0 %1920
        %1924 = vset.pattern.permute.xlu0 0
        %1925 = vperm.xlu0 %1924, %v444
        %v1926 = vpop.permute.xlu0 %1925
        %1929 = vset.pattern.permute.xlu0 0
        %1930 = vperm.xlu0 %1929, %v445
        %v1931 = vpop.permute.xlu0 %1930
        %1934 = vset.pattern.permute.xlu0 0
        %1935 = vperm.xlu0 %1934, %v446
        %v1936 = vpop.permute.xlu0 %1935
        %1939 = vset.pattern.permute.xlu0 0
        %1940 = vperm.xlu0 %1939, %v447
        %v1941 = vpop.permute.xlu0 %1940
        %1944 = vset.pattern.permute.xlu0 0
        %1945 = vperm.xlu0 %1944, %v448
        %v1946 = vpop.permute.xlu0 %1945
        %1949 = vset.pattern.permute.xlu0 0
        %1950 = vperm.xlu0 %1949, %v449
        %v1951 = vpop.permute.xlu0 %1950
        %1954 = vset.pattern.permute.xlu0 0
        %1955 = vperm.xlu0 %1954, %v450
        %v1956 = vpop.permute.xlu0 %1955
        %1959 = vset.pattern.permute.xlu0 0
        %1960 = vperm.xlu0 %1959, %v451
        %v1961 = vpop.permute.xlu0 %1960
        %v1963 = vmul.f32 %v1867, %v1886
        %v1964 = vmul.f32 %v1868, %v1891
        %v1965 = vmul.f32 %v1869, %v1896
        %v1966 = vmul.f32 %v1870, %v1901
        %v1967 = vmul.f32 %v1871, %v1906
        %v1968 = vmul.f32 %v1872, %v1911
        %v1969 = vmul.f32 %v1873, %v1916
        %v1970 = vmul.f32 %v1874, %v1921
        %v1971 = vmul.f32 %v1875, %v1926
        %v1972 = vmul.f32 %v1876, %v1931
        %v1973 = vmul.f32 %v1877, %v1936
        %v1974 = vmul.f32 %v1878, %v1941
        %v1975 = vmul.f32 %v1879, %v1946
        %v1976 = vmul.f32 %v1880, %v1951
        %v1977 = vmul.f32 %v1881, %v1956
        %v1978 = vmul.f32 %v1882, %v1961
        %s1979 = scalar_lea.vmem %s6, 4
        %v1980 = vld [vmem:[%s1979] sm:$0x7]
        %s1981 = scalar_lea.vmem [#allocation2], 384
        %v1982 = vld [vmem:[%s1981] sm:$0xff]
        %v1983 = vld [vmem:[%s1981 + $0x8] sm:$0xff]
        %v1984 = vld [vmem:[%s1981 + $0x10] sm:$0xff]
        %v1985 = vld [vmem:[%s1981 + $0x18] sm:$0xff]
        %v1986 = vld [vmem:[%s1981 + $0x20] sm:$0xff]
        %v1987 = vld [vmem:[%s1981 + $0x28] sm:$0xff]
        %v1988 = vld [vmem:[%s1981 + $0x30] sm:$0xff]
        %v1989 = vld [vmem:[%s1981 + $0x38] sm:$0xff]
        %v1990 = vld [vmem:[%s1981 + $0x40] sm:$0xff]
        %v1991 = vld [vmem:[%s1981 + $0x48] sm:$0xff]
        %v1992 = vld [vmem:[%s1981 + $0x50] sm:$0xff]
        %v1993 = vld [vmem:[%s1981 + $0x58] sm:$0xff]
        %v1994 = vld [vmem:[%s1981 + $0x60] sm:$0xff]
        %v1995 = vld [vmem:[%s1981 + $0x68] sm:$0xff]
        %v1996 = vld [vmem:[%s1981 + $0x70] sm:$0xff]
        %v1997 = vld [vmem:[%s1981 + $0x78] sm:$0xff]
        %v1998 = vld [vmem:[%s1981 + $0x80] sm:$0xff]
        %v1999 = vld [vmem:[%s1981 + $0x88] sm:$0xff]
        %v2000 = vld [vmem:[%s1981 + $0x90] sm:$0xff]
        %v2001 = vld [vmem:[%s1981 + $0x98] sm:$0xff]
        %v2002 = vld [vmem:[%s1981 + $0xa0] sm:$0xff]
        %v2003 = vld [vmem:[%s1981 + $0xa8] sm:$0xff]
        %v2004 = vld [vmem:[%s1981 + $0xb0] sm:$0xff]
        %v2005 = vld [vmem:[%s1981 + $0xb8] sm:$0xff]
        %v2006 = vld [vmem:[%s1981 + $0xc0] sm:$0xff]
        %v2007 = vld [vmem:[%s1981 + $0xc8] sm:$0xff]
        %v2008 = vld [vmem:[%s1981 + $0xd0] sm:$0xff]
        %v2009 = vld [vmem:[%s1981 + $0xd8] sm:$0xff]
        %v2010 = vld [vmem:[%s1981 + $0xe0] sm:$0xff]
        %v2011 = vld [vmem:[%s1981 + $0xe8] sm:$0xff]
        %v2012 = vld [vmem:[%s1981 + $0xf0] sm:$0xff]
        %v2013 = vld [vmem:[%s1981 + $0xf8] sm:$0xff]
        %v2014 = vld [vmem:[%s1981 + $0x100] sm:$0xff]
        %v2015 = vld [vmem:[%s1981 + $0x108] sm:$0xff]
        %v2016 = vld [vmem:[%s1981 + $0x110] sm:$0xff]
        %v2017 = vld [vmem:[%s1981 + $0x118] sm:$0xff]
        %v2018 = vld [vmem:[%s1981 + $0x120] sm:$0xff]
        %v2019 = vld [vmem:[%s1981 + $0x128] sm:$0xff]
        %v2020 = vld [vmem:[%s1981 + $0x130] sm:$0xff]
        %v2021 = vld [vmem:[%s1981 + $0x138] sm:$0xff]
        %v2022 = vld [vmem:[%s1981 + $0x140] sm:$0xff]
        %v2023 = vld [vmem:[%s1981 + $0x148] sm:$0xff]
        %v2024 = vld [vmem:[%s1981 + $0x150] sm:$0xff]
        %v2025 = vld [vmem:[%s1981 + $0x158] sm:$0xff]
        %v2026 = vld [vmem:[%s1981 + $0x160] sm:$0xff]
        %v2027 = vld [vmem:[%s1981 + $0x168] sm:$0xff]
        %v2028 = vld [vmem:[%s1981 + $0x170] sm:$0xff]
        %v2029 = vld [vmem:[%s1981 + $0x178] sm:$0xff]
        %2030 = vmatpush.msra.mxu0 %v2027
        %2031 = vmatpush.msra.mxu0 %v2024
        %2032 = vmatpush.msra.mxu0 %v2021
        %2033 = vmatpush.msra.mxu0 %v2018
        %2034 = vmatpush.msra.mxu0 %v2015
        %2035 = vmatpush.msra.mxu0 %v2012
        %2036 = vmatpush.msra.mxu0 %v2009
        %2037 = vmatpush.msra.mxu0 %v2006
        %2038 = vmatpush.msra.mxu0 %v2003
        %2039 = vmatpush.msra.mxu0 %v2000
        %2040 = vmatpush.msra.mxu0 %v1997
        %2041 = vmatpush.msra.mxu0 %v1994
        %2042 = vmatpush.msra.mxu0 %v1991
        %2043 = vmatpush.msra.mxu0 %v1988
        %2044 = vmatpush.msra.mxu0 %v1985
        %2045 = vmatpush.msra.mxu0 %v1982
        %2046 = vmatmul.f32.gmra.mxu0 %v1963
        %v2047 = vpop.f32.mrf.mxu0
        %v2048 = vadd.f32 0.0, %v2047
        %2049 = vmatmul.f32.gmra.mxu0 %v1964
        %v2050 = vpop.f32.mrf.mxu0
        %v2051 = vadd.f32 0.0, %v2050
        %2052 = vmatmul.f32.gmra.mxu0 %v1965
        %v2053 = vpop.f32.mrf.mxu0
        %v2054 = vadd.f32 0.0, %v2053
        %2055 = vmatmul.f32.gmra.mxu0 %v1966
        %v2056 = vpop.f32.mrf.mxu0
        %v2057 = vadd.f32 0.0, %v2056
        %2058 = vmatmul.f32.gmra.mxu0 %v1967
        %v2059 = vpop.f32.mrf.mxu0
        %v2060 = vadd.f32 0.0, %v2059
        %2061 = vmatmul.f32.gmra.mxu0 %v1968
        %v2062 = vpop.f32.mrf.mxu0
        %v2063 = vadd.f32 0.0, %v2062
        %2064 = vmatmul.f32.gmra.mxu0 %v1969
        %v2065 = vpop.f32.mrf.mxu0
        %v2066 = vadd.f32 0.0, %v2065
        %2067 = vmatmul.f32.gmra.mxu0 %v1970
        %v2068 = vpop.f32.mrf.mxu0
        %v2069 = vadd.f32 0.0, %v2068
        %2070 = vmatmul.f32.gmra.mxu0 %v1971
        %v2071 = vpop.f32.mrf.mxu0
        %v2072 = vadd.f32 0.0, %v2071
        %2073 = vmatmul.f32.gmra.mxu0 %v1972
        %v2074 = vpop.f32.mrf.mxu0
        %v2075 = vadd.f32 0.0, %v2074
        %2076 = vmatmul.f32.gmra.mxu0 %v1973
        %v2077 = vpop.f32.mrf.mxu0
        %v2078 = vadd.f32 0.0, %v2077
        %2079 = vmatmul.f32.gmra.mxu0 %v1974
        %v2080 = vpop.f32.mrf.mxu0
        %v2081 = vadd.f32 0.0, %v2080
        %2082 = vmatmul.f32.gmra.mxu0 %v1975
        %v2083 = vpop.f32.mrf.mxu0
        %v2084 = vadd.f32 0.0, %v2083
        %2085 = vmatmul.f32.gmra.mxu0 %v1976
        %v2086 = vpop.f32.mrf.mxu0
        %v2087 = vadd.f32 0.0, %v2086
        %2088 = vmatmul.f32.gmra.mxu0 %v1977
        %v2089 = vpop.f32.mrf.mxu0
        %v2090 = vadd.f32 0.0, %v2089
        %2091 = vmatmul.f32.gmra.mxu0 %v1978
        %v2092 = vpop.f32.mrf.mxu0
        %v2093 = vadd.f32 0.0, %v2092
        %2094 = vdwg.mxu0
        %2095 = vmatpush.msra.mxu0 %v2028
        %2096 = vmatpush.msra.mxu0 %v2025
        %2097 = vmatpush.msra.mxu0 %v2022
        %2098 = vmatpush.msra.mxu0 %v2019
        %2099 = vmatpush.msra.mxu0 %v2016
        %2100 = vmatpush.msra.mxu0 %v2013
        %2101 = vmatpush.msra.mxu0 %v2010
        %2102 = vmatpush.msra.mxu0 %v2007
        %2103 = vmatpush.msra.mxu0 %v2004
        %2104 = vmatpush.msra.mxu0 %v2001
        %2105 = vmatpush.msra.mxu0 %v1998
        %2106 = vmatpush.msra.mxu0 %v1995
        %2107 = vmatpush.msra.mxu0 %v1992
        %2108 = vmatpush.msra.mxu0 %v1989
        %2109 = vmatpush.msra.mxu0 %v1986
        %2110 = vmatpush.msra.mxu0 %v1983
        %2111 = vmatmul.f32.gmra.mxu0 %v1963
        %v2112 = vpop.f32.mrf.mxu0
        %v2113 = vadd.f32 0.0, %v2112
        %2114 = vmatmul.f32.gmra.mxu0 %v1964
        %v2115 = vpop.f32.mrf.mxu0
        %v2116 = vadd.f32 0.0, %v2115
        %2117 = vmatmul.f32.gmra.mxu0 %v1965
        %v2118 = vpop.f32.mrf.mxu0
        %v2119 = vadd.f32 0.0, %v2118
        %2120 = vmatmul.f32.gmra.mxu0 %v1966
        %v2121 = vpop.f32.mrf.mxu0
        %v2122 = vadd.f32 0.0, %v2121
        %2123 = vmatmul.f32.gmra.mxu0 %v1967
        %v2124 = vpop.f32.mrf.mxu0
        %v2125 = vadd.f32 0.0, %v2124
        %2126 = vmatmul.f32.gmra.mxu0 %v1968
        %v2127 = vpop.f32.mrf.mxu0
        %v2128 = vadd.f32 0.0, %v2127
        %2129 = vmatmul.f32.gmra.mxu0 %v1969
        %v2130 = vpop.f32.mrf.mxu0
        %v2131 = vadd.f32 0.0, %v2130
        %2132 = vmatmul.f32.gmra.mxu0 %v1970
        %v2133 = vpop.f32.mrf.mxu0
        %v2134 = vadd.f32 0.0, %v2133
        %2135 = vmatmul.f32.gmra.mxu0 %v1971
        %v2136 = vpop.f32.mrf.mxu0
        %v2137 = vadd.f32 0.0, %v2136
        %2138 = vmatmul.f32.gmra.mxu0 %v1972
        %v2139 = vpop.f32.mrf.mxu0
        %v2140 = vadd.f32 0.0, %v2139
        %2141 = vmatmul.f32.gmra.mxu0 %v1973
        %v2142 = vpop.f32.mrf.mxu0
        %v2143 = vadd.f32 0.0, %v2142
        %2144 = vmatmul.f32.gmra.mxu0 %v1974
        %v2145 = vpop.f32.mrf.mxu0
        %v2146 = vadd.f32 0.0, %v2145
        %2147 = vmatmul.f32.gmra.mxu0 %v1975
        %v2148 = vpop.f32.mrf.mxu0
        %v2149 = vadd.f32 0.0, %v2148
        %2150 = vmatmul.f32.gmra.mxu0 %v1976
        %v2151 = vpop.f32.mrf.mxu0
        %v2152 = vadd.f32 0.0, %v2151
        %2153 = vmatmul.f32.gmra.mxu0 %v1977
        %v2154 = vpop.f32.mrf.mxu0
        %v2155 = vadd.f32 0.0, %v2154
        %2156 = vmatmul.f32.gmra.mxu0 %v1978
        %v2157 = vpop.f32.mrf.mxu0
        %v2158 = vadd.f32 0.0, %v2157
        %2159 = vdwg.mxu0
        %2160 = vmatpush.msra.mxu0 %v2029
        %2161 = vmatpush.msra.mxu0 %v2026
        %2162 = vmatpush.msra.mxu0 %v2023
        %2163 = vmatpush.msra.mxu0 %v2020
        %2164 = vmatpush.msra.mxu0 %v2017
        %2165 = vmatpush.msra.mxu0 %v2014
        %2166 = vmatpush.msra.mxu0 %v2011
        %2167 = vmatpush.msra.mxu0 %v2008
        %2168 = vmatpush.msra.mxu0 %v2005
        %2169 = vmatpush.msra.mxu0 %v2002
        %2170 = vmatpush.msra.mxu0 %v1999
        %2171 = vmatpush.msra.mxu0 %v1996
        %2172 = vmatpush.msra.mxu0 %v1993
        %2173 = vmatpush.msra.mxu0 %v1990
        %2174 = vmatpush.msra.mxu0 %v1987
        %2175 = vmatpush.msra.mxu0 %v1984
        %2176 = vmatmul.f32.gmra.mxu0 %v1963
        %v2177 = vpop.f32.mrf.mxu0
        %v2178 = vadd.f32 0.0, %v2177
        %2179 = vmatmul.f32.gmra.mxu0 %v1964
        %v2180 = vpop.f32.mrf.mxu0
        %v2181 = vadd.f32 0.0, %v2180
        %2182 = vmatmul.f32.gmra.mxu0 %v1965
        %v2183 = vpop.f32.mrf.mxu0
        %v2184 = vadd.f32 0.0, %v2183
        %2185 = vmatmul.f32.gmra.mxu0 %v1966
        %v2186 = vpop.f32.mrf.mxu0
        %v2187 = vadd.f32 0.0, %v2186
        %2188 = vmatmul.f32.gmra.mxu0 %v1967
        %v2189 = vpop.f32.mrf.mxu0
        %v2190 = vadd.f32 0.0, %v2189
        %2191 = vmatmul.f32.gmra.mxu0 %v1968
        %v2192 = vpop.f32.mrf.mxu0
        %v2193 = vadd.f32 0.0, %v2192
        %2194 = vmatmul.f32.gmra.mxu0 %v1969
        %v2195 = vpop.f32.mrf.mxu0
        %v2196 = vadd.f32 0.0, %v2195
        %2197 = vmatmul.f32.gmra.mxu0 %v1970
        %v2198 = vpop.f32.mrf.mxu0
        %v2199 = vadd.f32 0.0, %v2198
        %2200 = vmatmul.f32.gmra.mxu0 %v1971
        %v2201 = vpop.f32.mrf.mxu0
        %v2202 = vadd.f32 0.0, %v2201
        %2203 = vmatmul.f32.gmra.mxu0 %v1972
        %v2204 = vpop.f32.mrf.mxu0
        %v2205 = vadd.f32 0.0, %v2204
        %2206 = vmatmul.f32.gmra.mxu0 %v1973
        %v2207 = vpop.f32.mrf.mxu0
        %v2208 = vadd.f32 0.0, %v2207
        %2209 = vmatmul.f32.gmra.mxu0 %v1974
        %v2210 = vpop.f32.mrf.mxu0
        %v2211 = vadd.f32 0.0, %v2210
        %2212 = vmatmul.f32.gmra.mxu0 %v1975
        %v2213 = vpop.f32.mrf.mxu0
        %v2214 = vadd.f32 0.0, %v2213
        %2215 = vmatmul.f32.gmra.mxu0 %v1976
        %v2216 = vpop.f32.mrf.mxu0
        %v2217 = vadd.f32 0.0, %v2216
        %2218 = vmatmul.f32.gmra.mxu0 %v1977
        %v2219 = vpop.f32.mrf.mxu0
        %v2220 = vadd.f32 0.0, %v2219
        %2221 = vmatmul.f32.gmra.mxu0 %v1978
        %v2222 = vpop.f32.mrf.mxu0
        %v2223 = vadd.f32 0.0, %v2222
        %2224 = vdwg.mxu0
        %vm2225 = vcmp.ge.s32.totalorder %v589, 2
        %vm2226 = vcmp.ge.s32.totalorder %v590, 2
        %vm2227 = vcmp.ge.s32.totalorder %v591, 2
        %vm2228 = vcmp.ge.s32.totalorder %v592, 2
        %vm2229 = vcmp.ge.s32.totalorder %v593, 2
        %vm2230 = vcmp.ge.s32.totalorder %v594, 2
        %vm2231 = vcmp.ge.s32.totalorder %v595, 2
        %vm2232 = vcmp.ge.s32.totalorder %v596, 2
        %vm2233 = vcmp.ge.s32.totalorder %v597, 2
        %vm2234 = vcmp.ge.s32.totalorder %v598, 2
        %vm2235 = vcmp.ge.s32.totalorder %v599, 2
        %vm2236 = vcmp.ge.s32.totalorder %v600, 2
        %vm2237 = vcmp.ge.s32.totalorder %v601, 2
        %vm2238 = vcmp.ge.s32.totalorder %v602, 2
        %vm2239 = vcmp.ge.s32.totalorder %v603, 2
        %vm2240 = vcmp.ge.s32.totalorder %v604, 2
        %v2241 = vsel %vm2225, 1, 0
        %v2242 = vsel %vm2226, 1, 0
        %v2243 = vsel %vm2227, 1, 0
        %v2244 = vsel %vm2228, 1, 0
        %v2245 = vsel %vm2229, 1, 0
        %v2246 = vsel %vm2230, 1, 0
        %v2247 = vsel %vm2231, 1, 0
        %v2248 = vsel %vm2232, 1, 0
        %v2249 = vsel %vm2233, 1, 0
        %v2250 = vsel %vm2234, 1, 0
        %v2251 = vsel %vm2235, 1, 0
        %v2252 = vsel %vm2236, 1, 0
        %v2253 = vsel %vm2237, 1, 0
        %v2254 = vsel %vm2238, 1, 0
        %v2255 = vsel %vm2239, 1, 0
        %v2256 = vsel %vm2240, 1, 0
        %v2257 = vcvt.s32.f32 %v2241
        %v2258 = vcvt.s32.f32 %v2242
        %v2259 = vcvt.s32.f32 %v2243
        %v2260 = vcvt.s32.f32 %v2244
        %v2261 = vcvt.s32.f32 %v2245
        %v2262 = vcvt.s32.f32 %v2246
        %v2263 = vcvt.s32.f32 %v2247
        %v2264 = vcvt.s32.f32 %v2248
        %v2265 = vcvt.s32.f32 %v2249
        %v2266 = vcvt.s32.f32 %v2250
        %v2267 = vcvt.s32.f32 %v2251
        %v2268 = vcvt.s32.f32 %v2252
        %v2269 = vcvt.s32.f32 %v2253
        %v2270 = vcvt.s32.f32 %v2254
        %v2271 = vcvt.s32.f32 %v2255
        %v2272 = vcvt.s32.f32 %v2256
        %vm2273 = vcmp.lt.s32.totalorder %v589, 14
        %vm2274 = vcmp.lt.s32.totalorder %v590, 14
        %vm2275 = vcmp.lt.s32.totalorder %v591, 14
        %vm2276 = vcmp.lt.s32.totalorder %v592, 14
        %vm2277 = vcmp.lt.s32.totalorder %v593, 14
        %vm2278 = vcmp.lt.s32.totalorder %v594, 14
        %vm2279 = vcmp.lt.s32.totalorder %v595, 14
        %vm2280 = vcmp.lt.s32.totalorder %v596, 14
        %vm2281 = vcmp.lt.s32.totalorder %v597, 14
        %vm2282 = vcmp.lt.s32.totalorder %v598, 14
        %vm2283 = vcmp.lt.s32.totalorder %v599, 14
        %vm2284 = vcmp.lt.s32.totalorder %v600, 14
        %vm2285 = vcmp.lt.s32.totalorder %v601, 14
        %vm2286 = vcmp.lt.s32.totalorder %v602, 14
        %vm2287 = vcmp.lt.s32.totalorder %v603, 14
        %vm2288 = vcmp.lt.s32.totalorder %v604, 14
        %v2289 = vsel %vm2273, 1, 0
        %v2290 = vsel %vm2274, 1, 0
        %v2291 = vsel %vm2275, 1, 0
        %v2292 = vsel %vm2276, 1, 0
        %v2293 = vsel %vm2277, 1, 0
        %v2294 = vsel %vm2278, 1, 0
        %v2295 = vsel %vm2279, 1, 0
        %v2296 = vsel %vm2280, 1, 0
        %v2297 = vsel %vm2281, 1, 0
        %v2298 = vsel %vm2282, 1, 0
        %v2299 = vsel %vm2283, 1, 0
        %v2300 = vsel %vm2284, 1, 0
        %v2301 = vsel %vm2285, 1, 0
        %v2302 = vsel %vm2286, 1, 0
        %v2303 = vsel %vm2287, 1, 0
        %v2304 = vsel %vm2288, 1, 0
        %v2305 = vcvt.s32.f32 %v2289
        %v2306 = vcvt.s32.f32 %v2290
        %v2307 = vcvt.s32.f32 %v2291
        %v2308 = vcvt.s32.f32 %v2292
        %v2309 = vcvt.s32.f32 %v2293
        %v2310 = vcvt.s32.f32 %v2294
        %v2311 = vcvt.s32.f32 %v2295
        %v2312 = vcvt.s32.f32 %v2296
        %v2313 = vcvt.s32.f32 %v2297
        %v2314 = vcvt.s32.f32 %v2298
        %v2315 = vcvt.s32.f32 %v2299
        %v2316 = vcvt.s32.f32 %v2300
        %v2317 = vcvt.s32.f32 %v2301
        %v2318 = vcvt.s32.f32 %v2302
        %v2319 = vcvt.s32.f32 %v2303
        %v2320 = vcvt.s32.f32 %v2304
        %v2321 = vrot.slane %v2113, 6
        %v2322 = vrot.slane %v2116, 6
        %v2323 = vrot.slane %v2119, 6
        %v2324 = vrot.slane %v2122, 6
        %v2325 = vrot.slane %v2125, 6
        %v2326 = vrot.slane %v2128, 6
        %v2327 = vrot.slane %v2131, 6
        %v2328 = vrot.slane %v2134, 6
        %v2329 = vrot.slane %v2137, 6
        %v2330 = vrot.slane %v2140, 6
        %v2331 = vrot.slane %v2143, 6
        %v2332 = vrot.slane %v2146, 6
        %v2333 = vrot.slane %v2149, 6
        %v2334 = vrot.slane %v2152, 6
        %v2335 = vrot.slane %v2155, 6
        %v2336 = vrot.slane %v2158, 6
        %vm2337 = vcmp.lt.s32.totalorder %v589, 2
        %v2338 = vsel %vm2337, %v2335, %v2336
        %v2339 = vsel %vm2337, %v2334, %v2335
        %v2340 = vsel %vm2337, %v2333, %v2334
        %v2341 = vsel %vm2337, %v2332, %v2333
        %v2342 = vsel %vm2337, %v2331, %v2332
        %v2343 = vsel %vm2337, %v2330, %v2331
        %v2344 = vsel %vm2337, %v2329, %v2330
        %v2345 = vsel %vm2337, %v2328, %v2329
        %v2346 = vsel %vm2337, %v2327, %v2328
        %v2347 = vsel %vm2337, %v2326, %v2327
        %v2348 = vsel %vm2337, %v2325, %v2326
        %v2349 = vsel %vm2337, %v2324, %v2325
        %v2350 = vsel %vm2337, %v2323, %v2324
        %v2351 = vsel %vm2337, %v2322, %v2323
        %v2352 = vsel %vm2337, %v2321, %v2322
        %v2353 = vsel %vm2337, %v2336, %v2321
        %v2354 = vmul.f32 %v2353, %v2257
        %v2355 = vmul.f32 %v2352, %v2258
        %v2356 = vmul.f32 %v2351, %v2259
        %v2357 = vmul.f32 %v2350, %v2260
        %v2358 = vmul.f32 %v2349, %v2261
        %v2359 = vmul.f32 %v2348, %v2262
        %v2360 = vmul.f32 %v2347, %v2263
        %v2361 = vmul.f32 %v2346, %v2264
        %v2362 = vmul.f32 %v2345, %v2265
        %v2363 = vmul.f32 %v2344, %v2266
        %v2364 = vmul.f32 %v2343, %v2267
        %v2365 = vmul.f32 %v2342, %v2268
        %v2366 = vmul.f32 %v2341, %v2269
        %v2367 = vmul.f32 %v2340, %v2270
        %v2368 = vmul.f32 %v2339, %v2271
        %v2369 = vmul.f32 %v2338, %v2272
        %v2370 = vrot.slane %v2113, 2
        %v2371 = vrot.slane %v2116, 2
        %v2372 = vrot.slane %v2119, 2
        %v2373 = vrot.slane %v2122, 2
        %v2374 = vrot.slane %v2125, 2
        %v2375 = vrot.slane %v2128, 2
        %v2376 = vrot.slane %v2131, 2
        %v2377 = vrot.slane %v2134, 2
        %v2378 = vrot.slane %v2137, 2
        %v2379 = vrot.slane %v2140, 2
        %v2380 = vrot.slane %v2143, 2
        %v2381 = vrot.slane %v2146, 2
        %v2382 = vrot.slane %v2149, 2
        %v2383 = vrot.slane %v2152, 2
        %v2384 = vrot.slane %v2155, 2
        %v2385 = vrot.slane %v2158, 2
        %vm2386 = vcmp.lt.s32.totalorder %v589, 6
        %v2387 = vsel %vm2386, %v2384, %v2385
        %v2388 = vsel %vm2386, %v2383, %v2384
        %v2389 = vsel %vm2386, %v2382, %v2383
        %v2390 = vsel %vm2386, %v2381, %v2382
        %v2391 = vsel %vm2386, %v2380, %v2381
        %v2392 = vsel %vm2386, %v2379, %v2380
        %v2393 = vsel %vm2386, %v2378, %v2379
        %v2394 = vsel %vm2386, %v2377, %v2378
        %v2395 = vsel %vm2386, %v2376, %v2377
        %v2396 = vsel %vm2386, %v2375, %v2376
        %v2397 = vsel %vm2386, %v2374, %v2375
        %v2398 = vsel %vm2386, %v2373, %v2374
        %v2399 = vsel %vm2386, %v2372, %v2373
        %v2400 = vsel %vm2386, %v2371, %v2372
        %v2401 = vsel %vm2386, %v2370, %v2371
        %v2402 = vsel %vm2386, %v2385, %v2370
        %v2403 = vmul.f32 %v2401, %v2305
        %v2404 = vmul.f32 %v2400, %v2306
        %v2405 = vmul.f32 %v2399, %v2307
        %v2406 = vmul.f32 %v2398, %v2308
        %v2407 = vmul.f32 %v2397, %v2309
        %v2408 = vmul.f32 %v2396, %v2310
        %v2409 = vmul.f32 %v2395, %v2311
        %v2410 = vmul.f32 %v2394, %v2312
        %v2411 = vmul.f32 %v2393, %v2313
        %v2412 = vmul.f32 %v2392, %v2314
        %v2413 = vmul.f32 %v2391, %v2315
        %v2414 = vmul.f32 %v2390, %v2316
        %v2415 = vmul.f32 %v2389, %v2317
        %v2416 = vmul.f32 %v2388, %v2318
        %v2417 = vmul.f32 %v2387, %v2319
        %v2418 = vmul.f32 %v2402, %v2320
        %v2419 = vrot.slane %v2178, 6
        %v2420 = vrot.slane %v2181, 6
        %v2421 = vrot.slane %v2184, 6
        %v2422 = vrot.slane %v2187, 6
        %v2423 = vrot.slane %v2190, 6
        %v2424 = vrot.slane %v2193, 6
        %v2425 = vrot.slane %v2196, 6
        %v2426 = vrot.slane %v2199, 6
        %v2427 = vrot.slane %v2202, 6
        %v2428 = vrot.slane %v2205, 6
        %v2429 = vrot.slane %v2208, 6
        %v2430 = vrot.slane %v2211, 6
        %v2431 = vrot.slane %v2214, 6
        %v2432 = vrot.slane %v2217, 6
        %v2433 = vrot.slane %v2220, 6
        %v2434 = vrot.slane %v2223, 6
        %v2435 = vsel %vm2337, %v2433, %v2434
        %v2436 = vsel %vm2337, %v2432, %v2433
        %v2437 = vsel %vm2337, %v2431, %v2432
        %v2438 = vsel %vm2337, %v2430, %v2431
        %v2439 = vsel %vm2337, %v2429, %v2430
        %v2440 = vsel %vm2337, %v2428, %v2429
        %v2441 = vsel %vm2337, %v2427, %v2428
        %v2442 = vsel %vm2337, %v2426, %v2427
        %v2443 = vsel %vm2337, %v2425, %v2426
        %v2444 = vsel %vm2337, %v2424, %v2425
        %v2445 = vsel %vm2337, %v2423, %v2424
        %v2446 = vsel %vm2337, %v2422, %v2423
        %v2447 = vsel %vm2337, %v2421, %v2422
        %v2448 = vsel %vm2337, %v2420, %v2421
        %v2449 = vsel %vm2337, %v2419, %v2420
        %v2450 = vsel %vm2337, %v2434, %v2419
        %v2451 = vmul.f32 %v2450, %v2257
        %v2452 = vmul.f32 %v2449, %v2258
        %v2453 = vmul.f32 %v2448, %v2259
        %v2454 = vmul.f32 %v2447, %v2260
        %v2455 = vmul.f32 %v2446, %v2261
        %v2456 = vmul.f32 %v2445, %v2262
        %v2457 = vmul.f32 %v2444, %v2263
        %v2458 = vmul.f32 %v2443, %v2264
        %v2459 = vmul.f32 %v2442, %v2265
        %v2460 = vmul.f32 %v2441, %v2266
        %v2461 = vmul.f32 %v2440, %v2267
        %v2462 = vmul.f32 %v2439, %v2268
        %v2463 = vmul.f32 %v2438, %v2269
        %v2464 = vmul.f32 %v2437, %v2270
        %v2465 = vmul.f32 %v2436, %v2271
        %v2466 = vmul.f32 %v2435, %v2272
        %v2467 = vperm.slane %v1980, 0
        %v2468 = vadd.f32 %v2451, %v2467
        %v2469 = vadd.f32 %v2452, %v2467
        %v2470 = vadd.f32 %v2453, %v2467
        %v2471 = vadd.f32 %v2454, %v2467
        %v2472 = vadd.f32 %v2455, %v2467
        %v2473 = vadd.f32 %v2456, %v2467
        %v2474 = vadd.f32 %v2457, %v2467
        %v2475 = vadd.f32 %v2458, %v2467
        %v2476 = vadd.f32 %v2459, %v2467
        %v2477 = vadd.f32 %v2460, %v2467
        %v2478 = vadd.f32 %v2461, %v2467
        %v2479 = vadd.f32 %v2462, %v2467
        %v2480 = vadd.f32 %v2463, %v2467
        %v2481 = vadd.f32 %v2464, %v2467
        %v2482 = vadd.f32 %v2465, %v2467
        %v2483 = vadd.f32 %v2466, %v2467
        %v2484 = vperm.slane %v1980, 1
        %v2485 = vadd.f32 %v2178, %v2484
        %v2486 = vadd.f32 %v2181, %v2484
        %v2487 = vadd.f32 %v2184, %v2484
        %v2488 = vadd.f32 %v2187, %v2484
        %v2489 = vadd.f32 %v2190, %v2484
        %v2490 = vadd.f32 %v2193, %v2484
        %v2491 = vadd.f32 %v2196, %v2484
        %v2492 = vadd.f32 %v2199, %v2484
        %v2493 = vadd.f32 %v2202, %v2484
        %v2494 = vadd.f32 %v2205, %v2484
        %v2495 = vadd.f32 %v2208, %v2484
        %v2496 = vadd.f32 %v2211, %v2484
        %v2497 = vadd.f32 %v2214, %v2484
        %v2498 = vadd.f32 %v2217, %v2484
        %v2499 = vadd.f32 %v2220, %v2484
        %v2500 = vadd.f32 %v2223, %v2484
        %v2501 = vrot.slane %v2178, 2
        %v2502 = vrot.slane %v2181, 2
        %v2503 = vrot.slane %v2184, 2
        %v2504 = vrot.slane %v2187, 2
        %v2505 = vrot.slane %v2190, 2
        %v2506 = vrot.slane %v2193, 2
        %v2507 = vrot.slane %v2196, 2
        %v2508 = vrot.slane %v2199, 2
        %v2509 = vrot.slane %v2202, 2
        %v2510 = vrot.slane %v2205, 2
        %v2511 = vrot.slane %v2208, 2
        %v2512 = vrot.slane %v2211, 2
        %v2513 = vrot.slane %v2214, 2
        %v2514 = vrot.slane %v2217, 2
        %v2515 = vrot.slane %v2220, 2
        %v2516 = vrot.slane %v2223, 2
        %v2517 = vsel %vm2386, %v2515, %v2516
        %v2518 = vsel %vm2386, %v2514, %v2515
        %v2519 = vsel %vm2386, %v2513, %v2514
        %v2520 = vsel %vm2386, %v2512, %v2513
        %v2521 = vsel %vm2386, %v2511, %v2512
        %v2522 = vsel %vm2386, %v2510, %v2511
        %v2523 = vsel %vm2386, %v2509, %v2510
        %v2524 = vsel %vm2386, %v2508, %v2509
        %v2525 = vsel %vm2386, %v2507, %v2508
        %v2526 = vsel %vm2386, %v2506, %v2507
        %v2527 = vsel %vm2386, %v2505, %v2506
        %v2528 = vsel %vm2386, %v2504, %v2505
        %v2529 = vsel %vm2386, %v2503, %v2504
        %v2530 = vsel %vm2386, %v2502, %v2503
        %v2531 = vsel %vm2386, %v2501, %v2502
        %v2532 = vsel %vm2386, %v2516, %v2501
        %v2533 = vmul.f32 %v2531, %v2305
        %v2534 = vmul.f32 %v2530, %v2306
        %v2535 = vmul.f32 %v2529, %v2307
        %v2536 = vmul.f32 %v2528, %v2308
        %v2537 = vmul.f32 %v2527, %v2309
        %v2538 = vmul.f32 %v2526, %v2310
        %v2539 = vmul.f32 %v2525, %v2311
        %v2540 = vmul.f32 %v2524, %v2312
        %v2541 = vmul.f32 %v2523, %v2313
        %v2542 = vmul.f32 %v2522, %v2314
        %v2543 = vmul.f32 %v2521, %v2315
        %v2544 = vmul.f32 %v2520, %v2316
        %v2545 = vmul.f32 %v2519, %v2317
        %v2546 = vmul.f32 %v2518, %v2318
        %v2547 = vmul.f32 %v2517, %v2319
        %v2548 = vmul.f32 %v2532, %v2320
        %v2549 = vperm.slane %v1980, 2
        %v2550 = vadd.f32 %v2533, %v2549
        %v2551 = vadd.f32 %v2534, %v2549
        %v2552 = vadd.f32 %v2535, %v2549
        %v2553 = vadd.f32 %v2536, %v2549
        %v2554 = vadd.f32 %v2537, %v2549
        %v2555 = vadd.f32 %v2538, %v2549
        %v2556 = vadd.f32 %v2539, %v2549
        %v2557 = vadd.f32 %v2540, %v2549
        %v2558 = vadd.f32 %v2541, %v2549
        %v2559 = vadd.f32 %v2542, %v2549
        %v2560 = vadd.f32 %v2543, %v2549
        %v2561 = vadd.f32 %v2544, %v2549
        %v2562 = vadd.f32 %v2545, %v2549
        %v2563 = vadd.f32 %v2546, %v2549
        %v2564 = vadd.f32 %v2547, %v2549
        %v2565 = vadd.f32 %v2548, %v2549
        %v2566 = vmul.f32 %v2048, %v2354
        %v2567 = vmul.f32 %v2051, %v2355
        %v2568 = vmul.f32 %v2054, %v2356
        %v2569 = vmul.f32 %v2057, %v2357
        %v2570 = vmul.f32 %v2060, %v2358
        %v2571 = vmul.f32 %v2063, %v2359
        %v2572 = vmul.f32 %v2066, %v2360
        %v2573 = vmul.f32 %v2069, %v2361
        %v2574 = vmul.f32 %v2072, %v2362
        %v2575 = vmul.f32 %v2075, %v2363
        %v2576 = vmul.f32 %v2078, %v2364
        %v2577 = vmul.f32 %v2081, %v2365
        %v2578 = vmul.f32 %v2084, %v2366
        %v2579 = vmul.f32 %v2087, %v2367
        %v2580 = vmul.f32 %v2090, %v2368
        %v2581 = vmul.f32 %v2093, %v2369
        %v2582 = vmul.f32 %v2048, %v2113
        %v2583 = vmul.f32 %v2051, %v2116
        %v2584 = vmul.f32 %v2054, %v2119
        %v2585 = vmul.f32 %v2057, %v2122
        %v2586 = vmul.f32 %v2060, %v2125
        %v2587 = vmul.f32 %v2063, %v2128
        %v2588 = vmul.f32 %v2066, %v2131
        %v2589 = vmul.f32 %v2069, %v2134
        %v2590 = vmul.f32 %v2072, %v2137
        %v2591 = vmul.f32 %v2075, %v2140
        %v2592 = vmul.f32 %v2078, %v2143
        %v2593 = vmul.f32 %v2081, %v2146
        %v2594 = vmul.f32 %v2084, %v2149
        %v2595 = vmul.f32 %v2087, %v2152
        %v2596 = vmul.f32 %v2090, %v2155
        %v2597 = vmul.f32 %v2093, %v2158
        %v2598 = vmul.f32 %v2048, %v2403
        %v2599 = vmul.f32 %v2051, %v2404
        %v2600 = vmul.f32 %v2054, %v2405
        %v2601 = vmul.f32 %v2057, %v2406
        %v2602 = vmul.f32 %v2060, %v2407
        %v2603 = vmul.f32 %v2063, %v2408
        %v2604 = vmul.f32 %v2066, %v2409
        %v2605 = vmul.f32 %v2069, %v2410
        %v2606 = vmul.f32 %v2072, %v2411
        %v2607 = vmul.f32 %v2075, %v2412
        %v2608 = vmul.f32 %v2078, %v2413
        %v2609 = vmul.f32 %v2081, %v2414
        %v2610 = vmul.f32 %v2084, %v2415
        %v2611 = vmul.f32 %v2087, %v2416
        %v2612 = vmul.f32 %v2090, %v2417
        %v2613 = vmul.f32 %v2093, %v2418
        %v2614 = vmax.f32 %v2566, %v2582
        %v2615 = vmax.f32 %v2567, %v2583
        %v2616 = vmax.f32 %v2568, %v2584
        %v2617 = vmax.f32 %v2569, %v2585
        %v2618 = vmax.f32 %v2570, %v2586
        %v2619 = vmax.f32 %v2571, %v2587
        %v2620 = vmax.f32 %v2572, %v2588
        %v2621 = vmax.f32 %v2573, %v2589
        %v2622 = vmax.f32 %v2574, %v2590
        %v2623 = vmax.f32 %v2575, %v2591
        %v2624 = vmax.f32 %v2576, %v2592
        %v2625 = vmax.f32 %v2577, %v2593
        %v2626 = vmax.f32 %v2578, %v2594
        %v2627 = vmax.f32 %v2579, %v2595
        %v2628 = vmax.f32 %v2580, %v2596
        %v2629 = vmax.f32 %v2581, %v2597
        %v2630 = vmax.f32 %v2614, %v2598
        %v2631 = vmax.f32 %v2615, %v2599
        %v2632 = vmax.f32 %v2616, %v2600
        %v2633 = vmax.f32 %v2617, %v2601
        %v2634 = vmax.f32 %v2618, %v2602
        %v2635 = vmax.f32 %v2619, %v2603
        %v2636 = vmax.f32 %v2620, %v2604
        %v2637 = vmax.f32 %v2621, %v2605
        %v2638 = vmax.f32 %v2622, %v2606
        %v2639 = vmax.f32 %v2623, %v2607
        %v2640 = vmax.f32 %v2624, %v2608
        %v2641 = vmax.f32 %v2625, %v2609
        %v2642 = vmax.f32 %v2626, %v2610
        %v2643 = vmax.f32 %v2627, %v2611
        %v2644 = vmax.f32 %v2628, %v2612
        %v2645 = vmax.f32 %v2629, %v2613
        %v2646 = vsub.f32 %v2566, %v2630
        %v2647 = vsub.f32 %v2567, %v2631
        %v2648 = vsub.f32 %v2568, %v2632
        %v2649 = vsub.f32 %v2569, %v2633
        %v2650 = vsub.f32 %v2570, %v2634
        %v2651 = vsub.f32 %v2571, %v2635
        %v2652 = vsub.f32 %v2572, %v2636
        %v2653 = vsub.f32 %v2573, %v2637
        %v2654 = vsub.f32 %v2574, %v2638
        %v2655 = vsub.f32 %v2575, %v2639
        %v2656 = vsub.f32 %v2576, %v2640
        %v2657 = vsub.f32 %v2577, %v2641
        %v2658 = vsub.f32 %v2578, %v2642
        %v2659 = vsub.f32 %v2579, %v2643
        %v2660 = vsub.f32 %v2580, %v2644
        %v2661 = vsub.f32 %v2581, %v2645
        %v2662 = vmul.f32 %v2646, 1.442695
        %v2663 = vpow.pop %v2662
        %v2664 = vmul.f32 %v2647, 1.442695
        %v2665 = vpow.pop %v2664
        %v2666 = vmul.f32 %v2648, 1.442695
        %v2667 = vpow.pop %v2666
        %v2668 = vmul.f32 %v2649, 1.442695
        %v2669 = vpow.pop %v2668
        %v2670 = vmul.f32 %v2650, 1.442695
        %v2671 = vpow.pop %v2670
        %v2672 = vmul.f32 %v2651, 1.442695
        %v2673 = vpow.pop %v2672
        %v2674 = vmul.f32 %v2652, 1.442695
        %v2675 = vpow.pop %v2674
        %v2676 = vmul.f32 %v2653, 1.442695
        %v2677 = vpow.pop %v2676
        %v2678 = vmul.f32 %v2654, 1.442695
        %v2679 = vpow.pop %v2678
        %v2680 = vmul.f32 %v2655, 1.442695
        %v2681 = vpow.pop %v2680
        %v2682 = vmul.f32 %v2656, 1.442695
        %v2683 = vpow.pop %v2682
        %v2684 = vmul.f32 %v2657, 1.442695
        %v2685 = vpow.pop %v2684
        %v2686 = vmul.f32 %v2658, 1.442695
        %v2687 = vpow.pop %v2686
        %v2688 = vmul.f32 %v2659, 1.442695
        %v2689 = vpow.pop %v2688
        %v2690 = vmul.f32 %v2660, 1.442695
        %v2691 = vpow.pop %v2690
        %v2692 = vmul.f32 %v2661, 1.442695
        %v2693 = vpow.pop %v2692
        %v2694 = vsub.f32 %v2582, %v2630
        %v2695 = vsub.f32 %v2583, %v2631
        %v2696 = vsub.f32 %v2584, %v2632
        %v2697 = vsub.f32 %v2585, %v2633
        %v2698 = vsub.f32 %v2586, %v2634
        %v2699 = vsub.f32 %v2587, %v2635
        %v2700 = vsub.f32 %v2588, %v2636
        %v2701 = vsub.f32 %v2589, %v2637
        %v2702 = vsub.f32 %v2590, %v2638
        %v2703 = vsub.f32 %v2591, %v2639
        %v2704 = vsub.f32 %v2592, %v2640
        %v2705 = vsub.f32 %v2593, %v2641
        %v2706 = vsub.f32 %v2594, %v2642
        %v2707 = vsub.f32 %v2595, %v2643
        %v2708 = vsub.f32 %v2596, %v2644
        %v2709 = vsub.f32 %v2597, %v2645
        %v2710 = vmul.f32 %v2694, 1.442695
        %v2711 = vpow.pop %v2710
        %v2712 = vmul.f32 %v2695, 1.442695
        %v2713 = vpow.pop %v2712
        %v2714 = vmul.f32 %v2696, 1.442695
        %v2715 = vpow.pop %v2714
        %v2716 = vmul.f32 %v2697, 1.442695
        %v2717 = vpow.pop %v2716
        %v2718 = vmul.f32 %v2698, 1.442695
        %v2719 = vpow.pop %v2718
        %v2720 = vmul.f32 %v2699, 1.442695
        %v2721 = vpow.pop %v2720
        %v2722 = vmul.f32 %v2700, 1.442695
        %v2723 = vpow.pop %v2722
        %v2724 = vmul.f32 %v2701, 1.442695
        %v2725 = vpow.pop %v2724
        %v2726 = vmul.f32 %v2702, 1.442695
        %v2727 = vpow.pop %v2726
        %v2728 = vmul.f32 %v2703, 1.442695
        %v2729 = vpow.pop %v2728
        %v2730 = vmul.f32 %v2704, 1.442695
        %v2731 = vpow.pop %v2730
        %v2732 = vmul.f32 %v2705, 1.442695
        %v2733 = vpow.pop %v2732
        %v2734 = vmul.f32 %v2706, 1.442695
        %v2735 = vpow.pop %v2734
        %v2736 = vmul.f32 %v2707, 1.442695
        %v2737 = vpow.pop %v2736
        %v2738 = vmul.f32 %v2708, 1.442695
        %v2739 = vpow.pop %v2738
        %v2740 = vmul.f32 %v2709, 1.442695
        %v2741 = vpow.pop %v2740
        %v2742 = vsub.f32 %v2598, %v2630
        %v2743 = vsub.f32 %v2599, %v2631
        %v2744 = vsub.f32 %v2600, %v2632
        %v2745 = vsub.f32 %v2601, %v2633
        %v2746 = vsub.f32 %v2602, %v2634
        %v2747 = vsub.f32 %v2603, %v2635
        %v2748 = vsub.f32 %v2604, %v2636
        %v2749 = vsub.f32 %v2605, %v2637
        %v2750 = vsub.f32 %v2606, %v2638
        %v2751 = vsub.f32 %v2607, %v2639
        %v2752 = vsub.f32 %v2608, %v2640
        %v2753 = vsub.f32 %v2609, %v2641
        %v2754 = vsub.f32 %v2610, %v2642
        %v2755 = vsub.f32 %v2611, %v2643
        %v2756 = vsub.f32 %v2612, %v2644
        %v2757 = vsub.f32 %v2613, %v2645
        %v2758 = vmul.f32 %v2742, 1.442695
        %v2759 = vpow.pop %v2758
        %v2760 = vmul.f32 %v2743, 1.442695
        %v2761 = vpow.pop %v2760
        %v2762 = vmul.f32 %v2744, 1.442695
        %v2763 = vpow.pop %v2762
        %v2764 = vmul.f32 %v2745, 1.442695
        %v2765 = vpow.pop %v2764
        %v2766 = vmul.f32 %v2746, 1.442695
        %v2767 = vpow.pop %v2766
        %v2768 = vmul.f32 %v2747, 1.442695
        %v2769 = vpow.pop %v2768
        %v2770 = vmul.f32 %v2748, 1.442695
        %v2771 = vpow.pop %v2770
        %v2772 = vmul.f32 %v2749, 1.442695
        %v2773 = vpow.pop %v2772
        %v2774 = vmul.f32 %v2750, 1.442695
        %v2775 = vpow.pop %v2774
        %v2776 = vmul.f32 %v2751, 1.442695
        %v2777 = vpow.pop %v2776
        %v2778 = vmul.f32 %v2752, 1.442695
        %v2779 = vpow.pop %v2778
        %v2780 = vmul.f32 %v2753, 1.442695
        %v2781 = vpow.pop %v2780
        %v2782 = vmul.f32 %v2754, 1.442695
        %v2783 = vpow.pop %v2782
        %v2784 = vmul.f32 %v2755, 1.442695
        %v2785 = vpow.pop %v2784
        %v2786 = vmul.f32 %v2756, 1.442695
        %v2787 = vpow.pop %v2786
        %v2788 = vmul.f32 %v2757, 1.442695
        %v2789 = vpow.pop %v2788
        %v2790 = vadd.f32 %v2663, %v2711
        %v2791 = vadd.f32 %v2665, %v2713
        %v2792 = vadd.f32 %v2667, %v2715
        %v2793 = vadd.f32 %v2669, %v2717
        %v2794 = vadd.f32 %v2671, %v2719
        %v2795 = vadd.f32 %v2673, %v2721
        %v2796 = vadd.f32 %v2675, %v2723
        %v2797 = vadd.f32 %v2677, %v2725
        %v2798 = vadd.f32 %v2679, %v2727
        %v2799 = vadd.f32 %v2681, %v2729
        %v2800 = vadd.f32 %v2683, %v2731
        %v2801 = vadd.f32 %v2685, %v2733
        %v2802 = vadd.f32 %v2687, %v2735
        %v2803 = vadd.f32 %v2689, %v2737
        %v2804 = vadd.f32 %v2691, %v2739
        %v2805 = vadd.f32 %v2693, %v2741
        %v2806 = vadd.f32 %v2790, %v2759
        %v2807 = vadd.f32 %v2791, %v2761
        %v2808 = vadd.f32 %v2792, %v2763
        %v2809 = vadd.f32 %v2793, %v2765
        %v2810 = vadd.f32 %v2794, %v2767
        %v2811 = vadd.f32 %v2795, %v2769
        %v2812 = vadd.f32 %v2796, %v2771
        %v2813 = vadd.f32 %v2797, %v2773
        %v2814 = vadd.f32 %v2798, %v2775
        %v2815 = vadd.f32 %v2799, %v2777
        %v2816 = vadd.f32 %v2800, %v2779
        %v2817 = vadd.f32 %v2801, %v2781
        %v2818 = vadd.f32 %v2802, %v2783
        %v2819 = vadd.f32 %v2803, %v2785
        %v2820 = vadd.f32 %v2804, %v2787
        %v2821 = vadd.f32 %v2805, %v2789
        %v2822 = vmul.f32 %v2663, %v2468
        %v2823 = vmul.f32 %v2665, %v2469
        %v2824 = vmul.f32 %v2667, %v2470
        %v2825 = vmul.f32 %v2669, %v2471
        %v2826 = vmul.f32 %v2671, %v2472
        %v2827 = vmul.f32 %v2673, %v2473
        %v2828 = vmul.f32 %v2675, %v2474
        %v2829 = vmul.f32 %v2677, %v2475
        %v2830 = vmul.f32 %v2679, %v2476
        %v2831 = vmul.f32 %v2681, %v2477
        %v2832 = vmul.f32 %v2683, %v2478
        %v2833 = vmul.f32 %v2685, %v2479
        %v2834 = vmul.f32 %v2687, %v2480
        %v2835 = vmul.f32 %v2689, %v2481
        %v2836 = vmul.f32 %v2691, %v2482
        %v2837 = vmul.f32 %v2693, %v2483
        %v2838 = vmul.f32 %v2711, %v2485
        %v2839 = vmul.f32 %v2713, %v2486
        %v2840 = vmul.f32 %v2715, %v2487
        %v2841 = vmul.f32 %v2717, %v2488
        %v2842 = vmul.f32 %v2719, %v2489
        %v2843 = vmul.f32 %v2721, %v2490
        %v2844 = vmul.f32 %v2723, %v2491
        %v2845 = vmul.f32 %v2725, %v2492
        %v2846 = vmul.f32 %v2727, %v2493
        %v2847 = vmul.f32 %v2729, %v2494
        %v2848 = vmul.f32 %v2731, %v2495
        %v2849 = vmul.f32 %v2733, %v2496
        %v2850 = vmul.f32 %v2735, %v2497
        %v2851 = vmul.f32 %v2737, %v2498
        %v2852 = vmul.f32 %v2739, %v2499
        %v2853 = vmul.f32 %v2741, %v2500
        %v2854 = vadd.f32 %v2822, %v2838
        %v2855 = vadd.f32 %v2823, %v2839
        %v2856 = vadd.f32 %v2824, %v2840
        %v2857 = vadd.f32 %v2825, %v2841
        %v2858 = vadd.f32 %v2826, %v2842
        %v2859 = vadd.f32 %v2827, %v2843
        %v2860 = vadd.f32 %v2828, %v2844
        %v2861 = vadd.f32 %v2829, %v2845
        %v2862 = vadd.f32 %v2830, %v2846
        %v2863 = vadd.f32 %v2831, %v2847
        %v2864 = vadd.f32 %v2832, %v2848
        %v2865 = vadd.f32 %v2833, %v2849
        %v2866 = vadd.f32 %v2834, %v2850
        %v2867 = vadd.f32 %v2835, %v2851
        %v2868 = vadd.f32 %v2836, %v2852
        %v2869 = vadd.f32 %v2837, %v2853
        %v2870 = vmul.f32 %v2759, %v2550
        %v2871 = vmul.f32 %v2761, %v2551
        %v2872 = vmul.f32 %v2763, %v2552
        %v2873 = vmul.f32 %v2765, %v2553
        %v2874 = vmul.f32 %v2767, %v2554
        %v2875 = vmul.f32 %v2769, %v2555
        %v2876 = vmul.f32 %v2771, %v2556
        %v2877 = vmul.f32 %v2773, %v2557
        %v2878 = vmul.f32 %v2775, %v2558
        %v2879 = vmul.f32 %v2777, %v2559
        %v2880 = vmul.f32 %v2779, %v2560
        %v2881 = vmul.f32 %v2781, %v2561
        %v2882 = vmul.f32 %v2783, %v2562
        %v2883 = vmul.f32 %v2785, %v2563
        %v2884 = vmul.f32 %v2787, %v2564
        %v2885 = vmul.f32 %v2789, %v2565
        %v2886 = vadd.f32 %v2854, %v2870
        %v2887 = vadd.f32 %v2855, %v2871
        %v2888 = vadd.f32 %v2856, %v2872
        %v2889 = vadd.f32 %v2857, %v2873
        %v2890 = vadd.f32 %v2858, %v2874
        %v2891 = vadd.f32 %v2859, %v2875
        %v2892 = vadd.f32 %v2860, %v2876
        %v2893 = vadd.f32 %v2861, %v2877
        %v2894 = vadd.f32 %v2862, %v2878
        %v2895 = vadd.f32 %v2863, %v2879
        %v2896 = vadd.f32 %v2864, %v2880
        %v2897 = vadd.f32 %v2865, %v2881
        %v2898 = vadd.f32 %v2866, %v2882
        %v2899 = vadd.f32 %v2867, %v2883
        %v2900 = vadd.f32 %v2868, %v2884
        %v2901 = vadd.f32 %v2869, %v2885
        %v2902 = vrcp.pop %v2806
        %v2903 = vmul.f32 %v2806, %v2902
        %v2904 = vsub.f32 1.0, %v2903
        %v2905 = vmul.f32 %v2902, %v2904
        %v2906 = vadd.f32 %v2902, %v2905
        %vm2907 = vweird.f32 %v2806
        %vm2908 = vweird.f32 %v2902
        %vm2909 = vmor %vm2907, %vm2908
        %v2910 = vsel %vm2909, %v2902, %v2906
        %v2911 = vand.u32 2147483647, %v2806
        %vm2912 = vcmp.eq.f32.partialorder %v2911, 8.507059e+37
        %v2913 = vand.u32 %v2806, 2147483648
        %v2914 = vor.u32 1.1754944e-38, %v2913
        %v2915 = vsel %vm2912, %v2914, %v2910
        %v2916 = vrcp.pop %v2807
        %v2917 = vmul.f32 %v2807, %v2916
        %v2918 = vsub.f32 1.0, %v2917
        %v2919 = vmul.f32 %v2916, %v2918
        %v2920 = vadd.f32 %v2916, %v2919
        %vm2921 = vweird.f32 %v2807
        %vm2922 = vweird.f32 %v2916
        %vm2923 = vmor %vm2921, %vm2922
        %v2924 = vsel %vm2923, %v2916, %v2920
        %v2925 = vand.u32 2147483647, %v2807
        %vm2926 = vcmp.eq.f32.partialorder %v2925, 8.507059e+37
        %v2927 = vand.u32 %v2807, 2147483648
        %v2928 = vor.u32 1.1754944e-38, %v2927
        %v2929 = vsel %vm2926, %v2928, %v2924
        %v2930 = vrcp.pop %v2808
        %v2931 = vmul.f32 %v2808, %v2930
        %v2932 = vsub.f32 1.0, %v2931
        %v2933 = vmul.f32 %v2930, %v2932
        %v2934 = vadd.f32 %v2930, %v2933
        %vm2935 = vweird.f32 %v2808
        %vm2936 = vweird.f32 %v2930
        %vm2937 = vmor %vm2935, %vm2936
        %v2938 = vsel %vm2937, %v2930, %v2934
        %v2939 = vand.u32 2147483647, %v2808
        %vm2940 = vcmp.eq.f32.partialorder %v2939, 8.507059e+37
        %v2941 = vand.u32 %v2808, 2147483648
        %v2942 = vor.u32 1.1754944e-38, %v2941
        %v2943 = vsel %vm2940, %v2942, %v2938
        %v2944 = vrcp.pop %v2809
        %v2945 = vmul.f32 %v2809, %v2944
        %v2946 = vsub.f32 1.0, %v2945
        %v2947 = vmul.f32 %v2944, %v2946
        %v2948 = vadd.f32 %v2944, %v2947
        %vm2949 = vweird.f32 %v2809
        %vm2950 = vweird.f32 %v2944
        %vm2951 = vmor %vm2949, %vm2950
        %v2952 = vsel %vm2951, %v2944, %v2948
        %v2953 = vand.u32 2147483647, %v2809
        %vm2954 = vcmp.eq.f32.partialorder %v2953, 8.507059e+37
        %v2955 = vand.u32 %v2809, 2147483648
        %v2956 = vor.u32 1.1754944e-38, %v2955
        %v2957 = vsel %vm2954, %v2956, %v2952
        %v2958 = vrcp.pop %v2810
        %v2959 = vmul.f32 %v2810, %v2958
        %v2960 = vsub.f32 1.0, %v2959
        %v2961 = vmul.f32 %v2958, %v2960
        %v2962 = vadd.f32 %v2958, %v2961
        %vm2963 = vweird.f32 %v2810
        %vm2964 = vweird.f32 %v2958
        %vm2965 = vmor %vm2963, %vm2964
        %v2966 = vsel %vm2965, %v2958, %v2962
        %v2967 = vand.u32 2147483647, %v2810
        %vm2968 = vcmp.eq.f32.partialorder %v2967, 8.507059e+37
        %v2969 = vand.u32 %v2810, 2147483648
        %v2970 = vor.u32 1.1754944e-38, %v2969
        %v2971 = vsel %vm2968, %v2970, %v2966
        %v2972 = vrcp.pop %v2811
        %v2973 = vmul.f32 %v2811, %v2972
        %v2974 = vsub.f32 1.0, %v2973
        %v2975 = vmul.f32 %v2972, %v2974
        %v2976 = vadd.f32 %v2972, %v2975
        %vm2977 = vweird.f32 %v2811
        %vm2978 = vweird.f32 %v2972
        %vm2979 = vmor %vm2977, %vm2978
        %v2980 = vsel %vm2979, %v2972, %v2976
        %v2981 = vand.u32 2147483647, %v2811
        %vm2982 = vcmp.eq.f32.partialorder %v2981, 8.507059e+37
        %v2983 = vand.u32 %v2811, 2147483648
        %v2984 = vor.u32 1.1754944e-38, %v2983
        %v2985 = vsel %vm2982, %v2984, %v2980
        %v2986 = vrcp.pop %v2812
        %v2987 = vmul.f32 %v2812, %v2986
        %v2988 = vsub.f32 1.0, %v2987
        %v2989 = vmul.f32 %v2986, %v2988
        %v2990 = vadd.f32 %v2986, %v2989
        %vm2991 = vweird.f32 %v2812
        %vm2992 = vweird.f32 %v2986
        %vm2993 = vmor %vm2991, %vm2992
        %v2994 = vsel %vm2993, %v2986, %v2990
        %v2995 = vand.u32 2147483647, %v2812
        %vm2996 = vcmp.eq.f32.partialorder %v2995, 8.507059e+37
        %v2997 = vand.u32 %v2812, 2147483648
        %v2998 = vor.u32 1.1754944e-38, %v2997
        %v2999 = vsel %vm2996, %v2998, %v2994
        %v3000 = vrcp.pop %v2813
        %v3001 = vmul.f32 %v2813, %v3000
        %v3002 = vsub.f32 1.0, %v3001
        %v3003 = vmul.f32 %v3000, %v3002
        %v3004 = vadd.f32 %v3000, %v3003
        %vm3005 = vweird.f32 %v2813
        %vm3006 = vweird.f32 %v3000
        %vm3007 = vmor %vm3005, %vm3006
        %v3008 = vsel %vm3007, %v3000, %v3004
        %v3009 = vand.u32 2147483647, %v2813
        %vm3010 = vcmp.eq.f32.partialorder %v3009, 8.507059e+37
        %v3011 = vand.u32 %v2813, 2147483648
        %v3012 = vor.u32 1.1754944e-38, %v3011
        %v3013 = vsel %vm3010, %v3012, %v3008
        %v3014 = vrcp.pop %v2814
        %v3015 = vmul.f32 %v2814, %v3014
        %v3016 = vsub.f32 1.0, %v3015
        %v3017 = vmul.f32 %v3014, %v3016
        %v3018 = vadd.f32 %v3014, %v3017
        %vm3019 = vweird.f32 %v2814
        %vm3020 = vweird.f32 %v3014
        %vm3021 = vmor %vm3019, %vm3020
        %v3022 = vsel %vm3021, %v3014, %v3018
        %v3023 = vand.u32 2147483647, %v2814
        %vm3024 = vcmp.eq.f32.partialorder %v3023, 8.507059e+37
        %v3025 = vand.u32 %v2814, 2147483648
        %v3026 = vor.u32 1.1754944e-38, %v3025
        %v3027 = vsel %vm3024, %v3026, %v3022
        %v3028 = vrcp.pop %v2815
        %v3029 = vmul.f32 %v2815, %v3028
        %v3030 = vsub.f32 1.0, %v3029
        %v3031 = vmul.f32 %v3028, %v3030
        %v3032 = vadd.f32 %v3028, %v3031
        %vm3033 = vweird.f32 %v2815
        %vm3034 = vweird.f32 %v3028
        %vm3035 = vmor %vm3033, %vm3034
        %v3036 = vsel %vm3035, %v3028, %v3032
        %v3037 = vand.u32 2147483647, %v2815
        %vm3038 = vcmp.eq.f32.partialorder %v3037, 8.507059e+37
        %v3039 = vand.u32 %v2815, 2147483648
        %v3040 = vor.u32 1.1754944e-38, %v3039
        %v3041 = vsel %vm3038, %v3040, %v3036
        %v3042 = vrcp.pop %v2816
        %v3043 = vmul.f32 %v2816, %v3042
        %v3044 = vsub.f32 1.0, %v3043
        %v3045 = vmul.f32 %v3042, %v3044
        %v3046 = vadd.f32 %v3042, %v3045
        %vm3047 = vweird.f32 %v2816
        %vm3048 = vweird.f32 %v3042
        %vm3049 = vmor %vm3047, %vm3048
        %v3050 = vsel %vm3049, %v3042, %v3046
        %v3051 = vand.u32 2147483647, %v2816
        %vm3052 = vcmp.eq.f32.partialorder %v3051, 8.507059e+37
        %v3053 = vand.u32 %v2816, 2147483648
        %v3054 = vor.u32 1.1754944e-38, %v3053
        %v3055 = vsel %vm3052, %v3054, %v3050
        %v3056 = vrcp.pop %v2817
        %v3057 = vmul.f32 %v2817, %v3056
        %v3058 = vsub.f32 1.0, %v3057
        %v3059 = vmul.f32 %v3056, %v3058
        %v3060 = vadd.f32 %v3056, %v3059
        %vm3061 = vweird.f32 %v2817
        %vm3062 = vweird.f32 %v3056
        %vm3063 = vmor %vm3061, %vm3062
        %v3064 = vsel %vm3063, %v3056, %v3060
        %v3065 = vand.u32 2147483647, %v2817
        %vm3066 = vcmp.eq.f32.partialorder %v3065, 8.507059e+37
        %v3067 = vand.u32 %v2817, 2147483648
        %v3068 = vor.u32 1.1754944e-38, %v3067
        %v3069 = vsel %vm3066, %v3068, %v3064
        %v3070 = vrcp.pop %v2818
        %v3071 = vmul.f32 %v2818, %v3070
        %v3072 = vsub.f32 1.0, %v3071
        %v3073 = vmul.f32 %v3070, %v3072
        %v3074 = vadd.f32 %v3070, %v3073
        %vm3075 = vweird.f32 %v2818
        %vm3076 = vweird.f32 %v3070
        %vm3077 = vmor %vm3075, %vm3076
        %v3078 = vsel %vm3077, %v3070, %v3074
        %v3079 = vand.u32 2147483647, %v2818
        %vm3080 = vcmp.eq.f32.partialorder %v3079, 8.507059e+37
        %v3081 = vand.u32 %v2818, 2147483648
        %v3082 = vor.u32 1.1754944e-38, %v3081
        %v3083 = vsel %vm3080, %v3082, %v3078
        %v3084 = vrcp.pop %v2819
        %v3085 = vmul.f32 %v2819, %v3084
        %v3086 = vsub.f32 1.0, %v3085
        %v3087 = vmul.f32 %v3084, %v3086
        %v3088 = vadd.f32 %v3084, %v3087
        %vm3089 = vweird.f32 %v2819
        %vm3090 = vweird.f32 %v3084
        %vm3091 = vmor %vm3089, %vm3090
        %v3092 = vsel %vm3091, %v3084, %v3088
        %v3093 = vand.u32 2147483647, %v2819
        %vm3094 = vcmp.eq.f32.partialorder %v3093, 8.507059e+37
        %v3095 = vand.u32 %v2819, 2147483648
        %v3096 = vor.u32 1.1754944e-38, %v3095
        %v3097 = vsel %vm3094, %v3096, %v3092
        %v3098 = vrcp.pop %v2820
        %v3099 = vmul.f32 %v2820, %v3098
        %v3100 = vsub.f32 1.0, %v3099
        %v3101 = vmul.f32 %v3098, %v3100
        %v3102 = vadd.f32 %v3098, %v3101
        %vm3103 = vweird.f32 %v2820
        %vm3104 = vweird.f32 %v3098
        %vm3105 = vmor %vm3103, %vm3104
        %v3106 = vsel %vm3105, %v3098, %v3102
        %v3107 = vand.u32 2147483647, %v2820
        %vm3108 = vcmp.eq.f32.partialorder %v3107, 8.507059e+37
        %v3109 = vand.u32 %v2820, 2147483648
        %v3110 = vor.u32 1.1754944e-38, %v3109
        %v3111 = vsel %vm3108, %v3110, %v3106
        %v3112 = vrcp.pop %v2821
        %v3113 = vmul.f32 %v2821, %v3112
        %v3114 = vsub.f32 1.0, %v3113
        %v3115 = vmul.f32 %v3112, %v3114
        %v3116 = vadd.f32 %v3112, %v3115
        %vm3117 = vweird.f32 %v2821
        %vm3118 = vweird.f32 %v3112
        %vm3119 = vmor %vm3117, %vm3118
        %v3120 = vsel %vm3119, %v3112, %v3116
        %v3121 = vand.u32 2147483647, %v2821
        %vm3122 = vcmp.eq.f32.partialorder %v3121, 8.507059e+37
        %v3123 = vand.u32 %v2821, 2147483648
        %v3124 = vor.u32 1.1754944e-38, %v3123
        %v3125 = vsel %vm3122, %v3124, %v3120
        %v3126 = vmul.f32 %v2886, %v2915
        %v3127 = vmul.f32 %v2887, %v2929
        %v3128 = vmul.f32 %v2888, %v2943
        %v3129 = vmul.f32 %v2889, %v2957
        %v3130 = vmul.f32 %v2890, %v2971
        %v3131 = vmul.f32 %v2891, %v2985
        %v3132 = vmul.f32 %v2892, %v2999
        %v3133 = vmul.f32 %v2893, %v3013
        %v3134 = vmul.f32 %v2894, %v3027
        %v3135 = vmul.f32 %v2895, %v3041
        %v3136 = vmul.f32 %v2896, %v3055
        %v3137 = vmul.f32 %v2897, %v3069
        %v3138 = vmul.f32 %v2898, %v3083
        %v3139 = vmul.f32 %v2899, %v3097
        %v3140 = vmul.f32 %v2900, %v3111
        %v3141 = vmul.f32 %v2901, %v3125
        %v3142 = vmax.f32 %v3126, 0.0
        %v3143 = vmax.f32 %v3127, 0.0
        %v3144 = vmax.f32 %v3128, 0.0
        %v3145 = vmax.f32 %v3129, 0.0
        %v3146 = vmax.f32 %v3130, 0.0
        %v3147 = vmax.f32 %v3131, 0.0
        %v3148 = vmax.f32 %v3132, 0.0
        %v3149 = vmax.f32 %v3133, 0.0
        %v3150 = vmax.f32 %v3134, 0.0
        %v3151 = vmax.f32 %v3135, 0.0
        %v3152 = vmax.f32 %v3136, 0.0
        %v3153 = vmax.f32 %v3137, 0.0
        %v3154 = vmax.f32 %v3138, 0.0
        %v3155 = vmax.f32 %v3139, 0.0
        %v3156 = vmax.f32 %v3140, 0.0
        %v3157 = vmax.f32 %v3141, 0.0
        %s3158 = scalar_lea.vmem %s7, 128
        %v3159 = vld [vmem:[%s3158] sm:$0xff]
        %v3160 = vld [vmem:[%s3158 + $0x8] sm:$0xff]
        %v3161 = vld [vmem:[%s3158 + $0x10] sm:$0xff]
        %v3162 = vld [vmem:[%s3158 + $0x18] sm:$0xff]
        %v3163 = vld [vmem:[%s3158 + $0x20] sm:$0xff]
        %v3164 = vld [vmem:[%s3158 + $0x28] sm:$0xff]
        %v3165 = vld [vmem:[%s3158 + $0x30] sm:$0xff]
        %v3166 = vld [vmem:[%s3158 + $0x38] sm:$0xff]
        %v3167 = vld [vmem:[%s3158 + $0x40] sm:$0xff]
        %v3168 = vld [vmem:[%s3158 + $0x48] sm:$0xff]
        %v3169 = vld [vmem:[%s3158 + $0x50] sm:$0xff]
        %v3170 = vld [vmem:[%s3158 + $0x58] sm:$0xff]
        %v3171 = vld [vmem:[%s3158 + $0x60] sm:$0xff]
        %v3172 = vld [vmem:[%s3158 + $0x68] sm:$0xff]
        %v3173 = vld [vmem:[%s3158 + $0x70] sm:$0xff]
        %v3174 = vld [vmem:[%s3158 + $0x78] sm:$0xff]
        %s3175 = scalar_lea.vmem %s8, 1
        %v3176 = vld [vmem:[%s3175] sm:$0x1]
        %v3178 = vperm.slane %v3176, 0
        %3180 = vmatpush.msra.mxu0 %v3174
        %3181 = vmatpush.msra.mxu0 %v3173
        %3182 = vmatpush.msra.mxu0 %v3172
        %3183 = vmatpush.msra.mxu0 %v3171
        %3184 = vmatpush.msra.mxu0 %v3170
        %3185 = vmatpush.msra.mxu0 %v3169
        %3186 = vmatpush.msra.mxu0 %v3168
        %3187 = vmatpush.msra.mxu0 %v3167
        %3188 = vmatpush.msra.mxu0 %v3166
        %3189 = vmatpush.msra.mxu0 %v3165
        %3190 = vmatpush.msra.mxu0 %v3164
        %3191 = vmatpush.msra.mxu0 %v3163
        %3192 = vmatpush.msra.mxu0 %v3162
        %3193 = vmatpush.msra.mxu0 %v3161
        %3194 = vmatpush.msra.mxu0 %v3160
        %3195 = vmatpush.msra.mxu0 %v3159
        %3196 = vmatmul.f32.gmra.mxu0 %v3142
        %v3197 = vpop.f32.mrf.mxu0
        %v3198 = vadd.f32 %v3178, %v3197
        %3199 = vmatmul.f32.gmra.mxu0 %v3143
        %v3200 = vpop.f32.mrf.mxu0
        %v3201 = vadd.f32 %v3178, %v3200
        %3202 = vmatmul.f32.gmra.mxu0 %v3144
        %v3203 = vpop.f32.mrf.mxu0
        %v3204 = vadd.f32 %v3178, %v3203
        %3205 = vmatmul.f32.gmra.mxu0 %v3145
        %v3206 = vpop.f32.mrf.mxu0
        %v3207 = vadd.f32 %v3178, %v3206
        %3208 = vmatmul.f32.gmra.mxu0 %v3146
        %v3209 = vpop.f32.mrf.mxu0
        %v3210 = vadd.f32 %v3178, %v3209
        %3211 = vmatmul.f32.gmra.mxu0 %v3147
        %v3212 = vpop.f32.mrf.mxu0
        %v3213 = vadd.f32 %v3178, %v3212
        %3214 = vmatmul.f32.gmra.mxu0 %v3148
        %v3215 = vpop.f32.mrf.mxu0
        %v3216 = vadd.f32 %v3178, %v3215
        %3217 = vmatmul.f32.gmra.mxu0 %v3149
        %v3218 = vpop.f32.mrf.mxu0
        %v3219 = vadd.f32 %v3178, %v3218
        %3220 = vmatmul.f32.gmra.mxu0 %v3150
        %v3221 = vpop.f32.mrf.mxu0
        %v3222 = vadd.f32 %v3178, %v3221
        %3223 = vmatmul.f32.gmra.mxu0 %v3151
        %v3224 = vpop.f32.mrf.mxu0
        %v3225 = vadd.f32 %v3178, %v3224
        %3226 = vmatmul.f32.gmra.mxu0 %v3152
        %v3227 = vpop.f32.mrf.mxu0
        %v3228 = vadd.f32 %v3178, %v3227
        %3229 = vmatmul.f32.gmra.mxu0 %v3153
        %v3230 = vpop.f32.mrf.mxu0
        %v3231 = vadd.f32 %v3178, %v3230
        %3232 = vmatmul.f32.gmra.mxu0 %v3154
        %v3233 = vpop.f32.mrf.mxu0
        %v3234 = vadd.f32 %v3178, %v3233
        %3235 = vmatmul.f32.gmra.mxu0 %v3155
        %v3236 = vpop.f32.mrf.mxu0
        %v3237 = vadd.f32 %v3178, %v3236
        %3238 = vmatmul.f32.gmra.mxu0 %v3156
        %v3239 = vpop.f32.mrf.mxu0
        %v3240 = vadd.f32 %v3178, %v3239
        %3241 = vmatmul.f32.gmra.mxu0 %v3157
        %v3242 = vpop.f32.mrf.mxu0
        %v3243 = vadd.f32 %v3178, %v3242
        %3244 = vdwg.mxu0
        %v3245 = vadd.f32 %v1963, %v3198
        %v3246 = vadd.f32 %v1964, %v3201
        %v3247 = vadd.f32 %v1965, %v3204
        %v3248 = vadd.f32 %v1966, %v3207
        %v3249 = vadd.f32 %v1967, %v3210
        %v3250 = vadd.f32 %v1968, %v3213
        %v3251 = vadd.f32 %v1969, %v3216
        %v3252 = vadd.f32 %v1970, %v3219
        %v3253 = vadd.f32 %v1971, %v3222
        %v3254 = vadd.f32 %v1972, %v3225
        %v3255 = vadd.f32 %v1973, %v3228
        %v3256 = vadd.f32 %v1974, %v3231
        %v3257 = vadd.f32 %v1975, %v3234
        %v3258 = vadd.f32 %v1976, %v3237
        %v3259 = vadd.f32 %v1977, %v3240
        %v3260 = vadd.f32 %v1978, %v3243
        %v3261 = vmul.f32 %v3245, %v1886
        %v3262 = vmul.f32 %v3246, %v1891
        %v3263 = vmul.f32 %v3247, %v1896
        %v3264 = vmul.f32 %v3248, %v1901
        %v3265 = vmul.f32 %v3249, %v1906
        %v3266 = vmul.f32 %v3250, %v1911
        %v3267 = vmul.f32 %v3251, %v1916
        %v3268 = vmul.f32 %v3252, %v1921
        %v3269 = vmul.f32 %v3253, %v1926
        %v3270 = vmul.f32 %v3254, %v1931
        %v3271 = vmul.f32 %v3255, %v1936
        %v3272 = vmul.f32 %v3256, %v1941
        %v3273 = vmul.f32 %v3257, %v1946
        %v3274 = vmul.f32 %v3258, %v1951
        %v3275 = vmul.f32 %v3259, %v1956
        %v3276 = vmul.f32 %v3260, %v1961
        %s3277 = scalar_lea.vmem %s6, 8
        %v3278 = vld [vmem:[%s3277] sm:$0x7]
        %s3279 = scalar_lea.vmem [#allocation2], 768
        %v3280 = vld [vmem:[%s3279] sm:$0xff]
        %v3281 = vld [vmem:[%s3279 + $0x8] sm:$0xff]
        %v3282 = vld [vmem:[%s3279 + $0x10] sm:$0xff]
        %v3283 = vld [vmem:[%s3279 + $0x18] sm:$0xff]
        %v3284 = vld [vmem:[%s3279 + $0x20] sm:$0xff]
        %v3285 = vld [vmem:[%s3279 + $0x28] sm:$0xff]
        %v3286 = vld [vmem:[%s3279 + $0x30] sm:$0xff]
        %v3287 = vld [vmem:[%s3279 + $0x38] sm:$0xff]
        %v3288 = vld [vmem:[%s3279 + $0x40] sm:$0xff]
        %v3289 = vld [vmem:[%s3279 + $0x48] sm:$0xff]
        %v3290 = vld [vmem:[%s3279 + $0x50] sm:$0xff]
        %v3291 = vld [vmem:[%s3279 + $0x58] sm:$0xff]
        %v3292 = vld [vmem:[%s3279 + $0x60] sm:$0xff]
        %v3293 = vld [vmem:[%s3279 + $0x68] sm:$0xff]
        %v3294 = vld [vmem:[%s3279 + $0x70] sm:$0xff]
        %v3295 = vld [vmem:[%s3279 + $0x78] sm:$0xff]
        %v3296 = vld [vmem:[%s3279 + $0x80] sm:$0xff]
        %v3297 = vld [vmem:[%s3279 + $0x88] sm:$0xff]
        %v3298 = vld [vmem:[%s3279 + $0x90] sm:$0xff]
        %v3299 = vld [vmem:[%s3279 + $0x98] sm:$0xff]
        %v3300 = vld [vmem:[%s3279 + $0xa0] sm:$0xff]
        %v3301 = vld [vmem:[%s3279 + $0xa8] sm:$0xff]
        %v3302 = vld [vmem:[%s3279 + $0xb0] sm:$0xff]
        %v3303 = vld [vmem:[%s3279 + $0xb8] sm:$0xff]
        %v3304 = vld [vmem:[%s3279 + $0xc0] sm:$0xff]
        %v3305 = vld [vmem:[%s3279 + $0xc8] sm:$0xff]
        %v3306 = vld [vmem:[%s3279 + $0xd0] sm:$0xff]
        %v3307 = vld [vmem:[%s3279 + $0xd8] sm:$0xff]
        %v3308 = vld [vmem:[%s3279 + $0xe0] sm:$0xff]
        %v3309 = vld [vmem:[%s3279 + $0xe8] sm:$0xff]
        %v3310 = vld [vmem:[%s3279 + $0xf0] sm:$0xff]
        %v3311 = vld [vmem:[%s3279 + $0xf8] sm:$0xff]
        %v3312 = vld [vmem:[%s3279 + $0x100] sm:$0xff]
        %v3313 = vld [vmem:[%s3279 + $0x108] sm:$0xff]
        %v3314 = vld [vmem:[%s3279 + $0x110] sm:$0xff]
        %v3315 = vld [vmem:[%s3279 + $0x118] sm:$0xff]
        %v3316 = vld [vmem:[%s3279 + $0x120] sm:$0xff]
        %v3317 = vld [vmem:[%s3279 + $0x128] sm:$0xff]
        %v3318 = vld [vmem:[%s3279 + $0x130] sm:$0xff]
        %v3319 = vld [vmem:[%s3279 + $0x138] sm:$0xff]
        %v3320 = vld [vmem:[%s3279 + $0x140] sm:$0xff]
        %v3321 = vld [vmem:[%s3279 + $0x148] sm:$0xff]
        %v3322 = vld [vmem:[%s3279 + $0x150] sm:$0xff]
        %v3323 = vld [vmem:[%s3279 + $0x158] sm:$0xff]
        %v3324 = vld [vmem:[%s3279 + $0x160] sm:$0xff]
        %v3325 = vld [vmem:[%s3279 + $0x168] sm:$0xff]
        %v3326 = vld [vmem:[%s3279 + $0x170] sm:$0xff]
        %v3327 = vld [vmem:[%s3279 + $0x178] sm:$0xff]
        %3328 = vmatpush.msra.mxu0 %v3325
        %3329 = vmatpush.msra.mxu0 %v3322
        %3330 = vmatpush.msra.mxu0 %v3319
        %3331 = vmatpush.msra.mxu0 %v3316
        %3332 = vmatpush.msra.mxu0 %v3313
        %3333 = vmatpush.msra.mxu0 %v3310
        %3334 = vmatpush.msra.mxu0 %v3307
        %3335 = vmatpush.msra.mxu0 %v3304
        %3336 = vmatpush.msra.mxu0 %v3301
        %3337 = vmatpush.msra.mxu0 %v3298
        %3338 = vmatpush.msra.mxu0 %v3295
        %3339 = vmatpush.msra.mxu0 %v3292
        %3340 = vmatpush.msra.mxu0 %v3289
        %3341 = vmatpush.msra.mxu0 %v3286
        %3342 = vmatpush.msra.mxu0 %v3283
        %3343 = vmatpush.msra.mxu0 %v3280
        %3344 = vmatmul.f32.gmra.mxu0 %v3261
        %v3345 = vpop.f32.mrf.mxu0
        %v3346 = vadd.f32 0.0, %v3345
        %3347 = vmatmul.f32.gmra.mxu0 %v3262
        %v3348 = vpop.f32.mrf.mxu0
        %v3349 = vadd.f32 0.0, %v3348
        %3350 = vmatmul.f32.gmra.mxu0 %v3263
        %v3351 = vpop.f32.mrf.mxu0
        %v3352 = vadd.f32 0.0, %v3351
        %3353 = vmatmul.f32.gmra.mxu0 %v3264
        %v3354 = vpop.f32.mrf.mxu0
        %v3355 = vadd.f32 0.0, %v3354
        %3356 = vmatmul.f32.gmra.mxu0 %v3265
        %v3357 = vpop.f32.mrf.mxu0
        %v3358 = vadd.f32 0.0, %v3357
        %3359 = vmatmul.f32.gmra.mxu0 %v3266
        %v3360 = vpop.f32.mrf.mxu0
        %v3361 = vadd.f32 0.0, %v3360
        %3362 = vmatmul.f32.gmra.mxu0 %v3267
        %v3363 = vpop.f32.mrf.mxu0
        %v3364 = vadd.f32 0.0, %v3363
        %3365 = vmatmul.f32.gmra.mxu0 %v3268
        %v3366 = vpop.f32.mrf.mxu0
        %v3367 = vadd.f32 0.0, %v3366
        %3368 = vmatmul.f32.gmra.mxu0 %v3269
        %v3369 = vpop.f32.mrf.mxu0
        %v3370 = vadd.f32 0.0, %v3369
        %3371 = vmatmul.f32.gmra.mxu0 %v3270
        %v3372 = vpop.f32.mrf.mxu0
        %v3373 = vadd.f32 0.0, %v3372
        %3374 = vmatmul.f32.gmra.mxu0 %v3271
        %v3375 = vpop.f32.mrf.mxu0
        %v3376 = vadd.f32 0.0, %v3375
        %3377 = vmatmul.f32.gmra.mxu0 %v3272
        %v3378 = vpop.f32.mrf.mxu0
        %v3379 = vadd.f32 0.0, %v3378
        %3380 = vmatmul.f32.gmra.mxu0 %v3273
        %v3381 = vpop.f32.mrf.mxu0
        %v3382 = vadd.f32 0.0, %v3381
        %3383 = vmatmul.f32.gmra.mxu0 %v3274
        %v3384 = vpop.f32.mrf.mxu0
        %v3385 = vadd.f32 0.0, %v3384
        %3386 = vmatmul.f32.gmra.mxu0 %v3275
        %v3387 = vpop.f32.mrf.mxu0
        %v3388 = vadd.f32 0.0, %v3387
        %3389 = vmatmul.f32.gmra.mxu0 %v3276
        %v3390 = vpop.f32.mrf.mxu0
        %v3391 = vadd.f32 0.0, %v3390
        %3392 = vdwg.mxu0
        %3393 = vmatpush.msra.mxu0 %v3326
        %3394 = vmatpush.msra.mxu0 %v3323
        %3395 = vmatpush.msra.mxu0 %v3320
        %3396 = vmatpush.msra.mxu0 %v3317
        %3397 = vmatpush.msra.mxu0 %v3314
        %3398 = vmatpush.msra.mxu0 %v3311
        %3399 = vmatpush.msra.mxu0 %v3308
        %3400 = vmatpush.msra.mxu0 %v3305
        %3401 = vmatpush.msra.mxu0 %v3302
        %3402 = vmatpush.msra.mxu0 %v3299
        %3403 = vmatpush.msra.mxu0 %v3296
        %3404 = vmatpush.msra.mxu0 %v3293
        %3405 = vmatpush.msra.mxu0 %v3290
        %3406 = vmatpush.msra.mxu0 %v3287
        %3407 = vmatpush.msra.mxu0 %v3284
        %3408 = vmatpush.msra.mxu0 %v3281
        %3409 = vmatmul.f32.gmra.mxu0 %v3261
        %v3410 = vpop.f32.mrf.mxu0
        %v3411 = vadd.f32 0.0, %v3410
        %3412 = vmatmul.f32.gmra.mxu0 %v3262
        %v3413 = vpop.f32.mrf.mxu0
        %v3414 = vadd.f32 0.0, %v3413
        %3415 = vmatmul.f32.gmra.mxu0 %v3263
        %v3416 = vpop.f32.mrf.mxu0
        %v3417 = vadd.f32 0.0, %v3416
        %3418 = vmatmul.f32.gmra.mxu0 %v3264
        %v3419 = vpop.f32.mrf.mxu0
        %v3420 = vadd.f32 0.0, %v3419
        %3421 = vmatmul.f32.gmra.mxu0 %v3265
        %v3422 = vpop.f32.mrf.mxu0
        %v3423 = vadd.f32 0.0, %v3422
        %3424 = vmatmul.f32.gmra.mxu0 %v3266
        %v3425 = vpop.f32.mrf.mxu0
        %v3426 = vadd.f32 0.0, %v3425
        %3427 = vmatmul.f32.gmra.mxu0 %v3267
        %v3428 = vpop.f32.mrf.mxu0
        %v3429 = vadd.f32 0.0, %v3428
        %3430 = vmatmul.f32.gmra.mxu0 %v3268
        %v3431 = vpop.f32.mrf.mxu0
        %v3432 = vadd.f32 0.0, %v3431
        %3433 = vmatmul.f32.gmra.mxu0 %v3269
        %v3434 = vpop.f32.mrf.mxu0
        %v3435 = vadd.f32 0.0, %v3434
        %3436 = vmatmul.f32.gmra.mxu0 %v3270
        %v3437 = vpop.f32.mrf.mxu0
        %v3438 = vadd.f32 0.0, %v3437
        %3439 = vmatmul.f32.gmra.mxu0 %v3271
        %v3440 = vpop.f32.mrf.mxu0
        %v3441 = vadd.f32 0.0, %v3440
        %3442 = vmatmul.f32.gmra.mxu0 %v3272
        %v3443 = vpop.f32.mrf.mxu0
        %v3444 = vadd.f32 0.0, %v3443
        %3445 = vmatmul.f32.gmra.mxu0 %v3273
        %v3446 = vpop.f32.mrf.mxu0
        %v3447 = vadd.f32 0.0, %v3446
        %3448 = vmatmul.f32.gmra.mxu0 %v3274
        %v3449 = vpop.f32.mrf.mxu0
        %v3450 = vadd.f32 0.0, %v3449
        %3451 = vmatmul.f32.gmra.mxu0 %v3275
        %v3452 = vpop.f32.mrf.mxu0
        %v3453 = vadd.f32 0.0, %v3452
        %3454 = vmatmul.f32.gmra.mxu0 %v3276
        %v3455 = vpop.f32.mrf.mxu0
        %v3456 = vadd.f32 0.0, %v3455
        %3457 = vdwg.mxu0
        %3458 = vmatpush.msra.mxu0 %v3327
        %3459 = vmatpush.msra.mxu0 %v3324
        %3460 = vmatpush.msra.mxu0 %v3321
        %3461 = vmatpush.msra.mxu0 %v3318
        %3462 = vmatpush.msra.mxu0 %v3315
        %3463 = vmatpush.msra.mxu0 %v3312
        %3464 = vmatpush.msra.mxu0 %v3309
        %3465 = vmatpush.msra.mxu0 %v3306
        %3466 = vmatpush.msra.mxu0 %v3303
        %3467 = vmatpush.msra.mxu0 %v3300
        %3468 = vmatpush.msra.mxu0 %v3297
        %3469 = vmatpush.msra.mxu0 %v3294
        %3470 = vmatpush.msra.mxu0 %v3291
        %3471 = vmatpush.msra.mxu0 %v3288
        %3472 = vmatpush.msra.mxu0 %v3285
        %3473 = vmatpush.msra.mxu0 %v3282
        %3474 = vmatmul.f32.gmra.mxu0 %v3261
        %v3475 = vpop.f32.mrf.mxu0
        %v3476 = vadd.f32 0.0, %v3475
        %3477 = vmatmul.f32.gmra.mxu0 %v3262
        %v3478 = vpop.f32.mrf.mxu0
        %v3479 = vadd.f32 0.0, %v3478
        %3480 = vmatmul.f32.gmra.mxu0 %v3263
        %v3481 = vpop.f32.mrf.mxu0
        %v3482 = vadd.f32 0.0, %v3481
        %3483 = vmatmul.f32.gmra.mxu0 %v3264
        %v3484 = vpop.f32.mrf.mxu0
        %v3485 = vadd.f32 0.0, %v3484
        %3486 = vmatmul.f32.gmra.mxu0 %v3265
        %v3487 = vpop.f32.mrf.mxu0
        %v3488 = vadd.f32 0.0, %v3487
        %3489 = vmatmul.f32.gmra.mxu0 %v3266
        %v3490 = vpop.f32.mrf.mxu0
        %v3491 = vadd.f32 0.0, %v3490
        %3492 = vmatmul.f32.gmra.mxu0 %v3267
        %v3493 = vpop.f32.mrf.mxu0
        %v3494 = vadd.f32 0.0, %v3493
        %3495 = vmatmul.f32.gmra.mxu0 %v3268
        %v3496 = vpop.f32.mrf.mxu0
        %v3497 = vadd.f32 0.0, %v3496
        %3498 = vmatmul.f32.gmra.mxu0 %v3269
        %v3499 = vpop.f32.mrf.mxu0
        %v3500 = vadd.f32 0.0, %v3499
        %3501 = vmatmul.f32.gmra.mxu0 %v3270
        %v3502 = vpop.f32.mrf.mxu0
        %v3503 = vadd.f32 0.0, %v3502
        %3504 = vmatmul.f32.gmra.mxu0 %v3271
        %v3505 = vpop.f32.mrf.mxu0
        %v3506 = vadd.f32 0.0, %v3505
        %3507 = vmatmul.f32.gmra.mxu0 %v3272
        %v3508 = vpop.f32.mrf.mxu0
        %v3509 = vadd.f32 0.0, %v3508
        %3510 = vmatmul.f32.gmra.mxu0 %v3273
        %v3511 = vpop.f32.mrf.mxu0
        %v3512 = vadd.f32 0.0, %v3511
        %3513 = vmatmul.f32.gmra.mxu0 %v3274
        %v3514 = vpop.f32.mrf.mxu0
        %v3515 = vadd.f32 0.0, %v3514
        %3516 = vmatmul.f32.gmra.mxu0 %v3275
        %v3517 = vpop.f32.mrf.mxu0
        %v3518 = vadd.f32 0.0, %v3517
        %3519 = vmatmul.f32.gmra.mxu0 %v3276
        %v3520 = vpop.f32.mrf.mxu0
        %v3521 = vadd.f32 0.0, %v3520
        %3522 = vdwg.mxu0
        %vm3523 = vcmp.ge.s32.totalorder %v589, 4
        %vm3524 = vcmp.ge.s32.totalorder %v590, 4
        %vm3525 = vcmp.ge.s32.totalorder %v591, 4
        %vm3526 = vcmp.ge.s32.totalorder %v592, 4
        %vm3527 = vcmp.ge.s32.totalorder %v593, 4
        %vm3528 = vcmp.ge.s32.totalorder %v594, 4
        %vm3529 = vcmp.ge.s32.totalorder %v595, 4
        %vm3530 = vcmp.ge.s32.totalorder %v596, 4
        %vm3531 = vcmp.ge.s32.totalorder %v597, 4
        %vm3532 = vcmp.ge.s32.totalorder %v598, 4
        %vm3533 = vcmp.ge.s32.totalorder %v599, 4
        %vm3534 = vcmp.ge.s32.totalorder %v600, 4
        %vm3535 = vcmp.ge.s32.totalorder %v601, 4
        %vm3536 = vcmp.ge.s32.totalorder %v602, 4
        %vm3537 = vcmp.ge.s32.totalorder %v603, 4
        %vm3538 = vcmp.ge.s32.totalorder %v604, 4
        %v3539 = vsel %vm3523, 1, 0
        %v3540 = vsel %vm3524, 1, 0
        %v3541 = vsel %vm3525, 1, 0
        %v3542 = vsel %vm3526, 1, 0
        %v3543 = vsel %vm3527, 1, 0
        %v3544 = vsel %vm3528, 1, 0
        %v3545 = vsel %vm3529, 1, 0
        %v3546 = vsel %vm3530, 1, 0
        %v3547 = vsel %vm3531, 1, 0
        %v3548 = vsel %vm3532, 1, 0
        %v3549 = vsel %vm3533, 1, 0
        %v3550 = vsel %vm3534, 1, 0
        %v3551 = vsel %vm3535, 1, 0
        %v3552 = vsel %vm3536, 1, 0
        %v3553 = vsel %vm3537, 1, 0
        %v3554 = vsel %vm3538, 1, 0
        %v3555 = vcvt.s32.f32 %v3539
        %v3556 = vcvt.s32.f32 %v3540
        %v3557 = vcvt.s32.f32 %v3541
        %v3558 = vcvt.s32.f32 %v3542
        %v3559 = vcvt.s32.f32 %v3543
        %v3560 = vcvt.s32.f32 %v3544
        %v3561 = vcvt.s32.f32 %v3545
        %v3562 = vcvt.s32.f32 %v3546
        %v3563 = vcvt.s32.f32 %v3547
        %v3564 = vcvt.s32.f32 %v3548
        %v3565 = vcvt.s32.f32 %v3549
        %v3566 = vcvt.s32.f32 %v3550
        %v3567 = vcvt.s32.f32 %v3551
        %v3568 = vcvt.s32.f32 %v3552
        %v3569 = vcvt.s32.f32 %v3553
        %v3570 = vcvt.s32.f32 %v3554
        %vm3571 = vcmp.lt.s32.totalorder %v589, 12
        %vm3572 = vcmp.lt.s32.totalorder %v590, 12
        %vm3573 = vcmp.lt.s32.totalorder %v591, 12
        %vm3574 = vcmp.lt.s32.totalorder %v592, 12
        %vm3575 = vcmp.lt.s32.totalorder %v593, 12
        %vm3576 = vcmp.lt.s32.totalorder %v594, 12
        %vm3577 = vcmp.lt.s32.totalorder %v595, 12
        %vm3578 = vcmp.lt.s32.totalorder %v596, 12
        %vm3579 = vcmp.lt.s32.totalorder %v597, 12
        %vm3580 = vcmp.lt.s32.totalorder %v598, 12
        %vm3581 = vcmp.lt.s32.totalorder %v599, 12
        %vm3582 = vcmp.lt.s32.totalorder %v600, 12
        %vm3583 = vcmp.lt.s32.totalorder %v601, 12
        %vm3584 = vcmp.lt.s32.totalorder %v602, 12
        %vm3585 = vcmp.lt.s32.totalorder %v603, 12
        %vm3586 = vcmp.lt.s32.totalorder %v604, 12
        %v3587 = vsel %vm3571, 1, 0
        %v3588 = vsel %vm3572, 1, 0
        %v3589 = vsel %vm3573, 1, 0
        %v3590 = vsel %vm3574, 1, 0
        %v3591 = vsel %vm3575, 1, 0
        %v3592 = vsel %vm3576, 1, 0
        %v3593 = vsel %vm3577, 1, 0
        %v3594 = vsel %vm3578, 1, 0
        %v3595 = vsel %vm3579, 1, 0
        %v3596 = vsel %vm3580, 1, 0
        %v3597 = vsel %vm3581, 1, 0
        %v3598 = vsel %vm3582, 1, 0
        %v3599 = vsel %vm3583, 1, 0
        %v3600 = vsel %vm3584, 1, 0
        %v3601 = vsel %vm3585, 1, 0
        %v3602 = vsel %vm3586, 1, 0
        %v3603 = vcvt.s32.f32 %v3587
        %v3604 = vcvt.s32.f32 %v3588
        %v3605 = vcvt.s32.f32 %v3589
        %v3606 = vcvt.s32.f32 %v3590
        %v3607 = vcvt.s32.f32 %v3591
        %v3608 = vcvt.s32.f32 %v3592
        %v3609 = vcvt.s32.f32 %v3593
        %v3610 = vcvt.s32.f32 %v3594
        %v3611 = vcvt.s32.f32 %v3595
        %v3612 = vcvt.s32.f32 %v3596
        %v3613 = vcvt.s32.f32 %v3597
        %v3614 = vcvt.s32.f32 %v3598
        %v3615 = vcvt.s32.f32 %v3599
        %v3616 = vcvt.s32.f32 %v3600
        %v3617 = vcvt.s32.f32 %v3601
        %v3618 = vcvt.s32.f32 %v3602
        %v3619 = vrot.slane %v3411, 4
        %v3620 = vrot.slane %v3414, 4
        %v3621 = vrot.slane %v3417, 4
        %v3622 = vrot.slane %v3420, 4
        %v3623 = vrot.slane %v3423, 4
        %v3624 = vrot.slane %v3426, 4
        %v3625 = vrot.slane %v3429, 4
        %v3626 = vrot.slane %v3432, 4
        %v3627 = vrot.slane %v3435, 4
        %v3628 = vrot.slane %v3438, 4
        %v3629 = vrot.slane %v3441, 4
        %v3630 = vrot.slane %v3444, 4
        %v3631 = vrot.slane %v3447, 4
        %v3632 = vrot.slane %v3450, 4
        %v3633 = vrot.slane %v3453, 4
        %v3634 = vrot.slane %v3456, 4
        %vm3635 = vcmp.lt.s32.totalorder %v589, 4
        %v3636 = vsel %vm3635, %v3633, %v3634
        %v3637 = vsel %vm3635, %v3632, %v3633
        %v3638 = vsel %vm3635, %v3631, %v3632
        %v3639 = vsel %vm3635, %v3630, %v3631
        %v3640 = vsel %vm3635, %v3629, %v3630
        %v3641 = vsel %vm3635, %v3628, %v3629
        %v3642 = vsel %vm3635, %v3627, %v3628
        %v3643 = vsel %vm3635, %v3626, %v3627
        %v3644 = vsel %vm3635, %v3625, %v3626
        %v3645 = vsel %vm3635, %v3624, %v3625
        %v3646 = vsel %vm3635, %v3623, %v3624
        %v3647 = vsel %vm3635, %v3622, %v3623
        %v3648 = vsel %vm3635, %v3621, %v3622
        %v3649 = vsel %vm3635, %v3620, %v3621
        %v3650 = vsel %vm3635, %v3619, %v3620
        %v3651 = vsel %vm3635, %v3634, %v3619
        %v3652 = vmul.f32 %v3651, %v3555
        %v3653 = vmul.f32 %v3650, %v3556
        %v3654 = vmul.f32 %v3649, %v3557
        %v3655 = vmul.f32 %v3648, %v3558
        %v3656 = vmul.f32 %v3647, %v3559
        %v3657 = vmul.f32 %v3646, %v3560
        %v3658 = vmul.f32 %v3645, %v3561
        %v3659 = vmul.f32 %v3644, %v3562
        %v3660 = vmul.f32 %v3643, %v3563
        %v3661 = vmul.f32 %v3642, %v3564
        %v3662 = vmul.f32 %v3641, %v3565
        %v3663 = vmul.f32 %v3640, %v3566
        %v3664 = vmul.f32 %v3639, %v3567
        %v3665 = vmul.f32 %v3638, %v3568
        %v3666 = vmul.f32 %v3637, %v3569
        %v3667 = vmul.f32 %v3636, %v3570
        %v3668 = vmul.f32 %v3650, %v3603
        %v3669 = vmul.f32 %v3649, %v3604
        %v3670 = vmul.f32 %v3648, %v3605
        %v3671 = vmul.f32 %v3647, %v3606
        %v3672 = vmul.f32 %v3646, %v3607
        %v3673 = vmul.f32 %v3645, %v3608
        %v3674 = vmul.f32 %v3644, %v3609
        %v3675 = vmul.f32 %v3643, %v3610
        %v3676 = vmul.f32 %v3642, %v3611
        %v3677 = vmul.f32 %v3641, %v3612
        %v3678 = vmul.f32 %v3640, %v3613
        %v3679 = vmul.f32 %v3639, %v3614
        %v3680 = vmul.f32 %v3638, %v3615
        %v3681 = vmul.f32 %v3637, %v3616
        %v3682 = vmul.f32 %v3636, %v3617
        %v3683 = vmul.f32 %v3651, %v3618
        %v3684 = vrot.slane %v3476, 4
        %v3685 = vrot.slane %v3479, 4
        %v3686 = vrot.slane %v3482, 4
        %v3687 = vrot.slane %v3485, 4
        %v3688 = vrot.slane %v3488, 4
        %v3689 = vrot.slane %v3491, 4
        %v3690 = vrot.slane %v3494, 4
        %v3691 = vrot.slane %v3497, 4
        %v3692 = vrot.slane %v3500, 4
        %v3693 = vrot.slane %v3503, 4
        %v3694 = vrot.slane %v3506, 4
        %v3695 = vrot.slane %v3509, 4
        %v3696 = vrot.slane %v3512, 4
        %v3697 = vrot.slane %v3515, 4
        %v3698 = vrot.slane %v3518, 4
        %v3699 = vrot.slane %v3521, 4
        %v3700 = vsel %vm3635, %v3698, %v3699
        %v3701 = vsel %vm3635, %v3697, %v3698
        %v3702 = vsel %vm3635, %v3696, %v3697
        %v3703 = vsel %vm3635, %v3695, %v3696
        %v3704 = vsel %vm3635, %v3694, %v3695
        %v3705 = vsel %vm3635, %v3693, %v3694
        %v3706 = vsel %vm3635, %v3692, %v3693
        %v3707 = vsel %vm3635, %v3691, %v3692
        %v3708 = vsel %vm3635, %v3690, %v3691
        %v3709 = vsel %vm3635, %v3689, %v3690
        %v3710 = vsel %vm3635, %v3688, %v3689
        %v3711 = vsel %vm3635, %v3687, %v3688
        %v3712 = vsel %vm3635, %v3686, %v3687
        %v3713 = vsel %vm3635, %v3685, %v3686
        %v3714 = vsel %vm3635, %v3684, %v3685
        %v3715 = vsel %vm3635, %v3699, %v3684
        %v3716 = vmul.f32 %v3715, %v3555
        %v3717 = vmul.f32 %v3714, %v3556
        %v3718 = vmul.f32 %v3713, %v3557
        %v3719 = vmul.f32 %v3712, %v3558
        %v3720 = vmul.f32 %v3711, %v3559
        %v3721 = vmul.f32 %v3710, %v3560
        %v3722 = vmul.f32 %v3709, %v3561
        %v3723 = vmul.f32 %v3708, %v3562
        %v3724 = vmul.f32 %v3707, %v3563
        %v3725 = vmul.f32 %v3706, %v3564
        %v3726 = vmul.f32 %v3705, %v3565
        %v3727 = vmul.f32 %v3704, %v3566
        %v3728 = vmul.f32 %v3703, %v3567
        %v3729 = vmul.f32 %v3702, %v3568
        %v3730 = vmul.f32 %v3701, %v3569
        %v3731 = vmul.f32 %v3700, %v3570
        %v3732 = vperm.slane %v3278, 0
        %v3733 = vadd.f32 %v3716, %v3732
        %v3734 = vadd.f32 %v3717, %v3732
        %v3735 = vadd.f32 %v3718, %v3732
        %v3736 = vadd.f32 %v3719, %v3732
        %v3737 = vadd.f32 %v3720, %v3732
        %v3738 = vadd.f32 %v3721, %v3732
        %v3739 = vadd.f32 %v3722, %v3732
        %v3740 = vadd.f32 %v3723, %v3732
        %v3741 = vadd.f32 %v3724, %v3732
        %v3742 = vadd.f32 %v3725, %v3732
        %v3743 = vadd.f32 %v3726, %v3732
        %v3744 = vadd.f32 %v3727, %v3732
        %v3745 = vadd.f32 %v3728, %v3732
        %v3746 = vadd.f32 %v3729, %v3732
        %v3747 = vadd.f32 %v3730, %v3732
        %v3748 = vadd.f32 %v3731, %v3732
        %v3749 = vperm.slane %v3278, 1
        %v3750 = vadd.f32 %v3476, %v3749
        %v3751 = vadd.f32 %v3479, %v3749
        %v3752 = vadd.f32 %v3482, %v3749
        %v3753 = vadd.f32 %v3485, %v3749
        %v3754 = vadd.f32 %v3488, %v3749
        %v3755 = vadd.f32 %v3491, %v3749
        %v3756 = vadd.f32 %v3494, %v3749
        %v3757 = vadd.f32 %v3497, %v3749
        %v3758 = vadd.f32 %v3500, %v3749
        %v3759 = vadd.f32 %v3503, %v3749
        %v3760 = vadd.f32 %v3506, %v3749
        %v3761 = vadd.f32 %v3509, %v3749
        %v3762 = vadd.f32 %v3512, %v3749
        %v3763 = vadd.f32 %v3515, %v3749
        %v3764 = vadd.f32 %v3518, %v3749
        %v3765 = vadd.f32 %v3521, %v3749
        %v3766 = vmul.f32 %v3714, %v3603
        %v3767 = vmul.f32 %v3713, %v3604
        %v3768 = vmul.f32 %v3712, %v3605
        %v3769 = vmul.f32 %v3711, %v3606
        %v3770 = vmul.f32 %v3710, %v3607
        %v3771 = vmul.f32 %v3709, %v3608
        %v3772 = vmul.f32 %v3708, %v3609
        %v3773 = vmul.f32 %v3707, %v3610
        %v3774 = vmul.f32 %v3706, %v3611
        %v3775 = vmul.f32 %v3705, %v3612
        %v3776 = vmul.f32 %v3704, %v3613
        %v3777 = vmul.f32 %v3703, %v3614
        %v3778 = vmul.f32 %v3702, %v3615
        %v3779 = vmul.f32 %v3701, %v3616
        %v3780 = vmul.f32 %v3700, %v3617
        %v3781 = vmul.f32 %v3715, %v3618
        %v3782 = vperm.slane %v3278, 2
        %v3783 = vadd.f32 %v3766, %v3782
        %v3784 = vadd.f32 %v3767, %v3782
        %v3785 = vadd.f32 %v3768, %v3782
        %v3786 = vadd.f32 %v3769, %v3782
        %v3787 = vadd.f32 %v3770, %v3782
        %v3788 = vadd.f32 %v3771, %v3782
        %v3789 = vadd.f32 %v3772, %v3782
        %v3790 = vadd.f32 %v3773, %v3782
        %v3791 = vadd.f32 %v3774, %v3782
        %v3792 = vadd.f32 %v3775, %v3782
        %v3793 = vadd.f32 %v3776, %v3782
        %v3794 = vadd.f32 %v3777, %v3782
        %v3795 = vadd.f32 %v3778, %v3782
        %v3796 = vadd.f32 %v3779, %v3782
        %v3797 = vadd.f32 %v3780, %v3782
        %v3798 = vadd.f32 %v3781, %v3782
        %v3799 = vmul.f32 %v3346, %v3652
        %v3800 = vmul.f32 %v3349, %v3653
        %v3801 = vmul.f32 %v3352, %v3654
        %v3802 = vmul.f32 %v3355, %v3655
        %v3803 = vmul.f32 %v3358, %v3656
        %v3804 = vmul.f32 %v3361, %v3657
        %v3805 = vmul.f32 %v3364, %v3658
        %v3806 = vmul.f32 %v3367, %v3659
        %v3807 = vmul.f32 %v3370, %v3660
        %v3808 = vmul.f32 %v3373, %v3661
        %v3809 = vmul.f32 %v3376, %v3662
        %v3810 = vmul.f32 %v3379, %v3663
        %v3811 = vmul.f32 %v3382, %v3664
        %v3812 = vmul.f32 %v3385, %v3665
        %v3813 = vmul.f32 %v3388, %v3666
        %v3814 = vmul.f32 %v3391, %v3667
        %v3815 = vmul.f32 %v3346, %v3411
        %v3816 = vmul.f32 %v3349, %v3414
        %v3817 = vmul.f32 %v3352, %v3417
        %v3818 = vmul.f32 %v3355, %v3420
        %v3819 = vmul.f32 %v3358, %v3423
        %v3820 = vmul.f32 %v3361, %v3426
        %v3821 = vmul.f32 %v3364, %v3429
        %v3822 = vmul.f32 %v3367, %v3432
        %v3823 = vmul.f32 %v3370, %v3435
        %v3824 = vmul.f32 %v3373, %v3438
        %v3825 = vmul.f32 %v3376, %v3441
        %v3826 = vmul.f32 %v3379, %v3444
        %v3827 = vmul.f32 %v3382, %v3447
        %v3828 = vmul.f32 %v3385, %v3450
        %v3829 = vmul.f32 %v3388, %v3453
        %v3830 = vmul.f32 %v3391, %v3456
        %v3831 = vmul.f32 %v3346, %v3668
        %v3832 = vmul.f32 %v3349, %v3669
        %v3833 = vmul.f32 %v3352, %v3670
        %v3834 = vmul.f32 %v3355, %v3671
        %v3835 = vmul.f32 %v3358, %v3672
        %v3836 = vmul.f32 %v3361, %v3673
        %v3837 = vmul.f32 %v3364, %v3674
        %v3838 = vmul.f32 %v3367, %v3675
        %v3839 = vmul.f32 %v3370, %v3676
        %v3840 = vmul.f32 %v3373, %v3677
        %v3841 = vmul.f32 %v3376, %v3678
        %v3842 = vmul.f32 %v3379, %v3679
        %v3843 = vmul.f32 %v3382, %v3680
        %v3844 = vmul.f32 %v3385, %v3681
        %v3845 = vmul.f32 %v3388, %v3682
        %v3846 = vmul.f32 %v3391, %v3683
        %v3847 = vmax.f32 %v3799, %v3815
        %v3848 = vmax.f32 %v3800, %v3816
        %v3849 = vmax.f32 %v3801, %v3817
        %v3850 = vmax.f32 %v3802, %v3818
        %v3851 = vmax.f32 %v3803, %v3819
        %v3852 = vmax.f32 %v3804, %v3820
        %v3853 = vmax.f32 %v3805, %v3821
        %v3854 = vmax.f32 %v3806, %v3822
        %v3855 = vmax.f32 %v3807, %v3823
        %v3856 = vmax.f32 %v3808, %v3824
        %v3857 = vmax.f32 %v3809, %v3825
        %v3858 = vmax.f32 %v3810, %v3826
        %v3859 = vmax.f32 %v3811, %v3827
        %v3860 = vmax.f32 %v3812, %v3828
        %v3861 = vmax.f32 %v3813, %v3829
        %v3862 = vmax.f32 %v3814, %v3830
        %v3863 = vmax.f32 %v3847, %v3831
        %v3864 = vmax.f32 %v3848, %v3832
        %v3865 = vmax.f32 %v3849, %v3833
        %v3866 = vmax.f32 %v3850, %v3834
        %v3867 = vmax.f32 %v3851, %v3835
        %v3868 = vmax.f32 %v3852, %v3836
        %v3869 = vmax.f32 %v3853, %v3837
        %v3870 = vmax.f32 %v3854, %v3838
        %v3871 = vmax.f32 %v3855, %v3839
        %v3872 = vmax.f32 %v3856, %v3840
        %v3873 = vmax.f32 %v3857, %v3841
        %v3874 = vmax.f32 %v3858, %v3842
        %v3875 = vmax.f32 %v3859, %v3843
        %v3876 = vmax.f32 %v3860, %v3844
        %v3877 = vmax.f32 %v3861, %v3845
        %v3878 = vmax.f32 %v3862, %v3846
        %v3879 = vsub.f32 %v3799, %v3863
        %v3880 = vsub.f32 %v3800, %v3864
        %v3881 = vsub.f32 %v3801, %v3865
        %v3882 = vsub.f32 %v3802, %v3866
        %v3883 = vsub.f32 %v3803, %v3867
        %v3884 = vsub.f32 %v3804, %v3868
        %v3885 = vsub.f32 %v3805, %v3869
        %v3886 = vsub.f32 %v3806, %v3870
        %v3887 = vsub.f32 %v3807, %v3871
        %v3888 = vsub.f32 %v3808, %v3872
        %v3889 = vsub.f32 %v3809, %v3873
        %v3890 = vsub.f32 %v3810, %v3874
        %v3891 = vsub.f32 %v3811, %v3875
        %v3892 = vsub.f32 %v3812, %v3876
        %v3893 = vsub.f32 %v3813, %v3877
        %v3894 = vsub.f32 %v3814, %v3878
        %v3895 = vmul.f32 %v3879, 1.442695
        %v3896 = vpow.pop %v3895
        %v3897 = vmul.f32 %v3880, 1.442695
        %v3898 = vpow.pop %v3897
        %v3899 = vmul.f32 %v3881, 1.442695
        %v3900 = vpow.pop %v3899
        %v3901 = vmul.f32 %v3882, 1.442695
        %v3902 = vpow.pop %v3901
        %v3903 = vmul.f32 %v3883, 1.442695
        %v3904 = vpow.pop %v3903
        %v3905 = vmul.f32 %v3884, 1.442695
        %v3906 = vpow.pop %v3905
        %v3907 = vmul.f32 %v3885, 1.442695
        %v3908 = vpow.pop %v3907
        %v3909 = vmul.f32 %v3886, 1.442695
        %v3910 = vpow.pop %v3909
        %v3911 = vmul.f32 %v3887, 1.442695
        %v3912 = vpow.pop %v3911
        %v3913 = vmul.f32 %v3888, 1.442695
        %v3914 = vpow.pop %v3913
        %v3915 = vmul.f32 %v3889, 1.442695
        %v3916 = vpow.pop %v3915
        %v3917 = vmul.f32 %v3890, 1.442695
        %v3918 = vpow.pop %v3917
        %v3919 = vmul.f32 %v3891, 1.442695
        %v3920 = vpow.pop %v3919
        %v3921 = vmul.f32 %v3892, 1.442695
        %v3922 = vpow.pop %v3921
        %v3923 = vmul.f32 %v3893, 1.442695
        %v3924 = vpow.pop %v3923
        %v3925 = vmul.f32 %v3894, 1.442695
        %v3926 = vpow.pop %v3925
        %v3927 = vsub.f32 %v3815, %v3863
        %v3928 = vsub.f32 %v3816, %v3864
        %v3929 = vsub.f32 %v3817, %v3865
        %v3930 = vsub.f32 %v3818, %v3866
        %v3931 = vsub.f32 %v3819, %v3867
        %v3932 = vsub.f32 %v3820, %v3868
        %v3933 = vsub.f32 %v3821, %v3869
        %v3934 = vsub.f32 %v3822, %v3870
        %v3935 = vsub.f32 %v3823, %v3871
        %v3936 = vsub.f32 %v3824, %v3872
        %v3937 = vsub.f32 %v3825, %v3873
        %v3938 = vsub.f32 %v3826, %v3874
        %v3939 = vsub.f32 %v3827, %v3875
        %v3940 = vsub.f32 %v3828, %v3876
        %v3941 = vsub.f32 %v3829, %v3877
        %v3942 = vsub.f32 %v3830, %v3878
        %v3943 = vmul.f32 %v3927, 1.442695
        %v3944 = vpow.pop %v3943
        %v3945 = vmul.f32 %v3928, 1.442695
        %v3946 = vpow.pop %v3945
        %v3947 = vmul.f32 %v3929, 1.442695
        %v3948 = vpow.pop %v3947
        %v3949 = vmul.f32 %v3930, 1.442695
        %v3950 = vpow.pop %v3949
        %v3951 = vmul.f32 %v3931, 1.442695
        %v3952 = vpow.pop %v3951
        %v3953 = vmul.f32 %v3932, 1.442695
        %v3954 = vpow.pop %v3953
        %v3955 = vmul.f32 %v3933, 1.442695
        %v3956 = vpow.pop %v3955
        %v3957 = vmul.f32 %v3934, 1.442695
        %v3958 = vpow.pop %v3957
        %v3959 = vmul.f32 %v3935, 1.442695
        %v3960 = vpow.pop %v3959
        %v3961 = vmul.f32 %v3936, 1.442695
        %v3962 = vpow.pop %v3961
        %v3963 = vmul.f32 %v3937, 1.442695
        %v3964 = vpow.pop %v3963
        %v3965 = vmul.f32 %v3938, 1.442695
        %v3966 = vpow.pop %v3965
        %v3967 = vmul.f32 %v3939, 1.442695
        %v3968 = vpow.pop %v3967
        %v3969 = vmul.f32 %v3940, 1.442695
        %v3970 = vpow.pop %v3969
        %v3971 = vmul.f32 %v3941, 1.442695
        %v3972 = vpow.pop %v3971
        %v3973 = vmul.f32 %v3942, 1.442695
        %v3974 = vpow.pop %v3973
        %v3975 = vsub.f32 %v3831, %v3863
        %v3976 = vsub.f32 %v3832, %v3864
        %v3977 = vsub.f32 %v3833, %v3865
        %v3978 = vsub.f32 %v3834, %v3866
        %v3979 = vsub.f32 %v3835, %v3867
        %v3980 = vsub.f32 %v3836, %v3868
        %v3981 = vsub.f32 %v3837, %v3869
        %v3982 = vsub.f32 %v3838, %v3870
        %v3983 = vsub.f32 %v3839, %v3871
        %v3984 = vsub.f32 %v3840, %v3872
        %v3985 = vsub.f32 %v3841, %v3873
        %v3986 = vsub.f32 %v3842, %v3874
        %v3987 = vsub.f32 %v3843, %v3875
        %v3988 = vsub.f32 %v3844, %v3876
        %v3989 = vsub.f32 %v3845, %v3877
        %v3990 = vsub.f32 %v3846, %v3878
        %v3991 = vmul.f32 %v3975, 1.442695
        %v3992 = vpow.pop %v3991
        %v3993 = vmul.f32 %v3976, 1.442695
        %v3994 = vpow.pop %v3993
        %v3995 = vmul.f32 %v3977, 1.442695
        %v3996 = vpow.pop %v3995
        %v3997 = vmul.f32 %v3978, 1.442695
        %v3998 = vpow.pop %v3997
        %v3999 = vmul.f32 %v3979, 1.442695
        %v4000 = vpow.pop %v3999
        %v4001 = vmul.f32 %v3980, 1.442695
        %v4002 = vpow.pop %v4001
        %v4003 = vmul.f32 %v3981, 1.442695
        %v4004 = vpow.pop %v4003
        %v4005 = vmul.f32 %v3982, 1.442695
        %v4006 = vpow.pop %v4005
        %v4007 = vmul.f32 %v3983, 1.442695
        %v4008 = vpow.pop %v4007
        %v4009 = vmul.f32 %v3984, 1.442695
        %v4010 = vpow.pop %v4009
        %v4011 = vmul.f32 %v3985, 1.442695
        %v4012 = vpow.pop %v4011
        %v4013 = vmul.f32 %v3986, 1.442695
        %v4014 = vpow.pop %v4013
        %v4015 = vmul.f32 %v3987, 1.442695
        %v4016 = vpow.pop %v4015
        %v4017 = vmul.f32 %v3988, 1.442695
        %v4018 = vpow.pop %v4017
        %v4019 = vmul.f32 %v3989, 1.442695
        %v4020 = vpow.pop %v4019
        %v4021 = vmul.f32 %v3990, 1.442695
        %v4022 = vpow.pop %v4021
        %v4023 = vadd.f32 %v3896, %v3944
        %v4024 = vadd.f32 %v3898, %v3946
        %v4025 = vadd.f32 %v3900, %v3948
        %v4026 = vadd.f32 %v3902, %v3950
        %v4027 = vadd.f32 %v3904, %v3952
        %v4028 = vadd.f32 %v3906, %v3954
        %v4029 = vadd.f32 %v3908, %v3956
        %v4030 = vadd.f32 %v3910, %v3958
        %v4031 = vadd.f32 %v3912, %v3960
        %v4032 = vadd.f32 %v3914, %v3962
        %v4033 = vadd.f32 %v3916, %v3964
        %v4034 = vadd.f32 %v3918, %v3966
        %v4035 = vadd.f32 %v3920, %v3968
        %v4036 = vadd.f32 %v3922, %v3970
        %v4037 = vadd.f32 %v3924, %v3972
        %v4038 = vadd.f32 %v3926, %v3974
        %v4039 = vadd.f32 %v4023, %v3992
        %v4040 = vadd.f32 %v4024, %v3994
        %v4041 = vadd.f32 %v4025, %v3996
        %v4042 = vadd.f32 %v4026, %v3998
        %v4043 = vadd.f32 %v4027, %v4000
        %v4044 = vadd.f32 %v4028, %v4002
        %v4045 = vadd.f32 %v4029, %v4004
        %v4046 = vadd.f32 %v4030, %v4006
        %v4047 = vadd.f32 %v4031, %v4008
        %v4048 = vadd.f32 %v4032, %v4010
        %v4049 = vadd.f32 %v4033, %v4012
        %v4050 = vadd.f32 %v4034, %v4014
        %v4051 = vadd.f32 %v4035, %v4016
        %v4052 = vadd.f32 %v4036, %v4018
        %v4053 = vadd.f32 %v4037, %v4020
        %v4054 = vadd.f32 %v4038, %v4022
        %v4055 = vmul.f32 %v3896, %v3733
        %v4056 = vmul.f32 %v3898, %v3734
        %v4057 = vmul.f32 %v3900, %v3735
        %v4058 = vmul.f32 %v3902, %v3736
        %v4059 = vmul.f32 %v3904, %v3737
        %v4060 = vmul.f32 %v3906, %v3738
        %v4061 = vmul.f32 %v3908, %v3739
        %v4062 = vmul.f32 %v3910, %v3740
        %v4063 = vmul.f32 %v3912, %v3741
        %v4064 = vmul.f32 %v3914, %v3742
        %v4065 = vmul.f32 %v3916, %v3743
        %v4066 = vmul.f32 %v3918, %v3744
        %v4067 = vmul.f32 %v3920, %v3745
        %v4068 = vmul.f32 %v3922, %v3746
        %v4069 = vmul.f32 %v3924, %v3747
        %v4070 = vmul.f32 %v3926, %v3748
        %v4071 = vmul.f32 %v3944, %v3750
        %v4072 = vmul.f32 %v3946, %v3751
        %v4073 = vmul.f32 %v3948, %v3752
        %v4074 = vmul.f32 %v3950, %v3753
        %v4075 = vmul.f32 %v3952, %v3754
        %v4076 = vmul.f32 %v3954, %v3755
        %v4077 = vmul.f32 %v3956, %v3756
        %v4078 = vmul.f32 %v3958, %v3757
        %v4079 = vmul.f32 %v3960, %v3758
        %v4080 = vmul.f32 %v3962, %v3759
        %v4081 = vmul.f32 %v3964, %v3760
        %v4082 = vmul.f32 %v3966, %v3761
        %v4083 = vmul.f32 %v3968, %v3762
        %v4084 = vmul.f32 %v3970, %v3763
        %v4085 = vmul.f32 %v3972, %v3764
        %v4086 = vmul.f32 %v3974, %v3765
        %v4087 = vadd.f32 %v4055, %v4071
        %v4088 = vadd.f32 %v4056, %v4072
        %v4089 = vadd.f32 %v4057, %v4073
        %v4090 = vadd.f32 %v4058, %v4074
        %v4091 = vadd.f32 %v4059, %v4075
        %v4092 = vadd.f32 %v4060, %v4076
        %v4093 = vadd.f32 %v4061, %v4077
        %v4094 = vadd.f32 %v4062, %v4078
        %v4095 = vadd.f32 %v4063, %v4079
        %v4096 = vadd.f32 %v4064, %v4080
        %v4097 = vadd.f32 %v4065, %v4081
        %v4098 = vadd.f32 %v4066, %v4082
        %v4099 = vadd.f32 %v4067, %v4083
        %v4100 = vadd.f32 %v4068, %v4084
        %v4101 = vadd.f32 %v4069, %v4085
        %v4102 = vadd.f32 %v4070, %v4086
        %v4103 = vmul.f32 %v3992, %v3783
        %v4104 = vmul.f32 %v3994, %v3784
        %v4105 = vmul.f32 %v3996, %v3785
        %v4106 = vmul.f32 %v3998, %v3786
        %v4107 = vmul.f32 %v4000, %v3787
        %v4108 = vmul.f32 %v4002, %v3788
        %v4109 = vmul.f32 %v4004, %v3789
        %v4110 = vmul.f32 %v4006, %v3790
        %v4111 = vmul.f32 %v4008, %v3791
        %v4112 = vmul.f32 %v4010, %v3792
        %v4113 = vmul.f32 %v4012, %v3793
        %v4114 = vmul.f32 %v4014, %v3794
        %v4115 = vmul.f32 %v4016, %v3795
        %v4116 = vmul.f32 %v4018, %v3796
        %v4117 = vmul.f32 %v4020, %v3797
        %v4118 = vmul.f32 %v4022, %v3798
        %v4119 = vadd.f32 %v4087, %v4103
        %v4120 = vadd.f32 %v4088, %v4104
        %v4121 = vadd.f32 %v4089, %v4105
        %v4122 = vadd.f32 %v4090, %v4106
        %v4123 = vadd.f32 %v4091, %v4107
        %v4124 = vadd.f32 %v4092, %v4108
        %v4125 = vadd.f32 %v4093, %v4109
        %v4126 = vadd.f32 %v4094, %v4110
        %v4127 = vadd.f32 %v4095, %v4111
        %v4128 = vadd.f32 %v4096, %v4112
        %v4129 = vadd.f32 %v4097, %v4113
        %v4130 = vadd.f32 %v4098, %v4114
        %v4131 = vadd.f32 %v4099, %v4115
        %v4132 = vadd.f32 %v4100, %v4116
        %v4133 = vadd.f32 %v4101, %v4117
        %v4134 = vadd.f32 %v4102, %v4118
        %v4135 = vrcp.pop %v4039
        %v4136 = vmul.f32 %v4039, %v4135
        %v4137 = vsub.f32 1.0, %v4136
        %v4138 = vmul.f32 %v4135, %v4137
        %v4139 = vadd.f32 %v4135, %v4138
        %vm4140 = vweird.f32 %v4039
        %vm4141 = vweird.f32 %v4135
        %vm4142 = vmor %vm4140, %vm4141
        %v4143 = vsel %vm4142, %v4135, %v4139
        %v4144 = vand.u32 2147483647, %v4039
        %vm4145 = vcmp.eq.f32.partialorder %v4144, 8.507059e+37
        %v4146 = vand.u32 %v4039, 2147483648
        %v4147 = vor.u32 1.1754944e-38, %v4146
        %v4148 = vsel %vm4145, %v4147, %v4143
        %v4149 = vrcp.pop %v4040
        %v4150 = vmul.f32 %v4040, %v4149
        %v4151 = vsub.f32 1.0, %v4150
        %v4152 = vmul.f32 %v4149, %v4151
        %v4153 = vadd.f32 %v4149, %v4152
        %vm4154 = vweird.f32 %v4040
        %vm4155 = vweird.f32 %v4149
        %vm4156 = vmor %vm4154, %vm4155
        %v4157 = vsel %vm4156, %v4149, %v4153
        %v4158 = vand.u32 2147483647, %v4040
        %vm4159 = vcmp.eq.f32.partialorder %v4158, 8.507059e+37
        %v4160 = vand.u32 %v4040, 2147483648
        %v4161 = vor.u32 1.1754944e-38, %v4160
        %v4162 = vsel %vm4159, %v4161, %v4157
        %v4163 = vrcp.pop %v4041
        %v4164 = vmul.f32 %v4041, %v4163
        %v4165 = vsub.f32 1.0, %v4164
        %v4166 = vmul.f32 %v4163, %v4165
        %v4167 = vadd.f32 %v4163, %v4166
        %vm4168 = vweird.f32 %v4041
        %vm4169 = vweird.f32 %v4163
        %vm4170 = vmor %vm4168, %vm4169
        %v4171 = vsel %vm4170, %v4163, %v4167
        %v4172 = vand.u32 2147483647, %v4041
        %vm4173 = vcmp.eq.f32.partialorder %v4172, 8.507059e+37
        %v4174 = vand.u32 %v4041, 2147483648
        %v4175 = vor.u32 1.1754944e-38, %v4174
        %v4176 = vsel %vm4173, %v4175, %v4171
        %v4177 = vrcp.pop %v4042
        %v4178 = vmul.f32 %v4042, %v4177
        %v4179 = vsub.f32 1.0, %v4178
        %v4180 = vmul.f32 %v4177, %v4179
        %v4181 = vadd.f32 %v4177, %v4180
        %vm4182 = vweird.f32 %v4042
        %vm4183 = vweird.f32 %v4177
        %vm4184 = vmor %vm4182, %vm4183
        %v4185 = vsel %vm4184, %v4177, %v4181
        %v4186 = vand.u32 2147483647, %v4042
        %vm4187 = vcmp.eq.f32.partialorder %v4186, 8.507059e+37
        %v4188 = vand.u32 %v4042, 2147483648
        %v4189 = vor.u32 1.1754944e-38, %v4188
        %v4190 = vsel %vm4187, %v4189, %v4185
        %v4191 = vrcp.pop %v4043
        %v4192 = vmul.f32 %v4043, %v4191
        %v4193 = vsub.f32 1.0, %v4192
        %v4194 = vmul.f32 %v4191, %v4193
        %v4195 = vadd.f32 %v4191, %v4194
        %vm4196 = vweird.f32 %v4043
        %vm4197 = vweird.f32 %v4191
        %vm4198 = vmor %vm4196, %vm4197
        %v4199 = vsel %vm4198, %v4191, %v4195
        %v4200 = vand.u32 2147483647, %v4043
        %vm4201 = vcmp.eq.f32.partialorder %v4200, 8.507059e+37
        %v4202 = vand.u32 %v4043, 2147483648
        %v4203 = vor.u32 1.1754944e-38, %v4202
        %v4204 = vsel %vm4201, %v4203, %v4199
        %v4205 = vrcp.pop %v4044
        %v4206 = vmul.f32 %v4044, %v4205
        %v4207 = vsub.f32 1.0, %v4206
        %v4208 = vmul.f32 %v4205, %v4207
        %v4209 = vadd.f32 %v4205, %v4208
        %vm4210 = vweird.f32 %v4044
        %vm4211 = vweird.f32 %v4205
        %vm4212 = vmor %vm4210, %vm4211
        %v4213 = vsel %vm4212, %v4205, %v4209
        %v4214 = vand.u32 2147483647, %v4044
        %vm4215 = vcmp.eq.f32.partialorder %v4214, 8.507059e+37
        %v4216 = vand.u32 %v4044, 2147483648
        %v4217 = vor.u32 1.1754944e-38, %v4216
        %v4218 = vsel %vm4215, %v4217, %v4213
        %v4219 = vrcp.pop %v4045
        %v4220 = vmul.f32 %v4045, %v4219
        %v4221 = vsub.f32 1.0, %v4220
        %v4222 = vmul.f32 %v4219, %v4221
        %v4223 = vadd.f32 %v4219, %v4222
        %vm4224 = vweird.f32 %v4045
        %vm4225 = vweird.f32 %v4219
        %vm4226 = vmor %vm4224, %vm4225
        %v4227 = vsel %vm4226, %v4219, %v4223
        %v4228 = vand.u32 2147483647, %v4045
        %vm4229 = vcmp.eq.f32.partialorder %v4228, 8.507059e+37
        %v4230 = vand.u32 %v4045, 2147483648
        %v4231 = vor.u32 1.1754944e-38, %v4230
        %v4232 = vsel %vm4229, %v4231, %v4227
        %v4233 = vrcp.pop %v4046
        %v4234 = vmul.f32 %v4046, %v4233
        %v4235 = vsub.f32 1.0, %v4234
        %v4236 = vmul.f32 %v4233, %v4235
        %v4237 = vadd.f32 %v4233, %v4236
        %vm4238 = vweird.f32 %v4046
        %vm4239 = vweird.f32 %v4233
        %vm4240 = vmor %vm4238, %vm4239
        %v4241 = vsel %vm4240, %v4233, %v4237
        %v4242 = vand.u32 2147483647, %v4046
        %vm4243 = vcmp.eq.f32.partialorder %v4242, 8.507059e+37
        %v4244 = vand.u32 %v4046, 2147483648
        %v4245 = vor.u32 1.1754944e-38, %v4244
        %v4246 = vsel %vm4243, %v4245, %v4241
        %v4247 = vrcp.pop %v4047
        %v4248 = vmul.f32 %v4047, %v4247
        %v4249 = vsub.f32 1.0, %v4248
        %v4250 = vmul.f32 %v4247, %v4249
        %v4251 = vadd.f32 %v4247, %v4250
        %vm4252 = vweird.f32 %v4047
        %vm4253 = vweird.f32 %v4247
        %vm4254 = vmor %vm4252, %vm4253
        %v4255 = vsel %vm4254, %v4247, %v4251
        %v4256 = vand.u32 2147483647, %v4047
        %vm4257 = vcmp.eq.f32.partialorder %v4256, 8.507059e+37
        %v4258 = vand.u32 %v4047, 2147483648
        %v4259 = vor.u32 1.1754944e-38, %v4258
        %v4260 = vsel %vm4257, %v4259, %v4255
        %v4261 = vrcp.pop %v4048
        %v4262 = vmul.f32 %v4048, %v4261
        %v4263 = vsub.f32 1.0, %v4262
        %v4264 = vmul.f32 %v4261, %v4263
        %v4265 = vadd.f32 %v4261, %v4264
        %vm4266 = vweird.f32 %v4048
        %vm4267 = vweird.f32 %v4261
        %vm4268 = vmor %vm4266, %vm4267
        %v4269 = vsel %vm4268, %v4261, %v4265
        %v4270 = vand.u32 2147483647, %v4048
        %vm4271 = vcmp.eq.f32.partialorder %v4270, 8.507059e+37
        %v4272 = vand.u32 %v4048, 2147483648
        %v4273 = vor.u32 1.1754944e-38, %v4272
        %v4274 = vsel %vm4271, %v4273, %v4269
        %v4275 = vrcp.pop %v4049
        %v4276 = vmul.f32 %v4049, %v4275
        %v4277 = vsub.f32 1.0, %v4276
        %v4278 = vmul.f32 %v4275, %v4277
        %v4279 = vadd.f32 %v4275, %v4278
        %vm4280 = vweird.f32 %v4049
        %vm4281 = vweird.f32 %v4275
        %vm4282 = vmor %vm4280, %vm4281
        %v4283 = vsel %vm4282, %v4275, %v4279
        %v4284 = vand.u32 2147483647, %v4049
        %vm4285 = vcmp.eq.f32.partialorder %v4284, 8.507059e+37
        %v4286 = vand.u32 %v4049, 2147483648
        %v4287 = vor.u32 1.1754944e-38, %v4286
        %v4288 = vsel %vm4285, %v4287, %v4283
        %v4289 = vrcp.pop %v4050
        %v4290 = vmul.f32 %v4050, %v4289
        %v4291 = vsub.f32 1.0, %v4290
        %v4292 = vmul.f32 %v4289, %v4291
        %v4293 = vadd.f32 %v4289, %v4292
        %vm4294 = vweird.f32 %v4050
        %vm4295 = vweird.f32 %v4289
        %vm4296 = vmor %vm4294, %vm4295
        %v4297 = vsel %vm4296, %v4289, %v4293
        %v4298 = vand.u32 2147483647, %v4050
        %vm4299 = vcmp.eq.f32.partialorder %v4298, 8.507059e+37
        %v4300 = vand.u32 %v4050, 2147483648
        %v4301 = vor.u32 1.1754944e-38, %v4300
        %v4302 = vsel %vm4299, %v4301, %v4297
        %v4303 = vrcp.pop %v4051
        %v4304 = vmul.f32 %v4051, %v4303
        %v4305 = vsub.f32 1.0, %v4304
        %v4306 = vmul.f32 %v4303, %v4305
        %v4307 = vadd.f32 %v4303, %v4306
        %vm4308 = vweird.f32 %v4051
        %vm4309 = vweird.f32 %v4303
        %vm4310 = vmor %vm4308, %vm4309
        %v4311 = vsel %vm4310, %v4303, %v4307
        %v4312 = vand.u32 2147483647, %v4051
        %vm4313 = vcmp.eq.f32.partialorder %v4312, 8.507059e+37
        %v4314 = vand.u32 %v4051, 2147483648
        %v4315 = vor.u32 1.1754944e-38, %v4314
        %v4316 = vsel %vm4313, %v4315, %v4311
        %v4317 = vrcp.pop %v4052
        %v4318 = vmul.f32 %v4052, %v4317
        %v4319 = vsub.f32 1.0, %v4318
        %v4320 = vmul.f32 %v4317, %v4319
        %v4321 = vadd.f32 %v4317, %v4320
        %vm4322 = vweird.f32 %v4052
        %vm4323 = vweird.f32 %v4317
        %vm4324 = vmor %vm4322, %vm4323
        %v4325 = vsel %vm4324, %v4317, %v4321
        %v4326 = vand.u32 2147483647, %v4052
        %vm4327 = vcmp.eq.f32.partialorder %v4326, 8.507059e+37
        %v4328 = vand.u32 %v4052, 2147483648
        %v4329 = vor.u32 1.1754944e-38, %v4328
        %v4330 = vsel %vm4327, %v4329, %v4325
        %v4331 = vrcp.pop %v4053
        %v4332 = vmul.f32 %v4053, %v4331
        %v4333 = vsub.f32 1.0, %v4332
        %v4334 = vmul.f32 %v4331, %v4333
        %v4335 = vadd.f32 %v4331, %v4334
        %vm4336 = vweird.f32 %v4053
        %vm4337 = vweird.f32 %v4331
        %vm4338 = vmor %vm4336, %vm4337
        %v4339 = vsel %vm4338, %v4331, %v4335
        %v4340 = vand.u32 2147483647, %v4053
        %vm4341 = vcmp.eq.f32.partialorder %v4340, 8.507059e+37
        %v4342 = vand.u32 %v4053, 2147483648
        %v4343 = vor.u32 1.1754944e-38, %v4342
        %v4344 = vsel %vm4341, %v4343, %v4339
        %v4345 = vrcp.pop %v4054
        %v4346 = vmul.f32 %v4054, %v4345
        %v4347 = vsub.f32 1.0, %v4346
        %v4348 = vmul.f32 %v4345, %v4347
        %v4349 = vadd.f32 %v4345, %v4348
        %vm4350 = vweird.f32 %v4054
        %vm4351 = vweird.f32 %v4345
        %vm4352 = vmor %vm4350, %vm4351
        %v4353 = vsel %vm4352, %v4345, %v4349
        %v4354 = vand.u32 2147483647, %v4054
        %vm4355 = vcmp.eq.f32.partialorder %v4354, 8.507059e+37
        %v4356 = vand.u32 %v4054, 2147483648
        %v4357 = vor.u32 1.1754944e-38, %v4356
        %v4358 = vsel %vm4355, %v4357, %v4353
        %v4359 = vmul.f32 %v4119, %v4148
        %v4360 = vmul.f32 %v4120, %v4162
        %v4361 = vmul.f32 %v4121, %v4176
        %v4362 = vmul.f32 %v4122, %v4190
        %v4363 = vmul.f32 %v4123, %v4204
        %v4364 = vmul.f32 %v4124, %v4218
        %v4365 = vmul.f32 %v4125, %v4232
        %v4366 = vmul.f32 %v4126, %v4246
        %v4367 = vmul.f32 %v4127, %v4260
        %v4368 = vmul.f32 %v4128, %v4274
        %v4369 = vmul.f32 %v4129, %v4288
        %v4370 = vmul.f32 %v4130, %v4302
        %v4371 = vmul.f32 %v4131, %v4316
        %v4372 = vmul.f32 %v4132, %v4330
        %v4373 = vmul.f32 %v4133, %v4344
        %v4374 = vmul.f32 %v4134, %v4358
        %v4375 = vmax.f32 %v4359, 0.0
        %v4376 = vmax.f32 %v4360, 0.0
        %v4377 = vmax.f32 %v4361, 0.0
        %v4378 = vmax.f32 %v4362, 0.0
        %v4379 = vmax.f32 %v4363, 0.0
        %v4380 = vmax.f32 %v4364, 0.0
        %v4381 = vmax.f32 %v4365, 0.0
        %v4382 = vmax.f32 %v4366, 0.0
        %v4383 = vmax.f32 %v4367, 0.0
        %v4384 = vmax.f32 %v4368, 0.0
        %v4385 = vmax.f32 %v4369, 0.0
        %v4386 = vmax.f32 %v4370, 0.0
        %v4387 = vmax.f32 %v4371, 0.0
        %v4388 = vmax.f32 %v4372, 0.0
        %v4389 = vmax.f32 %v4373, 0.0
        %v4390 = vmax.f32 %v4374, 0.0
        %s4391 = scalar_lea.vmem %s7, 256
        %v4392 = vld [vmem:[%s4391] sm:$0xff]
        %v4393 = vld [vmem:[%s4391 + $0x8] sm:$0xff]
        %v4394 = vld [vmem:[%s4391 + $0x10] sm:$0xff]
        %v4395 = vld [vmem:[%s4391 + $0x18] sm:$0xff]
        %v4396 = vld [vmem:[%s4391 + $0x20] sm:$0xff]
        %v4397 = vld [vmem:[%s4391 + $0x28] sm:$0xff]
        %v4398 = vld [vmem:[%s4391 + $0x30] sm:$0xff]
        %v4399 = vld [vmem:[%s4391 + $0x38] sm:$0xff]
        %v4400 = vld [vmem:[%s4391 + $0x40] sm:$0xff]
        %v4401 = vld [vmem:[%s4391 + $0x48] sm:$0xff]
        %v4402 = vld [vmem:[%s4391 + $0x50] sm:$0xff]
        %v4403 = vld [vmem:[%s4391 + $0x58] sm:$0xff]
        %v4404 = vld [vmem:[%s4391 + $0x60] sm:$0xff]
        %v4405 = vld [vmem:[%s4391 + $0x68] sm:$0xff]
        %v4406 = vld [vmem:[%s4391 + $0x70] sm:$0xff]
        %v4407 = vld [vmem:[%s4391 + $0x78] sm:$0xff]
        %s4408 = scalar_lea.vmem %s8, 2
        %v4409 = vld [vmem:[%s4408] sm:$0x1]
        %v4411 = vperm.slane %v4409, 0
        %4413 = vmatpush.msra.mxu0 %v4407
        %4414 = vmatpush.msra.mxu0 %v4406
        %4415 = vmatpush.msra.mxu0 %v4405
        %4416 = vmatpush.msra.mxu0 %v4404
        %4417 = vmatpush.msra.mxu0 %v4403
        %4418 = vmatpush.msra.mxu0 %v4402
        %4419 = vmatpush.msra.mxu0 %v4401
        %4420 = vmatpush.msra.mxu0 %v4400
        %4421 = vmatpush.msra.mxu0 %v4399
        %4422 = vmatpush.msra.mxu0 %v4398
        %4423 = vmatpush.msra.mxu0 %v4397
        %4424 = vmatpush.msra.mxu0 %v4396
        %4425 = vmatpush.msra.mxu0 %v4395
        %4426 = vmatpush.msra.mxu0 %v4394
        %4427 = vmatpush.msra.mxu0 %v4393
        %4428 = vmatpush.msra.mxu0 %v4392
        %4429 = vmatmul.f32.gmra.mxu0 %v4375
        %v4430 = vpop.f32.mrf.mxu0
        %v4431 = vadd.f32 %v4411, %v4430
        %4432 = vmatmul.f32.gmra.mxu0 %v4376
        %v4433 = vpop.f32.mrf.mxu0
        %v4434 = vadd.f32 %v4411, %v4433
        %4435 = vmatmul.f32.gmra.mxu0 %v4377
        %v4436 = vpop.f32.mrf.mxu0
        %v4437 = vadd.f32 %v4411, %v4436
        %4438 = vmatmul.f32.gmra.mxu0 %v4378
        %v4439 = vpop.f32.mrf.mxu0
        %v4440 = vadd.f32 %v4411, %v4439
        %4441 = vmatmul.f32.gmra.mxu0 %v4379
        %v4442 = vpop.f32.mrf.mxu0
        %v4443 = vadd.f32 %v4411, %v4442
        %4444 = vmatmul.f32.gmra.mxu0 %v4380
        %v4445 = vpop.f32.mrf.mxu0
        %v4446 = vadd.f32 %v4411, %v4445
        %4447 = vmatmul.f32.gmra.mxu0 %v4381
        %v4448 = vpop.f32.mrf.mxu0
        %v4449 = vadd.f32 %v4411, %v4448
        %4450 = vmatmul.f32.gmra.mxu0 %v4382
        %v4451 = vpop.f32.mrf.mxu0
        %v4452 = vadd.f32 %v4411, %v4451
        %4453 = vmatmul.f32.gmra.mxu0 %v4383
        %v4454 = vpop.f32.mrf.mxu0
        %v4455 = vadd.f32 %v4411, %v4454
        %4456 = vmatmul.f32.gmra.mxu0 %v4384
        %v4457 = vpop.f32.mrf.mxu0
        %v4458 = vadd.f32 %v4411, %v4457
        %4459 = vmatmul.f32.gmra.mxu0 %v4385
        %v4460 = vpop.f32.mrf.mxu0
        %v4461 = vadd.f32 %v4411, %v4460
        %4462 = vmatmul.f32.gmra.mxu0 %v4386
        %v4463 = vpop.f32.mrf.mxu0
        %v4464 = vadd.f32 %v4411, %v4463
        %4465 = vmatmul.f32.gmra.mxu0 %v4387
        %v4466 = vpop.f32.mrf.mxu0
        %v4467 = vadd.f32 %v4411, %v4466
        %4468 = vmatmul.f32.gmra.mxu0 %v4388
        %v4469 = vpop.f32.mrf.mxu0
        %v4470 = vadd.f32 %v4411, %v4469
        %4471 = vmatmul.f32.gmra.mxu0 %v4389
        %v4472 = vpop.f32.mrf.mxu0
        %v4473 = vadd.f32 %v4411, %v4472
        %4474 = vmatmul.f32.gmra.mxu0 %v4390
        %v4475 = vpop.f32.mrf.mxu0
        %v4476 = vadd.f32 %v4411, %v4475
        %4477 = vdwg.mxu0
        %v4478 = vadd.f32 %v3261, %v4431
        %v4479 = vadd.f32 %v3262, %v4434
        %v4480 = vadd.f32 %v3263, %v4437
        %v4481 = vadd.f32 %v3264, %v4440
        %v4482 = vadd.f32 %v3265, %v4443
        %v4483 = vadd.f32 %v3266, %v4446
        %v4484 = vadd.f32 %v3267, %v4449
        %v4485 = vadd.f32 %v3268, %v4452
        %v4486 = vadd.f32 %v3269, %v4455
        %v4487 = vadd.f32 %v3270, %v4458
        %v4488 = vadd.f32 %v3271, %v4461
        %v4489 = vadd.f32 %v3272, %v4464
        %v4490 = vadd.f32 %v3273, %v4467
        %v4491 = vadd.f32 %v3274, %v4470
        %v4492 = vadd.f32 %v3275, %v4473
        %v4493 = vadd.f32 %v3276, %v4476
        %v4494 = vmul.f32 %v4478, %v1886
        %v4495 = vmul.f32 %v4479, %v1891
        %v4496 = vmul.f32 %v4480, %v1896
        %v4497 = vmul.f32 %v4481, %v1901
        %v4498 = vmul.f32 %v4482, %v1906
        %v4499 = vmul.f32 %v4483, %v1911
        %v4500 = vmul.f32 %v4484, %v1916
        %v4501 = vmul.f32 %v4485, %v1921
        %v4502 = vmul.f32 %v4486, %v1926
        %v4503 = vmul.f32 %v4487, %v1931
        %v4504 = vmul.f32 %v4488, %v1936
        %v4505 = vmul.f32 %v4489, %v1941
        %v4506 = vmul.f32 %v4490, %v1946
        %v4507 = vmul.f32 %v4491, %v1951
        %v4508 = vmul.f32 %v4492, %v1956
        %v4509 = vmul.f32 %v4493, %v1961
        %v4510 = vld [vmem:[%s9] sm:$0xff]
        %v4511 = vld [vmem:[%s10] sm:$0xff]
        %4513 = vset.pattern.permute.xlu0 0
        %4514 = vperm.xlu0 %4513, %v4511
        %v4515 = vpop.permute.xlu0 %4514
        %4517 = vmatpush.xpose.msra.mxu0 %v4509
        %4518 = vmatpush.xpose.msra.mxu0 %v4508
        %4519 = vmatpush.xpose.msra.mxu0 %v4507
        %4520 = vmatpush.xpose.msra.mxu0 %v4506
        %4521 = vmatpush.xpose.msra.mxu0 %v4505
        %4522 = vmatpush.xpose.msra.mxu0 %v4504
        %4523 = vmatpush.xpose.msra.mxu0 %v4503
        %4524 = vmatpush.xpose.msra.mxu0 %v4502
        %4525 = vmatpush.xpose.msra.mxu0 %v4501
        %4526 = vmatpush.xpose.msra.mxu0 %v4500
        %4527 = vmatpush.xpose.msra.mxu0 %v4499
        %4528 = vmatpush.xpose.msra.mxu0 %v4498
        %4529 = vmatpush.xpose.msra.mxu0 %v4497
        %4530 = vmatpush.xpose.msra.mxu0 %v4496
        %4531 = vmatpush.xpose.msra.mxu0 %v4495
        %4532 = vmatpush.xpose.msra.mxu0 %v4494
        %4533 = vmatmul.f32.gmra.mxu0 %v4510
        %v4534 = vpop.f32.mrf.mxu0
        %v4535 = vadd.f32 %v4515, %v4534
        %4536 = vdwg.mxu0
        %v4538 = vperm.slane %v452, 0
        %v4540 = vmul.f32 %v4535, %v4538
        %4541 = vst [vmem:[%s422] sm:$0xff] %v4540
        %s4542 = sand.u32 %s280, 1
        %s4543 = scalar_lea.sflag [#allocation4], %s4542
        %s4544 = sand.u32 %s280, 1
        %s4545 = smul.addr %s4544, 8
        %s4546 = scalar_lea.vmem [#allocation5], %s4545
        // Predicated region
        $region69: #{tpu_custom_call.1} parent=63 // pred_check
          %p4547 = pneg %p290
        $region70: #{tpu_custom_call.1} parent=63 // pred_check_branch
          %4549 = sbr.rel (%p4547) target = $region72
        $region71: #{tpu_custom_call.1} parent=63 // pred_region
          %4551 = vsyncadd %s4543, 0
          %s4552 = smul.addr %s26, 8
          %s4553 = scalar_lea.hbm %s11, %s4552
          %s4555 = sshll.u32 %s4546, 4
          %s4556 = int_to_ptr.vmem [resolvable:$true] %s4555
          %s4557 = sshll.u32 %s4553, 4
          %s4558 = int_to_ptr.hbm [resolvable:$true] %s4557
          %4560 = dma.vmem_to_hbm [thread:$0]  %s4556, 128, %s4558, %s4543
        $region72: #{tpu_custom_call.1} parent=63 // pred_fallthru
          _
      $region64: #{tpu_custom_call.1} parent=5 // pred_fallthru
        _
      %p4561 = scmp.le.s32.totalorder 2, %s21
      // Predicated region
      $region73: #{tpu_custom_call.1} parent=5 // pred_check
        %p4562 = pneg %p4561
      $region74: #{tpu_custom_call.1} parent=5 // pred_check_branch
        %4564 = sbr.rel (%p4562) target = $region76
      $region75: #{tpu_custom_call.1} parent=5 // pred_region
        %s4565 = ssub.s32 %s21, 2
        // Predicated region
        $region77: #{tpu_custom_call.1} parent=75 // pred_check
          %p4566 = pneg %p296
        $region78: #{tpu_custom_call.1} parent=75 // pred_check_branch
          %4568 = sbr.rel (%p4566) target = $region80
        $region79: #{tpu_custom_call.1} parent=75 // pred_region
          %s4569 = sand.u32 %s281, 1
          %s4570 = scalar_lea.sflag [#allocation4], %s4569
          %s4571 = sand.u32 %s281, 1
          %s4572 = smul.addr %s4571, 8
          %s4573 = scalar_lea.vmem [#allocation5], %s4572
          %4575 = dma.done %s4570, 128
        $region80: #{tpu_custom_call.1} parent=75 // pred_fallthru
          _
      $region76: #{tpu_custom_call.1} parent=5 // pred_fallthru
        _
    $region6: #{tpu_custom_call.1} parent=1 // loop_footer
      %s25 = sadd.s32 1, %s21
    $region7: #{tpu_custom_call.1} parent=1 // loop_footer_branch
      %20 = sbr.rel target = $region3
    $region8: #{tpu_custom_call.1} parent=1 // loop_exit
      _
    %4576 = vsyncpa [#allocation3], 1
    %s4577 = scalar_lea.sflag [#allocation3], 1
    %4578 = vsyncpa %s4577, 1
    %4579 = vsyncpa [#allocation4], 1
    %s4580 = scalar_lea.sflag [#allocation4], 1
    %4581 = vsyncpa %s4580, 1

</llo_original>
